<compile_context>
chip_gen: v5e
topology: v5e:2x2
jax: 0.10.0
libtpu: 0.0.40
codegen_flags: <defaults>
</compile_context>

<pallas_src>
import functools
import numpy as np

import jax
import jax.numpy as jnp
from jax.experimental import pallas as pl
from jax.experimental.pallas import tpu as pltpu


# ----------------------------- in-kernel helpers -----------------------------

def _erf(x):
    # Abramowitz & Stegun 7.1.26 rational approximation, |err| < 1.5e-7.
    a1, a2, a3, a4, a5 = 0.254829592, -0.284496736, 1.421413741, -1.453152027, 1.061405429
    p = 0.3275911
    ax = jnp.abs(x)
    t = 1.0 / (1.0 + p * ax)
    poly = ((((a5 * t + a4) * t + a3) * t + a2) * t + a1) * t
    y = 1.0 - poly * jnp.exp(-ax * ax)
    return jnp.where(x >= 0, y, -y)


def _gelu(x):
    # Exact (erf-based) GELU, matching PyTorch F.gelu default.
    return 0.5 * x * (1.0 + _erf(x * np.float32(1.0 / np.sqrt(2.0))))


def _layer_norm(x, g, b, eps=1e-5):
    mu = jnp.mean(x, axis=-1, keepdims=True)
    var = jnp.mean((x - mu) ** 2, axis=-1, keepdims=True)
    return (x - mu) * jax.lax.rsqrt(var + eps) * g + b


def _cell(x_in, x_ctx, h_prev, c_ref, layer, W, *, n_heads):
    """One mLSTMCell step for one batch element.

    x_in  : (D, S)  primary input (f32)       x_ctx : (N, S)  context input (f32)
    h_prev: (D, hidden) previous hidden (f32)
    c_ref : VMEM ref (L, H, D, N) matrix memory (f32), updated in place.
    Weights are bf16 (matmul operands); accumulation is f32.
    """
    f32, bf16 = jnp.float32, jnp.bfloat16
    x_in_b = x_in.astype(bf16)
    x_ctx_b = x_ctx.astype(bf16)
    h_b = h_prev.astype(bf16)

    def gate(g):
        return (jnp.dot(x_in_b, W['wih'][g], preferred_element_type=f32)
                + jnp.dot(h_b, W['whh'][g], preferred_element_type=f32)
                + W['bg'][g])

    i_gate = gate(0)                          # (D, hidden) f32
    f_gate = gate(1)
    o = jax.nn.sigmoid(gate(2))               # (D, hidden) f32

    i_gate_b = i_gate.astype(bf16)
    f_gate_b = f_gate.astype(bf16)

    d_rows = x_in.shape[0]
    hidden = int(W['wo'].shape[2])
    out = jnp.zeros((d_rows, hidden), f32)    # lane-dense per-head accumulator

    for hh in range(n_heads):                 # static unroll; per-head leading-axis reads
        i_h = jnp.tanh(jnp.dot(i_gate_b, W['wi'][hh],
                               preferred_element_type=f32) + W['bi'][hh])         # (D, N)
        f_h = jax.nn.sigmoid(jnp.dot(f_gate_b, W['wf'][hh],
                                     preferred_element_type=f32) + W['bf'][hh])   # (D, N)
        # scale folded into wq; W_q/W_k/W_v biases are zero (reference reset_parameters).
        q_h = jnp.dot(x_in_b, W['wq'][hh], preferred_element_type=f32).astype(bf16)   # (D, dk)
        k_h = jnp.dot(x_ctx_b, W['wk'][hh], preferred_element_type=f32).astype(bf16)  # (N, dk)
        v_h = jnp.dot(x_ctx_b, W['wv'][hh], preferred_element_type=f32).astype(bf16)  # (N, dk)

        attn = jax.lax.dot_general(q_h, k_h, (((1,), (1,)), ((), ())),
                                   preferred_element_type=f32)                    # (D, N)
        c_new = c_ref[layer, hh] * f_h + attn * i_h                               # (D, N) f32
        c_ref[layer, hh] = c_new
        head_out = jnp.dot(c_new.astype(bf16), v_h, preferred_element_type=f32)   # (D, dk)
        out = out + jnp.dot(head_out.astype(bf16), W['wo'][hh],
                            preferred_element_type=f32)                           # (D, hidden)

    return o * (out + W['bo'][...])


def _ffn(z, ln_a_g, ln_a_b, fp, ln_b_g, ln_b_b):
    """x = LN_a(z); y = conv2(gelu(conv1(x))); return LN_b(x + y)  (matches PyTorch)."""
    f32, bf16 = jnp.float32, jnp.bfloat16
    x = _layer_norm(z, ln_a_g, ln_a_b)
    y = _gelu(jnp.dot(x.astype(bf16), fp['w1'][...], preferred_element_type=f32) + fp['c1'][...])
    y = jnp.dot(y.astype(bf16), fp['w2'][...], preferred_element_type=f32) + fp['c2'][...]
    return _layer_norm(x + y, ln_b_g, ln_b_b)


# --------------------------------- full forward --------------------------------

def mlstm_forward(feature, base, params, *, heads, hidden):
    B, T, D1, P = feature.shape
    _, _, D2, _ = base.shape
    num_layers = len(params['layers'])

    flat_w, treedef = jax.tree_util.tree_flatten(params)
    nw = len(flat_w)

    def kernel(feat_ref, base_ref, *rest):
        w_refs = rest[:nw]
        o1_ref, o2_ref = rest[nw], rest[nw + 1]
        h1_scr, c1_scr, h2_scr, c2_scr = rest[nw + 2:]
        p = jax.tree_util.tree_unflatten(treedef, list(w_refs))
        ln = p['ln']                                      # (8, 1, hidden) f32 slab

        # One grid step == one full batch element: reset recurrent state.
        h1_scr[...] = jnp.zeros_like(h1_scr)
        c1_scr[...] = jnp.zeros_like(c1_scr)
        h2_scr[...] = jnp.zeros_like(h2_scr)
        c2_scr[...] = jnp.zeros_like(c2_scr)

        # TODO(synk): for layer 0, the x-only projections (gate-ih, q/k/v) could be
        # batched over all T before this loop for better MXU utilization at large T.
        @pl.loop(0, T)
        def _time_step(t):
            x1 = feat_ref[0, t]                           # (D1, P) f32
            x2 = base_ref[0, t]                           # (D2, P) f32

            for l in range(num_layers):                   # static unroll; weights differ per layer
                lp = p['layers'][l]
                h1_new = _cell(x1, x2, h1_scr[l], c1_scr, l, lp['cell1'], n_heads=heads)
                h2_new = _cell(x2, x1, h2_scr[l], c2_scr, l, lp['cell2'], n_heads=heads)
                h1_scr[l] = h1_new
                h2_scr[l] = h2_new

                z1 = x1 + h1_new if l > 0 else h1_new     # dropout = identity (eval mode)
                x1 = _ffn(z1, ln[0], ln[1], p['ffn_basis'], ln[2], ln[3])
                z2 = x2 + h2_new if l > 0 else h2_new
                x2 = _ffn(z2, ln[4], ln[5], p['ffn_ts'], ln[6], ln[7])

            @pl.when(t == T - 1)
            def _store():
                o1_ref[0] = x1
                o2_ref[0] = x2

    def _const_spec(shape):
        nd = len(shape)
        return pl.BlockSpec(tuple(shape), lambda b, _n=nd: (0,) * _n)

    in_specs = [
        pl.BlockSpec((1, T, D1, P), lambda b: (b, 0, 0, 0)),
        pl.BlockSpec((1, T, D2, P), lambda b: (b, 0, 0, 0)),
    ] + [_const_spec(w.shape) for w in flat_w]

    out_specs = (
        pl.BlockSpec((1, D1, hidden), lambda b: (b, 0, 0)),
        pl.BlockSpec((1, D2, hidden), lambda b: (b, 0, 0)),
    )
    out_shape = (jax.ShapeDtypeStruct((B, D1, hidden), jnp.float32),
                 jax.ShapeDtypeStruct((B, D2, hidden), jnp.float32))

    scratch_shapes = [
        pltpu.VMEM((num_layers, D1, hidden), jnp.float32),           # h1 per layer
        pltpu.VMEM((num_layers, heads, D1, D2), jnp.float32),        # C1 per layer/head
        pltpu.VMEM((num_layers, D2, hidden), jnp.float32),           # h2 per layer
        pltpu.VMEM((num_layers, heads, D2, D1), jnp.float32),        # C2 per layer/head
    ]

    # VMEM budget sized from the actual operand footprint (inputs are double-buffered
    # by default, weights tiny here); clamp to a range that is safe on v5e/v6e/v7x.
    weight_bytes = sum(int(np.prod(w.shape)) * w.dtype.itemsize for w in flat_w)
    io_bytes = 4 * (T * D1 * P + T * D2 * P + D1 * hidden + D2 * hidden)
    scratch_bytes = 4 * num_layers * (D1 * hidden + D2 * hidden
                                      + heads * D1 * D2 + heads * D2 * D1)
    vmem_limit = int(min(96 * 2 ** 20,
                         max(32 * 2 ** 20, 4 * (weight_bytes + io_bytes) + scratch_bytes)))

    return pl.pallas_call(
        kernel,
        grid=(B,),
        in_specs=in_specs,
        out_specs=out_specs,
        out_shape=out_shape,
        scratch_shapes=scratch_shapes,
        compiler_params=pltpu.CompilerParams(
            dimension_semantics=("parallel",),
            vmem_limit_bytes=vmem_limit,
        ),
    )(feature, base, *flat_w)


# ------------------------------- parameter setup -------------------------------

def _xavier_t(key, out_dim, in_dim):
    """Xavier-uniform weight, pre-transposed to (in, out) layout for jnp.dot (f32)."""
    bound = float(np.sqrt(6.0 / (in_dim + out_dim)))
    return jax.random.uniform(key, (in_dim, out_dim), jnp.float32, -bound, bound)


def _linear_bias(key, out_dim, in_dim):
    bound = float(1.0 / np.sqrt(in_dim))
    return jax.random.uniform(key, (1, out_dim), jnp.float32, -bound, bound)


def make_cell_params(key, heads, n_ctx, seqlen, hidden):
    dk = hidden // heads
    scale = float(dk) ** -0.5
    ks = jax.random.split(key, 11)

    w_ih = _xavier_t(ks[0], 3 * hidden, seqlen)          # (seqlen, 3*hidden)
    w_hh = _xavier_t(ks[1], 3 * hidden, hidden)          # (hidden, 3*hidden)
    w_i = _xavier_t(ks[2], n_ctx * heads, hidden)        # (hidden, H*N)
    b_i = _linear_bias(ks[3], n_ctx * heads, hidden)
    w_f = _xavier_t(ks[4], n_ctx * heads, hidden)
    b_f = _linear_bias(ks[5], n_ctx * heads, hidden)
    w_q = _xavier_t(ks[6], dk * heads, seqlen) * scale   # scale folded in (W_q bias is zero)
    w_k = _xavier_t(ks[7], dk * heads, seqlen)
    w_v = _xavier_t(ks[8], dk * heads, seqlen)
    w_o = _xavier_t(ks[9], hidden, dk * heads)           # (H*dk, hidden)
    b_o = _linear_bias(ks[10], hidden, dk * heads)

    def stack_gates(w):     # (in, 3*hidden) -> (3, in, hidden), bf16
        return jnp.transpose(w.reshape(w.shape[0], 3, hidden), (1, 0, 2)).astype(jnp.bfloat16)

    def heads_w(w, d):      # (in, H*d) -> (H, in, d), bf16
        return jnp.transpose(w.reshape(w.shape[0], heads, d), (1, 0, 2)).astype(jnp.bfloat16)

    def heads_b(b, d):      # (1, H*d) -> (H, 1, d), f32
        return b.reshape(heads, 1, d)

    return dict(
        wih=stack_gates(w_ih),                            # (3, seqlen, hidden) bf16
        whh=stack_gates(w_hh),                            # (3, hidden, hidden) bf16
        bg=jnp.zeros((3, 1, hidden), jnp.float32),        # reference zero-inits the gate bias
        wi=heads_w(w_i, n_ctx), bi=heads_b(b_i, n_ctx),
        wf=heads_w(w_f, n_ctx), bf=heads_b(b_f, n_ctx),
        wq=heads_w(w_q, dk),
        wk=heads_w(w_k, dk),
        wv=heads_w(w_v, dk),
        wo=w_o.reshape(heads, dk, hidden).astype(jnp.bfloat16),   # (H, dk, hidden) bf16
        bo=b_o,                                                   # (1, hidden) f32
    )


def make_ffn_params(key, hidden, d_ff):
    ks = jax.random.split(key, 4)
    return dict(
        w1=_xavier_t(ks[0], d_ff, hidden).astype(jnp.bfloat16),   # (hidden, d_ff)
        c1=_linear_bias(ks[1], d_ff, hidden),
        w2=_xavier_t(ks[2], hidden, d_ff).astype(jnp.bfloat16),   # (d_ff, hidden)
        c2=_linear_bias(ks[3], hidden, d_ff),
    )


def make_ln_slab(hidden):
    # rows: [ln11.g, ln11.b, ln12.g, ln12.b, ln21.g, ln21.b, ln22.g, ln22.b]
    g = jnp.ones((1, hidden), jnp.float32)
    b = jnp.zeros((1, hidden), jnp.float32)
    return jnp.stack([g, b, g, b, g, b, g, b], axis=0)            # (8, 1, hidden)


def make_mlstm_params(key, input_size_1, input_size_2, heads, hidden, num_layers, patch):
    d_ff = 4 * hidden
    keys = jax.random.split(key, 2 * num_layers + 2)
    layers = []
    for l in range(num_layers):
        seqlen = patch if l == 0 else hidden
        layers.append(dict(
            cell1=make_cell_params(keys[2 * l], heads, input_size_2, seqlen, hidden),
            cell2=make_cell_params(keys[2 * l + 1], heads, input_size_1, seqlen, hidden),
        ))
    return dict(
        layers=layers,
        ffn_basis=make_ffn_params(keys[-2], hidden, d_ff),
        ffn_ts=make_ffn_params(keys[-1], hidden, d_ff),
        ln=make_ln_slab(hidden),
    )


# ------------------------------------- main -------------------------------------

if __name__ == "__main__":
    B, T = 2, 3
    input_size_1, input_size_2 = 6, 4            # feature rows / base rows
    patch = 8
    heads, hidden, num_layers = 2, 32, 2

    key = jax.random.PRNGKey(0)
    k_feat, k_base, k_par = jax.random.split(key, 3)
    feature = jax.random.normal(k_feat, (B, T, input_size_1, patch), jnp.float32)
    base = jax.random.normal(k_base, (B, T, input_size_2, patch), jnp.float32)

    params = make_mlstm_params(k_par, input_size_1, input_size_2,
                               heads, hidden, num_layers, patch)

    fwd = jax.jit(functools.partial(mlstm_forward, heads=heads, hidden=hidden))
    o1, o2 = fwd(feature, base, params)
    jax.block_until_ready((o1, o2))

    assert o1.shape == (B, input_size_1, hidden)
    assert o2.shape == (B, input_size_2, hidden)
    assert bool(jnp.all(jnp.isfinite(o1))) and bool(jnp.all(jnp.isfinite(o2)))
    print("KERNEL_OK")
</pallas_src>

<mosaic_0001>
module attributes {stable_mosaic.version = 11 : i64} {
  func.func @kernel(%arg0: i32, %arg1: memref<1x3x6x8xf32, #tpu.memory_space<vmem>>, %arg2: memref<1x3x4x8xf32, #tpu.memory_space<vmem>>, %arg3: memref<1x128xf32, #tpu.memory_space<vmem>>, %arg4: memref<1x32xf32, #tpu.memory_space<vmem>>, %arg5: memref<32x128xbf16, #tpu.memory_space<vmem>>, %arg6: memref<128x32xbf16, #tpu.memory_space<vmem>>, %arg7: memref<1x128xf32, #tpu.memory_space<vmem>>, %arg8: memref<1x32xf32, #tpu.memory_space<vmem>>, %arg9: memref<32x128xbf16, #tpu.memory_space<vmem>>, %arg10: memref<128x32xbf16, #tpu.memory_space<vmem>>, %arg11: memref<2x1x4xf32, #tpu.memory_space<vmem>>, %arg12: memref<3x1x32xf32, #tpu.memory_space<vmem>>, %arg13: memref<2x1x4xf32, #tpu.memory_space<vmem>>, %arg14: memref<1x32xf32, #tpu.memory_space<vmem>>, %arg15: memref<2x32x4xbf16, #tpu.memory_space<vmem>>, %arg16: memref<3x32x32xbf16, #tpu.memory_space<vmem>>, %arg17: memref<2x32x4xbf16, #tpu.memory_space<vmem>>, %arg18: memref<3x8x32xbf16, #tpu.memory_space<vmem>>, %arg19: memref<2x8x16xbf16, #tpu.memory_space<vmem>>, %arg20: memref<2x16x32xbf16, #tpu.memory_space<vmem>>, %arg21: memref<2x8x16xbf16, #tpu.memory_space<vmem>>, %arg22: memref<2x8x16xbf16, #tpu.memory_space<vmem>>, %arg23: memref<2x1x6xf32, #tpu.memory_space<vmem>>, %arg24: memref<3x1x32xf32, #tpu.memory_space<vmem>>, %arg25: memref<2x1x6xf32, #tpu.memory_space<vmem>>, %arg26: memref<1x32xf32, #tpu.memory_space<vmem>>, %arg27: memref<2x32x6xbf16, #tpu.memory_space<vmem>>, %arg28: memref<3x32x32xbf16, #tpu.memory_space<vmem>>, %arg29: memref<2x32x6xbf16, #tpu.memory_space<vmem>>, %arg30: memref<3x8x32xbf16, #tpu.memory_space<vmem>>, %arg31: memref<2x8x16xbf16, #tpu.memory_space<vmem>>, %arg32: memref<2x16x32xbf16, #tpu.memory_space<vmem>>, %arg33: memref<2x8x16xbf16, #tpu.memory_space<vmem>>, %arg34: memref<2x8x16xbf16, #tpu.memory_space<vmem>>, %arg35: memref<2x1x4xf32, #tpu.memory_space<vmem>>, %arg36: memref<3x1x32xf32, #tpu.memory_space<vmem>>, %arg37: memref<2x1x4xf32, #tpu.memory_space<vmem>>, %arg38: memref<1x32xf32, #tpu.memory_space<vmem>>, %arg39: memref<2x32x4xbf16, #tpu.memory_space<vmem>>, %arg40: memref<3x32x32xbf16, #tpu.memory_space<vmem>>, %arg41: memref<2x32x4xbf16, #tpu.memory_space<vmem>>, %arg42: memref<3x32x32xbf16, #tpu.memory_space<vmem>>, %arg43: memref<2x32x16xbf16, #tpu.memory_space<vmem>>, %arg44: memref<2x16x32xbf16, #tpu.memory_space<vmem>>, %arg45: memref<2x32x16xbf16, #tpu.memory_space<vmem>>, %arg46: memref<2x32x16xbf16, #tpu.memory_space<vmem>>, %arg47: memref<2x1x6xf32, #tpu.memory_space<vmem>>, %arg48: memref<3x1x32xf32, #tpu.memory_space<vmem>>, %arg49: memref<2x1x6xf32, #tpu.memory_space<vmem>>, %arg50: memref<1x32xf32, #tpu.memory_space<vmem>>, %arg51: memref<2x32x6xbf16, #tpu.memory_space<vmem>>, %arg52: memref<3x32x32xbf16, #tpu.memory_space<vmem>>, %arg53: memref<2x32x6xbf16, #tpu.memory_space<vmem>>, %arg54: memref<3x32x32xbf16, #tpu.memory_space<vmem>>, %arg55: memref<2x32x16xbf16, #tpu.memory_space<vmem>>, %arg56: memref<2x16x32xbf16, #tpu.memory_space<vmem>>, %arg57: memref<2x32x16xbf16, #tpu.memory_space<vmem>>, %arg58: memref<2x32x16xbf16, #tpu.memory_space<vmem>>, %arg59: memref<8x1x32xf32, #tpu.memory_space<vmem>>, %arg60: memref<1x6x32xf32, #tpu.memory_space<vmem>>, %arg61: memref<1x4x32xf32, #tpu.memory_space<vmem>>, %arg62: memref<2x6x32xf32, #tpu.memory_space<vmem>>, %arg63: memref<2x2x6x4xf32, #tpu.memory_space<vmem>>, %arg64: memref<2x4x32xf32, #tpu.memory_space<vmem>>, %arg65: memref<2x2x4x6xf32, #tpu.memory_space<vmem>>) attributes {dimension_semantics = [#tpu.dimension_semantics<parallel>], iteration_bounds = array<i64: 2>, scalar_prefetch = 0 : i64, scratch_operands = 4 : i64, tpu.core_type = #tpu.core_type<tc>, window_params = [{transform_indices = @transform_0, window_bounds = array<i64: 1, 3, 6, 8>}, {transform_indices = @transform_1, window_bounds = array<i64: 1, 3, 4, 8>}, {pipeline_mode = #tpu.pipeline_mode<synchronous>, transform_indices = @transform_2, window_bounds = array<i64: 1, 128>}, {pipeline_mode = #tpu.pipeline_mode<synchronous>, transform_indices = @transform_3, window_bounds = array<i64: 1, 32>}, {pipeline_mode = #tpu.pipeline_mode<synchronous>, transform_indices = @transform_4, window_bounds = array<i64: 32, 128>}, {pipeline_mode = #tpu.pipeline_mode<synchronous>, transform_indices = @transform_5, window_bounds = array<i64: 128, 32>}, {pipeline_mode = #tpu.pipeline_mode<synchronous>, transform_indices = @transform_6, window_bounds = array<i64: 1, 128>}, {pipeline_mode = #tpu.pipeline_mode<synchronous>, transform_indices = @transform_7, window_bounds = array<i64: 1, 32>}, {pipeline_mode = #tpu.pipeline_mode<synchronous>, transform_indices = @transform_8, window_bounds = array<i64: 32, 128>}, {pipeline_mode = #tpu.pipeline_mode<synchronous>, transform_indices = @transform_9, window_bounds = array<i64: 128, 32>}, {pipeline_mode = #tpu.pipeline_mode<synchronous>, transform_indices = @transform_10, window_bounds = array<i64: 2, 1, 4>}, {pipeline_mode = #tpu.pipeline_mode<synchronous>, transform_indices = @transform_11, window_bounds = array<i64: 3, 1, 32>}, {pipeline_mode = #tpu.pipeline_mode<synchronous>, transform_indices = @transform_12, window_bounds = array<i64: 2, 1, 4>}, {pipeline_mode = #tpu.pipeline_mode<synchronous>, transform_indices = @transform_13, window_bounds = array<i64: 1, 32>}, {pipeline_mode = #tpu.pipeline_mode<synchronous>, transform_indices = @transform_14, window_bounds = array<i64: 2, 32, 4>}, {pipeline_mode = #tpu.pipeline_mode<synchronous>, transform_indices = @transform_15, window_bounds = array<i64: 3, 32, 32>}, {pipeline_mode = #tpu.pipeline_mode<synchronous>, transform_indices = @transform_16, window_bounds = array<i64: 2, 32, 4>}, {pipeline_mode = #tpu.pipeline_mode<synchronous>, transform_indices = @transform_17, window_bounds = array<i64: 3, 8, 32>}, {pipeline_mode = #tpu.pipeline_mode<synchronous>, transform_indices = @transform_18, window_bounds = array<i64: 2, 8, 16>}, {pipeline_mode = #tpu.pipeline_mode<synchronous>, transform_indices = @transform_19, window_bounds = array<i64: 2, 16, 32>}, {pipeline_mode = #tpu.pipeline_mode<synchronous>, transform_indices = @transform_20, window_bounds = array<i64: 2, 8, 16>}, {pipeline_mode = #tpu.pipeline_mode<synchronous>, transform_indices = @transform_21, window_bounds = array<i64: 2, 8, 16>}, {pipeline_mode = #tpu.pipeline_mode<synchronous>, transform_indices = @transform_22, window_bounds = array<i64: 2, 1, 6>}, {pipeline_mode = #tpu.pipeline_mode<synchronous>, transform_indices = @transform_23, window_bounds = array<i64: 3, 1, 32>}, {pipeline_mode = #tpu.pipeline_mode<synchronous>, transform_indices = @transform_24, window_bounds = array<i64: 2, 1, 6>}, {pipeline_mode = #tpu.pipeline_mode<synchronous>, transform_indices = @transform_25, window_bounds = array<i64: 1, 32>}, {pipeline_mode = #tpu.pipeline_mode<synchronous>, transform_indices = @transform_26, window_bounds = array<i64: 2, 32, 6>}, {pipeline_mode = #tpu.pipeline_mode<synchronous>, transform_indices = @transform_27, window_bounds = array<i64: 3, 32, 32>}, {pipeline_mode = #tpu.pipeline_mode<synchronous>, transform_indices = @transform_28, window_bounds = array<i64: 2, 32, 6>}, {pipeline_mode = #tpu.pipeline_mode<synchronous>, transform_indices = @transform_29, window_bounds = array<i64: 3, 8, 32>}, {pipeline_mode = #tpu.pipeline_mode<synchronous>, transform_indices = @transform_30, window_bounds = array<i64: 2, 8, 16>}, {pipeline_mode = #tpu.pipeline_mode<synchronous>, transform_indices = @transform_31, window_bounds = array<i64: 2, 16, 32>}, {pipeline_mode = #tpu.pipeline_mode<synchronous>, transform_indices = @transform_32, window_bounds = array<i64: 2, 8, 16>}, {pipeline_mode = #tpu.pipeline_mode<synchronous>, transform_indices = @transform_33, window_bounds = array<i64: 2, 8, 16>}, {pipeline_mode = #tpu.pipeline_mode<synchronous>, transform_indices = @transform_34, window_bounds = array<i64: 2, 1, 4>}, {pipeline_mode = #tpu.pipeline_mode<synchronous>, transform_indices = @transform_35, window_bounds = array<i64: 3, 1, 32>}, {pipeline_mode = #tpu.pipeline_mode<synchronous>, transform_indices = @transform_36, window_bounds = array<i64: 2, 1, 4>}, {pipeline_mode = #tpu.pipeline_mode<synchronous>, transform_indices = @transform_37, window_bounds = array<i64: 1, 32>}, {pipeline_mode = #tpu.pipeline_mode<synchronous>, transform_indices = @transform_38, window_bounds = array<i64: 2, 32, 4>}, {pipeline_mode = #tpu.pipeline_mode<synchronous>, transform_indices = @transform_39, window_bounds = array<i64: 3, 32, 32>}, {pipeline_mode = #tpu.pipeline_mode<synchronous>, transform_indices = @transform_40, window_bounds = array<i64: 2, 32, 4>}, {pipeline_mode = #tpu.pipeline_mode<synchronous>, transform_indices = @transform_41, window_bounds = array<i64: 3, 32, 32>}, {pipeline_mode = #tpu.pipeline_mode<synchronous>, transform_indices = @transform_42, window_bounds = array<i64: 2, 32, 16>}, {pipeline_mode = #tpu.pipeline_mode<synchronous>, transform_indices = @transform_43, window_bounds = array<i64: 2, 16, 32>}, {pipeline_mode = #tpu.pipeline_mode<synchronous>, transform_indices = @transform_44, window_bounds = array<i64: 2, 32, 16>}, {pipeline_mode = #tpu.pipeline_mode<synchronous>, transform_indices = @transform_45, window_bounds = array<i64: 2, 32, 16>}, {pipeline_mode = #tpu.pipeline_mode<synchronous>, transform_indices = @transform_46, window_bounds = array<i64: 2, 1, 6>}, {pipeline_mode = #tpu.pipeline_mode<synchronous>, transform_indices = @transform_47, window_bounds = array<i64: 3, 1, 32>}, {pipeline_mode = #tpu.pipeline_mode<synchronous>, transform_indices = @transform_48, window_bounds = array<i64: 2, 1, 6>}, {pipeline_mode = #tpu.pipeline_mode<synchronous>, transform_indices = @transform_49, window_bounds = array<i64: 1, 32>}, {pipeline_mode = #tpu.pipeline_mode<synchronous>, transform_indices = @transform_50, window_bounds = array<i64: 2, 32, 6>}, {pipeline_mode = #tpu.pipeline_mode<synchronous>, transform_indices = @transform_51, window_bounds = array<i64: 3, 32, 32>}, {pipeline_mode = #tpu.pipeline_mode<synchronous>, transform_indices = @transform_52, window_bounds = array<i64: 2, 32, 6>}, {pipeline_mode = #tpu.pipeline_mode<synchronous>, transform_indices = @transform_53, window_bounds = array<i64: 3, 32, 32>}, {pipeline_mode = #tpu.pipeline_mode<synchronous>, transform_indices = @transform_54, window_bounds = array<i64: 2, 32, 16>}, {pipeline_mode = #tpu.pipeline_mode<synchronous>, transform_indices = @transform_55, window_bounds = array<i64: 2, 16, 32>}, {pipeline_mode = #tpu.pipeline_mode<synchronous>, transform_indices = @transform_56, window_bounds = array<i64: 2, 32, 16>}, {pipeline_mode = #tpu.pipeline_mode<synchronous>, transform_indices = @transform_57, window_bounds = array<i64: 2, 32, 16>}, {pipeline_mode = #tpu.pipeline_mode<synchronous>, transform_indices = @transform_58, window_bounds = array<i64: 8, 1, 32>}, {transform_indices = @transform_59, window_bounds = array<i64: 1, 6, 32>}, {transform_indices = @transform_60, window_bounds = array<i64: 1, 4, 32>}]} {
    %cst = arith.constant 0.000000e+00 : f32
    %0 = vector.broadcast %cst : f32 to vector<2x6x32xf32>
    %c0 = arith.constant 0 : index
    %c0_0 = arith.constant 0 : index
    %c0_1 = arith.constant 0 : index
    %1 = vector.load %arg62[%c0, %c0_0, %c0_1] : memref<2x6x32xf32, #tpu.memory_space<vmem>>, vector<2x6x32xf32>
    tpu.vector_store %arg62[%c0, %c0_0, %c0_1], %0 {strides = array<i32>} : memref<2x6x32xf32, #tpu.memory_space<vmem>>, vector<2x6x32xf32>,
    %cst_2 = arith.constant 0.000000e+00 : f32
    %2 = vector.broadcast %cst_2 : f32 to vector<2x2x6x4xf32>
    %c0_3 = arith.constant 0 : index
    %c0_4 = arith.constant 0 : index
    %c0_5 = arith.constant 0 : index
    %c0_6 = arith.constant 0 : index
    %3 = vector.load %arg63[%c0_3, %c0_4, %c0_5, %c0_6] : memref<2x2x6x4xf32, #tpu.memory_space<vmem>>, vector<2x2x6x4xf32>
    tpu.vector_store %arg63[%c0_3, %c0_4, %c0_5, %c0_6], %2 {strides = array<i32>} : memref<2x2x6x4xf32, #tpu.memory_space<vmem>>, vector<2x2x6x4xf32>,
    %cst_7 = arith.constant 0.000000e+00 : f32
    %4 = vector.broadcast %cst_7 : f32 to vector<2x4x32xf32>
    %c0_8 = arith.constant 0 : index
    %c0_9 = arith.constant 0 : index
    %c0_10 = arith.constant 0 : index
    %5 = vector.load %arg64[%c0_8, %c0_9, %c0_10] : memref<2x4x32xf32, #tpu.memory_space<vmem>>, vector<2x4x32xf32>
    tpu.vector_store %arg64[%c0_8, %c0_9, %c0_10], %4 {strides = array<i32>} : memref<2x4x32xf32, #tpu.memory_space<vmem>>, vector<2x4x32xf32>,
    %cst_11 = arith.constant 0.000000e+00 : f32
    %6 = vector.broadcast %cst_11 : f32 to vector<2x2x4x6xf32>
    %c0_12 = arith.constant 0 : index
    %c0_13 = arith.constant 0 : index
    %c0_14 = arith.constant 0 : index
    %c0_15 = arith.constant 0 : index
    %7 = vector.load %arg65[%c0_12, %c0_13, %c0_14, %c0_15] : memref<2x2x4x6xf32, #tpu.memory_space<vmem>>, vector<2x2x4x6xf32>
    tpu.vector_store %arg65[%c0_12, %c0_13, %c0_14, %c0_15], %6 {strides = array<i32>} : memref<2x2x4x6xf32, #tpu.memory_space<vmem>>, vector<2x2x4x6xf32>,
    %c0_i32 = arith.constant 0 : i32
    %c3_i32 = arith.constant 3 : i32
    %8 = arith.addi %c0_i32, %c3_i32 : i32
    %c1_i32 = arith.constant 1 : i32
    scf.for %arg66 = %c0_i32 to %8 step %c1_i32  : i32 {
      %c1_i32_17 = arith.constant 1 : i32
      %9 = arith.muli %arg66, %c1_i32_17 : i32
      %c0_i32_18 = arith.constant 0 : i32
      %10 = arith.addi %c0_i32_18, %9 : i32
      %c0_19 = arith.constant 0 : index
      %11 = arith.index_cast %10 : i32 to index
      %c0_20 = arith.constant 0 : index
      %c0_21 = arith.constant 0 : index
      %12 = vector.load %arg1[%c0_19, %11, %c0_20, %c0_21] : memref<1x3x6x8xf32, #tpu.memory_space<vmem>>, vector<1x1x6x8xf32>
      %13 = vector.shape_cast %12 : vector<1x1x6x8xf32> to vector<6x8xf32>
      %c0_22 = arith.constant 0 : index
      %14 = arith.index_cast %10 : i32 to index
      %c0_23 = arith.constant 0 : index
      %c0_24 = arith.constant 0 : index
      %15 = vector.load %arg2[%c0_22, %14, %c0_23, %c0_24] : memref<1x3x4x8xf32, #tpu.memory_space<vmem>>, vector<1x1x4x8xf32>
      %16 = vector.shape_cast %15 : vector<1x1x4x8xf32> to vector<4x8xf32>
      %c0_25 = arith.constant 0 : index
      %c0_26 = arith.constant 0 : index
      %c0_27 = arith.constant 0 : index
      %17 = vector.load %arg62[%c0_25, %c0_26, %c0_27] : memref<2x6x32xf32, #tpu.memory_space<vmem>>, vector<1x6x32xf32>
      %18 = vector.shape_cast %17 : vector<1x6x32xf32> to vector<6x32xf32>
      %19 = arith.truncf %13 : vector<6x8xf32> to vector<6x8xbf16>
      %20 = arith.truncf %16 : vector<4x8xf32> to vector<4x8xbf16>
      %21 = arith.truncf %18 : vector<6x32xf32> to vector<6x32xbf16>
      %c0_28 = arith.constant 0 : index
      %c0_29 = arith.constant 0 : index
      %c0_30 = arith.constant 0 : index
      %22 = vector.load %arg18[%c0_28, %c0_29, %c0_30] : memref<3x8x32xbf16, #tpu.memory_space<vmem>>, vector<1x8x32xbf16>
      %23 = vector.shape_cast %22 : vector<1x8x32xbf16> to vector<8x32xbf16>
      %cst_31 = arith.constant dense<0.000000e+00> : vector<6x32xf32>
      %24 = tpu.matmul %19, %23, %cst_31 {dimension_numbers = #tpu.dot_dimension_numbers<[1], [0], [0], [1], [0, 0, 1, 1], [], []>} : vector<6x8xbf16>, vector<8x32xbf16>, vector<6x32xf32> -> vector<6x32xf32>
      %c0_32 = arith.constant 0 : index
      %c0_33 = arith.constant 0 : index
      %c0_34 = arith.constant 0 : index
      %25 = vector.load %arg16[%c0_32, %c0_33, %c0_34] : memref<3x32x32xbf16, #tpu.memory_space<vmem>>, vector<1x32x32xbf16>
      %26 = vector.shape_cast %25 : vector<1x32x32xbf16> to vector<32x32xbf16>
      %cst_35 = arith.constant dense<0.000000e+00> : vector<6x32xf32>
      %27 = tpu.matmul %21, %26, %cst_35 {dimension_numbers = #tpu.dot_dimension_numbers<[1], [0], [0], [1], [0, 0, 1, 1], [], []>} : vector<6x32xbf16>, vector<32x32xbf16>, vector<6x32xf32> -> vector<6x32xf32>
      %28 = arith.addf %24, %27 : vector<6x32xf32>
      %c0_36 = arith.constant 0 : index
      %c0_37 = arith.constant 0 : index
      %c0_38 = arith.constant 0 : index
      %29 = vector.load %arg12[%c0_36, %c0_37, %c0_38] : memref<3x1x32xf32, #tpu.memory_space<vmem>>, vector<1x1x32xf32>
      %30 = vector.shape_cast %29 : vector<1x1x32xf32> to vector<1x32xf32>
      %31 = vector.broadcast %30 : vector<1x32xf32> to vector<6x32xf32>
      %32 = arith.addf %28, %31 : vector<6x32xf32>
      %c1 = arith.constant 1 : index
      %c0_39 = arith.constant 0 : index
      %c0_40 = arith.constant 0 : index
      %33 = vector.load %arg18[%c1, %c0_39, %c0_40] : memref<3x8x32xbf16, #tpu.memory_space<vmem>>, vector<1x8x32xbf16>
      %34 = vector.shape_cast %33 : vector<1x8x32xbf16> to vector<8x32xbf16>
      %cst_41 = arith.constant dense<0.000000e+00> : vector<6x32xf32>
      %35 = tpu.matmul %19, %34, %cst_41 {dimension_numbers = #tpu.dot_dimension_numbers<[1], [0], [0], [1], [0, 0, 1, 1], [], []>} : vector<6x8xbf16>, vector<8x32xbf16>, vector<6x32xf32> -> vector<6x32xf32>
      %c1_42 = arith.constant 1 : index
      %c0_43 = arith.constant 0 : index
      %c0_44 = arith.constant 0 : index
      %36 = vector.load %arg16[%c1_42, %c0_43, %c0_44] : memref<3x32x32xbf16, #tpu.memory_space<vmem>>, vector<1x32x32xbf16>
      %37 = vector.shape_cast %36 : vector<1x32x32xbf16> to vector<32x32xbf16>
      %cst_45 = arith.constant dense<0.000000e+00> : vector<6x32xf32>
      %38 = tpu.matmul %21, %37, %cst_45 {dimension_numbers = #tpu.dot_dimension_numbers<[1], [0], [0], [1], [0, 0, 1, 1], [], []>} : vector<6x32xbf16>, vector<32x32xbf16>, vector<6x32xf32> -> vector<6x32xf32>
      %39 = arith.addf %35, %38 : vector<6x32xf32>
      %c1_46 = arith.constant 1 : index
      %c0_47 = arith.constant 0 : index
      %c0_48 = arith.constant 0 : index
      %40 = vector.load %arg12[%c1_46, %c0_47, %c0_48] : memref<3x1x32xf32, #tpu.memory_space<vmem>>, vector<1x1x32xf32>
      %41 = vector.shape_cast %40 : vector<1x1x32xf32> to vector<1x32xf32>
      %42 = vector.broadcast %41 : vector<1x32xf32> to vector<6x32xf32>
      %43 = arith.addf %39, %42 : vector<6x32xf32>
      %c2 = arith.constant 2 : index
      %c0_49 = arith.constant 0 : index
      %c0_50 = arith.constant 0 : index
      %44 = vector.load %arg18[%c2, %c0_49, %c0_50] : memref<3x8x32xbf16, #tpu.memory_space<vmem>>, vector<1x8x32xbf16>
      %45 = vector.shape_cast %44 : vector<1x8x32xbf16> to vector<8x32xbf16>
      %cst_51 = arith.constant dense<0.000000e+00> : vector<6x32xf32>
      %46 = tpu.matmul %19, %45, %cst_51 {dimension_numbers = #tpu.dot_dimension_numbers<[1], [0], [0], [1], [0, 0, 1, 1], [], []>} : vector<6x8xbf16>, vector<8x32xbf16>, vector<6x32xf32> -> vector<6x32xf32>
      %c2_52 = arith.constant 2 : index
      %c0_53 = arith.constant 0 : index
      %c0_54 = arith.constant 0 : index
      %47 = vector.load %arg16[%c2_52, %c0_53, %c0_54] : memref<3x32x32xbf16, #tpu.memory_space<vmem>>, vector<1x32x32xbf16>
      %48 = vector.shape_cast %47 : vector<1x32x32xbf16> to vector<32x32xbf16>
      %cst_55 = arith.constant dense<0.000000e+00> : vector<6x32xf32>
      %49 = tpu.matmul %21, %48, %cst_55 {dimension_numbers = #tpu.dot_dimension_numbers<[1], [0], [0], [1], [0, 0, 1, 1], [], []>} : vector<6x32xbf16>, vector<32x32xbf16>, vector<6x32xf32> -> vector<6x32xf32>
      %50 = arith.addf %46, %49 : vector<6x32xf32>
      %c2_56 = arith.constant 2 : index
      %c0_57 = arith.constant 0 : index
      %c0_58 = arith.constant 0 : index
      %51 = vector.load %arg12[%c2_56, %c0_57, %c0_58] : memref<3x1x32xf32, #tpu.memory_space<vmem>>, vector<1x1x32xf32>
      %52 = vector.shape_cast %51 : vector<1x1x32xf32> to vector<1x32xf32>
      %53 = vector.broadcast %52 : vector<1x32xf32> to vector<6x32xf32>
      %54 = arith.addf %50, %53 : vector<6x32xf32>
      %55 = arith.negf %54 : vector<6x32xf32>
      %56 = math.exp %55 : vector<6x32xf32>
      %cst_59 = arith.constant 1.000000e+00 : f32
      %57 = vector.broadcast %cst_59 : f32 to vector<6x32xf32>
      %58 = arith.addf %57, %56 : vector<6x32xf32>
      %59 = arith.divf %57, %58 : vector<6x32xf32>
      %60 = arith.truncf %32 : vector<6x32xf32> to vector<6x32xbf16>
      %61 = arith.truncf %43 : vector<6x32xf32> to vector<6x32xbf16>
      %cst_60 = arith.constant 0.000000e+00 : f32
      %62 = vector.broadcast %cst_60 : f32 to vector<6x32xf32>
      %c0_61 = arith.constant 0 : index
      %c0_62 = arith.constant 0 : index
      %c0_63 = arith.constant 0 : index
      %63 = vector.load %arg17[%c0_61, %c0_62, %c0_63] : memref<2x32x4xbf16, #tpu.memory_space<vmem>>, vector<1x32x4xbf16>
      %64 = vector.shape_cast %63 : vector<1x32x4xbf16> to vector<32x4xbf16>
      %cst_64 = arith.constant dense<0.000000e+00> : vector<6x4xf32>
      %65 = tpu.matmul %60, %64, %cst_64 {dimension_numbers = #tpu.dot_dimension_numbers<[1], [0], [0], [1], [0, 0, 1, 1], [], []>} : vector<6x32xbf16>, vector<32x4xbf16>, vector<6x4xf32> -> vector<6x4xf32>
      %c0_65 = arith.constant 0 : index
      %c0_66 = arith.constant 0 : index
      %c0_67 = arith.constant 0 : index
      %66 = vector.load %arg13[%c0_65, %c0_66, %c0_67] : memref<2x1x4xf32, #tpu.memory_space<vmem>>, vector<1x1x4xf32>
      %67 = vector.shape_cast %66 : vector<1x1x4xf32> to vector<1x4xf32>
      %68 = vector.broadcast %67 : vector<1x4xf32> to vector<6x4xf32>
      %69 = arith.addf %65, %68 : vector<6x4xf32>
      %70 = math.tanh %69 : vector<6x4xf32>
      %c0_68 = arith.constant 0 : index
      %c0_69 = arith.constant 0 : index
      %c0_70 = arith.constant 0 : index
      %71 = vector.load %arg15[%c0_68, %c0_69, %c0_70] : memref<2x32x4xbf16, #tpu.memory_space<vmem>>, vector<1x32x4xbf16>
      %72 = vector.shape_cast %71 : vector<1x32x4xbf16> to vector<32x4xbf16>
      %cst_71 = arith.constant dense<0.000000e+00> : vector<6x4xf32>
      %73 = tpu.matmul %61, %72, %cst_71 {dimension_numbers = #tpu.dot_dimension_numbers<[1], [0], [0], [1], [0, 0, 1, 1], [], []>} : vector<6x32xbf16>, vector<32x4xbf16>, vector<6x4xf32> -> vector<6x4xf32>
      %c0_72 = arith.constant 0 : index
      %c0_73 = arith.constant 0 : index
      %c0_74 = arith.constant 0 : index
      %74 = vector.load %arg11[%c0_72, %c0_73, %c0_74] : memref<2x1x4xf32, #tpu.memory_space<vmem>>, vector<1x1x4xf32>
      %75 = vector.shape_cast %74 : vector<1x1x4xf32> to vector<1x4xf32>
      %76 = vector.broadcast %75 : vector<1x4xf32> to vector<6x4xf32>
      %77 = arith.addf %73, %76 : vector<6x4xf32>
      %78 = arith.negf %77 : vector<6x4xf32>
      %79 = math.exp %78 : vector<6x4xf32>
      %cst_75 = arith.constant 1.000000e+00 : f32
      %80 = vector.broadcast %cst_75 : f32 to vector<6x4xf32>
      %81 = arith.addf %80, %79 : vector<6x4xf32>
      %82 = arith.divf %80, %81 : vector<6x4xf32>
      %c0_76 = arith.constant 0 : index
      %c0_77 = arith.constant 0 : index
      %c0_78 = arith.constant 0 : index
      %83 = vector.load %arg21[%c0_76, %c0_77, %c0_78] : memref<2x8x16xbf16, #tpu.memory_space<vmem>>, vector<1x8x16xbf16>
      %84 = vector.shape_cast %83 : vector<1x8x16xbf16> to vector<8x16xbf16>
      %cst_79 = arith.constant dense<0.000000e+00> : vector<6x16xf32>
      %85 = tpu.matmul %19, %84, %cst_79 {dimension_numbers = #tpu.dot_dimension_numbers<[1], [0], [0], [1], [0, 0, 1, 1], [], []>} : vector<6x8xbf16>, vector<8x16xbf16>, vector<6x16xf32> -> vector<6x16xf32>
      %86 = arith.truncf %85 : vector<6x16xf32> to vector<6x16xbf16>
      %c0_80 = arith.constant 0 : index
      %c0_81 = arith.constant 0 : index
      %c0_82 = arith.constant 0 : index
      %87 = vector.load %arg19[%c0_80, %c0_81, %c0_82] : memref<2x8x16xbf16, #tpu.memory_space<vmem>>, vector<1x8x16xbf16>
      %88 = vector.shape_cast %87 : vector<1x8x16xbf16> to vector<8x16xbf16>
      %cst_83 = arith.constant dense<0.000000e+00> : vector<4x16xf32>
      %89 = tpu.matmul %20, %88, %cst_83 {dimension_numbers = #tpu.dot_dimension_numbers<[1], [0], [0], [1], [0, 0, 1, 1], [], []>} : vector<4x8xbf16>, vector<8x16xbf16>, vector<4x16xf32> -> vector<4x16xf32>
      %90 = arith.truncf %89 : vector<4x16xf32> to vector<4x16xbf16>
      %c0_84 = arith.constant 0 : index
      %c0_85 = arith.constant 0 : index
      %c0_86 = arith.constant 0 : index
      %91 = vector.load %arg22[%c0_84, %c0_85, %c0_86] : memref<2x8x16xbf16, #tpu.memory_space<vmem>>, vector<1x8x16xbf16>
      %92 = vector.shape_cast %91 : vector<1x8x16xbf16> to vector<8x16xbf16>
      %cst_87 = arith.constant dense<0.000000e+00> : vector<4x16xf32>
      %93 = tpu.matmul %20, %92, %cst_87 {dimension_numbers = #tpu.dot_dimension_numbers<[1], [0], [0], [1], [0, 0, 1, 1], [], []>} : vector<4x8xbf16>, vector<8x16xbf16>, vector<4x16xf32> -> vector<4x16xf32>
      %94 = arith.truncf %93 : vector<4x16xf32> to vector<4x16xbf16>
      %cst_88 = arith.constant dense<0.000000e+00> : vector<6x4xf32>
      %95 = tpu.matmul %86, %90, %cst_88 {dimension_numbers = #tpu.dot_dimension_numbers<[1], [1], [0], [0], [0, 0, 1, 0], [], []>} : vector<6x16xbf16>, vector<4x16xbf16>, vector<6x4xf32> -> vector<6x4xf32>
      %c0_89 = arith.constant 0 : index
      %c0_90 = arith.constant 0 : index
      %c0_91 = arith.constant 0 : index
      %c0_92 = arith.constant 0 : index
      %96 = vector.load %arg63[%c0_89, %c0_90, %c0_91, %c0_92] : memref<2x2x6x4xf32, #tpu.memory_space<vmem>>, vector<1x1x6x4xf32>
      %97 = vector.shape_cast %96 : vector<1x1x6x4xf32> to vector<6x4xf32>
      %98 = arith.mulf %97, %82 : vector<6x4xf32>
      %99 = arith.mulf %95, %70 : vector<6x4xf32>
      %100 = arith.addf %98, %99 : vector<6x4xf32>
      %c0_93 = arith.constant 0 : index
      %c0_94 = arith.constant 0 : index
      %c0_95 = arith.constant 0 : index
      %c0_96 = arith.constant 0 : index
      %101 = vector.load %arg63[%c0_93, %c0_94, %c0_95, %c0_96] : memref<2x2x6x4xf32, #tpu.memory_space<vmem>>, vector<1x1x6x4xf32>
      %102 = vector.shape_cast %101 : vector<1x1x6x4xf32> to vector<6x4xf32>
      %103 = vector.shape_cast %100 : vector<6x4xf32> to vector<1x1x6x4xf32>
      tpu.vector_store %arg63[%c0_93, %c0_94, %c0_95, %c0_96], %103 {strides = array<i32>} : memref<2x2x6x4xf32, #tpu.memory_space<vmem>>, vector<1x1x6x4xf32>,
      %104 = arith.truncf %100 : vector<6x4xf32> to vector<6x4xbf16>
      %cst_97 = arith.constant dense<0.000000e+00> : vector<6x16xf32>
      %105 = tpu.matmul %104, %94, %cst_97 {dimension_numbers = #tpu.dot_dimension_numbers<[1], [0], [0], [1], [0, 0, 1, 1], [], []>} : vector<6x4xbf16>, vector<4x16xbf16>, vector<6x16xf32> -> vector<6x16xf32>
      %106 = arith.truncf %105 : vector<6x16xf32> to vector<6x16xbf16>
      %c0_98 = arith.constant 0 : index
      %c0_99 = arith.constant 0 : index
      %c0_100 = arith.constant 0 : index
      %107 = vector.load %arg20[%c0_98, %c0_99, %c0_100] : memref<2x16x32xbf16, #tpu.memory_space<vmem>>, vector<1x16x32xbf16>
      %108 = vector.shape_cast %107 : vector<1x16x32xbf16> to vector<16x32xbf16>
      %cst_101 = arith.constant dense<0.000000e+00> : vector<6x32xf32>
      %109 = tpu.matmul %106, %108, %cst_101 {dimension_numbers = #tpu.dot_dimension_numbers<[1], [0], [0], [1], [0, 0, 1, 1], [], []>} : vector<6x16xbf16>, vector<16x32xbf16>, vector<6x32xf32> -> vector<6x32xf32>
      %110 = arith.addf %62, %109 : vector<6x32xf32>
      %c1_102 = arith.constant 1 : index
      %c0_103 = arith.constant 0 : index
      %c0_104 = arith.constant 0 : index
      %111 = vector.load %arg17[%c1_102, %c0_103, %c0_104] : memref<2x32x4xbf16, #tpu.memory_space<vmem>>, vector<1x32x4xbf16>
      %112 = vector.shape_cast %111 : vector<1x32x4xbf16> to vector<32x4xbf16>
      %cst_105 = arith.constant dense<0.000000e+00> : vector<6x4xf32>
      %113 = tpu.matmul %60, %112, %cst_105 {dimension_numbers = #tpu.dot_dimension_numbers<[1], [0], [0], [1], [0, 0, 1, 1], [], []>} : vector<6x32xbf16>, vector<32x4xbf16>, vector<6x4xf32> -> vector<6x4xf32>
      %c1_106 = arith.constant 1 : index
      %c0_107 = arith.constant 0 : index
      %c0_108 = arith.constant 0 : index
      %114 = vector.load %arg13[%c1_106, %c0_107, %c0_108] : memref<2x1x4xf32, #tpu.memory_space<vmem>>, vector<1x1x4xf32>
      %115 = vector.shape_cast %114 : vector<1x1x4xf32> to vector<1x4xf32>
      %116 = vector.broadcast %115 : vector<1x4xf32> to vector<6x4xf32>
      %117 = arith.addf %113, %116 : vector<6x4xf32>
      %118 = math.tanh %117 : vector<6x4xf32>
      %c1_109 = arith.constant 1 : index
      %c0_110 = arith.constant 0 : index
      %c0_111 = arith.constant 0 : index
      %119 = vector.load %arg15[%c1_109, %c0_110, %c0_111] : memref<2x32x4xbf16, #tpu.memory_space<vmem>>, vector<1x32x4xbf16>
      %120 = vector.shape_cast %119 : vector<1x32x4xbf16> to vector<32x4xbf16>
      %cst_112 = arith.constant dense<0.000000e+00> : vector<6x4xf32>
      %121 = tpu.matmul %61, %120, %cst_112 {dimension_numbers = #tpu.dot_dimension_numbers<[1], [0], [0], [1], [0, 0, 1, 1], [], []>} : vector<6x32xbf16>, vector<32x4xbf16>, vector<6x4xf32> -> vector<6x4xf32>
      %c1_113 = arith.constant 1 : index
      %c0_114 = arith.constant 0 : index
      %c0_115 = arith.constant 0 : index
      %122 = vector.load %arg11[%c1_113, %c0_114, %c0_115] : memref<2x1x4xf32, #tpu.memory_space<vmem>>, vector<1x1x4xf32>
      %123 = vector.shape_cast %122 : vector<1x1x4xf32> to vector<1x4xf32>
      %124 = vector.broadcast %123 : vector<1x4xf32> to vector<6x4xf32>
      %125 = arith.addf %121, %124 : vector<6x4xf32>
      %126 = arith.negf %125 : vector<6x4xf32>
      %127 = math.exp %126 : vector<6x4xf32>
      %cst_116 = arith.constant 1.000000e+00 : f32
      %128 = vector.broadcast %cst_116 : f32 to vector<6x4xf32>
      %129 = arith.addf %128, %127 : vector<6x4xf32>
      %130 = arith.divf %128, %129 : vector<6x4xf32>
      %c1_117 = arith.constant 1 : index
      %c0_118 = arith.constant 0 : index
      %c0_119 = arith.constant 0 : index
      %131 = vector.load %arg21[%c1_117, %c0_118, %c0_119] : memref<2x8x16xbf16, #tpu.memory_space<vmem>>, vector<1x8x16xbf16>
      %132 = vector.shape_cast %131 : vector<1x8x16xbf16> to vector<8x16xbf16>
      %cst_120 = arith.constant dense<0.000000e+00> : vector<6x16xf32>
      %133 = tpu.matmul %19, %132, %cst_120 {dimension_numbers = #tpu.dot_dimension_numbers<[1], [0], [0], [1], [0, 0, 1, 1], [], []>} : vector<6x8xbf16>, vector<8x16xbf16>, vector<6x16xf32> -> vector<6x16xf32>
      %134 = arith.truncf %133 : vector<6x16xf32> to vector<6x16xbf16>
      %c1_121 = arith.constant 1 : index
      %c0_122 = arith.constant 0 : index
      %c0_123 = arith.constant 0 : index
      %135 = vector.load %arg19[%c1_121, %c0_122, %c0_123] : memref<2x8x16xbf16, #tpu.memory_space<vmem>>, vector<1x8x16xbf16>
      %136 = vector.shape_cast %135 : vector<1x8x16xbf16> to vector<8x16xbf16>
      %cst_124 = arith.constant dense<0.000000e+00> : vector<4x16xf32>
      %137 = tpu.matmul %20, %136, %cst_124 {dimension_numbers = #tpu.dot_dimension_numbers<[1], [0], [0], [1], [0, 0, 1, 1], [], []>} : vector<4x8xbf16>, vector<8x16xbf16>, vector<4x16xf32> -> vector<4x16xf32>
      %138 = arith.truncf %137 : vector<4x16xf32> to vector<4x16xbf16>
      %c1_125 = arith.constant 1 : index
      %c0_126 = arith.constant 0 : index
      %c0_127 = arith.constant 0 : index
      %139 = vector.load %arg22[%c1_125, %c0_126, %c0_127] : memref<2x8x16xbf16, #tpu.memory_space<vmem>>, vector<1x8x16xbf16>
      %140 = vector.shape_cast %139 : vector<1x8x16xbf16> to vector<8x16xbf16>
      %cst_128 = arith.constant dense<0.000000e+00> : vector<4x16xf32>
      %141 = tpu.matmul %20, %140, %cst_128 {dimension_numbers = #tpu.dot_dimension_numbers<[1], [0], [0], [1], [0, 0, 1, 1], [], []>} : vector<4x8xbf16>, vector<8x16xbf16>, vector<4x16xf32> -> vector<4x16xf32>
      %142 = arith.truncf %141 : vector<4x16xf32> to vector<4x16xbf16>
      %cst_129 = arith.constant dense<0.000000e+00> : vector<6x4xf32>
      %143 = tpu.matmul %134, %138, %cst_129 {dimension_numbers = #tpu.dot_dimension_numbers<[1], [1], [0], [0], [0, 0, 1, 0], [], []>} : vector<6x16xbf16>, vector<4x16xbf16>, vector<6x4xf32> -> vector<6x4xf32>
      %c0_130 = arith.constant 0 : index
      %c1_131 = arith.constant 1 : index
      %c0_132 = arith.constant 0 : index
      %c0_133 = arith.constant 0 : index
      %144 = vector.load %arg63[%c0_130, %c1_131, %c0_132, %c0_133] : memref<2x2x6x4xf32, #tpu.memory_space<vmem>>, vector<1x1x6x4xf32>
      %145 = vector.shape_cast %144 : vector<1x1x6x4xf32> to vector<6x4xf32>
      %146 = arith.mulf %145, %130 : vector<6x4xf32>
      %147 = arith.mulf %143, %118 : vector<6x4xf32>
      %148 = arith.addf %146, %147 : vector<6x4xf32>
      %c0_134 = arith.constant 0 : index
      %c1_135 = arith.constant 1 : index
      %c0_136 = arith.constant 0 : index
      %c0_137 = arith.constant 0 : index
      %149 = vector.load %arg63[%c0_134, %c1_135, %c0_136, %c0_137] : memref<2x2x6x4xf32, #tpu.memory_space<vmem>>, vector<1x1x6x4xf32>
      %150 = vector.shape_cast %149 : vector<1x1x6x4xf32> to vector<6x4xf32>
      %151 = vector.shape_cast %148 : vector<6x4xf32> to vector<1x1x6x4xf32>
      tpu.vector_store %arg63[%c0_134, %c1_135, %c0_136, %c0_137], %151 {strides = array<i32>} : memref<2x2x6x4xf32, #tpu.memory_space<vmem>>, vector<1x1x6x4xf32>,
      %152 = arith.truncf %148 : vector<6x4xf32> to vector<6x4xbf16>
      %cst_138 = arith.constant dense<0.000000e+00> : vector<6x16xf32>
      %153 = tpu.matmul %152, %142, %cst_138 {dimension_numbers = #tpu.dot_dimension_numbers<[1], [0], [0], [1], [0, 0, 1, 1], [], []>} : vector<6x4xbf16>, vector<4x16xbf16>, vector<6x16xf32> -> vector<6x16xf32>
      %154 = arith.truncf %153 : vector<6x16xf32> to vector<6x16xbf16>
      %c1_139 = arith.constant 1 : index
      %c0_140 = arith.constant 0 : index
      %c0_141 = arith.constant 0 : index
      %155 = vector.load %arg20[%c1_139, %c0_140, %c0_141] : memref<2x16x32xbf16, #tpu.memory_space<vmem>>, vector<1x16x32xbf16>
      %156 = vector.shape_cast %155 : vector<1x16x32xbf16> to vector<16x32xbf16>
      %cst_142 = arith.constant dense<0.000000e+00> : vector<6x32xf32>
      %157 = tpu.matmul %154, %156, %cst_142 {dimension_numbers = #tpu.dot_dimension_numbers<[1], [0], [0], [1], [0, 0, 1, 1], [], []>} : vector<6x16xbf16>, vector<16x32xbf16>, vector<6x32xf32> -> vector<6x32xf32>
      %158 = arith.addf %110, %157 : vector<6x32xf32>
      %c0_143 = arith.constant 0 : index
      %c0_144 = arith.constant 0 : index
      %159 = vector.load %arg14[%c0_143, %c0_144] : memref<1x32xf32, #tpu.memory_space<vmem>>, vector<1x32xf32>
      %160 = vector.broadcast %159 : vector<1x32xf32> to vector<6x32xf32>
      %161 = arith.addf %158, %160 : vector<6x32xf32>
      %162 = arith.mulf %59, %161 : vector<6x32xf32>
      %c0_145 = arith.constant 0 : index
      %c0_146 = arith.constant 0 : index
      %c0_147 = arith.constant 0 : index
      %163 = vector.load %arg64[%c0_145, %c0_146, %c0_147] : memref<2x4x32xf32, #tpu.memory_space<vmem>>, vector<1x4x32xf32>
      %164 = vector.shape_cast %163 : vector<1x4x32xf32> to vector<4x32xf32>
      %165 = arith.truncf %16 : vector<4x8xf32> to vector<4x8xbf16>
      %166 = arith.truncf %13 : vector<6x8xf32> to vector<6x8xbf16>
      %167 = arith.truncf %164 : vector<4x32xf32> to vector<4x32xbf16>
      %c0_148 = arith.constant 0 : index
      %c0_149 = arith.constant 0 : index
      %c0_150 = arith.constant 0 : index
      %168 = vector.load %arg30[%c0_148, %c0_149, %c0_150] : memref<3x8x32xbf16, #tpu.memory_space<vmem>>, vector<1x8x32xbf16>
      %169 = vector.shape_cast %168 : vector<1x8x32xbf16> to vector<8x32xbf16>
      %cst_151 = arith.constant dense<0.000000e+00> : vector<4x32xf32>
      %170 = tpu.matmul %165, %169, %cst_151 {dimension_numbers = #tpu.dot_dimension_numbers<[1], [0], [0], [1], [0, 0, 1, 1], [], []>} : vector<4x8xbf16>, vector<8x32xbf16>, vector<4x32xf32> -> vector<4x32xf32>
      %c0_152 = arith.constant 0 : index
      %c0_153 = arith.constant 0 : index
      %c0_154 = arith.constant 0 : index
      %171 = vector.load %arg28[%c0_152, %c0_153, %c0_154] : memref<3x32x32xbf16, #tpu.memory_space<vmem>>, vector<1x32x32xbf16>
      %172 = vector.shape_cast %171 : vector<1x32x32xbf16> to vector<32x32xbf16>
      %cst_155 = arith.constant dense<0.000000e+00> : vector<4x32xf32>
      %173 = tpu.matmul %167, %172, %cst_155 {dimension_numbers = #tpu.dot_dimension_numbers<[1], [0], [0], [1], [0, 0, 1, 1], [], []>} : vector<4x32xbf16>, vector<32x32xbf16>, vector<4x32xf32> -> vector<4x32xf32>
      %174 = arith.addf %170, %173 : vector<4x32xf32>
      %c0_156 = arith.constant 0 : index
      %c0_157 = arith.constant 0 : index
      %c0_158 = arith.constant 0 : index
      %175 = vector.load %arg24[%c0_156, %c0_157, %c0_158] : memref<3x1x32xf32, #tpu.memory_space<vmem>>, vector<1x1x32xf32>
      %176 = vector.shape_cast %175 : vector<1x1x32xf32> to vector<1x32xf32>
      %177 = vector.broadcast %176 : vector<1x32xf32> to vector<4x32xf32>
      %178 = arith.addf %174, %177 : vector<4x32xf32>
      %c1_159 = arith.constant 1 : index
      %c0_160 = arith.constant 0 : index
      %c0_161 = arith.constant 0 : index
      %179 = vector.load %arg30[%c1_159, %c0_160, %c0_161] : memref<3x8x32xbf16, #tpu.memory_space<vmem>>, vector<1x8x32xbf16>
      %180 = vector.shape_cast %179 : vector<1x8x32xbf16> to vector<8x32xbf16>
      %cst_162 = arith.constant dense<0.000000e+00> : vector<4x32xf32>
      %181 = tpu.matmul %165, %180, %cst_162 {dimension_numbers = #tpu.dot_dimension_numbers<[1], [0], [0], [1], [0, 0, 1, 1], [], []>} : vector<4x8xbf16>, vector<8x32xbf16>, vector<4x32xf32> -> vector<4x32xf32>
      %c1_163 = arith.constant 1 : index
      %c0_164 = arith.constant 0 : index
      %c0_165 = arith.constant 0 : index
      %182 = vector.load %arg28[%c1_163, %c0_164, %c0_165] : memref<3x32x32xbf16, #tpu.memory_space<vmem>>, vector<1x32x32xbf16>
      %183 = vector.shape_cast %182 : vector<1x32x32xbf16> to vector<32x32xbf16>
      %cst_166 = arith.constant dense<0.000000e+00> : vector<4x32xf32>
      %184 = tpu.matmul %167, %183, %cst_166 {dimension_numbers = #tpu.dot_dimension_numbers<[1], [0], [0], [1], [0, 0, 1, 1], [], []>} : vector<4x32xbf16>, vector<32x32xbf16>, vector<4x32xf32> -> vector<4x32xf32>
      %185 = arith.addf %181, %184 : vector<4x32xf32>
      %c1_167 = arith.constant 1 : index
      %c0_168 = arith.constant 0 : index
      %c0_169 = arith.constant 0 : index
      %186 = vector.load %arg24[%c1_167, %c0_168, %c0_169] : memref<3x1x32xf32, #tpu.memory_space<vmem>>, vector<1x1x32xf32>
      %187 = vector.shape_cast %186 : vector<1x1x32xf32> to vector<1x32xf32>
      %188 = vector.broadcast %187 : vector<1x32xf32> to vector<4x32xf32>
      %189 = arith.addf %185, %188 : vector<4x32xf32>
      %c2_170 = arith.constant 2 : index
      %c0_171 = arith.constant 0 : index
      %c0_172 = arith.constant 0 : index
      %190 = vector.load %arg30[%c2_170, %c0_171, %c0_172] : memref<3x8x32xbf16, #tpu.memory_space<vmem>>, vector<1x8x32xbf16>
      %191 = vector.shape_cast %190 : vector<1x8x32xbf16> to vector<8x32xbf16>
      %cst_173 = arith.constant dense<0.000000e+00> : vector<4x32xf32>
      %192 = tpu.matmul %165, %191, %cst_173 {dimension_numbers = #tpu.dot_dimension_numbers<[1], [0], [0], [1], [0, 0, 1, 1], [], []>} : vector<4x8xbf16>, vector<8x32xbf16>, vector<4x32xf32> -> vector<4x32xf32>
      %c2_174 = arith.constant 2 : index
      %c0_175 = arith.constant 0 : index
      %c0_176 = arith.constant 0 : index
      %193 = vector.load %arg28[%c2_174, %c0_175, %c0_176] : memref<3x32x32xbf16, #tpu.memory_space<vmem>>, vector<1x32x32xbf16>
      %194 = vector.shape_cast %193 : vector<1x32x32xbf16> to vector<32x32xbf16>
      %cst_177 = arith.constant dense<0.000000e+00> : vector<4x32xf32>
      %195 = tpu.matmul %167, %194, %cst_177 {dimension_numbers = #tpu.dot_dimension_numbers<[1], [0], [0], [1], [0, 0, 1, 1], [], []>} : vector<4x32xbf16>, vector<32x32xbf16>, vector<4x32xf32> -> vector<4x32xf32>
      %196 = arith.addf %192, %195 : vector<4x32xf32>
      %c2_178 = arith.constant 2 : index
      %c0_179 = arith.constant 0 : index
      %c0_180 = arith.constant 0 : index
      %197 = vector.load %arg24[%c2_178, %c0_179, %c0_180] : memref<3x1x32xf32, #tpu.memory_space<vmem>>, vector<1x1x32xf32>
      %198 = vector.shape_cast %197 : vector<1x1x32xf32> to vector<1x32xf32>
      %199 = vector.broadcast %198 : vector<1x32xf32> to vector<4x32xf32>
      %200 = arith.addf %196, %199 : vector<4x32xf32>
      %201 = arith.negf %200 : vector<4x32xf32>
      %202 = math.exp %201 : vector<4x32xf32>
      %cst_181 = arith.constant 1.000000e+00 : f32
      %203 = vector.broadcast %cst_181 : f32 to vector<4x32xf32>
      %204 = arith.addf %203, %202 : vector<4x32xf32>
      %205 = arith.divf %203, %204 : vector<4x32xf32>
      %206 = arith.truncf %178 : vector<4x32xf32> to vector<4x32xbf16>
      %207 = arith.truncf %189 : vector<4x32xf32> to vector<4x32xbf16>
      %cst_182 = arith.constant 0.000000e+00 : f32
      %208 = vector.broadcast %cst_182 : f32 to vector<4x32xf32>
      %c0_183 = arith.constant 0 : index
      %c0_184 = arith.constant 0 : index
      %c0_185 = arith.constant 0 : index
      %209 = vector.load %arg29[%c0_183, %c0_184, %c0_185] : memref<2x32x6xbf16, #tpu.memory_space<vmem>>, vector<1x32x6xbf16>
      %210 = vector.shape_cast %209 : vector<1x32x6xbf16> to vector<32x6xbf16>
      %cst_186 = arith.constant dense<0.000000e+00> : vector<4x6xf32>
      %211 = tpu.matmul %206, %210, %cst_186 {dimension_numbers = #tpu.dot_dimension_numbers<[1], [0], [0], [1], [0, 0, 1, 1], [], []>} : vector<4x32xbf16>, vector<32x6xbf16>, vector<4x6xf32> -> vector<4x6xf32>
      %c0_187 = arith.constant 0 : index
      %c0_188 = arith.constant 0 : index
      %c0_189 = arith.constant 0 : index
      %212 = vector.load %arg25[%c0_187, %c0_188, %c0_189] : memref<2x1x6xf32, #tpu.memory_space<vmem>>, vector<1x1x6xf32>
      %213 = vector.shape_cast %212 : vector<1x1x6xf32> to vector<1x6xf32>
      %214 = vector.broadcast %213 : vector<1x6xf32> to vector<4x6xf32>
      %215 = arith.addf %211, %214 : vector<4x6xf32>
      %216 = math.tanh %215 : vector<4x6xf32>
      %c0_190 = arith.constant 0 : index
      %c0_191 = arith.constant 0 : index
      %c0_192 = arith.constant 0 : index
      %217 = vector.load %arg27[%c0_190, %c0_191, %c0_192] : memref<2x32x6xbf16, #tpu.memory_space<vmem>>, vector<1x32x6xbf16>
      %218 = vector.shape_cast %217 : vector<1x32x6xbf16> to vector<32x6xbf16>
      %cst_193 = arith.constant dense<0.000000e+00> : vector<4x6xf32>
      %219 = tpu.matmul %207, %218, %cst_193 {dimension_numbers = #tpu.dot_dimension_numbers<[1], [0], [0], [1], [0, 0, 1, 1], [], []>} : vector<4x32xbf16>, vector<32x6xbf16>, vector<4x6xf32> -> vector<4x6xf32>
      %c0_194 = arith.constant 0 : index
      %c0_195 = arith.constant 0 : index
      %c0_196 = arith.constant 0 : index
      %220 = vector.load %arg23[%c0_194, %c0_195, %c0_196] : memref<2x1x6xf32, #tpu.memory_space<vmem>>, vector<1x1x6xf32>
      %221 = vector.shape_cast %220 : vector<1x1x6xf32> to vector<1x6xf32>
      %222 = vector.broadcast %221 : vector<1x6xf32> to vector<4x6xf32>
      %223 = arith.addf %219, %222 : vector<4x6xf32>
      %224 = arith.negf %223 : vector<4x6xf32>
      %225 = math.exp %224 : vector<4x6xf32>
      %cst_197 = arith.constant 1.000000e+00 : f32
      %226 = vector.broadcast %cst_197 : f32 to vector<4x6xf32>
      %227 = arith.addf %226, %225 : vector<4x6xf32>
      %228 = arith.divf %226, %227 : vector<4x6xf32>
      %c0_198 = arith.constant 0 : index
      %c0_199 = arith.constant 0 : index
      %c0_200 = arith.constant 0 : index
      %229 = vector.load %arg33[%c0_198, %c0_199, %c0_200] : memref<2x8x16xbf16, #tpu.memory_space<vmem>>, vector<1x8x16xbf16>
      %230 = vector.shape_cast %229 : vector<1x8x16xbf16> to vector<8x16xbf16>
      %cst_201 = arith.constant dense<0.000000e+00> : vector<4x16xf32>
      %231 = tpu.matmul %165, %230, %cst_201 {dimension_numbers = #tpu.dot_dimension_numbers<[1], [0], [0], [1], [0, 0, 1, 1], [], []>} : vector<4x8xbf16>, vector<8x16xbf16>, vector<4x16xf32> -> vector<4x16xf32>
      %232 = arith.truncf %231 : vector<4x16xf32> to vector<4x16xbf16>
      %c0_202 = arith.constant 0 : index
      %c0_203 = arith.constant 0 : index
      %c0_204 = arith.constant 0 : index
      %233 = vector.load %arg31[%c0_202, %c0_203, %c0_204] : memref<2x8x16xbf16, #tpu.memory_space<vmem>>, vector<1x8x16xbf16>
      %234 = vector.shape_cast %233 : vector<1x8x16xbf16> to vector<8x16xbf16>
      %cst_205 = arith.constant dense<0.000000e+00> : vector<6x16xf32>
      %235 = tpu.matmul %166, %234, %cst_205 {dimension_numbers = #tpu.dot_dimension_numbers<[1], [0], [0], [1], [0, 0, 1, 1], [], []>} : vector<6x8xbf16>, vector<8x16xbf16>, vector<6x16xf32> -> vector<6x16xf32>
      %236 = arith.truncf %235 : vector<6x16xf32> to vector<6x16xbf16>
      %c0_206 = arith.constant 0 : index
      %c0_207 = arith.constant 0 : index
      %c0_208 = arith.constant 0 : index
      %237 = vector.load %arg34[%c0_206, %c0_207, %c0_208] : memref<2x8x16xbf16, #tpu.memory_space<vmem>>, vector<1x8x16xbf16>
      %238 = vector.shape_cast %237 : vector<1x8x16xbf16> to vector<8x16xbf16>
      %cst_209 = arith.constant dense<0.000000e+00> : vector<6x16xf32>
      %239 = tpu.matmul %166, %238, %cst_209 {dimension_numbers = #tpu.dot_dimension_numbers<[1], [0], [0], [1], [0, 0, 1, 1], [], []>} : vector<6x8xbf16>, vector<8x16xbf16>, vector<6x16xf32> -> vector<6x16xf32>
      %240 = arith.truncf %239 : vector<6x16xf32> to vector<6x16xbf16>
      %cst_210 = arith.constant dense<0.000000e+00> : vector<4x6xf32>
      %241 = tpu.matmul %232, %236, %cst_210 {dimension_numbers = #tpu.dot_dimension_numbers<[1], [1], [0], [0], [0, 0, 1, 0], [], []>} : vector<4x16xbf16>, vector<6x16xbf16>, vector<4x6xf32> -> vector<4x6xf32>
      %c0_211 = arith.constant 0 : index
      %c0_212 = arith.constant 0 : index
      %c0_213 = arith.constant 0 : index
      %c0_214 = arith.constant 0 : index
      %242 = vector.load %arg65[%c0_211, %c0_212, %c0_213, %c0_214] : memref<2x2x4x6xf32, #tpu.memory_space<vmem>>, vector<1x1x4x6xf32>
      %243 = vector.shape_cast %242 : vector<1x1x4x6xf32> to vector<4x6xf32>
      %244 = arith.mulf %243, %228 : vector<4x6xf32>
      %245 = arith.mulf %241, %216 : vector<4x6xf32>
      %246 = arith.addf %244, %245 : vector<4x6xf32>
      %c0_215 = arith.constant 0 : index
      %c0_216 = arith.constant 0 : index
      %c0_217 = arith.constant 0 : index
      %c0_218 = arith.constant 0 : index
      %247 = vector.load %arg65[%c0_215, %c0_216, %c0_217, %c0_218] : memref<2x2x4x6xf32, #tpu.memory_space<vmem>>, vector<1x1x4x6xf32>
      %248 = vector.shape_cast %247 : vector<1x1x4x6xf32> to vector<4x6xf32>
      %249 = vector.shape_cast %246 : vector<4x6xf32> to vector<1x1x4x6xf32>
      tpu.vector_store %arg65[%c0_215, %c0_216, %c0_217, %c0_218], %249 {strides = array<i32>} : memref<2x2x4x6xf32, #tpu.memory_space<vmem>>, vector<1x1x4x6xf32>,
      %250 = arith.truncf %246 : vector<4x6xf32> to vector<4x6xbf16>
      %cst_219 = arith.constant dense<0.000000e+00> : vector<4x16xf32>
      %251 = tpu.matmul %250, %240, %cst_219 {dimension_numbers = #tpu.dot_dimension_numbers<[1], [0], [0], [1], [0, 0, 1, 1], [], []>} : vector<4x6xbf16>, vector<6x16xbf16>, vector<4x16xf32> -> vector<4x16xf32>
      %252 = arith.truncf %251 : vector<4x16xf32> to vector<4x16xbf16>
      %c0_220 = arith.constant 0 : index
      %c0_221 = arith.constant 0 : index
      %c0_222 = arith.constant 0 : index
      %253 = vector.load %arg32[%c0_220, %c0_221, %c0_222] : memref<2x16x32xbf16, #tpu.memory_space<vmem>>, vector<1x16x32xbf16>
      %254 = vector.shape_cast %253 : vector<1x16x32xbf16> to vector<16x32xbf16>
      %cst_223 = arith.constant dense<0.000000e+00> : vector<4x32xf32>
      %255 = tpu.matmul %252, %254, %cst_223 {dimension_numbers = #tpu.dot_dimension_numbers<[1], [0], [0], [1], [0, 0, 1, 1], [], []>} : vector<4x16xbf16>, vector<16x32xbf16>, vector<4x32xf32> -> vector<4x32xf32>
      %256 = arith.addf %208, %255 : vector<4x32xf32>
      %c1_224 = arith.constant 1 : index
      %c0_225 = arith.constant 0 : index
      %c0_226 = arith.constant 0 : index
      %257 = vector.load %arg29[%c1_224, %c0_225, %c0_226] : memref<2x32x6xbf16, #tpu.memory_space<vmem>>, vector<1x32x6xbf16>
      %258 = vector.shape_cast %257 : vector<1x32x6xbf16> to vector<32x6xbf16>
      %cst_227 = arith.constant dense<0.000000e+00> : vector<4x6xf32>
      %259 = tpu.matmul %206, %258, %cst_227 {dimension_numbers = #tpu.dot_dimension_numbers<[1], [0], [0], [1], [0, 0, 1, 1], [], []>} : vector<4x32xbf16>, vector<32x6xbf16>, vector<4x6xf32> -> vector<4x6xf32>
      %c1_228 = arith.constant 1 : index
      %c0_229 = arith.constant 0 : index
      %c0_230 = arith.constant 0 : index
      %260 = vector.load %arg25[%c1_228, %c0_229, %c0_230] : memref<2x1x6xf32, #tpu.memory_space<vmem>>, vector<1x1x6xf32>
      %261 = vector.shape_cast %260 : vector<1x1x6xf32> to vector<1x6xf32>
      %262 = vector.broadcast %261 : vector<1x6xf32> to vector<4x6xf32>
      %263 = arith.addf %259, %262 : vector<4x6xf32>
      %264 = math.tanh %263 : vector<4x6xf32>
      %c1_231 = arith.constant 1 : index
      %c0_232 = arith.constant 0 : index
      %c0_233 = arith.constant 0 : index
      %265 = vector.load %arg27[%c1_231, %c0_232, %c0_233] : memref<2x32x6xbf16, #tpu.memory_space<vmem>>, vector<1x32x6xbf16>
      %266 = vector.shape_cast %265 : vector<1x32x6xbf16> to vector<32x6xbf16>
      %cst_234 = arith.constant dense<0.000000e+00> : vector<4x6xf32>
      %267 = tpu.matmul %207, %266, %cst_234 {dimension_numbers = #tpu.dot_dimension_numbers<[1], [0], [0], [1], [0, 0, 1, 1], [], []>} : vector<4x32xbf16>, vector<32x6xbf16>, vector<4x6xf32> -> vector<4x6xf32>
      %c1_235 = arith.constant 1 : index
      %c0_236 = arith.constant 0 : index
      %c0_237 = arith.constant 0 : index
      %268 = vector.load %arg23[%c1_235, %c0_236, %c0_237] : memref<2x1x6xf32, #tpu.memory_space<vmem>>, vector<1x1x6xf32>
      %269 = vector.shape_cast %268 : vector<1x1x6xf32> to vector<1x6xf32>
      %270 = vector.broadcast %269 : vector<1x6xf32> to vector<4x6xf32>
      %271 = arith.addf %267, %270 : vector<4x6xf32>
      %272 = arith.negf %271 : vector<4x6xf32>
      %273 = math.exp %272 : vector<4x6xf32>
      %cst_238 = arith.constant 1.000000e+00 : f32
      %274 = vector.broadcast %cst_238 : f32 to vector<4x6xf32>
      %275 = arith.addf %274, %273 : vector<4x6xf32>
      %276 = arith.divf %274, %275 : vector<4x6xf32>
      %c1_239 = arith.constant 1 : index
      %c0_240 = arith.constant 0 : index
      %c0_241 = arith.constant 0 : index
      %277 = vector.load %arg33[%c1_239, %c0_240, %c0_241] : memref<2x8x16xbf16, #tpu.memory_space<vmem>>, vector<1x8x16xbf16>
      %278 = vector.shape_cast %277 : vector<1x8x16xbf16> to vector<8x16xbf16>
      %cst_242 = arith.constant dense<0.000000e+00> : vector<4x16xf32>
      %279 = tpu.matmul %165, %278, %cst_242 {dimension_numbers = #tpu.dot_dimension_numbers<[1], [0], [0], [1], [0, 0, 1, 1], [], []>} : vector<4x8xbf16>, vector<8x16xbf16>, vector<4x16xf32> -> vector<4x16xf32>
      %280 = arith.truncf %279 : vector<4x16xf32> to vector<4x16xbf16>
      %c1_243 = arith.constant 1 : index
      %c0_244 = arith.constant 0 : index
      %c0_245 = arith.constant 0 : index
      %281 = vector.load %arg31[%c1_243, %c0_244, %c0_245] : memref<2x8x16xbf16, #tpu.memory_space<vmem>>, vector<1x8x16xbf16>
      %282 = vector.shape_cast %281 : vector<1x8x16xbf16> to vector<8x16xbf16>
      %cst_246 = arith.constant dense<0.000000e+00> : vector<6x16xf32>
      %283 = tpu.matmul %166, %282, %cst_246 {dimension_numbers = #tpu.dot_dimension_numbers<[1], [0], [0], [1], [0, 0, 1, 1], [], []>} : vector<6x8xbf16>, vector<8x16xbf16>, vector<6x16xf32> -> vector<6x16xf32>
      %284 = arith.truncf %283 : vector<6x16xf32> to vector<6x16xbf16>
      %c1_247 = arith.constant 1 : index
      %c0_248 = arith.constant 0 : index
      %c0_249 = arith.constant 0 : index
      %285 = vector.load %arg34[%c1_247, %c0_248, %c0_249] : memref<2x8x16xbf16, #tpu.memory_space<vmem>>, vector<1x8x16xbf16>
      %286 = vector.shape_cast %285 : vector<1x8x16xbf16> to vector<8x16xbf16>
      %cst_250 = arith.constant dense<0.000000e+00> : vector<6x16xf32>
      %287 = tpu.matmul %166, %286, %cst_250 {dimension_numbers = #tpu.dot_dimension_numbers<[1], [0], [0], [1], [0, 0, 1, 1], [], []>} : vector<6x8xbf16>, vector<8x16xbf16>, vector<6x16xf32> -> vector<6x16xf32>
      %288 = arith.truncf %287 : vector<6x16xf32> to vector<6x16xbf16>
      %cst_251 = arith.constant dense<0.000000e+00> : vector<4x6xf32>
      %289 = tpu.matmul %280, %284, %cst_251 {dimension_numbers = #tpu.dot_dimension_numbers<[1], [1], [0], [0], [0, 0, 1, 0], [], []>} : vector<4x16xbf16>, vector<6x16xbf16>, vector<4x6xf32> -> vector<4x6xf32>
      %c0_252 = arith.constant 0 : index
      %c1_253 = arith.constant 1 : index
      %c0_254 = arith.constant 0 : index
      %c0_255 = arith.constant 0 : index
      %290 = vector.load %arg65[%c0_252, %c1_253, %c0_254, %c0_255] : memref<2x2x4x6xf32, #tpu.memory_space<vmem>>, vector<1x1x4x6xf32>
      %291 = vector.shape_cast %290 : vector<1x1x4x6xf32> to vector<4x6xf32>
      %292 = arith.mulf %291, %276 : vector<4x6xf32>
      %293 = arith.mulf %289, %264 : vector<4x6xf32>
      %294 = arith.addf %292, %293 : vector<4x6xf32>
      %c0_256 = arith.constant 0 : index
      %c1_257 = arith.constant 1 : index
      %c0_258 = arith.constant 0 : index
      %c0_259 = arith.constant 0 : index
      %295 = vector.load %arg65[%c0_256, %c1_257, %c0_258, %c0_259] : memref<2x2x4x6xf32, #tpu.memory_space<vmem>>, vector<1x1x4x6xf32>
      %296 = vector.shape_cast %295 : vector<1x1x4x6xf32> to vector<4x6xf32>
      %297 = vector.shape_cast %294 : vector<4x6xf32> to vector<1x1x4x6xf32>
      tpu.vector_store %arg65[%c0_256, %c1_257, %c0_258, %c0_259], %297 {strides = array<i32>} : memref<2x2x4x6xf32, #tpu.memory_space<vmem>>, vector<1x1x4x6xf32>,
      %298 = arith.truncf %294 : vector<4x6xf32> to vector<4x6xbf16>
      %cst_260 = arith.constant dense<0.000000e+00> : vector<4x16xf32>
      %299 = tpu.matmul %298, %288, %cst_260 {dimension_numbers = #tpu.dot_dimension_numbers<[1], [0], [0], [1], [0, 0, 1, 1], [], []>} : vector<4x6xbf16>, vector<6x16xbf16>, vector<4x16xf32> -> vector<4x16xf32>
      %300 = arith.truncf %299 : vector<4x16xf32> to vector<4x16xbf16>
      %c1_261 = arith.constant 1 : index
      %c0_262 = arith.constant 0 : index
      %c0_263 = arith.constant 0 : index
      %301 = vector.load %arg32[%c1_261, %c0_262, %c0_263] : memref<2x16x32xbf16, #tpu.memory_space<vmem>>, vector<1x16x32xbf16>
      %302 = vector.shape_cast %301 : vector<1x16x32xbf16> to vector<16x32xbf16>
      %cst_264 = arith.constant dense<0.000000e+00> : vector<4x32xf32>
      %303 = tpu.matmul %300, %302, %cst_264 {dimension_numbers = #tpu.dot_dimension_numbers<[1], [0], [0], [1], [0, 0, 1, 1], [], []>} : vector<4x16xbf16>, vector<16x32xbf16>, vector<4x32xf32> -> vector<4x32xf32>
      %304 = arith.addf %256, %303 : vector<4x32xf32>
      %c0_265 = arith.constant 0 : index
      %c0_266 = arith.constant 0 : index
      %305 = vector.load %arg26[%c0_265, %c0_266] : memref<1x32xf32, #tpu.memory_space<vmem>>, vector<1x32xf32>
      %306 = vector.broadcast %305 : vector<1x32xf32> to vector<4x32xf32>
      %307 = arith.addf %304, %306 : vector<4x32xf32>
      %308 = arith.mulf %205, %307 : vector<4x32xf32>
      %c0_267 = arith.constant 0 : index
      %c0_268 = arith.constant 0 : index
      %c0_269 = arith.constant 0 : index
      %309 = vector.load %arg62[%c0_267, %c0_268, %c0_269] : memref<2x6x32xf32, #tpu.memory_space<vmem>>, vector<1x6x32xf32>
      %310 = vector.shape_cast %309 : vector<1x6x32xf32> to vector<6x32xf32>
      %311 = vector.shape_cast %162 : vector<6x32xf32> to vector<1x6x32xf32>
      tpu.vector_store %arg62[%c0_267, %c0_268, %c0_269], %311 {strides = array<i32>} : memref<2x6x32xf32, #tpu.memory_space<vmem>>, vector<1x6x32xf32>,
      %c0_270 = arith.constant 0 : index
      %c0_271 = arith.constant 0 : index
      %c0_272 = arith.constant 0 : index
      %312 = vector.load %arg64[%c0_270, %c0_271, %c0_272] : memref<2x4x32xf32, #tpu.memory_space<vmem>>, vector<1x4x32xf32>
      %313 = vector.shape_cast %312 : vector<1x4x32xf32> to vector<4x32xf32>
      %314 = vector.shape_cast %308 : vector<4x32xf32> to vector<1x4x32xf32>
      tpu.vector_store %arg64[%c0_270, %c0_271, %c0_272], %314 {strides = array<i32>} : memref<2x4x32xf32, #tpu.memory_space<vmem>>, vector<1x4x32xf32>,
      %c0_273 = arith.constant 0 : index
      %c0_274 = arith.constant 0 : index
      %c0_275 = arith.constant 0 : index
      %315 = vector.load %arg59[%c0_273, %c0_274, %c0_275] : memref<8x1x32xf32, #tpu.memory_space<vmem>>, vector<1x1x32xf32>
      %316 = vector.shape_cast %315 : vector<1x1x32xf32> to vector<1x32xf32>
      %c1_276 = arith.constant 1 : index
      %c0_277 = arith.constant 0 : index
      %c0_278 = arith.constant 0 : index
      %317 = vector.load %arg59[%c1_276, %c0_277, %c0_278] : memref<8x1x32xf32, #tpu.memory_space<vmem>>, vector<1x1x32xf32>
      %318 = vector.shape_cast %317 : vector<1x1x32xf32> to vector<1x32xf32>
      %c2_279 = arith.constant 2 : index
      %c0_280 = arith.constant 0 : index
      %c0_281 = arith.constant 0 : index
      %319 = vector.load %arg59[%c2_279, %c0_280, %c0_281] : memref<8x1x32xf32, #tpu.memory_space<vmem>>, vector<1x1x32xf32>
      %320 = vector.shape_cast %319 : vector<1x1x32xf32> to vector<1x32xf32>
      %c3 = arith.constant 3 : index
      %c0_282 = arith.constant 0 : index
      %c0_283 = arith.constant 0 : index
      %321 = vector.load %arg59[%c3, %c0_282, %c0_283] : memref<8x1x32xf32, #tpu.memory_space<vmem>>, vector<1x1x32xf32>
      %322 = vector.shape_cast %321 : vector<1x1x32xf32> to vector<1x32xf32>
      %cst_284 = arith.constant dense<0.000000e+00> : vector<6xf32>
      %323 = vector.multi_reduction <add>, %162, %cst_284 [1] : vector<6x32xf32> to vector<6xf32>
      %324 = vector.shape_cast %323 : vector<6xf32> to vector<6x1xf32>
      %cst_285 = arith.constant 3.200000e+01 : f32
      %325 = vector.broadcast %cst_285 : f32 to vector<6x1xf32>
      %326 = arith.divf %324, %325 : vector<6x1xf32>
      %327 = vector.broadcast %326 : vector<6x1xf32> to vector<6x32xf32>
      %328 = arith.subf %162, %327 : vector<6x32xf32>
      %329 = arith.mulf %328, %328 : vector<6x32xf32>
      %cst_286 = arith.constant dense<0.000000e+00> : vector<6xf32>
      %330 = vector.multi_reduction <add>, %329, %cst_286 [1] : vector<6x32xf32> to vector<6xf32>
      %331 = vector.shape_cast %330 : vector<6xf32> to vector<6x1xf32>
      %cst_287 = arith.constant 3.200000e+01 : f32
      %332 = vector.broadcast %cst_287 : f32 to vector<6x1xf32>
      %333 = arith.divf %331, %332 : vector<6x1xf32>
      %334 = vector.broadcast %326 : vector<6x1xf32> to vector<6x32xf32>
      %335 = arith.subf %162, %334 : vector<6x32xf32>
      %cst_288 = arith.constant 9.99999974E-6 : f32
      %336 = vector.broadcast %cst_288 : f32 to vector<6x1xf32>
      %337 = arith.addf %333, %336 : vector<6x1xf32>
      %338 = math.rsqrt %337 : vector<6x1xf32>
      %339 = vector.broadcast %338 : vector<6x1xf32> to vector<6x32xf32>
      %340 = arith.mulf %335, %339 : vector<6x32xf32>
      %341 = vector.broadcast %316 : vector<1x32xf32> to vector<6x32xf32>
      %342 = arith.mulf %340, %341 : vector<6x32xf32>
      %343 = vector.broadcast %318 : vector<1x32xf32> to vector<6x32xf32>
      %344 = arith.addf %342, %343 : vector<6x32xf32>
      %345 = arith.truncf %344 : vector<6x32xf32> to vector<6x32xbf16>
      %c0_289 = arith.constant 0 : index
      %c0_290 = arith.constant 0 : index
      %346 = vector.load %arg5[%c0_289, %c0_290] : memref<32x128xbf16, #tpu.memory_space<vmem>>, vector<32x128xbf16>
      %cst_291 = arith.constant dense<0.000000e+00> : vector<6x128xf32>
      %347 = tpu.matmul %345, %346, %cst_291 {dimension_numbers = #tpu.dot_dimension_numbers<[1], [0], [0], [1], [0, 0, 1, 1], [], []>} : vector<6x32xbf16>, vector<32x128xbf16>, vector<6x128xf32> -> vector<6x128xf32>
      %c0_292 = arith.constant 0 : index
      %c0_293 = arith.constant 0 : index
      %348 = vector.load %arg3[%c0_292, %c0_293] : memref<1x128xf32, #tpu.memory_space<vmem>>, vector<1x128xf32>
      %349 = vector.broadcast %348 : vector<1x128xf32> to vector<6x128xf32>
      %350 = arith.addf %347, %349 : vector<6x128xf32>
      %cst_294 = arith.constant 5.000000e-01 : f32
      %351 = vector.broadcast %cst_294 : f32 to vector<6x128xf32>
      %352 = arith.mulf %351, %350 : vector<6x128xf32>
      %cst_295 = arith.constant 0.707106769 : f32
      %353 = vector.broadcast %cst_295 : f32 to vector<6x128xf32>
      %354 = arith.mulf %350, %353 : vector<6x128xf32>
      %355 = math.absf %354 : vector<6x128xf32>
      %cst_296 = arith.constant 0.327591091 : f32
      %356 = vector.broadcast %cst_296 : f32 to vector<6x128xf32>
      %357 = arith.mulf %356, %355 : vector<6x128xf32>
      %cst_297 = arith.constant 1.000000e+00 : f32
      %358 = vector.broadcast %cst_297 : f32 to vector<6x128xf32>
      %359 = arith.addf %358, %357 : vector<6x128xf32>
      %cst_298 = arith.constant 1.000000e+00 : f32
      %360 = vector.broadcast %cst_298 : f32 to vector<6x128xf32>
      %361 = arith.divf %360, %359 : vector<6x128xf32>
      %cst_299 = arith.constant 1.06140542 : f32
      %362 = vector.broadcast %cst_299 : f32 to vector<6x128xf32>
      %363 = arith.mulf %362, %361 : vector<6x128xf32>
      %cst_300 = arith.constant -1.45315206 : f32
      %364 = vector.broadcast %cst_300 : f32 to vector<6x128xf32>
      %365 = arith.addf %363, %364 : vector<6x128xf32>
      %366 = arith.mulf %365, %361 : vector<6x128xf32>
      %cst_301 = arith.constant 1.42141378 : f32
      %367 = vector.broadcast %cst_301 : f32 to vector<6x128xf32>
      %368 = arith.addf %366, %367 : vector<6x128xf32>
      %369 = arith.mulf %368, %361 : vector<6x128xf32>
      %cst_302 = arith.constant -0.284496725 : f32
      %370 = vector.broadcast %cst_302 : f32 to vector<6x128xf32>
      %371 = arith.addf %369, %370 : vector<6x128xf32>
      %372 = arith.mulf %371, %361 : vector<6x128xf32>
      %cst_303 = arith.constant 0.254829586 : f32
      %373 = vector.broadcast %cst_303 : f32 to vector<6x128xf32>
      %374 = arith.addf %372, %373 : vector<6x128xf32>
      %375 = arith.mulf %374, %361 : vector<6x128xf32>
      %cst_304 = arith.constant 0.000000e+00 : f32
      %376 = vector.broadcast %cst_304 : f32 to vector<6x128xf32>
      %377 = arith.subf %376, %355 : vector<6x128xf32>
      %378 = arith.mulf %377, %355 : vector<6x128xf32>
      %379 = math.exp %378 : vector<6x128xf32>
      %380 = arith.mulf %375, %379 : vector<6x128xf32>
      %cst_305 = arith.constant 1.000000e+00 : f32
      %381 = vector.broadcast %cst_305 : f32 to vector<6x128xf32>
      %382 = arith.subf %381, %380 : vector<6x128xf32>
      %cst_306 = arith.constant 0.000000e+00 : f32
      %383 = vector.broadcast %cst_306 : f32 to vector<6x128xf32>
      %384 = arith.cmpf oge, %354, %383 : vector<6x128xf32>
      %cst_307 = arith.constant 0.000000e+00 : f32
      %385 = vector.broadcast %cst_307 : f32 to vector<6x128xf32>
      %386 = arith.subf %385, %382 : vector<6x128xf32>
      %387 = arith.select %384, %382, %386 : vector<6x128xi1>, vector<6x128xf32>
      %cst_308 = arith.constant 1.000000e+00 : f32
      %388 = vector.broadcast %cst_308 : f32 to vector<6x128xf32>
      %389 = arith.addf %388, %387 : vector<6x128xf32>
      %390 = arith.mulf %352, %389 : vector<6x128xf32>
      %391 = arith.truncf %390 : vector<6x128xf32> to vector<6x128xbf16>
      %c0_309 = arith.constant 0 : index
      %c0_310 = arith.constant 0 : index
      %392 = vector.load %arg6[%c0_309, %c0_310] : memref<128x32xbf16, #tpu.memory_space<vmem>>, vector<128x32xbf16>
      %cst_311 = arith.constant dense<0.000000e+00> : vector<6x32xf32>
      %393 = tpu.matmul %391, %392, %cst_311 {dimension_numbers = #tpu.dot_dimension_numbers<[1], [0], [0], [1], [0, 0, 1, 1], [], []>} : vector<6x128xbf16>, vector<128x32xbf16>, vector<6x32xf32> -> vector<6x32xf32>
      %c0_312 = arith.constant 0 : index
      %c0_313 = arith.constant 0 : index
      %394 = vector.load %arg4[%c0_312, %c0_313] : memref<1x32xf32, #tpu.memory_space<vmem>>, vector<1x32xf32>
      %395 = vector.broadcast %394 : vector<1x32xf32> to vector<6x32xf32>
      %396 = arith.addf %393, %395 : vector<6x32xf32>
      %397 = arith.addf %344, %396 : vector<6x32xf32>
      %cst_314 = arith.constant dense<0.000000e+00> : vector<6xf32>
      %398 = vector.multi_reduction <add>, %397, %cst_314 [1] : vector<6x32xf32> to vector<6xf32>
      %399 = vector.shape_cast %398 : vector<6xf32> to vector<6x1xf32>
      %cst_315 = arith.constant 3.200000e+01 : f32
      %400 = vector.broadcast %cst_315 : f32 to vector<6x1xf32>
      %401 = arith.divf %399, %400 : vector<6x1xf32>
      %402 = vector.broadcast %401 : vector<6x1xf32> to vector<6x32xf32>
      %403 = arith.subf %397, %402 : vector<6x32xf32>
      %404 = arith.mulf %403, %403 : vector<6x32xf32>
      %cst_316 = arith.constant dense<0.000000e+00> : vector<6xf32>
      %405 = vector.multi_reduction <add>, %404, %cst_316 [1] : vector<6x32xf32> to vector<6xf32>
      %406 = vector.shape_cast %405 : vector<6xf32> to vector<6x1xf32>
      %cst_317 = arith.constant 3.200000e+01 : f32
      %407 = vector.broadcast %cst_317 : f32 to vector<6x1xf32>
      %408 = arith.divf %406, %407 : vector<6x1xf32>
      %409 = vector.broadcast %401 : vector<6x1xf32> to vector<6x32xf32>
      %410 = arith.subf %397, %409 : vector<6x32xf32>
      %cst_318 = arith.constant 9.99999974E-6 : f32
      %411 = vector.broadcast %cst_318 : f32 to vector<6x1xf32>
      %412 = arith.addf %408, %411 : vector<6x1xf32>
      %413 = math.rsqrt %412 : vector<6x1xf32>
      %414 = vector.broadcast %413 : vector<6x1xf32> to vector<6x32xf32>
      %415 = arith.mulf %410, %414 : vector<6x32xf32>
      %416 = vector.broadcast %320 : vector<1x32xf32> to vector<6x32xf32>
      %417 = arith.mulf %415, %416 : vector<6x32xf32>
      %418 = vector.broadcast %322 : vector<1x32xf32> to vector<6x32xf32>
      %419 = arith.addf %417, %418 : vector<6x32xf32>
      %c4 = arith.constant 4 : index
      %c0_319 = arith.constant 0 : index
      %c0_320 = arith.constant 0 : index
      %420 = vector.load %arg59[%c4, %c0_319, %c0_320] : memref<8x1x32xf32, #tpu.memory_space<vmem>>, vector<1x1x32xf32>
      %421 = vector.shape_cast %420 : vector<1x1x32xf32> to vector<1x32xf32>
      %c5 = arith.constant 5 : index
      %c0_321 = arith.constant 0 : index
      %c0_322 = arith.constant 0 : index
      %422 = vector.load %arg59[%c5, %c0_321, %c0_322] : memref<8x1x32xf32, #tpu.memory_space<vmem>>, vector<1x1x32xf32>
      %423 = vector.shape_cast %422 : vector<1x1x32xf32> to vector<1x32xf32>
      %c6 = arith.constant 6 : index
      %c0_323 = arith.constant 0 : index
      %c0_324 = arith.constant 0 : index
      %424 = vector.load %arg59[%c6, %c0_323, %c0_324] : memref<8x1x32xf32, #tpu.memory_space<vmem>>, vector<1x1x32xf32>
      %425 = vector.shape_cast %424 : vector<1x1x32xf32> to vector<1x32xf32>
      %c7 = arith.constant 7 : index
      %c0_325 = arith.constant 0 : index
      %c0_326 = arith.constant 0 : index
      %426 = vector.load %arg59[%c7, %c0_325, %c0_326] : memref<8x1x32xf32, #tpu.memory_space<vmem>>, vector<1x1x32xf32>
      %427 = vector.shape_cast %426 : vector<1x1x32xf32> to vector<1x32xf32>
      %cst_327 = arith.constant dense<0.000000e+00> : vector<4xf32>
      %428 = vector.multi_reduction <add>, %308, %cst_327 [1] : vector<4x32xf32> to vector<4xf32>
      %429 = vector.shape_cast %428 : vector<4xf32> to vector<4x1xf32>
      %cst_328 = arith.constant 3.200000e+01 : f32
      %430 = vector.broadcast %cst_328 : f32 to vector<4x1xf32>
      %431 = arith.divf %429, %430 : vector<4x1xf32>
      %432 = vector.broadcast %431 : vector<4x1xf32> to vector<4x32xf32>
      %433 = arith.subf %308, %432 : vector<4x32xf32>
      %434 = arith.mulf %433, %433 : vector<4x32xf32>
      %cst_329 = arith.constant dense<0.000000e+00> : vector<4xf32>
      %435 = vector.multi_reduction <add>, %434, %cst_329 [1] : vector<4x32xf32> to vector<4xf32>
      %436 = vector.shape_cast %435 : vector<4xf32> to vector<4x1xf32>
      %cst_330 = arith.constant 3.200000e+01 : f32
      %437 = vector.broadcast %cst_330 : f32 to vector<4x1xf32>
      %438 = arith.divf %436, %437 : vector<4x1xf32>
      %439 = vector.broadcast %431 : vector<4x1xf32> to vector<4x32xf32>
      %440 = arith.subf %308, %439 : vector<4x32xf32>
      %cst_331 = arith.constant 9.99999974E-6 : f32
      %441 = vector.broadcast %cst_331 : f32 to vector<4x1xf32>
      %442 = arith.addf %438, %441 : vector<4x1xf32>
      %443 = math.rsqrt %442 : vector<4x1xf32>
      %444 = vector.broadcast %443 : vector<4x1xf32> to vector<4x32xf32>
      %445 = arith.mulf %440, %444 : vector<4x32xf32>
      %446 = vector.broadcast %421 : vector<1x32xf32> to vector<4x32xf32>
      %447 = arith.mulf %445, %446 : vector<4x32xf32>
      %448 = vector.broadcast %423 : vector<1x32xf32> to vector<4x32xf32>
      %449 = arith.addf %447, %448 : vector<4x32xf32>
      %450 = arith.truncf %449 : vector<4x32xf32> to vector<4x32xbf16>
      %c0_332 = arith.constant 0 : index
      %c0_333 = arith.constant 0 : index
      %451 = vector.load %arg9[%c0_332, %c0_333] : memref<32x128xbf16, #tpu.memory_space<vmem>>, vector<32x128xbf16>
      %cst_334 = arith.constant dense<0.000000e+00> : vector<4x128xf32>
      %452 = tpu.matmul %450, %451, %cst_334 {dimension_numbers = #tpu.dot_dimension_numbers<[1], [0], [0], [1], [0, 0, 1, 1], [], []>} : vector<4x32xbf16>, vector<32x128xbf16>, vector<4x128xf32> -> vector<4x128xf32>
      %c0_335 = arith.constant 0 : index
      %c0_336 = arith.constant 0 : index
      %453 = vector.load %arg7[%c0_335, %c0_336] : memref<1x128xf32, #tpu.memory_space<vmem>>, vector<1x128xf32>
      %454 = vector.broadcast %453 : vector<1x128xf32> to vector<4x128xf32>
      %455 = arith.addf %452, %454 : vector<4x128xf32>
      %cst_337 = arith.constant 5.000000e-01 : f32
      %456 = vector.broadcast %cst_337 : f32 to vector<4x128xf32>
      %457 = arith.mulf %456, %455 : vector<4x128xf32>
      %cst_338 = arith.constant 0.707106769 : f32
      %458 = vector.broadcast %cst_338 : f32 to vector<4x128xf32>
      %459 = arith.mulf %455, %458 : vector<4x128xf32>
      %460 = math.absf %459 : vector<4x128xf32>
      %cst_339 = arith.constant 0.327591091 : f32
      %461 = vector.broadcast %cst_339 : f32 to vector<4x128xf32>
      %462 = arith.mulf %461, %460 : vector<4x128xf32>
      %cst_340 = arith.constant 1.000000e+00 : f32
      %463 = vector.broadcast %cst_340 : f32 to vector<4x128xf32>
      %464 = arith.addf %463, %462 : vector<4x128xf32>
      %cst_341 = arith.constant 1.000000e+00 : f32
      %465 = vector.broadcast %cst_341 : f32 to vector<4x128xf32>
      %466 = arith.divf %465, %464 : vector<4x128xf32>
      %cst_342 = arith.constant 1.06140542 : f32
      %467 = vector.broadcast %cst_342 : f32 to vector<4x128xf32>
      %468 = arith.mulf %467, %466 : vector<4x128xf32>
      %cst_343 = arith.constant -1.45315206 : f32
      %469 = vector.broadcast %cst_343 : f32 to vector<4x128xf32>
      %470 = arith.addf %468, %469 : vector<4x128xf32>
      %471 = arith.mulf %470, %466 : vector<4x128xf32>
      %cst_344 = arith.constant 1.42141378 : f32
      %472 = vector.broadcast %cst_344 : f32 to vector<4x128xf32>
      %473 = arith.addf %471, %472 : vector<4x128xf32>
      %474 = arith.mulf %473, %466 : vector<4x128xf32>
      %cst_345 = arith.constant -0.284496725 : f32
      %475 = vector.broadcast %cst_345 : f32 to vector<4x128xf32>
      %476 = arith.addf %474, %475 : vector<4x128xf32>
      %477 = arith.mulf %476, %466 : vector<4x128xf32>
      %cst_346 = arith.constant 0.254829586 : f32
      %478 = vector.broadcast %cst_346 : f32 to vector<4x128xf32>
      %479 = arith.addf %477, %478 : vector<4x128xf32>
      %480 = arith.mulf %479, %466 : vector<4x128xf32>
      %cst_347 = arith.constant 0.000000e+00 : f32
      %481 = vector.broadcast %cst_347 : f32 to vector<4x128xf32>
      %482 = arith.subf %481, %460 : vector<4x128xf32>
      %483 = arith.mulf %482, %460 : vector<4x128xf32>
      %484 = math.exp %483 : vector<4x128xf32>
      %485 = arith.mulf %480, %484 : vector<4x128xf32>
      %cst_348 = arith.constant 1.000000e+00 : f32
      %486 = vector.broadcast %cst_348 : f32 to vector<4x128xf32>
      %487 = arith.subf %486, %485 : vector<4x128xf32>
      %cst_349 = arith.constant 0.000000e+00 : f32
      %488 = vector.broadcast %cst_349 : f32 to vector<4x128xf32>
      %489 = arith.cmpf oge, %459, %488 : vector<4x128xf32>
      %cst_350 = arith.constant 0.000000e+00 : f32
      %490 = vector.broadcast %cst_350 : f32 to vector<4x128xf32>
      %491 = arith.subf %490, %487 : vector<4x128xf32>
      %492 = arith.select %489, %487, %491 : vector<4x128xi1>, vector<4x128xf32>
      %cst_351 = arith.constant 1.000000e+00 : f32
      %493 = vector.broadcast %cst_351 : f32 to vector<4x128xf32>
      %494 = arith.addf %493, %492 : vector<4x128xf32>
      %495 = arith.mulf %457, %494 : vector<4x128xf32>
      %496 = arith.truncf %495 : vector<4x128xf32> to vector<4x128xbf16>
      %c0_352 = arith.constant 0 : index
      %c0_353 = arith.constant 0 : index
      %497 = vector.load %arg10[%c0_352, %c0_353] : memref<128x32xbf16, #tpu.memory_space<vmem>>, vector<128x32xbf16>
      %cst_354 = arith.constant dense<0.000000e+00> : vector<4x32xf32>
      %498 = tpu.matmul %496, %497, %cst_354 {dimension_numbers = #tpu.dot_dimension_numbers<[1], [0], [0], [1], [0, 0, 1, 1], [], []>} : vector<4x128xbf16>, vector<128x32xbf16>, vector<4x32xf32> -> vector<4x32xf32>
      %c0_355 = arith.constant 0 : index
      %c0_356 = arith.constant 0 : index
      %499 = vector.load %arg8[%c0_355, %c0_356] : memref<1x32xf32, #tpu.memory_space<vmem>>, vector<1x32xf32>
      %500 = vector.broadcast %499 : vector<1x32xf32> to vector<4x32xf32>
      %501 = arith.addf %498, %500 : vector<4x32xf32>
      %502 = arith.addf %449, %501 : vector<4x32xf32>
      %cst_357 = arith.constant dense<0.000000e+00> : vector<4xf32>
      %503 = vector.multi_reduction <add>, %502, %cst_357 [1] : vector<4x32xf32> to vector<4xf32>
      %504 = vector.shape_cast %503 : vector<4xf32> to vector<4x1xf32>
      %cst_358 = arith.constant 3.200000e+01 : f32
      %505 = vector.broadcast %cst_358 : f32 to vector<4x1xf32>
      %506 = arith.divf %504, %505 : vector<4x1xf32>
      %507 = vector.broadcast %506 : vector<4x1xf32> to vector<4x32xf32>
      %508 = arith.subf %502, %507 : vector<4x32xf32>
      %509 = arith.mulf %508, %508 : vector<4x32xf32>
      %cst_359 = arith.constant dense<0.000000e+00> : vector<4xf32>
      %510 = vector.multi_reduction <add>, %509, %cst_359 [1] : vector<4x32xf32> to vector<4xf32>
      %511 = vector.shape_cast %510 : vector<4xf32> to vector<4x1xf32>
      %cst_360 = arith.constant 3.200000e+01 : f32
      %512 = vector.broadcast %cst_360 : f32 to vector<4x1xf32>
      %513 = arith.divf %511, %512 : vector<4x1xf32>
      %514 = vector.broadcast %506 : vector<4x1xf32> to vector<4x32xf32>
      %515 = arith.subf %502, %514 : vector<4x32xf32>
      %cst_361 = arith.constant 9.99999974E-6 : f32
      %516 = vector.broadcast %cst_361 : f32 to vector<4x1xf32>
      %517 = arith.addf %513, %516 : vector<4x1xf32>
      %518 = math.rsqrt %517 : vector<4x1xf32>
      %519 = vector.broadcast %518 : vector<4x1xf32> to vector<4x32xf32>
      %520 = arith.mulf %515, %519 : vector<4x32xf32>
      %521 = vector.broadcast %425 : vector<1x32xf32> to vector<4x32xf32>
      %522 = arith.mulf %520, %521 : vector<4x32xf32>
      %523 = vector.broadcast %427 : vector<1x32xf32> to vector<4x32xf32>
      %524 = arith.addf %522, %523 : vector<4x32xf32>
      %c1_362 = arith.constant 1 : index
      %c0_363 = arith.constant 0 : index
      %c0_364 = arith.constant 0 : index
      %525 = vector.load %arg62[%c1_362, %c0_363, %c0_364] : memref<2x6x32xf32, #tpu.memory_space<vmem>>, vector<1x6x32xf32>
      %526 = vector.shape_cast %525 : vector<1x6x32xf32> to vector<6x32xf32>
      %527 = arith.truncf %419 : vector<6x32xf32> to vector<6x32xbf16>
      %528 = arith.truncf %524 : vector<4x32xf32> to vector<4x32xbf16>
      %529 = arith.truncf %526 : vector<6x32xf32> to vector<6x32xbf16>
      %c0_365 = arith.constant 0 : index
      %c0_366 = arith.constant 0 : index
      %c0_367 = arith.constant 0 : index
      %530 = vector.load %arg42[%c0_365, %c0_366, %c0_367] : memref<3x32x32xbf16, #tpu.memory_space<vmem>>, vector<1x32x32xbf16>
      %531 = vector.shape_cast %530 : vector<1x32x32xbf16> to vector<32x32xbf16>
      %cst_368 = arith.constant dense<0.000000e+00> : vector<6x32xf32>
      %532 = tpu.matmul %527, %531, %cst_368 {dimension_numbers = #tpu.dot_dimension_numbers<[1], [0], [0], [1], [0, 0, 1, 1], [], []>} : vector<6x32xbf16>, vector<32x32xbf16>, vector<6x32xf32> -> vector<6x32xf32>
      %c0_369 = arith.constant 0 : index
      %c0_370 = arith.constant 0 : index
      %c0_371 = arith.constant 0 : index
      %533 = vector.load %arg40[%c0_369, %c0_370, %c0_371] : memref<3x32x32xbf16, #tpu.memory_space<vmem>>, vector<1x32x32xbf16>
      %534 = vector.shape_cast %533 : vector<1x32x32xbf16> to vector<32x32xbf16>
      %cst_372 = arith.constant dense<0.000000e+00> : vector<6x32xf32>
      %535 = tpu.matmul %529, %534, %cst_372 {dimension_numbers = #tpu.dot_dimension_numbers<[1], [0], [0], [1], [0, 0, 1, 1], [], []>} : vector<6x32xbf16>, vector<32x32xbf16>, vector<6x32xf32> -> vector<6x32xf32>
      %536 = arith.addf %532, %535 : vector<6x32xf32>
      %c0_373 = arith.constant 0 : index
      %c0_374 = arith.constant 0 : index
      %c0_375 = arith.constant 0 : index
      %537 = vector.load %arg36[%c0_373, %c0_374, %c0_375] : memref<3x1x32xf32, #tpu.memory_space<vmem>>, vector<1x1x32xf32>
      %538 = vector.shape_cast %537 : vector<1x1x32xf32> to vector<1x32xf32>
      %539 = vector.broadcast %538 : vector<1x32xf32> to vector<6x32xf32>
      %540 = arith.addf %536, %539 : vector<6x32xf32>
      %c1_376 = arith.constant 1 : index
      %c0_377 = arith.constant 0 : index
      %c0_378 = arith.constant 0 : index
      %541 = vector.load %arg42[%c1_376, %c0_377, %c0_378] : memref<3x32x32xbf16, #tpu.memory_space<vmem>>, vector<1x32x32xbf16>
      %542 = vector.shape_cast %541 : vector<1x32x32xbf16> to vector<32x32xbf16>
      %cst_379 = arith.constant dense<0.000000e+00> : vector<6x32xf32>
      %543 = tpu.matmul %527, %542, %cst_379 {dimension_numbers = #tpu.dot_dimension_numbers<[1], [0], [0], [1], [0, 0, 1, 1], [], []>} : vector<6x32xbf16>, vector<32x32xbf16>, vector<6x32xf32> -> vector<6x32xf32>
      %c1_380 = arith.constant 1 : index
      %c0_381 = arith.constant 0 : index
      %c0_382 = arith.constant 0 : index
      %544 = vector.load %arg40[%c1_380, %c0_381, %c0_382] : memref<3x32x32xbf16, #tpu.memory_space<vmem>>, vector<1x32x32xbf16>
      %545 = vector.shape_cast %544 : vector<1x32x32xbf16> to vector<32x32xbf16>
      %cst_383 = arith.constant dense<0.000000e+00> : vector<6x32xf32>
      %546 = tpu.matmul %529, %545, %cst_383 {dimension_numbers = #tpu.dot_dimension_numbers<[1], [0], [0], [1], [0, 0, 1, 1], [], []>} : vector<6x32xbf16>, vector<32x32xbf16>, vector<6x32xf32> -> vector<6x32xf32>
      %547 = arith.addf %543, %546 : vector<6x32xf32>
      %c1_384 = arith.constant 1 : index
      %c0_385 = arith.constant 0 : index
      %c0_386 = arith.constant 0 : index
      %548 = vector.load %arg36[%c1_384, %c0_385, %c0_386] : memref<3x1x32xf32, #tpu.memory_space<vmem>>, vector<1x1x32xf32>
      %549 = vector.shape_cast %548 : vector<1x1x32xf32> to vector<1x32xf32>
      %550 = vector.broadcast %549 : vector<1x32xf32> to vector<6x32xf32>
      %551 = arith.addf %547, %550 : vector<6x32xf32>
      %c2_387 = arith.constant 2 : index
      %c0_388 = arith.constant 0 : index
      %c0_389 = arith.constant 0 : index
      %552 = vector.load %arg42[%c2_387, %c0_388, %c0_389] : memref<3x32x32xbf16, #tpu.memory_space<vmem>>, vector<1x32x32xbf16>
      %553 = vector.shape_cast %552 : vector<1x32x32xbf16> to vector<32x32xbf16>
      %cst_390 = arith.constant dense<0.000000e+00> : vector<6x32xf32>
      %554 = tpu.matmul %527, %553, %cst_390 {dimension_numbers = #tpu.dot_dimension_numbers<[1], [0], [0], [1], [0, 0, 1, 1], [], []>} : vector<6x32xbf16>, vector<32x32xbf16>, vector<6x32xf32> -> vector<6x32xf32>
      %c2_391 = arith.constant 2 : index
      %c0_392 = arith.constant 0 : index
      %c0_393 = arith.constant 0 : index
      %555 = vector.load %arg40[%c2_391, %c0_392, %c0_393] : memref<3x32x32xbf16, #tpu.memory_space<vmem>>, vector<1x32x32xbf16>
      %556 = vector.shape_cast %555 : vector<1x32x32xbf16> to vector<32x32xbf16>
      %cst_394 = arith.constant dense<0.000000e+00> : vector<6x32xf32>
      %557 = tpu.matmul %529, %556, %cst_394 {dimension_numbers = #tpu.dot_dimension_numbers<[1], [0], [0], [1], [0, 0, 1, 1], [], []>} : vector<6x32xbf16>, vector<32x32xbf16>, vector<6x32xf32> -> vector<6x32xf32>
      %558 = arith.addf %554, %557 : vector<6x32xf32>
      %c2_395 = arith.constant 2 : index
      %c0_396 = arith.constant 0 : index
      %c0_397 = arith.constant 0 : index
      %559 = vector.load %arg36[%c2_395, %c0_396, %c0_397] : memref<3x1x32xf32, #tpu.memory_space<vmem>>, vector<1x1x32xf32>
      %560 = vector.shape_cast %559 : vector<1x1x32xf32> to vector<1x32xf32>
      %561 = vector.broadcast %560 : vector<1x32xf32> to vector<6x32xf32>
      %562 = arith.addf %558, %561 : vector<6x32xf32>
      %563 = arith.negf %562 : vector<6x32xf32>
      %564 = math.exp %563 : vector<6x32xf32>
      %cst_398 = arith.constant 1.000000e+00 : f32
      %565 = vector.broadcast %cst_398 : f32 to vector<6x32xf32>
      %566 = arith.addf %565, %564 : vector<6x32xf32>
      %567 = arith.divf %565, %566 : vector<6x32xf32>
      %568 = arith.truncf %540 : vector<6x32xf32> to vector<6x32xbf16>
      %569 = arith.truncf %551 : vector<6x32xf32> to vector<6x32xbf16>
      %cst_399 = arith.constant 0.000000e+00 : f32
      %570 = vector.broadcast %cst_399 : f32 to vector<6x32xf32>
      %c0_400 = arith.constant 0 : index
      %c0_401 = arith.constant 0 : index
      %c0_402 = arith.constant 0 : index
      %571 = vector.load %arg41[%c0_400, %c0_401, %c0_402] : memref<2x32x4xbf16, #tpu.memory_space<vmem>>, vector<1x32x4xbf16>
      %572 = vector.shape_cast %571 : vector<1x32x4xbf16> to vector<32x4xbf16>
      %cst_403 = arith.constant dense<0.000000e+00> : vector<6x4xf32>
      %573 = tpu.matmul %568, %572, %cst_403 {dimension_numbers = #tpu.dot_dimension_numbers<[1], [0], [0], [1], [0, 0, 1, 1], [], []>} : vector<6x32xbf16>, vector<32x4xbf16>, vector<6x4xf32> -> vector<6x4xf32>
      %c0_404 = arith.constant 0 : index
      %c0_405 = arith.constant 0 : index
      %c0_406 = arith.constant 0 : index
      %574 = vector.load %arg37[%c0_404, %c0_405, %c0_406] : memref<2x1x4xf32, #tpu.memory_space<vmem>>, vector<1x1x4xf32>
      %575 = vector.shape_cast %574 : vector<1x1x4xf32> to vector<1x4xf32>
      %576 = vector.broadcast %575 : vector<1x4xf32> to vector<6x4xf32>
      %577 = arith.addf %573, %576 : vector<6x4xf32>
      %578 = math.tanh %577 : vector<6x4xf32>
      %c0_407 = arith.constant 0 : index
      %c0_408 = arith.constant 0 : index
      %c0_409 = arith.constant 0 : index
      %579 = vector.load %arg39[%c0_407, %c0_408, %c0_409] : memref<2x32x4xbf16, #tpu.memory_space<vmem>>, vector<1x32x4xbf16>
      %580 = vector.shape_cast %579 : vector<1x32x4xbf16> to vector<32x4xbf16>
      %cst_410 = arith.constant dense<0.000000e+00> : vector<6x4xf32>
      %581 = tpu.matmul %569, %580, %cst_410 {dimension_numbers = #tpu.dot_dimension_numbers<[1], [0], [0], [1], [0, 0, 1, 1], [], []>} : vector<6x32xbf16>, vector<32x4xbf16>, vector<6x4xf32> -> vector<6x4xf32>
      %c0_411 = arith.constant 0 : index
      %c0_412 = arith.constant 0 : index
      %c0_413 = arith.constant 0 : index
      %582 = vector.load %arg35[%c0_411, %c0_412, %c0_413] : memref<2x1x4xf32, #tpu.memory_space<vmem>>, vector<1x1x4xf32>
      %583 = vector.shape_cast %582 : vector<1x1x4xf32> to vector<1x4xf32>
      %584 = vector.broadcast %583 : vector<1x4xf32> to vector<6x4xf32>
      %585 = arith.addf %581, %584 : vector<6x4xf32>
      %586 = arith.negf %585 : vector<6x4xf32>
      %587 = math.exp %586 : vector<6x4xf32>
      %cst_414 = arith.constant 1.000000e+00 : f32
      %588 = vector.broadcast %cst_414 : f32 to vector<6x4xf32>
      %589 = arith.addf %588, %587 : vector<6x4xf32>
      %590 = arith.divf %588, %589 : vector<6x4xf32>
      %c0_415 = arith.constant 0 : index
      %c0_416 = arith.constant 0 : index
      %c0_417 = arith.constant 0 : index
      %591 = vector.load %arg45[%c0_415, %c0_416, %c0_417] : memref<2x32x16xbf16, #tpu.memory_space<vmem>>, vector<1x32x16xbf16>
      %592 = vector.shape_cast %591 : vector<1x32x16xbf16> to vector<32x16xbf16>
      %cst_418 = arith.constant dense<0.000000e+00> : vector<6x16xf32>
      %593 = tpu.matmul %527, %592, %cst_418 {dimension_numbers = #tpu.dot_dimension_numbers<[1], [0], [0], [1], [0, 0, 1, 1], [], []>} : vector<6x32xbf16>, vector<32x16xbf16>, vector<6x16xf32> -> vector<6x16xf32>
      %594 = arith.truncf %593 : vector<6x16xf32> to vector<6x16xbf16>
      %c0_419 = arith.constant 0 : index
      %c0_420 = arith.constant 0 : index
      %c0_421 = arith.constant 0 : index
      %595 = vector.load %arg43[%c0_419, %c0_420, %c0_421] : memref<2x32x16xbf16, #tpu.memory_space<vmem>>, vector<1x32x16xbf16>
      %596 = vector.shape_cast %595 : vector<1x32x16xbf16> to vector<32x16xbf16>
      %cst_422 = arith.constant dense<0.000000e+00> : vector<4x16xf32>
      %597 = tpu.matmul %528, %596, %cst_422 {dimension_numbers = #tpu.dot_dimension_numbers<[1], [0], [0], [1], [0, 0, 1, 1], [], []>} : vector<4x32xbf16>, vector<32x16xbf16>, vector<4x16xf32> -> vector<4x16xf32>
      %598 = arith.truncf %597 : vector<4x16xf32> to vector<4x16xbf16>
      %c0_423 = arith.constant 0 : index
      %c0_424 = arith.constant 0 : index
      %c0_425 = arith.constant 0 : index
      %599 = vector.load %arg46[%c0_423, %c0_424, %c0_425] : memref<2x32x16xbf16, #tpu.memory_space<vmem>>, vector<1x32x16xbf16>
      %600 = vector.shape_cast %599 : vector<1x32x16xbf16> to vector<32x16xbf16>
      %cst_426 = arith.constant dense<0.000000e+00> : vector<4x16xf32>
      %601 = tpu.matmul %528, %600, %cst_426 {dimension_numbers = #tpu.dot_dimension_numbers<[1], [0], [0], [1], [0, 0, 1, 1], [], []>} : vector<4x32xbf16>, vector<32x16xbf16>, vector<4x16xf32> -> vector<4x16xf32>
      %602 = arith.truncf %601 : vector<4x16xf32> to vector<4x16xbf16>
      %cst_427 = arith.constant dense<0.000000e+00> : vector<6x4xf32>
      %603 = tpu.matmul %594, %598, %cst_427 {dimension_numbers = #tpu.dot_dimension_numbers<[1], [1], [0], [0], [0, 0, 1, 0], [], []>} : vector<6x16xbf16>, vector<4x16xbf16>, vector<6x4xf32> -> vector<6x4xf32>
      %c1_428 = arith.constant 1 : index
      %c0_429 = arith.constant 0 : index
      %c0_430 = arith.constant 0 : index
      %c0_431 = arith.constant 0 : index
      %604 = vector.load %arg63[%c1_428, %c0_429, %c0_430, %c0_431] : memref<2x2x6x4xf32, #tpu.memory_space<vmem>>, vector<1x1x6x4xf32>
      %605 = vector.shape_cast %604 : vector<1x1x6x4xf32> to vector<6x4xf32>
      %606 = arith.mulf %605, %590 : vector<6x4xf32>
      %607 = arith.mulf %603, %578 : vector<6x4xf32>
      %608 = arith.addf %606, %607 : vector<6x4xf32>
      %c1_432 = arith.constant 1 : index
      %c0_433 = arith.constant 0 : index
      %c0_434 = arith.constant 0 : index
      %c0_435 = arith.constant 0 : index
      %609 = vector.load %arg63[%c1_432, %c0_433, %c0_434, %c0_435] : memref<2x2x6x4xf32, #tpu.memory_space<vmem>>, vector<1x1x6x4xf32>
      %610 = vector.shape_cast %609 : vector<1x1x6x4xf32> to vector<6x4xf32>
      %611 = vector.shape_cast %608 : vector<6x4xf32> to vector<1x1x6x4xf32>
      tpu.vector_store %arg63[%c1_432, %c0_433, %c0_434, %c0_435], %611 {strides = array<i32>} : memref<2x2x6x4xf32, #tpu.memory_space<vmem>>, vector<1x1x6x4xf32>,
      %612 = arith.truncf %608 : vector<6x4xf32> to vector<6x4xbf16>
      %cst_436 = arith.constant dense<0.000000e+00> : vector<6x16xf32>
      %613 = tpu.matmul %612, %602, %cst_436 {dimension_numbers = #tpu.dot_dimension_numbers<[1], [0], [0], [1], [0, 0, 1, 1], [], []>} : vector<6x4xbf16>, vector<4x16xbf16>, vector<6x16xf32> -> vector<6x16xf32>
      %614 = arith.truncf %613 : vector<6x16xf32> to vector<6x16xbf16>
      %c0_437 = arith.constant 0 : index
      %c0_438 = arith.constant 0 : index
      %c0_439 = arith.constant 0 : index
      %615 = vector.load %arg44[%c0_437, %c0_438, %c0_439] : memref<2x16x32xbf16, #tpu.memory_space<vmem>>, vector<1x16x32xbf16>
      %616 = vector.shape_cast %615 : vector<1x16x32xbf16> to vector<16x32xbf16>
      %cst_440 = arith.constant dense<0.000000e+00> : vector<6x32xf32>
      %617 = tpu.matmul %614, %616, %cst_440 {dimension_numbers = #tpu.dot_dimension_numbers<[1], [0], [0], [1], [0, 0, 1, 1], [], []>} : vector<6x16xbf16>, vector<16x32xbf16>, vector<6x32xf32> -> vector<6x32xf32>
      %618 = arith.addf %570, %617 : vector<6x32xf32>
      %c1_441 = arith.constant 1 : index
      %c0_442 = arith.constant 0 : index
      %c0_443 = arith.constant 0 : index
      %619 = vector.load %arg41[%c1_441, %c0_442, %c0_443] : memref<2x32x4xbf16, #tpu.memory_space<vmem>>, vector<1x32x4xbf16>
      %620 = vector.shape_cast %619 : vector<1x32x4xbf16> to vector<32x4xbf16>
      %cst_444 = arith.constant dense<0.000000e+00> : vector<6x4xf32>
      %621 = tpu.matmul %568, %620, %cst_444 {dimension_numbers = #tpu.dot_dimension_numbers<[1], [0], [0], [1], [0, 0, 1, 1], [], []>} : vector<6x32xbf16>, vector<32x4xbf16>, vector<6x4xf32> -> vector<6x4xf32>
      %c1_445 = arith.constant 1 : index
      %c0_446 = arith.constant 0 : index
      %c0_447 = arith.constant 0 : index
      %622 = vector.load %arg37[%c1_445, %c0_446, %c0_447] : memref<2x1x4xf32, #tpu.memory_space<vmem>>, vector<1x1x4xf32>
      %623 = vector.shape_cast %622 : vector<1x1x4xf32> to vector<1x4xf32>
      %624 = vector.broadcast %623 : vector<1x4xf32> to vector<6x4xf32>
      %625 = arith.addf %621, %624 : vector<6x4xf32>
      %626 = math.tanh %625 : vector<6x4xf32>
      %c1_448 = arith.constant 1 : index
      %c0_449 = arith.constant 0 : index
      %c0_450 = arith.constant 0 : index
      %627 = vector.load %arg39[%c1_448, %c0_449, %c0_450] : memref<2x32x4xbf16, #tpu.memory_space<vmem>>, vector<1x32x4xbf16>
      %628 = vector.shape_cast %627 : vector<1x32x4xbf16> to vector<32x4xbf16>
      %cst_451 = arith.constant dense<0.000000e+00> : vector<6x4xf32>
      %629 = tpu.matmul %569, %628, %cst_451 {dimension_numbers = #tpu.dot_dimension_numbers<[1], [0], [0], [1], [0, 0, 1, 1], [], []>} : vector<6x32xbf16>, vector<32x4xbf16>, vector<6x4xf32> -> vector<6x4xf32>
      %c1_452 = arith.constant 1 : index
      %c0_453 = arith.constant 0 : index
      %c0_454 = arith.constant 0 : index
      %630 = vector.load %arg35[%c1_452, %c0_453, %c0_454] : memref<2x1x4xf32, #tpu.memory_space<vmem>>, vector<1x1x4xf32>
      %631 = vector.shape_cast %630 : vector<1x1x4xf32> to vector<1x4xf32>
      %632 = vector.broadcast %631 : vector<1x4xf32> to vector<6x4xf32>
      %633 = arith.addf %629, %632 : vector<6x4xf32>
      %634 = arith.negf %633 : vector<6x4xf32>
      %635 = math.exp %634 : vector<6x4xf32>
      %cst_455 = arith.constant 1.000000e+00 : f32
      %636 = vector.broadcast %cst_455 : f32 to vector<6x4xf32>
      %637 = arith.addf %636, %635 : vector<6x4xf32>
      %638 = arith.divf %636, %637 : vector<6x4xf32>
      %c1_456 = arith.constant 1 : index
      %c0_457 = arith.constant 0 : index
      %c0_458 = arith.constant 0 : index
      %639 = vector.load %arg45[%c1_456, %c0_457, %c0_458] : memref<2x32x16xbf16, #tpu.memory_space<vmem>>, vector<1x32x16xbf16>
      %640 = vector.shape_cast %639 : vector<1x32x16xbf16> to vector<32x16xbf16>
      %cst_459 = arith.constant dense<0.000000e+00> : vector<6x16xf32>
      %641 = tpu.matmul %527, %640, %cst_459 {dimension_numbers = #tpu.dot_dimension_numbers<[1], [0], [0], [1], [0, 0, 1, 1], [], []>} : vector<6x32xbf16>, vector<32x16xbf16>, vector<6x16xf32> -> vector<6x16xf32>
      %642 = arith.truncf %641 : vector<6x16xf32> to vector<6x16xbf16>
      %c1_460 = arith.constant 1 : index
      %c0_461 = arith.constant 0 : index
      %c0_462 = arith.constant 0 : index
      %643 = vector.load %arg43[%c1_460, %c0_461, %c0_462] : memref<2x32x16xbf16, #tpu.memory_space<vmem>>, vector<1x32x16xbf16>
      %644 = vector.shape_cast %643 : vector<1x32x16xbf16> to vector<32x16xbf16>
      %cst_463 = arith.constant dense<0.000000e+00> : vector<4x16xf32>
      %645 = tpu.matmul %528, %644, %cst_463 {dimension_numbers = #tpu.dot_dimension_numbers<[1], [0], [0], [1], [0, 0, 1, 1], [], []>} : vector<4x32xbf16>, vector<32x16xbf16>, vector<4x16xf32> -> vector<4x16xf32>
      %646 = arith.truncf %645 : vector<4x16xf32> to vector<4x16xbf16>
      %c1_464 = arith.constant 1 : index
      %c0_465 = arith.constant 0 : index
      %c0_466 = arith.constant 0 : index
      %647 = vector.load %arg46[%c1_464, %c0_465, %c0_466] : memref<2x32x16xbf16, #tpu.memory_space<vmem>>, vector<1x32x16xbf16>
      %648 = vector.shape_cast %647 : vector<1x32x16xbf16> to vector<32x16xbf16>
      %cst_467 = arith.constant dense<0.000000e+00> : vector<4x16xf32>
      %649 = tpu.matmul %528, %648, %cst_467 {dimension_numbers = #tpu.dot_dimension_numbers<[1], [0], [0], [1], [0, 0, 1, 1], [], []>} : vector<4x32xbf16>, vector<32x16xbf16>, vector<4x16xf32> -> vector<4x16xf32>
      %650 = arith.truncf %649 : vector<4x16xf32> to vector<4x16xbf16>
      %cst_468 = arith.constant dense<0.000000e+00> : vector<6x4xf32>
      %651 = tpu.matmul %642, %646, %cst_468 {dimension_numbers = #tpu.dot_dimension_numbers<[1], [1], [0], [0], [0, 0, 1, 0], [], []>} : vector<6x16xbf16>, vector<4x16xbf16>, vector<6x4xf32> -> vector<6x4xf32>
      %c1_469 = arith.constant 1 : index
      %c1_470 = arith.constant 1 : index
      %c0_471 = arith.constant 0 : index
      %c0_472 = arith.constant 0 : index
      %652 = vector.load %arg63[%c1_469, %c1_470, %c0_471, %c0_472] : memref<2x2x6x4xf32, #tpu.memory_space<vmem>>, vector<1x1x6x4xf32>
      %653 = vector.shape_cast %652 : vector<1x1x6x4xf32> to vector<6x4xf32>
      %654 = arith.mulf %653, %638 : vector<6x4xf32>
      %655 = arith.mulf %651, %626 : vector<6x4xf32>
      %656 = arith.addf %654, %655 : vector<6x4xf32>
      %c1_473 = arith.constant 1 : index
      %c1_474 = arith.constant 1 : index
      %c0_475 = arith.constant 0 : index
      %c0_476 = arith.constant 0 : index
      %657 = vector.load %arg63[%c1_473, %c1_474, %c0_475, %c0_476] : memref<2x2x6x4xf32, #tpu.memory_space<vmem>>, vector<1x1x6x4xf32>
      %658 = vector.shape_cast %657 : vector<1x1x6x4xf32> to vector<6x4xf32>
      %659 = vector.shape_cast %656 : vector<6x4xf32> to vector<1x1x6x4xf32>
      tpu.vector_store %arg63[%c1_473, %c1_474, %c0_475, %c0_476], %659 {strides = array<i32>} : memref<2x2x6x4xf32, #tpu.memory_space<vmem>>, vector<1x1x6x4xf32>,
      %660 = arith.truncf %656 : vector<6x4xf32> to vector<6x4xbf16>
      %cst_477 = arith.constant dense<0.000000e+00> : vector<6x16xf32>
      %661 = tpu.matmul %660, %650, %cst_477 {dimension_numbers = #tpu.dot_dimension_numbers<[1], [0], [0], [1], [0, 0, 1, 1], [], []>} : vector<6x4xbf16>, vector<4x16xbf16>, vector<6x16xf32> -> vector<6x16xf32>
      %662 = arith.truncf %661 : vector<6x16xf32> to vector<6x16xbf16>
      %c1_478 = arith.constant 1 : index
      %c0_479 = arith.constant 0 : index
      %c0_480 = arith.constant 0 : index
      %663 = vector.load %arg44[%c1_478, %c0_479, %c0_480] : memref<2x16x32xbf16, #tpu.memory_space<vmem>>, vector<1x16x32xbf16>
      %664 = vector.shape_cast %663 : vector<1x16x32xbf16> to vector<16x32xbf16>
      %cst_481 = arith.constant dense<0.000000e+00> : vector<6x32xf32>
      %665 = tpu.matmul %662, %664, %cst_481 {dimension_numbers = #tpu.dot_dimension_numbers<[1], [0], [0], [1], [0, 0, 1, 1], [], []>} : vector<6x16xbf16>, vector<16x32xbf16>, vector<6x32xf32> -> vector<6x32xf32>
      %666 = arith.addf %618, %665 : vector<6x32xf32>
      %c0_482 = arith.constant 0 : index
      %c0_483 = arith.constant 0 : index
      %667 = vector.load %arg38[%c0_482, %c0_483] : memref<1x32xf32, #tpu.memory_space<vmem>>, vector<1x32xf32>
      %668 = vector.broadcast %667 : vector<1x32xf32> to vector<6x32xf32>
      %669 = arith.addf %666, %668 : vector<6x32xf32>
      %670 = arith.mulf %567, %669 : vector<6x32xf32>
      %c1_484 = arith.constant 1 : index
      %c0_485 = arith.constant 0 : index
      %c0_486 = arith.constant 0 : index
      %671 = vector.load %arg64[%c1_484, %c0_485, %c0_486] : memref<2x4x32xf32, #tpu.memory_space<vmem>>, vector<1x4x32xf32>
      %672 = vector.shape_cast %671 : vector<1x4x32xf32> to vector<4x32xf32>
      %673 = arith.truncf %524 : vector<4x32xf32> to vector<4x32xbf16>
      %674 = arith.truncf %419 : vector<6x32xf32> to vector<6x32xbf16>
      %675 = arith.truncf %672 : vector<4x32xf32> to vector<4x32xbf16>
      %c0_487 = arith.constant 0 : index
      %c0_488 = arith.constant 0 : index
      %c0_489 = arith.constant 0 : index
      %676 = vector.load %arg54[%c0_487, %c0_488, %c0_489] : memref<3x32x32xbf16, #tpu.memory_space<vmem>>, vector<1x32x32xbf16>
      %677 = vector.shape_cast %676 : vector<1x32x32xbf16> to vector<32x32xbf16>
      %cst_490 = arith.constant dense<0.000000e+00> : vector<4x32xf32>
      %678 = tpu.matmul %673, %677, %cst_490 {dimension_numbers = #tpu.dot_dimension_numbers<[1], [0], [0], [1], [0, 0, 1, 1], [], []>} : vector<4x32xbf16>, vector<32x32xbf16>, vector<4x32xf32> -> vector<4x32xf32>
      %c0_491 = arith.constant 0 : index
      %c0_492 = arith.constant 0 : index
      %c0_493 = arith.constant 0 : index
      %679 = vector.load %arg52[%c0_491, %c0_492, %c0_493] : memref<3x32x32xbf16, #tpu.memory_space<vmem>>, vector<1x32x32xbf16>
      %680 = vector.shape_cast %679 : vector<1x32x32xbf16> to vector<32x32xbf16>
      %cst_494 = arith.constant dense<0.000000e+00> : vector<4x32xf32>
      %681 = tpu.matmul %675, %680, %cst_494 {dimension_numbers = #tpu.dot_dimension_numbers<[1], [0], [0], [1], [0, 0, 1, 1], [], []>} : vector<4x32xbf16>, vector<32x32xbf16>, vector<4x32xf32> -> vector<4x32xf32>
      %682 = arith.addf %678, %681 : vector<4x32xf32>
      %c0_495 = arith.constant 0 : index
      %c0_496 = arith.constant 0 : index
      %c0_497 = arith.constant 0 : index
      %683 = vector.load %arg48[%c0_495, %c0_496, %c0_497] : memref<3x1x32xf32, #tpu.memory_space<vmem>>, vector<1x1x32xf32>
      %684 = vector.shape_cast %683 : vector<1x1x32xf32> to vector<1x32xf32>
      %685 = vector.broadcast %684 : vector<1x32xf32> to vector<4x32xf32>
      %686 = arith.addf %682, %685 : vector<4x32xf32>
      %c1_498 = arith.constant 1 : index
      %c0_499 = arith.constant 0 : index
      %c0_500 = arith.constant 0 : index
      %687 = vector.load %arg54[%c1_498, %c0_499, %c0_500] : memref<3x32x32xbf16, #tpu.memory_space<vmem>>, vector<1x32x32xbf16>
      %688 = vector.shape_cast %687 : vector<1x32x32xbf16> to vector<32x32xbf16>
      %cst_501 = arith.constant dense<0.000000e+00> : vector<4x32xf32>
      %689 = tpu.matmul %673, %688, %cst_501 {dimension_numbers = #tpu.dot_dimension_numbers<[1], [0], [0], [1], [0, 0, 1, 1], [], []>} : vector<4x32xbf16>, vector<32x32xbf16>, vector<4x32xf32> -> vector<4x32xf32>
      %c1_502 = arith.constant 1 : index
      %c0_503 = arith.constant 0 : index
      %c0_504 = arith.constant 0 : index
      %690 = vector.load %arg52[%c1_502, %c0_503, %c0_504] : memref<3x32x32xbf16, #tpu.memory_space<vmem>>, vector<1x32x32xbf16>
      %691 = vector.shape_cast %690 : vector<1x32x32xbf16> to vector<32x32xbf16>
      %cst_505 = arith.constant dense<0.000000e+00> : vector<4x32xf32>
      %692 = tpu.matmul %675, %691, %cst_505 {dimension_numbers = #tpu.dot_dimension_numbers<[1], [0], [0], [1], [0, 0, 1, 1], [], []>} : vector<4x32xbf16>, vector<32x32xbf16>, vector<4x32xf32> -> vector<4x32xf32>
      %693 = arith.addf %689, %692 : vector<4x32xf32>
      %c1_506 = arith.constant 1 : index
      %c0_507 = arith.constant 0 : index
      %c0_508 = arith.constant 0 : index
      %694 = vector.load %arg48[%c1_506, %c0_507, %c0_508] : memref<3x1x32xf32, #tpu.memory_space<vmem>>, vector<1x1x32xf32>
      %695 = vector.shape_cast %694 : vector<1x1x32xf32> to vector<1x32xf32>
      %696 = vector.broadcast %695 : vector<1x32xf32> to vector<4x32xf32>
      %697 = arith.addf %693, %696 : vector<4x32xf32>
      %c2_509 = arith.constant 2 : index
      %c0_510 = arith.constant 0 : index
      %c0_511 = arith.constant 0 : index
      %698 = vector.load %arg54[%c2_509, %c0_510, %c0_511] : memref<3x32x32xbf16, #tpu.memory_space<vmem>>, vector<1x32x32xbf16>
      %699 = vector.shape_cast %698 : vector<1x32x32xbf16> to vector<32x32xbf16>
      %cst_512 = arith.constant dense<0.000000e+00> : vector<4x32xf32>
      %700 = tpu.matmul %673, %699, %cst_512 {dimension_numbers = #tpu.dot_dimension_numbers<[1], [0], [0], [1], [0, 0, 1, 1], [], []>} : vector<4x32xbf16>, vector<32x32xbf16>, vector<4x32xf32> -> vector<4x32xf32>
      %c2_513 = arith.constant 2 : index
      %c0_514 = arith.constant 0 : index
      %c0_515 = arith.constant 0 : index
      %701 = vector.load %arg52[%c2_513, %c0_514, %c0_515] : memref<3x32x32xbf16, #tpu.memory_space<vmem>>, vector<1x32x32xbf16>
      %702 = vector.shape_cast %701 : vector<1x32x32xbf16> to vector<32x32xbf16>
      %cst_516 = arith.constant dense<0.000000e+00> : vector<4x32xf32>
      %703 = tpu.matmul %675, %702, %cst_516 {dimension_numbers = #tpu.dot_dimension_numbers<[1], [0], [0], [1], [0, 0, 1, 1], [], []>} : vector<4x32xbf16>, vector<32x32xbf16>, vector<4x32xf32> -> vector<4x32xf32>
      %704 = arith.addf %700, %703 : vector<4x32xf32>
      %c2_517 = arith.constant 2 : index
      %c0_518 = arith.constant 0 : index
      %c0_519 = arith.constant 0 : index
      %705 = vector.load %arg48[%c2_517, %c0_518, %c0_519] : memref<3x1x32xf32, #tpu.memory_space<vmem>>, vector<1x1x32xf32>
      %706 = vector.shape_cast %705 : vector<1x1x32xf32> to vector<1x32xf32>
      %707 = vector.broadcast %706 : vector<1x32xf32> to vector<4x32xf32>
      %708 = arith.addf %704, %707 : vector<4x32xf32>
      %709 = arith.negf %708 : vector<4x32xf32>
      %710 = math.exp %709 : vector<4x32xf32>
      %cst_520 = arith.constant 1.000000e+00 : f32
      %711 = vector.broadcast %cst_520 : f32 to vector<4x32xf32>
      %712 = arith.addf %711, %710 : vector<4x32xf32>
      %713 = arith.divf %711, %712 : vector<4x32xf32>
      %714 = arith.truncf %686 : vector<4x32xf32> to vector<4x32xbf16>
      %715 = arith.truncf %697 : vector<4x32xf32> to vector<4x32xbf16>
      %cst_521 = arith.constant 0.000000e+00 : f32
      %716 = vector.broadcast %cst_521 : f32 to vector<4x32xf32>
      %c0_522 = arith.constant 0 : index
      %c0_523 = arith.constant 0 : index
      %c0_524 = arith.constant 0 : index
      %717 = vector.load %arg53[%c0_522, %c0_523, %c0_524] : memref<2x32x6xbf16, #tpu.memory_space<vmem>>, vector<1x32x6xbf16>
      %718 = vector.shape_cast %717 : vector<1x32x6xbf16> to vector<32x6xbf16>
      %cst_525 = arith.constant dense<0.000000e+00> : vector<4x6xf32>
      %719 = tpu.matmul %714, %718, %cst_525 {dimension_numbers = #tpu.dot_dimension_numbers<[1], [0], [0], [1], [0, 0, 1, 1], [], []>} : vector<4x32xbf16>, vector<32x6xbf16>, vector<4x6xf32> -> vector<4x6xf32>
      %c0_526 = arith.constant 0 : index
      %c0_527 = arith.constant 0 : index
      %c0_528 = arith.constant 0 : index
      %720 = vector.load %arg49[%c0_526, %c0_527, %c0_528] : memref<2x1x6xf32, #tpu.memory_space<vmem>>, vector<1x1x6xf32>
      %721 = vector.shape_cast %720 : vector<1x1x6xf32> to vector<1x6xf32>
      %722 = vector.broadcast %721 : vector<1x6xf32> to vector<4x6xf32>
      %723 = arith.addf %719, %722 : vector<4x6xf32>
      %724 = math.tanh %723 : vector<4x6xf32>
      %c0_529 = arith.constant 0 : index
      %c0_530 = arith.constant 0 : index
      %c0_531 = arith.constant 0 : index
      %725 = vector.load %arg51[%c0_529, %c0_530, %c0_531] : memref<2x32x6xbf16, #tpu.memory_space<vmem>>, vector<1x32x6xbf16>
      %726 = vector.shape_cast %725 : vector<1x32x6xbf16> to vector<32x6xbf16>
      %cst_532 = arith.constant dense<0.000000e+00> : vector<4x6xf32>
      %727 = tpu.matmul %715, %726, %cst_532 {dimension_numbers = #tpu.dot_dimension_numbers<[1], [0], [0], [1], [0, 0, 1, 1], [], []>} : vector<4x32xbf16>, vector<32x6xbf16>, vector<4x6xf32> -> vector<4x6xf32>
      %c0_533 = arith.constant 0 : index
      %c0_534 = arith.constant 0 : index
      %c0_535 = arith.constant 0 : index
      %728 = vector.load %arg47[%c0_533, %c0_534, %c0_535] : memref<2x1x6xf32, #tpu.memory_space<vmem>>, vector<1x1x6xf32>
      %729 = vector.shape_cast %728 : vector<1x1x6xf32> to vector<1x6xf32>
      %730 = vector.broadcast %729 : vector<1x6xf32> to vector<4x6xf32>
      %731 = arith.addf %727, %730 : vector<4x6xf32>
      %732 = arith.negf %731 : vector<4x6xf32>
      %733 = math.exp %732 : vector<4x6xf32>
      %cst_536 = arith.constant 1.000000e+00 : f32
      %734 = vector.broadcast %cst_536 : f32 to vector<4x6xf32>
      %735 = arith.addf %734, %733 : vector<4x6xf32>
      %736 = arith.divf %734, %735 : vector<4x6xf32>
      %c0_537 = arith.constant 0 : index
      %c0_538 = arith.constant 0 : index
      %c0_539 = arith.constant 0 : index
      %737 = vector.load %arg57[%c0_537, %c0_538, %c0_539] : memref<2x32x16xbf16, #tpu.memory_space<vmem>>, vector<1x32x16xbf16>
      %738 = vector.shape_cast %737 : vector<1x32x16xbf16> to vector<32x16xbf16>
      %cst_540 = arith.constant dense<0.000000e+00> : vector<4x16xf32>
      %739 = tpu.matmul %673, %738, %cst_540 {dimension_numbers = #tpu.dot_dimension_numbers<[1], [0], [0], [1], [0, 0, 1, 1], [], []>} : vector<4x32xbf16>, vector<32x16xbf16>, vector<4x16xf32> -> vector<4x16xf32>
      %740 = arith.truncf %739 : vector<4x16xf32> to vector<4x16xbf16>
      %c0_541 = arith.constant 0 : index
      %c0_542 = arith.constant 0 : index
      %c0_543 = arith.constant 0 : index
      %741 = vector.load %arg55[%c0_541, %c0_542, %c0_543] : memref<2x32x16xbf16, #tpu.memory_space<vmem>>, vector<1x32x16xbf16>
      %742 = vector.shape_cast %741 : vector<1x32x16xbf16> to vector<32x16xbf16>
      %cst_544 = arith.constant dense<0.000000e+00> : vector<6x16xf32>
      %743 = tpu.matmul %674, %742, %cst_544 {dimension_numbers = #tpu.dot_dimension_numbers<[1], [0], [0], [1], [0, 0, 1, 1], [], []>} : vector<6x32xbf16>, vector<32x16xbf16>, vector<6x16xf32> -> vector<6x16xf32>
      %744 = arith.truncf %743 : vector<6x16xf32> to vector<6x16xbf16>
      %c0_545 = arith.constant 0 : index
      %c0_546 = arith.constant 0 : index
      %c0_547 = arith.constant 0 : index
      %745 = vector.load %arg58[%c0_545, %c0_546, %c0_547] : memref<2x32x16xbf16, #tpu.memory_space<vmem>>, vector<1x32x16xbf16>
      %746 = vector.shape_cast %745 : vector<1x32x16xbf16> to vector<32x16xbf16>
      %cst_548 = arith.constant dense<0.000000e+00> : vector<6x16xf32>
      %747 = tpu.matmul %674, %746, %cst_548 {dimension_numbers = #tpu.dot_dimension_numbers<[1], [0], [0], [1], [0, 0, 1, 1], [], []>} : vector<6x32xbf16>, vector<32x16xbf16>, vector<6x16xf32> -> vector<6x16xf32>
      %748 = arith.truncf %747 : vector<6x16xf32> to vector<6x16xbf16>
      %cst_549 = arith.constant dense<0.000000e+00> : vector<4x6xf32>
      %749 = tpu.matmul %740, %744, %cst_549 {dimension_numbers = #tpu.dot_dimension_numbers<[1], [1], [0], [0], [0, 0, 1, 0], [], []>} : vector<4x16xbf16>, vector<6x16xbf16>, vector<4x6xf32> -> vector<4x6xf32>
      %c1_550 = arith.constant 1 : index
      %c0_551 = arith.constant 0 : index
      %c0_552 = arith.constant 0 : index
      %c0_553 = arith.constant 0 : index
      %750 = vector.load %arg65[%c1_550, %c0_551, %c0_552, %c0_553] : memref<2x2x4x6xf32, #tpu.memory_space<vmem>>, vector<1x1x4x6xf32>
      %751 = vector.shape_cast %750 : vector<1x1x4x6xf32> to vector<4x6xf32>
      %752 = arith.mulf %751, %736 : vector<4x6xf32>
      %753 = arith.mulf %749, %724 : vector<4x6xf32>
      %754 = arith.addf %752, %753 : vector<4x6xf32>
      %c1_554 = arith.constant 1 : index
      %c0_555 = arith.constant 0 : index
      %c0_556 = arith.constant 0 : index
      %c0_557 = arith.constant 0 : index
      %755 = vector.load %arg65[%c1_554, %c0_555, %c0_556, %c0_557] : memref<2x2x4x6xf32, #tpu.memory_space<vmem>>, vector<1x1x4x6xf32>
      %756 = vector.shape_cast %755 : vector<1x1x4x6xf32> to vector<4x6xf32>
      %757 = vector.shape_cast %754 : vector<4x6xf32> to vector<1x1x4x6xf32>
      tpu.vector_store %arg65[%c1_554, %c0_555, %c0_556, %c0_557], %757 {strides = array<i32>} : memref<2x2x4x6xf32, #tpu.memory_space<vmem>>, vector<1x1x4x6xf32>,
      %758 = arith.truncf %754 : vector<4x6xf32> to vector<4x6xbf16>
      %cst_558 = arith.constant dense<0.000000e+00> : vector<4x16xf32>
      %759 = tpu.matmul %758, %748, %cst_558 {dimension_numbers = #tpu.dot_dimension_numbers<[1], [0], [0], [1], [0, 0, 1, 1], [], []>} : vector<4x6xbf16>, vector<6x16xbf16>, vector<4x16xf32> -> vector<4x16xf32>
      %760 = arith.truncf %759 : vector<4x16xf32> to vector<4x16xbf16>
      %c0_559 = arith.constant 0 : index
      %c0_560 = arith.constant 0 : index
      %c0_561 = arith.constant 0 : index
      %761 = vector.load %arg56[%c0_559, %c0_560, %c0_561] : memref<2x16x32xbf16, #tpu.memory_space<vmem>>, vector<1x16x32xbf16>
      %762 = vector.shape_cast %761 : vector<1x16x32xbf16> to vector<16x32xbf16>
      %cst_562 = arith.constant dense<0.000000e+00> : vector<4x32xf32>
      %763 = tpu.matmul %760, %762, %cst_562 {dimension_numbers = #tpu.dot_dimension_numbers<[1], [0], [0], [1], [0, 0, 1, 1], [], []>} : vector<4x16xbf16>, vector<16x32xbf16>, vector<4x32xf32> -> vector<4x32xf32>
      %764 = arith.addf %716, %763 : vector<4x32xf32>
      %c1_563 = arith.constant 1 : index
      %c0_564 = arith.constant 0 : index
      %c0_565 = arith.constant 0 : index
      %765 = vector.load %arg53[%c1_563, %c0_564, %c0_565] : memref<2x32x6xbf16, #tpu.memory_space<vmem>>, vector<1x32x6xbf16>
      %766 = vector.shape_cast %765 : vector<1x32x6xbf16> to vector<32x6xbf16>
      %cst_566 = arith.constant dense<0.000000e+00> : vector<4x6xf32>
      %767 = tpu.matmul %714, %766, %cst_566 {dimension_numbers = #tpu.dot_dimension_numbers<[1], [0], [0], [1], [0, 0, 1, 1], [], []>} : vector<4x32xbf16>, vector<32x6xbf16>, vector<4x6xf32> -> vector<4x6xf32>
      %c1_567 = arith.constant 1 : index
      %c0_568 = arith.constant 0 : index
      %c0_569 = arith.constant 0 : index
      %768 = vector.load %arg49[%c1_567, %c0_568, %c0_569] : memref<2x1x6xf32, #tpu.memory_space<vmem>>, vector<1x1x6xf32>
      %769 = vector.shape_cast %768 : vector<1x1x6xf32> to vector<1x6xf32>
      %770 = vector.broadcast %769 : vector<1x6xf32> to vector<4x6xf32>
      %771 = arith.addf %767, %770 : vector<4x6xf32>
      %772 = math.tanh %771 : vector<4x6xf32>
      %c1_570 = arith.constant 1 : index
      %c0_571 = arith.constant 0 : index
      %c0_572 = arith.constant 0 : index
      %773 = vector.load %arg51[%c1_570, %c0_571, %c0_572] : memref<2x32x6xbf16, #tpu.memory_space<vmem>>, vector<1x32x6xbf16>
      %774 = vector.shape_cast %773 : vector<1x32x6xbf16> to vector<32x6xbf16>
      %cst_573 = arith.constant dense<0.000000e+00> : vector<4x6xf32>
      %775 = tpu.matmul %715, %774, %cst_573 {dimension_numbers = #tpu.dot_dimension_numbers<[1], [0], [0], [1], [0, 0, 1, 1], [], []>} : vector<4x32xbf16>, vector<32x6xbf16>, vector<4x6xf32> -> vector<4x6xf32>
      %c1_574 = arith.constant 1 : index
      %c0_575 = arith.constant 0 : index
      %c0_576 = arith.constant 0 : index
      %776 = vector.load %arg47[%c1_574, %c0_575, %c0_576] : memref<2x1x6xf32, #tpu.memory_space<vmem>>, vector<1x1x6xf32>
      %777 = vector.shape_cast %776 : vector<1x1x6xf32> to vector<1x6xf32>
      %778 = vector.broadcast %777 : vector<1x6xf32> to vector<4x6xf32>
      %779 = arith.addf %775, %778 : vector<4x6xf32>
      %780 = arith.negf %779 : vector<4x6xf32>
      %781 = math.exp %780 : vector<4x6xf32>
      %cst_577 = arith.constant 1.000000e+00 : f32
      %782 = vector.broadcast %cst_577 : f32 to vector<4x6xf32>
      %783 = arith.addf %782, %781 : vector<4x6xf32>
      %784 = arith.divf %782, %783 : vector<4x6xf32>
      %c1_578 = arith.constant 1 : index
      %c0_579 = arith.constant 0 : index
      %c0_580 = arith.constant 0 : index
      %785 = vector.load %arg57[%c1_578, %c0_579, %c0_580] : memref<2x32x16xbf16, #tpu.memory_space<vmem>>, vector<1x32x16xbf16>
      %786 = vector.shape_cast %785 : vector<1x32x16xbf16> to vector<32x16xbf16>
      %cst_581 = arith.constant dense<0.000000e+00> : vector<4x16xf32>
      %787 = tpu.matmul %673, %786, %cst_581 {dimension_numbers = #tpu.dot_dimension_numbers<[1], [0], [0], [1], [0, 0, 1, 1], [], []>} : vector<4x32xbf16>, vector<32x16xbf16>, vector<4x16xf32> -> vector<4x16xf32>
      %788 = arith.truncf %787 : vector<4x16xf32> to vector<4x16xbf16>
      %c1_582 = arith.constant 1 : index
      %c0_583 = arith.constant 0 : index
      %c0_584 = arith.constant 0 : index
      %789 = vector.load %arg55[%c1_582, %c0_583, %c0_584] : memref<2x32x16xbf16, #tpu.memory_space<vmem>>, vector<1x32x16xbf16>
      %790 = vector.shape_cast %789 : vector<1x32x16xbf16> to vector<32x16xbf16>
      %cst_585 = arith.constant dense<0.000000e+00> : vector<6x16xf32>
      %791 = tpu.matmul %674, %790, %cst_585 {dimension_numbers = #tpu.dot_dimension_numbers<[1], [0], [0], [1], [0, 0, 1, 1], [], []>} : vector<6x32xbf16>, vector<32x16xbf16>, vector<6x16xf32> -> vector<6x16xf32>
      %792 = arith.truncf %791 : vector<6x16xf32> to vector<6x16xbf16>
      %c1_586 = arith.constant 1 : index
      %c0_587 = arith.constant 0 : index
      %c0_588 = arith.constant 0 : index
      %793 = vector.load %arg58[%c1_586, %c0_587, %c0_588] : memref<2x32x16xbf16, #tpu.memory_space<vmem>>, vector<1x32x16xbf16>
      %794 = vector.shape_cast %793 : vector<1x32x16xbf16> to vector<32x16xbf16>
      %cst_589 = arith.constant dense<0.000000e+00> : vector<6x16xf32>
      %795 = tpu.matmul %674, %794, %cst_589 {dimension_numbers = #tpu.dot_dimension_numbers<[1], [0], [0], [1], [0, 0, 1, 1], [], []>} : vector<6x32xbf16>, vector<32x16xbf16>, vector<6x16xf32> -> vector<6x16xf32>
      %796 = arith.truncf %795 : vector<6x16xf32> to vector<6x16xbf16>
      %cst_590 = arith.constant dense<0.000000e+00> : vector<4x6xf32>
      %797 = tpu.matmul %788, %792, %cst_590 {dimension_numbers = #tpu.dot_dimension_numbers<[1], [1], [0], [0], [0, 0, 1, 0], [], []>} : vector<4x16xbf16>, vector<6x16xbf16>, vector<4x6xf32> -> vector<4x6xf32>
      %c1_591 = arith.constant 1 : index
      %c1_592 = arith.constant 1 : index
      %c0_593 = arith.constant 0 : index
      %c0_594 = arith.constant 0 : index
      %798 = vector.load %arg65[%c1_591, %c1_592, %c0_593, %c0_594] : memref<2x2x4x6xf32, #tpu.memory_space<vmem>>, vector<1x1x4x6xf32>
      %799 = vector.shape_cast %798 : vector<1x1x4x6xf32> to vector<4x6xf32>
      %800 = arith.mulf %799, %784 : vector<4x6xf32>
      %801 = arith.mulf %797, %772 : vector<4x6xf32>
      %802 = arith.addf %800, %801 : vector<4x6xf32>
      %c1_595 = arith.constant 1 : index
      %c1_596 = arith.constant 1 : index
      %c0_597 = arith.constant 0 : index
      %c0_598 = arith.constant 0 : index
      %803 = vector.load %arg65[%c1_595, %c1_596, %c0_597, %c0_598] : memref<2x2x4x6xf32, #tpu.memory_space<vmem>>, vector<1x1x4x6xf32>
      %804 = vector.shape_cast %803 : vector<1x1x4x6xf32> to vector<4x6xf32>
      %805 = vector.shape_cast %802 : vector<4x6xf32> to vector<1x1x4x6xf32>
      tpu.vector_store %arg65[%c1_595, %c1_596, %c0_597, %c0_598], %805 {strides = array<i32>} : memref<2x2x4x6xf32, #tpu.memory_space<vmem>>, vector<1x1x4x6xf32>,
      %806 = arith.truncf %802 : vector<4x6xf32> to vector<4x6xbf16>
      %cst_599 = arith.constant dense<0.000000e+00> : vector<4x16xf32>
      %807 = tpu.matmul %806, %796, %cst_599 {dimension_numbers = #tpu.dot_dimension_numbers<[1], [0], [0], [1], [0, 0, 1, 1], [], []>} : vector<4x6xbf16>, vector<6x16xbf16>, vector<4x16xf32> -> vector<4x16xf32>
      %808 = arith.truncf %807 : vector<4x16xf32> to vector<4x16xbf16>
      %c1_600 = arith.constant 1 : index
      %c0_601 = arith.constant 0 : index
      %c0_602 = arith.constant 0 : index
      %809 = vector.load %arg56[%c1_600, %c0_601, %c0_602] : memref<2x16x32xbf16, #tpu.memory_space<vmem>>, vector<1x16x32xbf16>
      %810 = vector.shape_cast %809 : vector<1x16x32xbf16> to vector<16x32xbf16>
      %cst_603 = arith.constant dense<0.000000e+00> : vector<4x32xf32>
      %811 = tpu.matmul %808, %810, %cst_603 {dimension_numbers = #tpu.dot_dimension_numbers<[1], [0], [0], [1], [0, 0, 1, 1], [], []>} : vector<4x16xbf16>, vector<16x32xbf16>, vector<4x32xf32> -> vector<4x32xf32>
      %812 = arith.addf %764, %811 : vector<4x32xf32>
      %c0_604 = arith.constant 0 : index
      %c0_605 = arith.constant 0 : index
      %813 = vector.load %arg50[%c0_604, %c0_605] : memref<1x32xf32, #tpu.memory_space<vmem>>, vector<1x32xf32>
      %814 = vector.broadcast %813 : vector<1x32xf32> to vector<4x32xf32>
      %815 = arith.addf %812, %814 : vector<4x32xf32>
      %816 = arith.mulf %713, %815 : vector<4x32xf32>
      %c1_606 = arith.constant 1 : index
      %c0_607 = arith.constant 0 : index
      %c0_608 = arith.constant 0 : index
      %817 = vector.load %arg62[%c1_606, %c0_607, %c0_608] : memref<2x6x32xf32, #tpu.memory_space<vmem>>, vector<1x6x32xf32>
      %818 = vector.shape_cast %817 : vector<1x6x32xf32> to vector<6x32xf32>
      %819 = vector.shape_cast %670 : vector<6x32xf32> to vector<1x6x32xf32>
      tpu.vector_store %arg62[%c1_606, %c0_607, %c0_608], %819 {strides = array<i32>} : memref<2x6x32xf32, #tpu.memory_space<vmem>>, vector<1x6x32xf32>,
      %c1_609 = arith.constant 1 : index
      %c0_610 = arith.constant 0 : index
      %c0_611 = arith.constant 0 : index
      %820 = vector.load %arg64[%c1_609, %c0_610, %c0_611] : memref<2x4x32xf32, #tpu.memory_space<vmem>>, vector<1x4x32xf32>
      %821 = vector.shape_cast %820 : vector<1x4x32xf32> to vector<4x32xf32>
      %822 = vector.shape_cast %816 : vector<4x32xf32> to vector<1x4x32xf32>
      tpu.vector_store %arg64[%c1_609, %c0_610, %c0_611], %822 {strides = array<i32>} : memref<2x4x32xf32, #tpu.memory_space<vmem>>, vector<1x4x32xf32>,
      %823 = arith.addf %419, %670 : vector<6x32xf32>
      %c0_612 = arith.constant 0 : index
      %c0_613 = arith.constant 0 : index
      %c0_614 = arith.constant 0 : index
      %824 = vector.load %arg59[%c0_612, %c0_613, %c0_614] : memref<8x1x32xf32, #tpu.memory_space<vmem>>, vector<1x1x32xf32>
      %825 = vector.shape_cast %824 : vector<1x1x32xf32> to vector<1x32xf32>
      %c1_615 = arith.constant 1 : index
      %c0_616 = arith.constant 0 : index
      %c0_617 = arith.constant 0 : index
      %826 = vector.load %arg59[%c1_615, %c0_616, %c0_617] : memref<8x1x32xf32, #tpu.memory_space<vmem>>, vector<1x1x32xf32>
      %827 = vector.shape_cast %826 : vector<1x1x32xf32> to vector<1x32xf32>
      %c2_618 = arith.constant 2 : index
      %c0_619 = arith.constant 0 : index
      %c0_620 = arith.constant 0 : index
      %828 = vector.load %arg59[%c2_618, %c0_619, %c0_620] : memref<8x1x32xf32, #tpu.memory_space<vmem>>, vector<1x1x32xf32>
      %829 = vector.shape_cast %828 : vector<1x1x32xf32> to vector<1x32xf32>
      %c3_621 = arith.constant 3 : index
      %c0_622 = arith.constant 0 : index
      %c0_623 = arith.constant 0 : index
      %830 = vector.load %arg59[%c3_621, %c0_622, %c0_623] : memref<8x1x32xf32, #tpu.memory_space<vmem>>, vector<1x1x32xf32>
      %831 = vector.shape_cast %830 : vector<1x1x32xf32> to vector<1x32xf32>
      %cst_624 = arith.constant dense<0.000000e+00> : vector<6xf32>
      %832 = vector.multi_reduction <add>, %823, %cst_624 [1] : vector<6x32xf32> to vector<6xf32>
      %833 = vector.shape_cast %832 : vector<6xf32> to vector<6x1xf32>
      %cst_625 = arith.constant 3.200000e+01 : f32
      %834 = vector.broadcast %cst_625 : f32 to vector<6x1xf32>
      %835 = arith.divf %833, %834 : vector<6x1xf32>
      %836 = vector.broadcast %835 : vector<6x1xf32> to vector<6x32xf32>
      %837 = arith.subf %823, %836 : vector<6x32xf32>
      %838 = arith.mulf %837, %837 : vector<6x32xf32>
      %cst_626 = arith.constant dense<0.000000e+00> : vector<6xf32>
      %839 = vector.multi_reduction <add>, %838, %cst_626 [1] : vector<6x32xf32> to vector<6xf32>
      %840 = vector.shape_cast %839 : vector<6xf32> to vector<6x1xf32>
      %cst_627 = arith.constant 3.200000e+01 : f32
      %841 = vector.broadcast %cst_627 : f32 to vector<6x1xf32>
      %842 = arith.divf %840, %841 : vector<6x1xf32>
      %843 = vector.broadcast %835 : vector<6x1xf32> to vector<6x32xf32>
      %844 = arith.subf %823, %843 : vector<6x32xf32>
      %cst_628 = arith.constant 9.99999974E-6 : f32
      %845 = vector.broadcast %cst_628 : f32 to vector<6x1xf32>
      %846 = arith.addf %842, %845 : vector<6x1xf32>
      %847 = math.rsqrt %846 : vector<6x1xf32>
      %848 = vector.broadcast %847 : vector<6x1xf32> to vector<6x32xf32>
      %849 = arith.mulf %844, %848 : vector<6x32xf32>
      %850 = vector.broadcast %825 : vector<1x32xf32> to vector<6x32xf32>
      %851 = arith.mulf %849, %850 : vector<6x32xf32>
      %852 = vector.broadcast %827 : vector<1x32xf32> to vector<6x32xf32>
      %853 = arith.addf %851, %852 : vector<6x32xf32>
      %854 = arith.truncf %853 : vector<6x32xf32> to vector<6x32xbf16>
      %c0_629 = arith.constant 0 : index
      %c0_630 = arith.constant 0 : index
      %855 = vector.load %arg5[%c0_629, %c0_630] : memref<32x128xbf16, #tpu.memory_space<vmem>>, vector<32x128xbf16>
      %cst_631 = arith.constant dense<0.000000e+00> : vector<6x128xf32>
      %856 = tpu.matmul %854, %855, %cst_631 {dimension_numbers = #tpu.dot_dimension_numbers<[1], [0], [0], [1], [0, 0, 1, 1], [], []>} : vector<6x32xbf16>, vector<32x128xbf16>, vector<6x128xf32> -> vector<6x128xf32>
      %c0_632 = arith.constant 0 : index
      %c0_633 = arith.constant 0 : index
      %857 = vector.load %arg3[%c0_632, %c0_633] : memref<1x128xf32, #tpu.memory_space<vmem>>, vector<1x128xf32>
      %858 = vector.broadcast %857 : vector<1x128xf32> to vector<6x128xf32>
      %859 = arith.addf %856, %858 : vector<6x128xf32>
      %cst_634 = arith.constant 5.000000e-01 : f32
      %860 = vector.broadcast %cst_634 : f32 to vector<6x128xf32>
      %861 = arith.mulf %860, %859 : vector<6x128xf32>
      %cst_635 = arith.constant 0.707106769 : f32
      %862 = vector.broadcast %cst_635 : f32 to vector<6x128xf32>
      %863 = arith.mulf %859, %862 : vector<6x128xf32>
      %864 = math.absf %863 : vector<6x128xf32>
      %cst_636 = arith.constant 0.327591091 : f32
      %865 = vector.broadcast %cst_636 : f32 to vector<6x128xf32>
      %866 = arith.mulf %865, %864 : vector<6x128xf32>
      %cst_637 = arith.constant 1.000000e+00 : f32
      %867 = vector.broadcast %cst_637 : f32 to vector<6x128xf32>
      %868 = arith.addf %867, %866 : vector<6x128xf32>
      %cst_638 = arith.constant 1.000000e+00 : f32
      %869 = vector.broadcast %cst_638 : f32 to vector<6x128xf32>
      %870 = arith.divf %869, %868 : vector<6x128xf32>
      %cst_639 = arith.constant 1.06140542 : f32
      %871 = vector.broadcast %cst_639 : f32 to vector<6x128xf32>
      %872 = arith.mulf %871, %870 : vector<6x128xf32>
      %cst_640 = arith.constant -1.45315206 : f32
      %873 = vector.broadcast %cst_640 : f32 to vector<6x128xf32>
      %874 = arith.addf %872, %873 : vector<6x128xf32>
      %875 = arith.mulf %874, %870 : vector<6x128xf32>
      %cst_641 = arith.constant 1.42141378 : f32
      %876 = vector.broadcast %cst_641 : f32 to vector<6x128xf32>
      %877 = arith.addf %875, %876 : vector<6x128xf32>
      %878 = arith.mulf %877, %870 : vector<6x128xf32>
      %cst_642 = arith.constant -0.284496725 : f32
      %879 = vector.broadcast %cst_642 : f32 to vector<6x128xf32>
      %880 = arith.addf %878, %879 : vector<6x128xf32>
      %881 = arith.mulf %880, %870 : vector<6x128xf32>
      %cst_643 = arith.constant 0.254829586 : f32
      %882 = vector.broadcast %cst_643 : f32 to vector<6x128xf32>
      %883 = arith.addf %881, %882 : vector<6x128xf32>
      %884 = arith.mulf %883, %870 : vector<6x128xf32>
      %cst_644 = arith.constant 0.000000e+00 : f32
      %885 = vector.broadcast %cst_644 : f32 to vector<6x128xf32>
      %886 = arith.subf %885, %864 : vector<6x128xf32>
      %887 = arith.mulf %886, %864 : vector<6x128xf32>
      %888 = math.exp %887 : vector<6x128xf32>
      %889 = arith.mulf %884, %888 : vector<6x128xf32>
      %cst_645 = arith.constant 1.000000e+00 : f32
      %890 = vector.broadcast %cst_645 : f32 to vector<6x128xf32>
      %891 = arith.subf %890, %889 : vector<6x128xf32>
      %cst_646 = arith.constant 0.000000e+00 : f32
      %892 = vector.broadcast %cst_646 : f32 to vector<6x128xf32>
      %893 = arith.cmpf oge, %863, %892 : vector<6x128xf32>
      %cst_647 = arith.constant 0.000000e+00 : f32
      %894 = vector.broadcast %cst_647 : f32 to vector<6x128xf32>
      %895 = arith.subf %894, %891 : vector<6x128xf32>
      %896 = arith.select %893, %891, %895 : vector<6x128xi1>, vector<6x128xf32>
      %cst_648 = arith.constant 1.000000e+00 : f32
      %897 = vector.broadcast %cst_648 : f32 to vector<6x128xf32>
      %898 = arith.addf %897, %896 : vector<6x128xf32>
      %899 = arith.mulf %861, %898 : vector<6x128xf32>
      %900 = arith.truncf %899 : vector<6x128xf32> to vector<6x128xbf16>
      %c0_649 = arith.constant 0 : index
      %c0_650 = arith.constant 0 : index
      %901 = vector.load %arg6[%c0_649, %c0_650] : memref<128x32xbf16, #tpu.memory_space<vmem>>, vector<128x32xbf16>
      %cst_651 = arith.constant dense<0.000000e+00> : vector<6x32xf32>
      %902 = tpu.matmul %900, %901, %cst_651 {dimension_numbers = #tpu.dot_dimension_numbers<[1], [0], [0], [1], [0, 0, 1, 1], [], []>} : vector<6x128xbf16>, vector<128x32xbf16>, vector<6x32xf32> -> vector<6x32xf32>
      %c0_652 = arith.constant 0 : index
      %c0_653 = arith.constant 0 : index
      %903 = vector.load %arg4[%c0_652, %c0_653] : memref<1x32xf32, #tpu.memory_space<vmem>>, vector<1x32xf32>
      %904 = vector.broadcast %903 : vector<1x32xf32> to vector<6x32xf32>
      %905 = arith.addf %902, %904 : vector<6x32xf32>
      %906 = arith.addf %853, %905 : vector<6x32xf32>
      %cst_654 = arith.constant dense<0.000000e+00> : vector<6xf32>
      %907 = vector.multi_reduction <add>, %906, %cst_654 [1] : vector<6x32xf32> to vector<6xf32>
      %908 = vector.shape_cast %907 : vector<6xf32> to vector<6x1xf32>
      %cst_655 = arith.constant 3.200000e+01 : f32
      %909 = vector.broadcast %cst_655 : f32 to vector<6x1xf32>
      %910 = arith.divf %908, %909 : vector<6x1xf32>
      %911 = vector.broadcast %910 : vector<6x1xf32> to vector<6x32xf32>
      %912 = arith.subf %906, %911 : vector<6x32xf32>
      %913 = arith.mulf %912, %912 : vector<6x32xf32>
      %cst_656 = arith.constant dense<0.000000e+00> : vector<6xf32>
      %914 = vector.multi_reduction <add>, %913, %cst_656 [1] : vector<6x32xf32> to vector<6xf32>
      %915 = vector.shape_cast %914 : vector<6xf32> to vector<6x1xf32>
      %cst_657 = arith.constant 3.200000e+01 : f32
      %916 = vector.broadcast %cst_657 : f32 to vector<6x1xf32>
      %917 = arith.divf %915, %916 : vector<6x1xf32>
      %918 = vector.broadcast %910 : vector<6x1xf32> to vector<6x32xf32>
      %919 = arith.subf %906, %918 : vector<6x32xf32>
      %cst_658 = arith.constant 9.99999974E-6 : f32
      %920 = vector.broadcast %cst_658 : f32 to vector<6x1xf32>
      %921 = arith.addf %917, %920 : vector<6x1xf32>
      %922 = math.rsqrt %921 : vector<6x1xf32>
      %923 = vector.broadcast %922 : vector<6x1xf32> to vector<6x32xf32>
      %924 = arith.mulf %919, %923 : vector<6x32xf32>
      %925 = vector.broadcast %829 : vector<1x32xf32> to vector<6x32xf32>
      %926 = arith.mulf %924, %925 : vector<6x32xf32>
      %927 = vector.broadcast %831 : vector<1x32xf32> to vector<6x32xf32>
      %928 = arith.addf %926, %927 : vector<6x32xf32>
      %929 = arith.addf %524, %816 : vector<4x32xf32>
      %c4_659 = arith.constant 4 : index
      %c0_660 = arith.constant 0 : index
      %c0_661 = arith.constant 0 : index
      %930 = vector.load %arg59[%c4_659, %c0_660, %c0_661] : memref<8x1x32xf32, #tpu.memory_space<vmem>>, vector<1x1x32xf32>
      %931 = vector.shape_cast %930 : vector<1x1x32xf32> to vector<1x32xf32>
      %c5_662 = arith.constant 5 : index
      %c0_663 = arith.constant 0 : index
      %c0_664 = arith.constant 0 : index
      %932 = vector.load %arg59[%c5_662, %c0_663, %c0_664] : memref<8x1x32xf32, #tpu.memory_space<vmem>>, vector<1x1x32xf32>
      %933 = vector.shape_cast %932 : vector<1x1x32xf32> to vector<1x32xf32>
      %c6_665 = arith.constant 6 : index
      %c0_666 = arith.constant 0 : index
      %c0_667 = arith.constant 0 : index
      %934 = vector.load %arg59[%c6_665, %c0_666, %c0_667] : memref<8x1x32xf32, #tpu.memory_space<vmem>>, vector<1x1x32xf32>
      %935 = vector.shape_cast %934 : vector<1x1x32xf32> to vector<1x32xf32>
      %c7_668 = arith.constant 7 : index
      %c0_669 = arith.constant 0 : index
      %c0_670 = arith.constant 0 : index
      %936 = vector.load %arg59[%c7_668, %c0_669, %c0_670] : memref<8x1x32xf32, #tpu.memory_space<vmem>>, vector<1x1x32xf32>
      %937 = vector.shape_cast %936 : vector<1x1x32xf32> to vector<1x32xf32>
      %cst_671 = arith.constant dense<0.000000e+00> : vector<4xf32>
      %938 = vector.multi_reduction <add>, %929, %cst_671 [1] : vector<4x32xf32> to vector<4xf32>
      %939 = vector.shape_cast %938 : vector<4xf32> to vector<4x1xf32>
      %cst_672 = arith.constant 3.200000e+01 : f32
      %940 = vector.broadcast %cst_672 : f32 to vector<4x1xf32>
      %941 = arith.divf %939, %940 : vector<4x1xf32>
      %942 = vector.broadcast %941 : vector<4x1xf32> to vector<4x32xf32>
      %943 = arith.subf %929, %942 : vector<4x32xf32>
      %944 = arith.mulf %943, %943 : vector<4x32xf32>
      %cst_673 = arith.constant dense<0.000000e+00> : vector<4xf32>
      %945 = vector.multi_reduction <add>, %944, %cst_673 [1] : vector<4x32xf32> to vector<4xf32>
      %946 = vector.shape_cast %945 : vector<4xf32> to vector<4x1xf32>
      %cst_674 = arith.constant 3.200000e+01 : f32
      %947 = vector.broadcast %cst_674 : f32 to vector<4x1xf32>
      %948 = arith.divf %946, %947 : vector<4x1xf32>
      %949 = vector.broadcast %941 : vector<4x1xf32> to vector<4x32xf32>
      %950 = arith.subf %929, %949 : vector<4x32xf32>
      %cst_675 = arith.constant 9.99999974E-6 : f32
      %951 = vector.broadcast %cst_675 : f32 to vector<4x1xf32>
      %952 = arith.addf %948, %951 : vector<4x1xf32>
      %953 = math.rsqrt %952 : vector<4x1xf32>
      %954 = vector.broadcast %953 : vector<4x1xf32> to vector<4x32xf32>
      %955 = arith.mulf %950, %954 : vector<4x32xf32>
      %956 = vector.broadcast %931 : vector<1x32xf32> to vector<4x32xf32>
      %957 = arith.mulf %955, %956 : vector<4x32xf32>
      %958 = vector.broadcast %933 : vector<1x32xf32> to vector<4x32xf32>
      %959 = arith.addf %957, %958 : vector<4x32xf32>
      %960 = arith.truncf %959 : vector<4x32xf32> to vector<4x32xbf16>
      %c0_676 = arith.constant 0 : index
      %c0_677 = arith.constant 0 : index
      %961 = vector.load %arg9[%c0_676, %c0_677] : memref<32x128xbf16, #tpu.memory_space<vmem>>, vector<32x128xbf16>
      %cst_678 = arith.constant dense<0.000000e+00> : vector<4x128xf32>
      %962 = tpu.matmul %960, %961, %cst_678 {dimension_numbers = #tpu.dot_dimension_numbers<[1], [0], [0], [1], [0, 0, 1, 1], [], []>} : vector<4x32xbf16>, vector<32x128xbf16>, vector<4x128xf32> -> vector<4x128xf32>
      %c0_679 = arith.constant 0 : index
      %c0_680 = arith.constant 0 : index
      %963 = vector.load %arg7[%c0_679, %c0_680] : memref<1x128xf32, #tpu.memory_space<vmem>>, vector<1x128xf32>
      %964 = vector.broadcast %963 : vector<1x128xf32> to vector<4x128xf32>
      %965 = arith.addf %962, %964 : vector<4x128xf32>
      %cst_681 = arith.constant 5.000000e-01 : f32
      %966 = vector.broadcast %cst_681 : f32 to vector<4x128xf32>
      %967 = arith.mulf %966, %965 : vector<4x128xf32>
      %cst_682 = arith.constant 0.707106769 : f32
      %968 = vector.broadcast %cst_682 : f32 to vector<4x128xf32>
      %969 = arith.mulf %965, %968 : vector<4x128xf32>
      %970 = math.absf %969 : vector<4x128xf32>
      %cst_683 = arith.constant 0.327591091 : f32
      %971 = vector.broadcast %cst_683 : f32 to vector<4x128xf32>
      %972 = arith.mulf %971, %970 : vector<4x128xf32>
      %cst_684 = arith.constant 1.000000e+00 : f32
      %973 = vector.broadcast %cst_684 : f32 to vector<4x128xf32>
      %974 = arith.addf %973, %972 : vector<4x128xf32>
      %cst_685 = arith.constant 1.000000e+00 : f32
      %975 = vector.broadcast %cst_685 : f32 to vector<4x128xf32>
      %976 = arith.divf %975, %974 : vector<4x128xf32>
      %cst_686 = arith.constant 1.06140542 : f32
      %977 = vector.broadcast %cst_686 : f32 to vector<4x128xf32>
      %978 = arith.mulf %977, %976 : vector<4x128xf32>
      %cst_687 = arith.constant -1.45315206 : f32
      %979 = vector.broadcast %cst_687 : f32 to vector<4x128xf32>
      %980 = arith.addf %978, %979 : vector<4x128xf32>
      %981 = arith.mulf %980, %976 : vector<4x128xf32>
      %cst_688 = arith.constant 1.42141378 : f32
      %982 = vector.broadcast %cst_688 : f32 to vector<4x128xf32>
      %983 = arith.addf %981, %982 : vector<4x128xf32>
      %984 = arith.mulf %983, %976 : vector<4x128xf32>
      %cst_689 = arith.constant -0.284496725 : f32
      %985 = vector.broadcast %cst_689 : f32 to vector<4x128xf32>
      %986 = arith.addf %984, %985 : vector<4x128xf32>
      %987 = arith.mulf %986, %976 : vector<4x128xf32>
      %cst_690 = arith.constant 0.254829586 : f32
      %988 = vector.broadcast %cst_690 : f32 to vector<4x128xf32>
      %989 = arith.addf %987, %988 : vector<4x128xf32>
      %990 = arith.mulf %989, %976 : vector<4x128xf32>
      %cst_691 = arith.constant 0.000000e+00 : f32
      %991 = vector.broadcast %cst_691 : f32 to vector<4x128xf32>
      %992 = arith.subf %991, %970 : vector<4x128xf32>
      %993 = arith.mulf %992, %970 : vector<4x128xf32>
      %994 = math.exp %993 : vector<4x128xf32>
      %995 = arith.mulf %990, %994 : vector<4x128xf32>
      %cst_692 = arith.constant 1.000000e+00 : f32
      %996 = vector.broadcast %cst_692 : f32 to vector<4x128xf32>
      %997 = arith.subf %996, %995 : vector<4x128xf32>
      %cst_693 = arith.constant 0.000000e+00 : f32
      %998 = vector.broadcast %cst_693 : f32 to vector<4x128xf32>
      %999 = arith.cmpf oge, %969, %998 : vector<4x128xf32>
      %cst_694 = arith.constant 0.000000e+00 : f32
      %1000 = vector.broadcast %cst_694 : f32 to vector<4x128xf32>
      %1001 = arith.subf %1000, %997 : vector<4x128xf32>
      %1002 = arith.select %999, %997, %1001 : vector<4x128xi1>, vector<4x128xf32>
      %cst_695 = arith.constant 1.000000e+00 : f32
      %1003 = vector.broadcast %cst_695 : f32 to vector<4x128xf32>
      %1004 = arith.addf %1003, %1002 : vector<4x128xf32>
      %1005 = arith.mulf %967, %1004 : vector<4x128xf32>
      %1006 = arith.truncf %1005 : vector<4x128xf32> to vector<4x128xbf16>
      %c0_696 = arith.constant 0 : index
      %c0_697 = arith.constant 0 : index
      %1007 = vector.load %arg10[%c0_696, %c0_697] : memref<128x32xbf16, #tpu.memory_space<vmem>>, vector<128x32xbf16>
      %cst_698 = arith.constant dense<0.000000e+00> : vector<4x32xf32>
      %1008 = tpu.matmul %1006, %1007, %cst_698 {dimension_numbers = #tpu.dot_dimension_numbers<[1], [0], [0], [1], [0, 0, 1, 1], [], []>} : vector<4x128xbf16>, vector<128x32xbf16>, vector<4x32xf32> -> vector<4x32xf32>
      %c0_699 = arith.constant 0 : index
      %c0_700 = arith.constant 0 : index
      %1009 = vector.load %arg8[%c0_699, %c0_700] : memref<1x32xf32, #tpu.memory_space<vmem>>, vector<1x32xf32>
      %1010 = vector.broadcast %1009 : vector<1x32xf32> to vector<4x32xf32>
      %1011 = arith.addf %1008, %1010 : vector<4x32xf32>
      %1012 = arith.addf %959, %1011 : vector<4x32xf32>
      %cst_701 = arith.constant dense<0.000000e+00> : vector<4xf32>
      %1013 = vector.multi_reduction <add>, %1012, %cst_701 [1] : vector<4x32xf32> to vector<4xf32>
      %1014 = vector.shape_cast %1013 : vector<4xf32> to vector<4x1xf32>
      %cst_702 = arith.constant 3.200000e+01 : f32
      %1015 = vector.broadcast %cst_702 : f32 to vector<4x1xf32>
      %1016 = arith.divf %1014, %1015 : vector<4x1xf32>
      %1017 = vector.broadcast %1016 : vector<4x1xf32> to vector<4x32xf32>
      %1018 = arith.subf %1012, %1017 : vector<4x32xf32>
      %1019 = arith.mulf %1018, %1018 : vector<4x32xf32>
      %cst_703 = arith.constant dense<0.000000e+00> : vector<4xf32>
      %1020 = vector.multi_reduction <add>, %1019, %cst_703 [1] : vector<4x32xf32> to vector<4xf32>
      %1021 = vector.shape_cast %1020 : vector<4xf32> to vector<4x1xf32>
      %cst_704 = arith.constant 3.200000e+01 : f32
      %1022 = vector.broadcast %cst_704 : f32 to vector<4x1xf32>
      %1023 = arith.divf %1021, %1022 : vector<4x1xf32>
      %1024 = vector.broadcast %1016 : vector<4x1xf32> to vector<4x32xf32>
      %1025 = arith.subf %1012, %1024 : vector<4x32xf32>
      %cst_705 = arith.constant 9.99999974E-6 : f32
      %1026 = vector.broadcast %cst_705 : f32 to vector<4x1xf32>
      %1027 = arith.addf %1023, %1026 : vector<4x1xf32>
      %1028 = math.rsqrt %1027 : vector<4x1xf32>
      %1029 = vector.broadcast %1028 : vector<4x1xf32> to vector<4x32xf32>
      %1030 = arith.mulf %1025, %1029 : vector<4x32xf32>
      %1031 = vector.broadcast %935 : vector<1x32xf32> to vector<4x32xf32>
      %1032 = arith.mulf %1030, %1031 : vector<4x32xf32>
      %1033 = vector.broadcast %937 : vector<1x32xf32> to vector<4x32xf32>
      %1034 = arith.addf %1032, %1033 : vector<4x32xf32>
      %c2_i32 = arith.constant 2 : i32
      %1035 = arith.cmpi eq, %10, %c2_i32 : i32
      %1036 = arith.extui %1035 : i1 to i32
      %c0_i32_706 = arith.constant 0 : i32
      %1037 = arith.cmpi ne, %1036, %c0_i32_706 : i32
      scf.if %1037 {
        %c0_707 = arith.constant 0 : index
        %c0_708 = arith.constant 0 : index
        %c0_709 = arith.constant 0 : index
        %1038 = vector.load %arg60[%c0_707, %c0_708, %c0_709] : memref<1x6x32xf32, #tpu.memory_space<vmem>>, vector<1x6x32xf32>
        %1039 = vector.shape_cast %1038 : vector<1x6x32xf32> to vector<6x32xf32>
        %1040 = vector.shape_cast %928 : vector<6x32xf32> to vector<1x6x32xf32>
        tpu.vector_store %arg60[%c0_707, %c0_708, %c0_709], %1040 {strides = array<i32>} : memref<1x6x32xf32, #tpu.memory_space<vmem>>, vector<1x6x32xf32>,
        %c0_710 = arith.constant 0 : index
        %c0_711 = arith.constant 0 : index
        %c0_712 = arith.constant 0 : index
        %1041 = vector.load %arg61[%c0_710, %c0_711, %c0_712] : memref<1x4x32xf32, #tpu.memory_space<vmem>>, vector<1x4x32xf32>
        %1042 = vector.shape_cast %1041 : vector<1x4x32xf32> to vector<4x32xf32>
        %1043 = vector.shape_cast %1034 : vector<4x32xf32> to vector<1x4x32xf32>
        tpu.vector_store %arg61[%c0_710, %c0_711, %c0_712], %1043 {strides = array<i32>} : memref<1x4x32xf32, #tpu.memory_space<vmem>>, vector<1x4x32xf32>,
      } else {
      }
    }
    %c3_i32_16 = arith.constant 3 : i32
    return
  }
  func.func @transform_0(%arg0: i32) -> (i32, i32, i32, i32) {
    %c0_i32 = arith.constant 0 : i32
    %c0_i32_0 = arith.constant 0 : i32
    %c0_i32_1 = arith.constant 0 : i32
    %c0_i32_2 = arith.constant 0 : i32
    return %arg0, %c0_i32, %c0_i32_0, %c0_i32_1 : i32, i32, i32, i32
  }
  func.func @transform_1(%arg0: i32) -> (i32, i32, i32, i32) {
    %c0_i32 = arith.constant 0 : i32
    %c0_i32_0 = arith.constant 0 : i32
    %c0_i32_1 = arith.constant 0 : i32
    %c0_i32_2 = arith.constant 0 : i32
    return %arg0, %c0_i32, %c0_i32_0, %c0_i32_1 : i32, i32, i32, i32
  }
  func.func @transform_2(%arg0: i32) -> (i32, i32) {
    %c0_i32 = arith.constant 0 : i32
    %c0_i32_0 = arith.constant 0 : i32
    %c0_i32_1 = arith.constant 0 : i32
    return %c0_i32, %c0_i32_0 : i32, i32
  }
  func.func @transform_3(%arg0: i32) -> (i32, i32) {
    %c0_i32 = arith.constant 0 : i32
    %c0_i32_0 = arith.constant 0 : i32
    %c0_i32_1 = arith.constant 0 : i32
    return %c0_i32, %c0_i32_0 : i32, i32
  }
  func.func @transform_4(%arg0: i32) -> (i32, i32) {
    %c0_i32 = arith.constant 0 : i32
    %c0_i32_0 = arith.constant 0 : i32
    %c0_i32_1 = arith.constant 0 : i32
    return %c0_i32, %c0_i32_0 : i32, i32
  }
  func.func @transform_5(%arg0: i32) -> (i32, i32) {
    %c0_i32 = arith.constant 0 : i32
    %c0_i32_0 = arith.constant 0 : i32
    %c0_i32_1 = arith.constant 0 : i32
    return %c0_i32, %c0_i32_0 : i32, i32
  }
  func.func @transform_6(%arg0: i32) -> (i32, i32) {
    %c0_i32 = arith.constant 0 : i32
    %c0_i32_0 = arith.constant 0 : i32
    %c0_i32_1 = arith.constant 0 : i32
    return %c0_i32, %c0_i32_0 : i32, i32
  }
  func.func @transform_7(%arg0: i32) -> (i32, i32) {
    %c0_i32 = arith.constant 0 : i32
    %c0_i32_0 = arith.constant 0 : i32
    %c0_i32_1 = arith.constant 0 : i32
    return %c0_i32, %c0_i32_0 : i32, i32
  }
  func.func @transform_8(%arg0: i32) -> (i32, i32) {
    %c0_i32 = arith.constant 0 : i32
    %c0_i32_0 = arith.constant 0 : i32
    %c0_i32_1 = arith.constant 0 : i32
    return %c0_i32, %c0_i32_0 : i32, i32
  }
  func.func @transform_9(%arg0: i32) -> (i32, i32) {
    %c0_i32 = arith.constant 0 : i32
    %c0_i32_0 = arith.constant 0 : i32
    %c0_i32_1 = arith.constant 0 : i32
    return %c0_i32, %c0_i32_0 : i32, i32
  }
  func.func @transform_10(%arg0: i32) -> (i32, i32, i32) {
    %c0_i32 = arith.constant 0 : i32
    %c0_i32_0 = arith.constant 0 : i32
    %c0_i32_1 = arith.constant 0 : i32
    %c0_i32_2 = arith.constant 0 : i32
    return %c0_i32, %c0_i32_0, %c0_i32_1 : i32, i32, i32
  }
  func.func @transform_11(%arg0: i32) -> (i32, i32, i32) {
    %c0_i32 = arith.constant 0 : i32
    %c0_i32_0 = arith.constant 0 : i32
    %c0_i32_1 = arith.constant 0 : i32
    %c0_i32_2 = arith.constant 0 : i32
    return %c0_i32, %c0_i32_0, %c0_i32_1 : i32, i32, i32
  }
  func.func @transform_12(%arg0: i32) -> (i32, i32, i32) {
    %c0_i32 = arith.constant 0 : i32
    %c0_i32_0 = arith.constant 0 : i32
    %c0_i32_1 = arith.constant 0 : i32
    %c0_i32_2 = arith.constant 0 : i32
    return %c0_i32, %c0_i32_0, %c0_i32_1 : i32, i32, i32
  }
  func.func @transform_13(%arg0: i32) -> (i32, i32) {
    %c0_i32 = arith.constant 0 : i32
    %c0_i32_0 = arith.constant 0 : i32
    %c0_i32_1 = arith.constant 0 : i32
    return %c0_i32, %c0_i32_0 : i32, i32
  }
  func.func @transform_14(%arg0: i32) -> (i32, i32, i32) {
    %c0_i32 = arith.constant 0 : i32
    %c0_i32_0 = arith.constant 0 : i32
    %c0_i32_1 = arith.constant 0 : i32
    %c0_i32_2 = arith.constant 0 : i32
    return %c0_i32, %c0_i32_0, %c0_i32_1 : i32, i32, i32
  }
  func.func @transform_15(%arg0: i32) -> (i32, i32, i32) {
    %c0_i32 = arith.constant 0 : i32
    %c0_i32_0 = arith.constant 0 : i32
    %c0_i32_1 = arith.constant 0 : i32
    %c0_i32_2 = arith.constant 0 : i32
    return %c0_i32, %c0_i32_0, %c0_i32_1 : i32, i32, i32
  }
  func.func @transform_16(%arg0: i32) -> (i32, i32, i32) {
    %c0_i32 = arith.constant 0 : i32
    %c0_i32_0 = arith.constant 0 : i32
    %c0_i32_1 = arith.constant 0 : i32
    %c0_i32_2 = arith.constant 0 : i32
    return %c0_i32, %c0_i32_0, %c0_i32_1 : i32, i32, i32
  }
  func.func @transform_17(%arg0: i32) -> (i32, i32, i32) {
    %c0_i32 = arith.constant 0 : i32
    %c0_i32_0 = arith.constant 0 : i32
    %c0_i32_1 = arith.constant 0 : i32
    %c0_i32_2 = arith.constant 0 : i32
    return %c0_i32, %c0_i32_0, %c0_i32_1 : i32, i32, i32
  }
  func.func @transform_18(%arg0: i32) -> (i32, i32, i32) {
    %c0_i32 = arith.constant 0 : i32
    %c0_i32_0 = arith.constant 0 : i32
    %c0_i32_1 = arith.constant 0 : i32
    %c0_i32_2 = arith.constant 0 : i32
    return %c0_i32, %c0_i32_0, %c0_i32_1 : i32, i32, i32
  }
  func.func @transform_19(%arg0: i32) -> (i32, i32, i32) {
    %c0_i32 = arith.constant 0 : i32
    %c0_i32_0 = arith.constant 0 : i32
    %c0_i32_1 = arith.constant 0 : i32
    %c0_i32_2 = arith.constant 0 : i32
    return %c0_i32, %c0_i32_0, %c0_i32_1 : i32, i32, i32
  }
  func.func @transform_20(%arg0: i32) -> (i32, i32, i32) {
    %c0_i32 = arith.constant 0 : i32
    %c0_i32_0 = arith.constant 0 : i32
    %c0_i32_1 = arith.constant 0 : i32
    %c0_i32_2 = arith.constant 0 : i32
    return %c0_i32, %c0_i32_0, %c0_i32_1 : i32, i32, i32
  }
  func.func @transform_21(%arg0: i32) -> (i32, i32, i32) {
    %c0_i32 = arith.constant 0 : i32
    %c0_i32_0 = arith.constant 0 : i32
    %c0_i32_1 = arith.constant 0 : i32
    %c0_i32_2 = arith.constant 0 : i32
    return %c0_i32, %c0_i32_0, %c0_i32_1 : i32, i32, i32
  }
  func.func @transform_22(%arg0: i32) -> (i32, i32, i32) {
    %c0_i32 = arith.constant 0 : i32
    %c0_i32_0 = arith.constant 0 : i32
    %c0_i32_1 = arith.constant 0 : i32
    %c0_i32_2 = arith.constant 0 : i32
    return %c0_i32, %c0_i32_0, %c0_i32_1 : i32, i32, i32
  }
  func.func @transform_23(%arg0: i32) -> (i32, i32, i32) {
    %c0_i32 = arith.constant 0 : i32
    %c0_i32_0 = arith.constant 0 : i32
    %c0_i32_1 = arith.constant 0 : i32
    %c0_i32_2 = arith.constant 0 : i32
    return %c0_i32, %c0_i32_0, %c0_i32_1 : i32, i32, i32
  }
  func.func @transform_24(%arg0: i32) -> (i32, i32, i32) {
    %c0_i32 = arith.constant 0 : i32
    %c0_i32_0 = arith.constant 0 : i32
    %c0_i32_1 = arith.constant 0 : i32
    %c0_i32_2 = arith.constant 0 : i32
    return %c0_i32, %c0_i32_0, %c0_i32_1 : i32, i32, i32
  }
  func.func @transform_25(%arg0: i32) -> (i32, i32) {
    %c0_i32 = arith.constant 0 : i32
    %c0_i32_0 = arith.constant 0 : i32
    %c0_i32_1 = arith.constant 0 : i32
    return %c0_i32, %c0_i32_0 : i32, i32
  }
  func.func @transform_26(%arg0: i32) -> (i32, i32, i32) {
    %c0_i32 = arith.constant 0 : i32
    %c0_i32_0 = arith.constant 0 : i32
    %c0_i32_1 = arith.constant 0 : i32
    %c0_i32_2 = arith.constant 0 : i32
    return %c0_i32, %c0_i32_0, %c0_i32_1 : i32, i32, i32
  }
  func.func @transform_27(%arg0: i32) -> (i32, i32, i32) {
    %c0_i32 = arith.constant 0 : i32
    %c0_i32_0 = arith.constant 0 : i32
    %c0_i32_1 = arith.constant 0 : i32
    %c0_i32_2 = arith.constant 0 : i32
    return %c0_i32, %c0_i32_0, %c0_i32_1 : i32, i32, i32
  }
  func.func @transform_28(%arg0: i32) -> (i32, i32, i32) {
    %c0_i32 = arith.constant 0 : i32
    %c0_i32_0 = arith.constant 0 : i32
    %c0_i32_1 = arith.constant 0 : i32
    %c0_i32_2 = arith.constant 0 : i32
    return %c0_i32, %c0_i32_0, %c0_i32_1 : i32, i32, i32
  }
  func.func @transform_29(%arg0: i32) -> (i32, i32, i32) {
    %c0_i32 = arith.constant 0 : i32
    %c0_i32_0 = arith.constant 0 : i32
    %c0_i32_1 = arith.constant 0 : i32
    %c0_i32_2 = arith.constant 0 : i32
    return %c0_i32, %c0_i32_0, %c0_i32_1 : i32, i32, i32
  }
  func.func @transform_30(%arg0: i32) -> (i32, i32, i32) {
    %c0_i32 = arith.constant 0 : i32
    %c0_i32_0 = arith.constant 0 : i32
    %c0_i32_1 = arith.constant 0 : i32
    %c0_i32_2 = arith.constant 0 : i32
    return %c0_i32, %c0_i32_0, %c0_i32_1 : i32, i32, i32
  }
  func.func @transform_31(%arg0: i32) -> (i32, i32, i32) {
    %c0_i32 = arith.constant 0 : i32
    %c0_i32_0 = arith.constant 0 : i32
    %c0_i32_1 = arith.constant 0 : i32
    %c0_i32_2 = arith.constant 0 : i32
    return %c0_i32, %c0_i32_0, %c0_i32_1 : i32, i32, i32
  }
  func.func @transform_32(%arg0: i32) -> (i32, i32, i32) {
    %c0_i32 = arith.constant 0 : i32
    %c0_i32_0 = arith.constant 0 : i32
    %c0_i32_1 = arith.constant 0 : i32
    %c0_i32_2 = arith.constant 0 : i32
    return %c0_i32, %c0_i32_0, %c0_i32_1 : i32, i32, i32
  }
  func.func @transform_33(%arg0: i32) -> (i32, i32, i32) {
    %c0_i32 = arith.constant 0 : i32
    %c0_i32_0 = arith.constant 0 : i32
    %c0_i32_1 = arith.constant 0 : i32
    %c0_i32_2 = arith.constant 0 : i32
    return %c0_i32, %c0_i32_0, %c0_i32_1 : i32, i32, i32
  }
  func.func @transform_34(%arg0: i32) -> (i32, i32, i32) {
    %c0_i32 = arith.constant 0 : i32
    %c0_i32_0 = arith.constant 0 : i32
    %c0_i32_1 = arith.constant 0 : i32
    %c0_i32_2 = arith.constant 0 : i32
    return %c0_i32, %c0_i32_0, %c0_i32_1 : i32, i32, i32
  }
  func.func @transform_35(%arg0: i32) -> (i32, i32, i32) {
    %c0_i32 = arith.constant 0 : i32
    %c0_i32_0 = arith.constant 0 : i32
    %c0_i32_1 = arith.constant 0 : i32
    %c0_i32_2 = arith.constant 0 : i32
    return %c0_i32, %c0_i32_0, %c0_i32_1 : i32, i32, i32
  }
  func.func @transform_36(%arg0: i32) -> (i32, i32, i32) {
    %c0_i32 = arith.constant 0 : i32
    %c0_i32_0 = arith.constant 0 : i32
    %c0_i32_1 = arith.constant 0 : i32
    %c0_i32_2 = arith.constant 0 : i32
    return %c0_i32, %c0_i32_0, %c0_i32_1 : i32, i32, i32
  }
  func.func @transform_37(%arg0: i32) -> (i32, i32) {
    %c0_i32 = arith.constant 0 : i32
    %c0_i32_0 = arith.constant 0 : i32
    %c0_i32_1 = arith.constant 0 : i32
    return %c0_i32, %c0_i32_0 : i32, i32
  }
  func.func @transform_38(%arg0: i32) -> (i32, i32, i32) {
    %c0_i32 = arith.constant 0 : i32
    %c0_i32_0 = arith.constant 0 : i32
    %c0_i32_1 = arith.constant 0 : i32
    %c0_i32_2 = arith.constant 0 : i32
    return %c0_i32, %c0_i32_0, %c0_i32_1 : i32, i32, i32
  }
  func.func @transform_39(%arg0: i32) -> (i32, i32, i32) {
    %c0_i32 = arith.constant 0 : i32
    %c0_i32_0 = arith.constant 0 : i32
    %c0_i32_1 = arith.constant 0 : i32
    %c0_i32_2 = arith.constant 0 : i32
    return %c0_i32, %c0_i32_0, %c0_i32_1 : i32, i32, i32
  }
  func.func @transform_40(%arg0: i32) -> (i32, i32, i32) {
    %c0_i32 = arith.constant 0 : i32
    %c0_i32_0 = arith.constant 0 : i32
    %c0_i32_1 = arith.constant 0 : i32
    %c0_i32_2 = arith.constant 0 : i32
    return %c0_i32, %c0_i32_0, %c0_i32_1 : i32, i32, i32
  }
  func.func @transform_41(%arg0: i32) -> (i32, i32, i32) {
    %c0_i32 = arith.constant 0 : i32
    %c0_i32_0 = arith.constant 0 : i32
    %c0_i32_1 = arith.constant 0 : i32
    %c0_i32_2 = arith.constant 0 : i32
    return %c0_i32, %c0_i32_0, %c0_i32_1 : i32, i32, i32
  }
  func.func @transform_42(%arg0: i32) -> (i32, i32, i32) {
    %c0_i32 = arith.constant 0 : i32
    %c0_i32_0 = arith.constant 0 : i32
    %c0_i32_1 = arith.constant 0 : i32
    %c0_i32_2 = arith.constant 0 : i32
    return %c0_i32, %c0_i32_0, %c0_i32_1 : i32, i32, i32
  }
  func.func @transform_43(%arg0: i32) -> (i32, i32, i32) {
    %c0_i32 = arith.constant 0 : i32
    %c0_i32_0 = arith.constant 0 : i32
    %c0_i32_1 = arith.constant 0 : i32
    %c0_i32_2 = arith.constant 0 : i32
    return %c0_i32, %c0_i32_0, %c0_i32_1 : i32, i32, i32
  }
  func.func @transform_44(%arg0: i32) -> (i32, i32, i32) {
    %c0_i32 = arith.constant 0 : i32
    %c0_i32_0 = arith.constant 0 : i32
    %c0_i32_1 = arith.constant 0 : i32
    %c0_i32_2 = arith.constant 0 : i32
    return %c0_i32, %c0_i32_0, %c0_i32_1 : i32, i32, i32
  }
  func.func @transform_45(%arg0: i32) -> (i32, i32, i32) {
    %c0_i32 = arith.constant 0 : i32
    %c0_i32_0 = arith.constant 0 : i32
    %c0_i32_1 = arith.constant 0 : i32
    %c0_i32_2 = arith.constant 0 : i32
    return %c0_i32, %c0_i32_0, %c0_i32_1 : i32, i32, i32
  }
  func.func @transform_46(%arg0: i32) -> (i32, i32, i32) {
    %c0_i32 = arith.constant 0 : i32
    %c0_i32_0 = arith.constant 0 : i32
    %c0_i32_1 = arith.constant 0 : i32
    %c0_i32_2 = arith.constant 0 : i32
    return %c0_i32, %c0_i32_0, %c0_i32_1 : i32, i32, i32
  }
  func.func @transform_47(%arg0: i32) -> (i32, i32, i32) {
    %c0_i32 = arith.constant 0 : i32
    %c0_i32_0 = arith.constant 0 : i32
    %c0_i32_1 = arith.constant 0 : i32
    %c0_i32_2 = arith.constant 0 : i32
    return %c0_i32, %c0_i32_0, %c0_i32_1 : i32, i32, i32
  }
  func.func @transform_48(%arg0: i32) -> (i32, i32, i32) {
    %c0_i32 = arith.constant 0 : i32
    %c0_i32_0 = arith.constant 0 : i32
    %c0_i32_1 = arith.constant 0 : i32
    %c0_i32_2 = arith.constant 0 : i32
    return %c0_i32, %c0_i32_0, %c0_i32_1 : i32, i32, i32
  }
  func.func @transform_49(%arg0: i32) -> (i32, i32) {
    %c0_i32 = arith.constant 0 : i32
    %c0_i32_0 = arith.constant 0 : i32
    %c0_i32_1 = arith.constant 0 : i32
    return %c0_i32, %c0_i32_0 : i32, i32
  }
  func.func @transform_50(%arg0: i32) -> (i32, i32, i32) {
    %c0_i32 = arith.constant 0 : i32
    %c0_i32_0 = arith.constant 0 : i32
    %c0_i32_1 = arith.constant 0 : i32
    %c0_i32_2 = arith.constant 0 : i32
    return %c0_i32, %c0_i32_0, %c0_i32_1 : i32, i32, i32
  }
  func.func @transform_51(%arg0: i32) -> (i32, i32, i32) {
    %c0_i32 = arith.constant 0 : i32
    %c0_i32_0 = arith.constant 0 : i32
    %c0_i32_1 = arith.constant 0 : i32
    %c0_i32_2 = arith.constant 0 : i32
    return %c0_i32, %c0_i32_0, %c0_i32_1 : i32, i32, i32
  }
  func.func @transform_52(%arg0: i32) -> (i32, i32, i32) {
    %c0_i32 = arith.constant 0 : i32
    %c0_i32_0 = arith.constant 0 : i32
    %c0_i32_1 = arith.constant 0 : i32
    %c0_i32_2 = arith.constant 0 : i32
    return %c0_i32, %c0_i32_0, %c0_i32_1 : i32, i32, i32
  }
  func.func @transform_53(%arg0: i32) -> (i32, i32, i32) {
    %c0_i32 = arith.constant 0 : i32
    %c0_i32_0 = arith.constant 0 : i32
    %c0_i32_1 = arith.constant 0 : i32
    %c0_i32_2 = arith.constant 0 : i32
    return %c0_i32, %c0_i32_0, %c0_i32_1 : i32, i32, i32
  }
  func.func @transform_54(%arg0: i32) -> (i32, i32, i32) {
    %c0_i32 = arith.constant 0 : i32
    %c0_i32_0 = arith.constant 0 : i32
    %c0_i32_1 = arith.constant 0 : i32
    %c0_i32_2 = arith.constant 0 : i32
    return %c0_i32, %c0_i32_0, %c0_i32_1 : i32, i32, i32
  }
  func.func @transform_55(%arg0: i32) -> (i32, i32, i32) {
    %c0_i32 = arith.constant 0 : i32
    %c0_i32_0 = arith.constant 0 : i32
    %c0_i32_1 = arith.constant 0 : i32
    %c0_i32_2 = arith.constant 0 : i32
    return %c0_i32, %c0_i32_0, %c0_i32_1 : i32, i32, i32
  }
  func.func @transform_56(%arg0: i32) -> (i32, i32, i32) {
    %c0_i32 = arith.constant 0 : i32
    %c0_i32_0 = arith.constant 0 : i32
    %c0_i32_1 = arith.constant 0 : i32
    %c0_i32_2 = arith.constant 0 : i32
    return %c0_i32, %c0_i32_0, %c0_i32_1 : i32, i32, i32
  }
  func.func @transform_57(%arg0: i32) -> (i32, i32, i32) {
    %c0_i32 = arith.constant 0 : i32
    %c0_i32_0 = arith.constant 0 : i32
    %c0_i32_1 = arith.constant 0 : i32
    %c0_i32_2 = arith.constant 0 : i32
    return %c0_i32, %c0_i32_0, %c0_i32_1 : i32, i32, i32
  }
  func.func @transform_58(%arg0: i32) -> (i32, i32, i32) {
    %c0_i32 = arith.constant 0 : i32
    %c0_i32_0 = arith.constant 0 : i32
    %c0_i32_1 = arith.constant 0 : i32
    %c0_i32_2 = arith.constant 0 : i32
    return %c0_i32, %c0_i32_0, %c0_i32_1 : i32, i32, i32
  }
  func.func @transform_59(%arg0: i32) -> (i32, i32, i32) {
    %c0_i32 = arith.constant 0 : i32
    %c0_i32_0 = arith.constant 0 : i32
    %c0_i32_1 = arith.constant 0 : i32
    return %arg0, %c0_i32, %c0_i32_0 : i32, i32, i32
  }
  func.func @transform_60(%arg0: i32) -> (i32, i32, i32) {
    %c0_i32 = arith.constant 0 : i32
    %c0_i32_0 = arith.constant 0 : i32
    %c0_i32_1 = arith.constant 0 : i32
    return %arg0, %c0_i32, %c0_i32_0 : i32, i32, i32
  }
}

</mosaic_0001>

<llo_original>
// kernel: mlstm_forward.1
$region0: #{mlstm_forward.1}
  #allocation0 [shape = 'u32[]', space=smem, size = 0x4, offset = 0x4, fixed_abs, tag = 'smem constant byte address 0x4 - core index']
  #allocation1 [shape = 'u32[72,128]{1,0:T(1,128)}', space=vmem, size = 0x9000, scoped, tag = 'internal scratch']
  #allocation2 [shape = 'f32[2,6,32]{2,1,0:T(8,128)}', space=vmem, size = 0x2000, scoped, tag = 'scratch operand']
  #allocation3 [shape = 'f32[2,2,6,4]{3,2,1,0:T(8,128)}', space=vmem, size = 0x4000, scoped, tag = 'scratch operand']
  #allocation4 [shape = 'f32[2,4,32]{2,1,0:T(4,128)}', space=vmem, size = 0x1000, scoped, tag = 'scratch operand']
  #allocation5 [shape = 'f32[2,2,4,6]{3,2,1,0:T(4,128)}', space=vmem, size = 0x2000, scoped, tag = 'scratch operand']
  %s0 = inlined_call_operand.smem [shape: u32[61], index: -1, kind: input, shape index: {}]
  %s1 = sld [smem:[%s0]]
  %s2 = scalar_lea.smem %s0, 1
  %s3 = sld [smem:[%s2]]
  %s4 = scalar_lea.smem %s0, 2
  %s5 = sld [smem:[%s4]]
  %s6 = scalar_lea.smem %s0, 3
  %s7 = sld [smem:[%s6]]
  %s8 = scalar_lea.smem %s0, 4
  %s9 = sld [smem:[%s8]]
  %s10 = scalar_lea.smem %s0, 5
  %s11 = sld [smem:[%s10]]
  %s12 = scalar_lea.smem %s0, 6
  %s13 = sld [smem:[%s12]]
  %s14 = scalar_lea.smem %s0, 7
  %s15 = sld [smem:[%s14]]
  %s16 = scalar_lea.smem %s0, 8
  %s17 = sld [smem:[%s16]]
  %s18 = scalar_lea.smem %s0, 9
  %s19 = sld [smem:[%s18]]
  %s20 = scalar_lea.smem %s0, 10
  %s21 = sld [smem:[%s20]]
  %s22 = scalar_lea.smem %s0, 11
  %s23 = sld [smem:[%s22]]
  %s24 = scalar_lea.smem %s0, 12
  %s25 = sld [smem:[%s24]]
  %s26 = scalar_lea.smem %s0, 13
  %s27 = sld [smem:[%s26]]
  %s28 = scalar_lea.smem %s0, 14
  %s29 = sld [smem:[%s28]]
  %s30 = scalar_lea.smem %s0, 15
  %s31 = sld [smem:[%s30]]
  %s32 = scalar_lea.smem %s0, 16
  %s33 = sld [smem:[%s32]]
  %s34 = scalar_lea.smem %s0, 17
  %s35 = sld [smem:[%s34]]
  %s36 = scalar_lea.smem %s0, 18
  %s37 = sld [smem:[%s36]]
  %s38 = scalar_lea.smem %s0, 19
  %s39 = sld [smem:[%s38]]
  %s40 = scalar_lea.smem %s0, 20
  %s41 = sld [smem:[%s40]]
  %s42 = scalar_lea.smem %s0, 21
  %s43 = sld [smem:[%s42]]
  %s44 = scalar_lea.smem %s0, 22
  %s45 = sld [smem:[%s44]]
  %s46 = scalar_lea.smem %s0, 23
  %s47 = sld [smem:[%s46]]
  %s48 = scalar_lea.smem %s0, 24
  %s49 = sld [smem:[%s48]]
  %s50 = scalar_lea.smem %s0, 25
  %s51 = sld [smem:[%s50]]
  %s52 = scalar_lea.smem %s0, 26
  %s53 = sld [smem:[%s52]]
  %s54 = scalar_lea.smem %s0, 27
  %s55 = sld [smem:[%s54]]
  %s56 = scalar_lea.smem %s0, 28
  %s57 = sld [smem:[%s56]]
  %s58 = scalar_lea.smem %s0, 29
  %s59 = sld [smem:[%s58]]
  %s60 = scalar_lea.smem %s0, 30
  %s61 = sld [smem:[%s60]]
  %s62 = scalar_lea.smem %s0, 31
  %s63 = sld [smem:[%s62]]
  %s64 = scalar_lea.smem %s0, 32
  %s65 = sld [smem:[%s64]]
  %s66 = scalar_lea.smem %s0, 33
  %s67 = sld [smem:[%s66]]
  %s68 = scalar_lea.smem %s0, 34
  %s69 = sld [smem:[%s68]]
  %s70 = scalar_lea.smem %s0, 35
  %s71 = sld [smem:[%s70]]
  %s72 = scalar_lea.smem %s0, 36
  %s73 = sld [smem:[%s72]]
  %s74 = scalar_lea.smem %s0, 37
  %s75 = sld [smem:[%s74]]
  %s76 = scalar_lea.smem %s0, 38
  %s77 = sld [smem:[%s76]]
  %s78 = scalar_lea.smem %s0, 39
  %s79 = sld [smem:[%s78]]
  %s80 = scalar_lea.smem %s0, 40
  %s81 = sld [smem:[%s80]]
  %s82 = scalar_lea.smem %s0, 41
  %s83 = sld [smem:[%s82]]
  %s84 = scalar_lea.smem %s0, 42
  %s85 = sld [smem:[%s84]]
  %s86 = scalar_lea.smem %s0, 43
  %s87 = sld [smem:[%s86]]
  %s88 = scalar_lea.smem %s0, 44
  %s89 = sld [smem:[%s88]]
  %s90 = scalar_lea.smem %s0, 45
  %s91 = sld [smem:[%s90]]
  %s92 = scalar_lea.smem %s0, 46
  %s93 = sld [smem:[%s92]]
  %s94 = scalar_lea.smem %s0, 47
  %s95 = sld [smem:[%s94]]
  %s96 = scalar_lea.smem %s0, 48
  %s97 = sld [smem:[%s96]]
  %s98 = scalar_lea.smem %s0, 49
  %s99 = sld [smem:[%s98]]
  %s100 = scalar_lea.smem %s0, 50
  %s101 = sld [smem:[%s100]]
  %s102 = scalar_lea.smem %s0, 51
  %s103 = sld [smem:[%s102]]
  %s104 = scalar_lea.smem %s0, 52
  %s105 = sld [smem:[%s104]]
  %s106 = scalar_lea.smem %s0, 53
  %s107 = sld [smem:[%s106]]
  %s108 = scalar_lea.smem %s0, 54
  %s109 = sld [smem:[%s108]]
  %s110 = scalar_lea.smem %s0, 55
  %s111 = sld [smem:[%s110]]
  %s112 = scalar_lea.smem %s0, 56
  %s113 = sld [smem:[%s112]]
  %s114 = scalar_lea.smem %s0, 57
  %s115 = sld [smem:[%s114]]
  %s116 = scalar_lea.smem %s0, 58
  %s117 = sld [smem:[%s116]]
  %s118 = scalar_lea.smem %s0, 59
  %s119 = sld [smem:[%s118]]
  %s120 = scalar_lea.smem %s0, 60
  %s121 = sld [smem:[%s120]]
  %122 = xla_tuple %s119, %s121
  %s123 = sld [smem:[#allocation0]]
  $region352: #{mlstm_forward.1} parent=0
    _
  %s125 = ssub.s32 1, %s123
  %s126 = scalar_select 0, %s125, %s123
  $region1: #{mlstm_forward.1} parent=0
    #allocation6 [shape = 'u8[512]{0}', space=vmem, size = 0x400, scoped, tag = 'input window, operand 2, single buffered']
    #allocation7 [shape = 's32[2]{0}', space=sflag, size = 0x8, scoped, tag = 'scoped memory for mlstm_forward.1']
    #allocation8 [shape = 's32[2]{0}', space=sflag, size = 0x8, scoped, tag = 'scoped memory for mlstm_forward.1']
    #allocation9 [shape = 'u8[512]{0}', space=vmem, size = 0x400, scoped, tag = 'input window, operand 3, single buffered']
    #allocation10 [shape = 's32[1]{0}', space=sflag, size = 0x4, scoped, tag = 'scoped memory for mlstm_forward.1']
    #allocation11 [shape = 'u8[512]{0}', space=vmem, size = 0x400, scoped, tag = 'input window, operand 6, single buffered']
    #allocation12 [shape = 'u8[512]{0}', space=vmem, size = 0x400, scoped, tag = 'input window, operand 7, single buffered']
    #allocation13 [shape = 's32[1]{0}', space=sflag, size = 0x4, scoped, tag = 'scoped memory for mlstm_forward.1']
    #allocation14 [shape = 'u8[1024]{0}', space=vmem, size = 0x400, scoped, tag = 'input window, operand 10, single buffered']
    #allocation15 [shape = 'u8[1024]{0}', space=vmem, size = 0x400, scoped, tag = 'input window, operand 12, single buffered']
    #allocation16 [shape = 's32[1]{0}', space=sflag, size = 0x4, scoped, tag = 'scoped memory for mlstm_forward.1']
    #allocation17 [shape = 'u8[512]{0}', space=vmem, size = 0x400, scoped, tag = 'input window, operand 13, single buffered']
    #allocation18 [shape = 'u8[1024]{0}', space=vmem, size = 0x400, scoped, tag = 'input window, operand 22, single buffered']
    #allocation19 [shape = 's32[1]{0}', space=sflag, size = 0x4, scoped, tag = 'scoped memory for mlstm_forward.1']
    #allocation20 [shape = 'u8[1024]{0}', space=vmem, size = 0x400, scoped, tag = 'input window, operand 24, single buffered']
    #allocation21 [shape = 'u8[512]{0}', space=vmem, size = 0x400, scoped, tag = 'input window, operand 25, single buffered']
    #allocation22 [shape = 's32[1]{0}', space=sflag, size = 0x4, scoped, tag = 'scoped memory for mlstm_forward.1']
    #allocation23 [shape = 'u8[1024]{0}', space=vmem, size = 0x400, scoped, tag = 'input window, operand 34, single buffered']
    #allocation24 [shape = 'u8[1024]{0}', space=vmem, size = 0x400, scoped, tag = 'input window, operand 36, single buffered']
    #allocation25 [shape = 's32[1]{0}', space=sflag, size = 0x4, scoped, tag = 'scoped memory for mlstm_forward.1']
    #allocation26 [shape = 'u8[512]{0}', space=vmem, size = 0x400, scoped, tag = 'input window, operand 37, single buffered']
    #allocation27 [shape = 'u8[1024]{0}', space=vmem, size = 0x400, scoped, tag = 'input window, operand 46, single buffered']
    #allocation28 [shape = 's32[1]{0}', space=sflag, size = 0x4, scoped, tag = 'scoped memory for mlstm_forward.1']
    #allocation29 [shape = 'u8[1024]{0}', space=vmem, size = 0x400, scoped, tag = 'input window, operand 48, single buffered']
    #allocation30 [shape = 'u8[512]{0}', space=vmem, size = 0x400, scoped, tag = 'input window, operand 49, single buffered']
    #allocation31 [shape = 's32[1]{0}', space=sflag, size = 0x4, scoped, tag = 'scoped memory for mlstm_forward.1']
    #allocation32 [shape = 'u8[4096]{0}', space=vmem, size = 0x1000, scoped, tag = 'output window, operand 1']
    %127 = vsyncpa [#allocation7], 0
    %128 = vsyncpa [#allocation10], 0
    %129 = vsyncpa [#allocation13], 0
    %130 = vsyncpa [#allocation16], 0
    %131 = vsyncpa [#allocation19], 0
    %132 = vsyncpa [#allocation22], 0
    %133 = vsyncpa [#allocation25], 0
    %134 = vsyncpa [#allocation28], 0
    %135 = vsyncpa [#allocation31], 0
    %136 = vsyncpa [#allocation8], 0
    %s137 = scalar_lea.sflag [#allocation8], 1
    %138 = vsyncpa %s137, 0
    loop: start=0, step=1, limit=4
    $region2: #{mlstm_forward.1} parent=1 // loop_pre_header
      _
    $region3: #{mlstm_forward.1} parent=1 // loop_header
      %s140 = sphi 0, %s144
      %p141 = scmp.ge.s32.totalorder %s140, 4
      %s150 = sphi 0, %s152
      %s153 = sphi 0, %s150
      %s154 = sphi 0, %s153
      %s170 = sphi 0, %s154
      %s176 = sphi 0, %s178
      %s179 = sphi 0, %s176
      %s180 = sphi 0, %s179
      %s196 = sphi 0, %s180
      %s200 = sphi 0, %s200
      %s202 = sphi 0, %s200
      %s203 = sphi 0, %s202
      %s217 = sphi 0, %s203
      %s221 = sphi 0, %s221
      %s223 = sphi 0, %s221
      %s224 = sphi 0, %s223
      %s238 = sphi 0, %s224
      %s242 = sphi 0, %s242
      %s244 = sphi 0, %s242
      %s245 = sphi 0, %s244
      %s259 = sphi 0, %s245
      %s263 = sphi 0, %s263
      %s265 = sphi 0, %s263
      %s266 = sphi 0, %s265
      %s280 = sphi 0, %s266
      %s284 = sphi 0, %s284
      %s286 = sphi 0, %s284
      %s287 = sphi 0, %s286
      %s301 = sphi 0, %s287
      %s305 = sphi 0, %s305
      %s307 = sphi 0, %s305
      %s308 = sphi 0, %s307
      %s322 = sphi 0, %s308
      %s326 = sphi 0, %s326
      %s328 = sphi 0, %s326
      %s329 = sphi 0, %s328
      %s343 = sphi 0, %s329
      %s347 = sphi 0, %s347
      %s349 = sphi 0, %s347
      %s350 = sphi 0, %s349
      %s364 = sphi 0, %s350
      %s368 = sphi 0, %s368
      %s370 = sphi 0, %s368
      %s371 = sphi 0, %s370
      %s385 = sphi 0, %s371
      %s389 = sphi 0, %s389
      %s391 = sphi 0, %s389
      %s392 = sphi 0, %s391
      %s406 = sphi 0, %s392
      %s410 = sphi 0, %s410
      %s412 = sphi 0, %s410
      %s413 = sphi 0, %s412
      %s427 = sphi 0, %s413
      %s431 = sphi 0, %s431
      %s433 = sphi 0, %s431
      %s434 = sphi 0, %s433
      %s448 = sphi 0, %s434
      %s452 = sphi 0, %s452
      %s454 = sphi 0, %s452
      %s455 = sphi 0, %s454
      %s469 = sphi 0, %s455
      %s473 = sphi 0, %s473
      %s475 = sphi 0, %s473
      %s476 = sphi 0, %s475
      %s490 = sphi 0, %s476
      %s494 = sphi 0, %s494
      %s496 = sphi 0, %s494
      %s497 = sphi 0, %s496
      %s511 = sphi 0, %s497
      %s515 = sphi 0, %s515
      %s517 = sphi 0, %s515
      %s518 = sphi 0, %s517
      %s532 = sphi 0, %s518
      %s536 = sphi 0, %s536
      %s538 = sphi 0, %s536
      %s539 = sphi 0, %s538
      %s553 = sphi 0, %s539
      %s557 = sphi 0, %s557
      %s559 = sphi 0, %s557
      %s560 = sphi 0, %s559
      %s574 = sphi 0, %s560
      %s578 = sphi 0, %s578
      %s580 = sphi 0, %s578
      %s581 = sphi 0, %s580
      %s595 = sphi 0, %s581
      %s599 = sphi 0, %s599
      %s601 = sphi 0, %s599
      %s602 = sphi 0, %s601
      %s616 = sphi 0, %s602
      %s620 = sphi 0, %s620
      %s622 = sphi 0, %s620
      %s623 = sphi 0, %s622
      %s637 = sphi 0, %s623
      %s641 = sphi 0, %s641
      %s643 = sphi 0, %s641
      %s644 = sphi 0, %s643
      %s658 = sphi 0, %s644
      %s662 = sphi 0, %s662
      %s664 = sphi 0, %s662
      %s665 = sphi 0, %s664
      %s679 = sphi 0, %s665
      %s683 = sphi 0, %s683
      %s685 = sphi 0, %s683
      %s686 = sphi 0, %s685
      %s700 = sphi 0, %s686
      %s704 = sphi 0, %s704
      %s706 = sphi 0, %s704
      %s707 = sphi 0, %s706
      %s721 = sphi 0, %s707
      %s725 = sphi 0, %s725
      %s727 = sphi 0, %s725
      %s728 = sphi 0, %s727
      %s742 = sphi 0, %s728
      %s746 = sphi 0, %s746
      %s748 = sphi 0, %s746
      %s749 = sphi 0, %s748
      %s763 = sphi 0, %s749
      %s767 = sphi 0, %s767
      %s769 = sphi 0, %s767
      %s770 = sphi 0, %s769
      %s784 = sphi 0, %s770
      %s788 = sphi 0, %s788
      %s790 = sphi 0, %s788
      %s791 = sphi 0, %s790
      %s805 = sphi 0, %s791
      %s809 = sphi 0, %s809
      %s811 = sphi 0, %s809
      %s812 = sphi 0, %s811
      %s826 = sphi 0, %s812
      %s830 = sphi 0, %s830
      %s832 = sphi 0, %s830
      %s833 = sphi 0, %s832
      %s847 = sphi 0, %s833
      %s851 = sphi 0, %s851
      %s853 = sphi 0, %s851
      %s854 = sphi 0, %s853
      %s868 = sphi 0, %s854
      %s872 = sphi 0, %s872
      %s874 = sphi 0, %s872
      %s875 = sphi 0, %s874
      %s889 = sphi 0, %s875
      %s893 = sphi 0, %s893
      %s895 = sphi 0, %s893
      %s896 = sphi 0, %s895
      %s910 = sphi 0, %s896
      %s914 = sphi 0, %s914
      %s916 = sphi 0, %s914
      %s917 = sphi 0, %s916
      %s931 = sphi 0, %s917
      %s935 = sphi 0, %s935
      %s937 = sphi 0, %s935
      %s938 = sphi 0, %s937
      %s952 = sphi 0, %s938
      %s956 = sphi 0, %s956
      %s958 = sphi 0, %s956
      %s959 = sphi 0, %s958
      %s973 = sphi 0, %s959
      %s977 = sphi 0, %s977
      %s979 = sphi 0, %s977
      %s980 = sphi 0, %s979
      %s994 = sphi 0, %s980
      %s998 = sphi 0, %s998
      %s1000 = sphi 0, %s998
      %s1001 = sphi 0, %s1000
      %s1015 = sphi 0, %s1001
      %s1019 = sphi 0, %s1019
      %s1021 = sphi 0, %s1019
      %s1022 = sphi 0, %s1021
      %s1036 = sphi 0, %s1022
      %s1040 = sphi 0, %s1040
      %s1042 = sphi 0, %s1040
      %s1043 = sphi 0, %s1042
      %s1057 = sphi 0, %s1043
      %s1061 = sphi 0, %s1061
      %s1063 = sphi 0, %s1061
      %s1064 = sphi 0, %s1063
      %s1078 = sphi 0, %s1064
      %s1082 = sphi 0, %s1082
      %s1084 = sphi 0, %s1082
      %s1085 = sphi 0, %s1084
      %s1099 = sphi 0, %s1085
      %s1103 = sphi 0, %s1103
      %s1105 = sphi 0, %s1103
      %s1106 = sphi 0, %s1105
      %s1120 = sphi 0, %s1106
      %s1124 = sphi 0, %s1124
      %s1126 = sphi 0, %s1124
      %s1127 = sphi 0, %s1126
      %s1141 = sphi 0, %s1127
      %s1145 = sphi 0, %s1145
      %s1147 = sphi 0, %s1145
      %s1148 = sphi 0, %s1147
      %s1162 = sphi 0, %s1148
      %s1166 = sphi 0, %s1166
      %s1168 = sphi 0, %s1166
      %s1169 = sphi 0, %s1168
      %s1183 = sphi 0, %s1169
      %s1187 = sphi 0, %s1187
      %s1189 = sphi 0, %s1187
      %s1190 = sphi 0, %s1189
      %s1204 = sphi 0, %s1190
      %s1208 = sphi 0, %s1208
      %s1210 = sphi 0, %s1208
      %s1211 = sphi 0, %s1210
      %s1225 = sphi 0, %s1211
      %s1229 = sphi 0, %s1229
      %s1231 = sphi 0, %s1229
      %s1232 = sphi 0, %s1231
      %s1246 = sphi 0, %s1232
      %s1250 = sphi 0, %s1250
      %s1252 = sphi 0, %s1250
      %s1253 = sphi 0, %s1252
      %s1267 = sphi 0, %s1253
      %s1271 = sphi 0, %s1271
      %s1273 = sphi 0, %s1271
      %s1274 = sphi 0, %s1273
      %s1288 = sphi 0, %s1274
      %s1292 = sphi 0, %s1292
      %s1294 = sphi 0, %s1292
      %s1295 = sphi 0, %s1294
      %s1309 = sphi 0, %s1295
      %s1313 = sphi 0, %s1313
      %s1315 = sphi 0, %s1313
      %s1316 = sphi 0, %s1315
      %s1330 = sphi 0, %s1316
      %s1334 = sphi 0, %s1334
      %s1336 = sphi 0, %s1334
      %s1337 = sphi 0, %s1336
      %s1351 = sphi 0, %s1337
      %s1355 = sphi 0, %s1355
      %s1357 = sphi 0, %s1355
      %s1358 = sphi 0, %s1357
      %s1372 = sphi 0, %s1358
      %s1376 = sphi 0, %s1376
      %s1378 = sphi 0, %s1376
      %s1379 = sphi 0, %s1378
      %s1393 = sphi 0, %s1379
      %s1399 = sphi 0, %s1401
      %s1402 = sphi 0, %s1399
      %s1403 = sphi 0, %s1402
      %s1419 = sphi 0, %s1403
      %s1425 = sphi 0, %s1427
      %s1428 = sphi 0, %s1425
      %s1429 = sphi 0, %s1428
      %s1445 = sphi 0, %s1429
    $region4: #{mlstm_forward.1} parent=1 // loop_header_branch
      %143 = sbr.rel (%p141) target = $region8
    $region5: #{mlstm_forward.1} parent=1 // loop_body
      %s145 = ssub.s32 %s140, 1
      %s146 = ssub.s32 %s140, 2
      %s147 = sadd.s32 %s140, 1
      %s148 = ssub.s32 %s140, %s147
      %p149 = scmp.eq.s32.totalorder %s148, 0
      %s151 = sadd.s32 %s150, 1
      %s152 = scalar_select %p149, %s150, %s151
      %p155 = pneg %p149
      %p156 = scmp.eq.s32.totalorder %s140, 1
      %p157 = por %p155, %p156
      %p158 = scmp.ne.s32.totalorder %s150, %s153
      %p159 = scmp.eq.s32.totalorder %s140, 0
      %p160 = por %p158, %p159
      %p161 = scmp.ne.s32.totalorder %s150, %s153
      %p162 = scmp.eq.s32.totalorder %s145, 1
      %p163 = por %p161, %p162
      %p164 = scmp.ne.s32.totalorder %s153, %s154
      %p165 = scmp.eq.s32.totalorder %s145, 0
      %p166 = por %p164, %p165
      %p167 = scmp.ne.s32.totalorder %s153, %s154
      %p168 = scmp.eq.s32.totalorder %s146, 1
      %p169 = por %p167, %p168
      %p171 = scmp.ne.s32.totalorder %s154, %s170
      %p172 = scmp.eq.s32.totalorder %s146, 0
      %p173 = por %p171, %p172
      %s174 = ssub.s32 %s140, %s147
      %p175 = scmp.eq.s32.totalorder %s174, 0
      %s177 = sadd.s32 %s176, 1
      %s178 = scalar_select %p175, %s176, %s177
      %p181 = pneg %p175
      %p182 = scmp.eq.s32.totalorder %s140, 1
      %p183 = por %p181, %p182
      %p184 = scmp.ne.s32.totalorder %s176, %s179
      %p185 = scmp.eq.s32.totalorder %s140, 0
      %p186 = por %p184, %p185
      %p187 = scmp.ne.s32.totalorder %s176, %s179
      %p188 = scmp.eq.s32.totalorder %s145, 1
      %p189 = por %p187, %p188
      %p190 = scmp.ne.s32.totalorder %s179, %s180
      %p191 = scmp.eq.s32.totalorder %s145, 0
      %p192 = por %p190, %p191
      %p193 = scmp.ne.s32.totalorder %s179, %s180
      %p194 = scmp.eq.s32.totalorder %s146, 1
      %p195 = por %p193, %p194
      %p197 = scmp.ne.s32.totalorder %s180, %s196
      %p198 = scmp.eq.s32.totalorder %s146, 0
      %p199 = por %p197, %p198
      %s201 = sadd.s32 %s200, 1
      %p204 = scmp.eq.s32.totalorder %s140, 1
      %p205 = scmp.ne.s32.totalorder %s200, %s202
      %p206 = scmp.eq.s32.totalorder %s140, 0
      %p207 = por %p205, %p206
      %p208 = scmp.ne.s32.totalorder %s200, %s202
      %p209 = scmp.eq.s32.totalorder %s145, 1
      %p210 = por %p208, %p209
      %p211 = scmp.ne.s32.totalorder %s202, %s203
      %p212 = scmp.eq.s32.totalorder %s145, 0
      %p213 = por %p211, %p212
      %p214 = scmp.ne.s32.totalorder %s202, %s203
      %p215 = scmp.eq.s32.totalorder %s146, 1
      %p216 = por %p214, %p215
      %p218 = scmp.ne.s32.totalorder %s203, %s217
      %p219 = scmp.eq.s32.totalorder %s146, 0
      %p220 = por %p218, %p219
      %s222 = sadd.s32 %s221, 1
      %p225 = scmp.eq.s32.totalorder %s140, 1
      %p226 = scmp.ne.s32.totalorder %s221, %s223
      %p227 = scmp.eq.s32.totalorder %s140, 0
      %p228 = por %p226, %p227
      %p229 = scmp.ne.s32.totalorder %s221, %s223
      %p230 = scmp.eq.s32.totalorder %s145, 1
      %p231 = por %p229, %p230
      %p232 = scmp.ne.s32.totalorder %s223, %s224
      %p233 = scmp.eq.s32.totalorder %s145, 0
      %p234 = por %p232, %p233
      %p235 = scmp.ne.s32.totalorder %s223, %s224
      %p236 = scmp.eq.s32.totalorder %s146, 1
      %p237 = por %p235, %p236
      %p239 = scmp.ne.s32.totalorder %s224, %s238
      %p240 = scmp.eq.s32.totalorder %s146, 0
      %p241 = por %p239, %p240
      %s243 = sadd.s32 %s242, 1
      %p246 = scmp.eq.s32.totalorder %s140, 1
      %p247 = scmp.ne.s32.totalorder %s242, %s244
      %p248 = scmp.eq.s32.totalorder %s140, 0
      %p249 = por %p247, %p248
      %p250 = scmp.ne.s32.totalorder %s242, %s244
      %p251 = scmp.eq.s32.totalorder %s145, 1
      %p252 = por %p250, %p251
      %p253 = scmp.ne.s32.totalorder %s244, %s245
      %p254 = scmp.eq.s32.totalorder %s145, 0
      %p255 = por %p253, %p254
      %p256 = scmp.ne.s32.totalorder %s244, %s245
      %p257 = scmp.eq.s32.totalorder %s146, 1
      %p258 = por %p256, %p257
      %p260 = scmp.ne.s32.totalorder %s245, %s259
      %p261 = scmp.eq.s32.totalorder %s146, 0
      %p262 = por %p260, %p261
      %s264 = sadd.s32 %s263, 1
      %p267 = scmp.eq.s32.totalorder %s140, 1
      %p268 = scmp.ne.s32.totalorder %s263, %s265
      %p269 = scmp.eq.s32.totalorder %s140, 0
      %p270 = por %p268, %p269
      %p271 = scmp.ne.s32.totalorder %s263, %s265
      %p272 = scmp.eq.s32.totalorder %s145, 1
      %p273 = por %p271, %p272
      %p274 = scmp.ne.s32.totalorder %s265, %s266
      %p275 = scmp.eq.s32.totalorder %s145, 0
      %p276 = por %p274, %p275
      %p277 = scmp.ne.s32.totalorder %s265, %s266
      %p278 = scmp.eq.s32.totalorder %s146, 1
      %p279 = por %p277, %p278
      %p281 = scmp.ne.s32.totalorder %s266, %s280
      %p282 = scmp.eq.s32.totalorder %s146, 0
      %p283 = por %p281, %p282
      %s285 = sadd.s32 %s284, 1
      %p288 = scmp.eq.s32.totalorder %s140, 1
      %p289 = scmp.ne.s32.totalorder %s284, %s286
      %p290 = scmp.eq.s32.totalorder %s140, 0
      %p291 = por %p289, %p290
      %p292 = scmp.ne.s32.totalorder %s284, %s286
      %p293 = scmp.eq.s32.totalorder %s145, 1
      %p294 = por %p292, %p293
      %p295 = scmp.ne.s32.totalorder %s286, %s287
      %p296 = scmp.eq.s32.totalorder %s145, 0
      %p297 = por %p295, %p296
      %p298 = scmp.ne.s32.totalorder %s286, %s287
      %p299 = scmp.eq.s32.totalorder %s146, 1
      %p300 = por %p298, %p299
      %p302 = scmp.ne.s32.totalorder %s287, %s301
      %p303 = scmp.eq.s32.totalorder %s146, 0
      %p304 = por %p302, %p303
      %s306 = sadd.s32 %s305, 1
      %p309 = scmp.eq.s32.totalorder %s140, 1
      %p310 = scmp.ne.s32.totalorder %s305, %s307
      %p311 = scmp.eq.s32.totalorder %s140, 0
      %p312 = por %p310, %p311
      %p313 = scmp.ne.s32.totalorder %s305, %s307
      %p314 = scmp.eq.s32.totalorder %s145, 1
      %p315 = por %p313, %p314
      %p316 = scmp.ne.s32.totalorder %s307, %s308
      %p317 = scmp.eq.s32.totalorder %s145, 0
      %p318 = por %p316, %p317
      %p319 = scmp.ne.s32.totalorder %s307, %s308
      %p320 = scmp.eq.s32.totalorder %s146, 1
      %p321 = por %p319, %p320
      %p323 = scmp.ne.s32.totalorder %s308, %s322
      %p324 = scmp.eq.s32.totalorder %s146, 0
      %p325 = por %p323, %p324
      %s327 = sadd.s32 %s326, 1
      %p330 = scmp.eq.s32.totalorder %s140, 1
      %p331 = scmp.ne.s32.totalorder %s326, %s328
      %p332 = scmp.eq.s32.totalorder %s140, 0
      %p333 = por %p331, %p332
      %p334 = scmp.ne.s32.totalorder %s326, %s328
      %p335 = scmp.eq.s32.totalorder %s145, 1
      %p336 = por %p334, %p335
      %p337 = scmp.ne.s32.totalorder %s328, %s329
      %p338 = scmp.eq.s32.totalorder %s145, 0
      %p339 = por %p337, %p338
      %p340 = scmp.ne.s32.totalorder %s328, %s329
      %p341 = scmp.eq.s32.totalorder %s146, 1
      %p342 = por %p340, %p341
      %p344 = scmp.ne.s32.totalorder %s329, %s343
      %p345 = scmp.eq.s32.totalorder %s146, 0
      %p346 = por %p344, %p345
      %s348 = sadd.s32 %s347, 1
      %p351 = scmp.eq.s32.totalorder %s140, 1
      %p352 = scmp.ne.s32.totalorder %s347, %s349
      %p353 = scmp.eq.s32.totalorder %s140, 0
      %p354 = por %p352, %p353
      %p355 = scmp.ne.s32.totalorder %s347, %s349
      %p356 = scmp.eq.s32.totalorder %s145, 1
      %p357 = por %p355, %p356
      %p358 = scmp.ne.s32.totalorder %s349, %s350
      %p359 = scmp.eq.s32.totalorder %s145, 0
      %p360 = por %p358, %p359
      %p361 = scmp.ne.s32.totalorder %s349, %s350
      %p362 = scmp.eq.s32.totalorder %s146, 1
      %p363 = por %p361, %p362
      %p365 = scmp.ne.s32.totalorder %s350, %s364
      %p366 = scmp.eq.s32.totalorder %s146, 0
      %p367 = por %p365, %p366
      %s369 = sadd.s32 %s368, 1
      %p372 = scmp.eq.s32.totalorder %s140, 1
      %p373 = scmp.ne.s32.totalorder %s368, %s370
      %p374 = scmp.eq.s32.totalorder %s140, 0
      %p375 = por %p373, %p374
      %p376 = scmp.ne.s32.totalorder %s368, %s370
      %p377 = scmp.eq.s32.totalorder %s145, 1
      %p378 = por %p376, %p377
      %p379 = scmp.ne.s32.totalorder %s370, %s371
      %p380 = scmp.eq.s32.totalorder %s145, 0
      %p381 = por %p379, %p380
      %p382 = scmp.ne.s32.totalorder %s370, %s371
      %p383 = scmp.eq.s32.totalorder %s146, 1
      %p384 = por %p382, %p383
      %p386 = scmp.ne.s32.totalorder %s371, %s385
      %p387 = scmp.eq.s32.totalorder %s146, 0
      %p388 = por %p386, %p387
      %s390 = sadd.s32 %s389, 1
      %p393 = scmp.eq.s32.totalorder %s140, 1
      %p394 = scmp.ne.s32.totalorder %s389, %s391
      %p395 = scmp.eq.s32.totalorder %s140, 0
      %p396 = por %p394, %p395
      %p397 = scmp.ne.s32.totalorder %s389, %s391
      %p398 = scmp.eq.s32.totalorder %s145, 1
      %p399 = por %p397, %p398
      %p400 = scmp.ne.s32.totalorder %s391, %s392
      %p401 = scmp.eq.s32.totalorder %s145, 0
      %p402 = por %p400, %p401
      %p403 = scmp.ne.s32.totalorder %s391, %s392
      %p404 = scmp.eq.s32.totalorder %s146, 1
      %p405 = por %p403, %p404
      %p407 = scmp.ne.s32.totalorder %s392, %s406
      %p408 = scmp.eq.s32.totalorder %s146, 0
      %p409 = por %p407, %p408
      %s411 = sadd.s32 %s410, 1
      %p414 = scmp.eq.s32.totalorder %s140, 1
      %p415 = scmp.ne.s32.totalorder %s410, %s412
      %p416 = scmp.eq.s32.totalorder %s140, 0
      %p417 = por %p415, %p416
      %p418 = scmp.ne.s32.totalorder %s410, %s412
      %p419 = scmp.eq.s32.totalorder %s145, 1
      %p420 = por %p418, %p419
      %p421 = scmp.ne.s32.totalorder %s412, %s413
      %p422 = scmp.eq.s32.totalorder %s145, 0
      %p423 = por %p421, %p422
      %p424 = scmp.ne.s32.totalorder %s412, %s413
      %p425 = scmp.eq.s32.totalorder %s146, 1
      %p426 = por %p424, %p425
      %p428 = scmp.ne.s32.totalorder %s413, %s427
      %p429 = scmp.eq.s32.totalorder %s146, 0
      %p430 = por %p428, %p429
      %s432 = sadd.s32 %s431, 1
      %p435 = scmp.eq.s32.totalorder %s140, 1
      %p436 = scmp.ne.s32.totalorder %s431, %s433
      %p437 = scmp.eq.s32.totalorder %s140, 0
      %p438 = por %p436, %p437
      %p439 = scmp.ne.s32.totalorder %s431, %s433
      %p440 = scmp.eq.s32.totalorder %s145, 1
      %p441 = por %p439, %p440
      %p442 = scmp.ne.s32.totalorder %s433, %s434
      %p443 = scmp.eq.s32.totalorder %s145, 0
      %p444 = por %p442, %p443
      %p445 = scmp.ne.s32.totalorder %s433, %s434
      %p446 = scmp.eq.s32.totalorder %s146, 1
      %p447 = por %p445, %p446
      %p449 = scmp.ne.s32.totalorder %s434, %s448
      %p450 = scmp.eq.s32.totalorder %s146, 0
      %p451 = por %p449, %p450
      %s453 = sadd.s32 %s452, 1
      %p456 = scmp.eq.s32.totalorder %s140, 1
      %p457 = scmp.ne.s32.totalorder %s452, %s454
      %p458 = scmp.eq.s32.totalorder %s140, 0
      %p459 = por %p457, %p458
      %p460 = scmp.ne.s32.totalorder %s452, %s454
      %p461 = scmp.eq.s32.totalorder %s145, 1
      %p462 = por %p460, %p461
      %p463 = scmp.ne.s32.totalorder %s454, %s455
      %p464 = scmp.eq.s32.totalorder %s145, 0
      %p465 = por %p463, %p464
      %p466 = scmp.ne.s32.totalorder %s454, %s455
      %p467 = scmp.eq.s32.totalorder %s146, 1
      %p468 = por %p466, %p467
      %p470 = scmp.ne.s32.totalorder %s455, %s469
      %p471 = scmp.eq.s32.totalorder %s146, 0
      %p472 = por %p470, %p471
      %s474 = sadd.s32 %s473, 1
      %p477 = scmp.eq.s32.totalorder %s140, 1
      %p478 = scmp.ne.s32.totalorder %s473, %s475
      %p479 = scmp.eq.s32.totalorder %s140, 0
      %p480 = por %p478, %p479
      %p481 = scmp.ne.s32.totalorder %s473, %s475
      %p482 = scmp.eq.s32.totalorder %s145, 1
      %p483 = por %p481, %p482
      %p484 = scmp.ne.s32.totalorder %s475, %s476
      %p485 = scmp.eq.s32.totalorder %s145, 0
      %p486 = por %p484, %p485
      %p487 = scmp.ne.s32.totalorder %s475, %s476
      %p488 = scmp.eq.s32.totalorder %s146, 1
      %p489 = por %p487, %p488
      %p491 = scmp.ne.s32.totalorder %s476, %s490
      %p492 = scmp.eq.s32.totalorder %s146, 0
      %p493 = por %p491, %p492
      %s495 = sadd.s32 %s494, 1
      %p498 = scmp.eq.s32.totalorder %s140, 1
      %p499 = scmp.ne.s32.totalorder %s494, %s496
      %p500 = scmp.eq.s32.totalorder %s140, 0
      %p501 = por %p499, %p500
      %p502 = scmp.ne.s32.totalorder %s494, %s496
      %p503 = scmp.eq.s32.totalorder %s145, 1
      %p504 = por %p502, %p503
      %p505 = scmp.ne.s32.totalorder %s496, %s497
      %p506 = scmp.eq.s32.totalorder %s145, 0
      %p507 = por %p505, %p506
      %p508 = scmp.ne.s32.totalorder %s496, %s497
      %p509 = scmp.eq.s32.totalorder %s146, 1
      %p510 = por %p508, %p509
      %p512 = scmp.ne.s32.totalorder %s497, %s511
      %p513 = scmp.eq.s32.totalorder %s146, 0
      %p514 = por %p512, %p513
      %s516 = sadd.s32 %s515, 1
      %p519 = scmp.eq.s32.totalorder %s140, 1
      %p520 = scmp.ne.s32.totalorder %s515, %s517
      %p521 = scmp.eq.s32.totalorder %s140, 0
      %p522 = por %p520, %p521
      %p523 = scmp.ne.s32.totalorder %s515, %s517
      %p524 = scmp.eq.s32.totalorder %s145, 1
      %p525 = por %p523, %p524
      %p526 = scmp.ne.s32.totalorder %s517, %s518
      %p527 = scmp.eq.s32.totalorder %s145, 0
      %p528 = por %p526, %p527
      %p529 = scmp.ne.s32.totalorder %s517, %s518
      %p530 = scmp.eq.s32.totalorder %s146, 1
      %p531 = por %p529, %p530
      %p533 = scmp.ne.s32.totalorder %s518, %s532
      %p534 = scmp.eq.s32.totalorder %s146, 0
      %p535 = por %p533, %p534
      %s537 = sadd.s32 %s536, 1
      %p540 = scmp.eq.s32.totalorder %s140, 1
      %p541 = scmp.ne.s32.totalorder %s536, %s538
      %p542 = scmp.eq.s32.totalorder %s140, 0
      %p543 = por %p541, %p542
      %p544 = scmp.ne.s32.totalorder %s536, %s538
      %p545 = scmp.eq.s32.totalorder %s145, 1
      %p546 = por %p544, %p545
      %p547 = scmp.ne.s32.totalorder %s538, %s539
      %p548 = scmp.eq.s32.totalorder %s145, 0
      %p549 = por %p547, %p548
      %p550 = scmp.ne.s32.totalorder %s538, %s539
      %p551 = scmp.eq.s32.totalorder %s146, 1
      %p552 = por %p550, %p551
      %p554 = scmp.ne.s32.totalorder %s539, %s553
      %p555 = scmp.eq.s32.totalorder %s146, 0
      %p556 = por %p554, %p555
      %s558 = sadd.s32 %s557, 1
      %p561 = scmp.eq.s32.totalorder %s140, 1
      %p562 = scmp.ne.s32.totalorder %s557, %s559
      %p563 = scmp.eq.s32.totalorder %s140, 0
      %p564 = por %p562, %p563
      %p565 = scmp.ne.s32.totalorder %s557, %s559
      %p566 = scmp.eq.s32.totalorder %s145, 1
      %p567 = por %p565, %p566
      %p568 = scmp.ne.s32.totalorder %s559, %s560
      %p569 = scmp.eq.s32.totalorder %s145, 0
      %p570 = por %p568, %p569
      %p571 = scmp.ne.s32.totalorder %s559, %s560
      %p572 = scmp.eq.s32.totalorder %s146, 1
      %p573 = por %p571, %p572
      %p575 = scmp.ne.s32.totalorder %s560, %s574
      %p576 = scmp.eq.s32.totalorder %s146, 0
      %p577 = por %p575, %p576
      %s579 = sadd.s32 %s578, 1
      %p582 = scmp.eq.s32.totalorder %s140, 1
      %p583 = scmp.ne.s32.totalorder %s578, %s580
      %p584 = scmp.eq.s32.totalorder %s140, 0
      %p585 = por %p583, %p584
      %p586 = scmp.ne.s32.totalorder %s578, %s580
      %p587 = scmp.eq.s32.totalorder %s145, 1
      %p588 = por %p586, %p587
      %p589 = scmp.ne.s32.totalorder %s580, %s581
      %p590 = scmp.eq.s32.totalorder %s145, 0
      %p591 = por %p589, %p590
      %p592 = scmp.ne.s32.totalorder %s580, %s581
      %p593 = scmp.eq.s32.totalorder %s146, 1
      %p594 = por %p592, %p593
      %p596 = scmp.ne.s32.totalorder %s581, %s595
      %p597 = scmp.eq.s32.totalorder %s146, 0
      %p598 = por %p596, %p597
      %s600 = sadd.s32 %s599, 1
      %p603 = scmp.eq.s32.totalorder %s140, 1
      %p604 = scmp.ne.s32.totalorder %s599, %s601
      %p605 = scmp.eq.s32.totalorder %s140, 0
      %p606 = por %p604, %p605
      %p607 = scmp.ne.s32.totalorder %s599, %s601
      %p608 = scmp.eq.s32.totalorder %s145, 1
      %p609 = por %p607, %p608
      %p610 = scmp.ne.s32.totalorder %s601, %s602
      %p611 = scmp.eq.s32.totalorder %s145, 0
      %p612 = por %p610, %p611
      %p613 = scmp.ne.s32.totalorder %s601, %s602
      %p614 = scmp.eq.s32.totalorder %s146, 1
      %p615 = por %p613, %p614
      %p617 = scmp.ne.s32.totalorder %s602, %s616
      %p618 = scmp.eq.s32.totalorder %s146, 0
      %p619 = por %p617, %p618
      %s621 = sadd.s32 %s620, 1
      %p624 = scmp.eq.s32.totalorder %s140, 1
      %p625 = scmp.ne.s32.totalorder %s620, %s622
      %p626 = scmp.eq.s32.totalorder %s140, 0
      %p627 = por %p625, %p626
      %p628 = scmp.ne.s32.totalorder %s620, %s622
      %p629 = scmp.eq.s32.totalorder %s145, 1
      %p630 = por %p628, %p629
      %p631 = scmp.ne.s32.totalorder %s622, %s623
      %p632 = scmp.eq.s32.totalorder %s145, 0
      %p633 = por %p631, %p632
      %p634 = scmp.ne.s32.totalorder %s622, %s623
      %p635 = scmp.eq.s32.totalorder %s146, 1
      %p636 = por %p634, %p635
      %p638 = scmp.ne.s32.totalorder %s623, %s637
      %p639 = scmp.eq.s32.totalorder %s146, 0
      %p640 = por %p638, %p639
      %s642 = sadd.s32 %s641, 1
      %p645 = scmp.eq.s32.totalorder %s140, 1
      %p646 = scmp.ne.s32.totalorder %s641, %s643
      %p647 = scmp.eq.s32.totalorder %s140, 0
      %p648 = por %p646, %p647
      %p649 = scmp.ne.s32.totalorder %s641, %s643
      %p650 = scmp.eq.s32.totalorder %s145, 1
      %p651 = por %p649, %p650
      %p652 = scmp.ne.s32.totalorder %s643, %s644
      %p653 = scmp.eq.s32.totalorder %s145, 0
      %p654 = por %p652, %p653
      %p655 = scmp.ne.s32.totalorder %s643, %s644
      %p656 = scmp.eq.s32.totalorder %s146, 1
      %p657 = por %p655, %p656
      %p659 = scmp.ne.s32.totalorder %s644, %s658
      %p660 = scmp.eq.s32.totalorder %s146, 0
      %p661 = por %p659, %p660
      %s663 = sadd.s32 %s662, 1
      %p666 = scmp.eq.s32.totalorder %s140, 1
      %p667 = scmp.ne.s32.totalorder %s662, %s664
      %p668 = scmp.eq.s32.totalorder %s140, 0
      %p669 = por %p667, %p668
      %p670 = scmp.ne.s32.totalorder %s662, %s664
      %p671 = scmp.eq.s32.totalorder %s145, 1
      %p672 = por %p670, %p671
      %p673 = scmp.ne.s32.totalorder %s664, %s665
      %p674 = scmp.eq.s32.totalorder %s145, 0
      %p675 = por %p673, %p674
      %p676 = scmp.ne.s32.totalorder %s664, %s665
      %p677 = scmp.eq.s32.totalorder %s146, 1
      %p678 = por %p676, %p677
      %p680 = scmp.ne.s32.totalorder %s665, %s679
      %p681 = scmp.eq.s32.totalorder %s146, 0
      %p682 = por %p680, %p681
      %s684 = sadd.s32 %s683, 1
      %p687 = scmp.eq.s32.totalorder %s140, 1
      %p688 = scmp.ne.s32.totalorder %s683, %s685
      %p689 = scmp.eq.s32.totalorder %s140, 0
      %p690 = por %p688, %p689
      %p691 = scmp.ne.s32.totalorder %s683, %s685
      %p692 = scmp.eq.s32.totalorder %s145, 1
      %p693 = por %p691, %p692
      %p694 = scmp.ne.s32.totalorder %s685, %s686
      %p695 = scmp.eq.s32.totalorder %s145, 0
      %p696 = por %p694, %p695
      %p697 = scmp.ne.s32.totalorder %s685, %s686
      %p698 = scmp.eq.s32.totalorder %s146, 1
      %p699 = por %p697, %p698
      %p701 = scmp.ne.s32.totalorder %s686, %s700
      %p702 = scmp.eq.s32.totalorder %s146, 0
      %p703 = por %p701, %p702
      %s705 = sadd.s32 %s704, 1
      %p708 = scmp.eq.s32.totalorder %s140, 1
      %p709 = scmp.ne.s32.totalorder %s704, %s706
      %p710 = scmp.eq.s32.totalorder %s140, 0
      %p711 = por %p709, %p710
      %p712 = scmp.ne.s32.totalorder %s704, %s706
      %p713 = scmp.eq.s32.totalorder %s145, 1
      %p714 = por %p712, %p713
      %p715 = scmp.ne.s32.totalorder %s706, %s707
      %p716 = scmp.eq.s32.totalorder %s145, 0
      %p717 = por %p715, %p716
      %p718 = scmp.ne.s32.totalorder %s706, %s707
      %p719 = scmp.eq.s32.totalorder %s146, 1
      %p720 = por %p718, %p719
      %p722 = scmp.ne.s32.totalorder %s707, %s721
      %p723 = scmp.eq.s32.totalorder %s146, 0
      %p724 = por %p722, %p723
      %s726 = sadd.s32 %s725, 1
      %p729 = scmp.eq.s32.totalorder %s140, 1
      %p730 = scmp.ne.s32.totalorder %s725, %s727
      %p731 = scmp.eq.s32.totalorder %s140, 0
      %p732 = por %p730, %p731
      %p733 = scmp.ne.s32.totalorder %s725, %s727
      %p734 = scmp.eq.s32.totalorder %s145, 1
      %p735 = por %p733, %p734
      %p736 = scmp.ne.s32.totalorder %s727, %s728
      %p737 = scmp.eq.s32.totalorder %s145, 0
      %p738 = por %p736, %p737
      %p739 = scmp.ne.s32.totalorder %s727, %s728
      %p740 = scmp.eq.s32.totalorder %s146, 1
      %p741 = por %p739, %p740
      %p743 = scmp.ne.s32.totalorder %s728, %s742
      %p744 = scmp.eq.s32.totalorder %s146, 0
      %p745 = por %p743, %p744
      %s747 = sadd.s32 %s746, 1
      %p750 = scmp.eq.s32.totalorder %s140, 1
      %p751 = scmp.ne.s32.totalorder %s746, %s748
      %p752 = scmp.eq.s32.totalorder %s140, 0
      %p753 = por %p751, %p752
      %p754 = scmp.ne.s32.totalorder %s746, %s748
      %p755 = scmp.eq.s32.totalorder %s145, 1
      %p756 = por %p754, %p755
      %p757 = scmp.ne.s32.totalorder %s748, %s749
      %p758 = scmp.eq.s32.totalorder %s145, 0
      %p759 = por %p757, %p758
      %p760 = scmp.ne.s32.totalorder %s748, %s749
      %p761 = scmp.eq.s32.totalorder %s146, 1
      %p762 = por %p760, %p761
      %p764 = scmp.ne.s32.totalorder %s749, %s763
      %p765 = scmp.eq.s32.totalorder %s146, 0
      %p766 = por %p764, %p765
      %s768 = sadd.s32 %s767, 1
      %p771 = scmp.eq.s32.totalorder %s140, 1
      %p772 = scmp.ne.s32.totalorder %s767, %s769
      %p773 = scmp.eq.s32.totalorder %s140, 0
      %p774 = por %p772, %p773
      %p775 = scmp.ne.s32.totalorder %s767, %s769
      %p776 = scmp.eq.s32.totalorder %s145, 1
      %p777 = por %p775, %p776
      %p778 = scmp.ne.s32.totalorder %s769, %s770
      %p779 = scmp.eq.s32.totalorder %s145, 0
      %p780 = por %p778, %p779
      %p781 = scmp.ne.s32.totalorder %s769, %s770
      %p782 = scmp.eq.s32.totalorder %s146, 1
      %p783 = por %p781, %p782
      %p785 = scmp.ne.s32.totalorder %s770, %s784
      %p786 = scmp.eq.s32.totalorder %s146, 0
      %p787 = por %p785, %p786
      %s789 = sadd.s32 %s788, 1
      %p792 = scmp.eq.s32.totalorder %s140, 1
      %p793 = scmp.ne.s32.totalorder %s788, %s790
      %p794 = scmp.eq.s32.totalorder %s140, 0
      %p795 = por %p793, %p794
      %p796 = scmp.ne.s32.totalorder %s788, %s790
      %p797 = scmp.eq.s32.totalorder %s145, 1
      %p798 = por %p796, %p797
      %p799 = scmp.ne.s32.totalorder %s790, %s791
      %p800 = scmp.eq.s32.totalorder %s145, 0
      %p801 = por %p799, %p800
      %p802 = scmp.ne.s32.totalorder %s790, %s791
      %p803 = scmp.eq.s32.totalorder %s146, 1
      %p804 = por %p802, %p803
      %p806 = scmp.ne.s32.totalorder %s791, %s805
      %p807 = scmp.eq.s32.totalorder %s146, 0
      %p808 = por %p806, %p807
      %s810 = sadd.s32 %s809, 1
      %p813 = scmp.eq.s32.totalorder %s140, 1
      %p814 = scmp.ne.s32.totalorder %s809, %s811
      %p815 = scmp.eq.s32.totalorder %s140, 0
      %p816 = por %p814, %p815
      %p817 = scmp.ne.s32.totalorder %s809, %s811
      %p818 = scmp.eq.s32.totalorder %s145, 1
      %p819 = por %p817, %p818
      %p820 = scmp.ne.s32.totalorder %s811, %s812
      %p821 = scmp.eq.s32.totalorder %s145, 0
      %p822 = por %p820, %p821
      %p823 = scmp.ne.s32.totalorder %s811, %s812
      %p824 = scmp.eq.s32.totalorder %s146, 1
      %p825 = por %p823, %p824
      %p827 = scmp.ne.s32.totalorder %s812, %s826
      %p828 = scmp.eq.s32.totalorder %s146, 0
      %p829 = por %p827, %p828
      %s831 = sadd.s32 %s830, 1
      %p834 = scmp.eq.s32.totalorder %s140, 1
      %p835 = scmp.ne.s32.totalorder %s830, %s832
      %p836 = scmp.eq.s32.totalorder %s140, 0
      %p837 = por %p835, %p836
      %p838 = scmp.ne.s32.totalorder %s830, %s832
      %p839 = scmp.eq.s32.totalorder %s145, 1
      %p840 = por %p838, %p839
      %p841 = scmp.ne.s32.totalorder %s832, %s833
      %p842 = scmp.eq.s32.totalorder %s145, 0
      %p843 = por %p841, %p842
      %p844 = scmp.ne.s32.totalorder %s832, %s833
      %p845 = scmp.eq.s32.totalorder %s146, 1
      %p846 = por %p844, %p845
      %p848 = scmp.ne.s32.totalorder %s833, %s847
      %p849 = scmp.eq.s32.totalorder %s146, 0
      %p850 = por %p848, %p849
      %s852 = sadd.s32 %s851, 1
      %p855 = scmp.eq.s32.totalorder %s140, 1
      %p856 = scmp.ne.s32.totalorder %s851, %s853
      %p857 = scmp.eq.s32.totalorder %s140, 0
      %p858 = por %p856, %p857
      %p859 = scmp.ne.s32.totalorder %s851, %s853
      %p860 = scmp.eq.s32.totalorder %s145, 1
      %p861 = por %p859, %p860
      %p862 = scmp.ne.s32.totalorder %s853, %s854
      %p863 = scmp.eq.s32.totalorder %s145, 0
      %p864 = por %p862, %p863
      %p865 = scmp.ne.s32.totalorder %s853, %s854
      %p866 = scmp.eq.s32.totalorder %s146, 1
      %p867 = por %p865, %p866
      %p869 = scmp.ne.s32.totalorder %s854, %s868
      %p870 = scmp.eq.s32.totalorder %s146, 0
      %p871 = por %p869, %p870
      %s873 = sadd.s32 %s872, 1
      %p876 = scmp.eq.s32.totalorder %s140, 1
      %p877 = scmp.ne.s32.totalorder %s872, %s874
      %p878 = scmp.eq.s32.totalorder %s140, 0
      %p879 = por %p877, %p878
      %p880 = scmp.ne.s32.totalorder %s872, %s874
      %p881 = scmp.eq.s32.totalorder %s145, 1
      %p882 = por %p880, %p881
      %p883 = scmp.ne.s32.totalorder %s874, %s875
      %p884 = scmp.eq.s32.totalorder %s145, 0
      %p885 = por %p883, %p884
      %p886 = scmp.ne.s32.totalorder %s874, %s875
      %p887 = scmp.eq.s32.totalorder %s146, 1
      %p888 = por %p886, %p887
      %p890 = scmp.ne.s32.totalorder %s875, %s889
      %p891 = scmp.eq.s32.totalorder %s146, 0
      %p892 = por %p890, %p891
      %s894 = sadd.s32 %s893, 1
      %p897 = scmp.eq.s32.totalorder %s140, 1
      %p898 = scmp.ne.s32.totalorder %s893, %s895
      %p899 = scmp.eq.s32.totalorder %s140, 0
      %p900 = por %p898, %p899
      %p901 = scmp.ne.s32.totalorder %s893, %s895
      %p902 = scmp.eq.s32.totalorder %s145, 1
      %p903 = por %p901, %p902
      %p904 = scmp.ne.s32.totalorder %s895, %s896
      %p905 = scmp.eq.s32.totalorder %s145, 0
      %p906 = por %p904, %p905
      %p907 = scmp.ne.s32.totalorder %s895, %s896
      %p908 = scmp.eq.s32.totalorder %s146, 1
      %p909 = por %p907, %p908
      %p911 = scmp.ne.s32.totalorder %s896, %s910
      %p912 = scmp.eq.s32.totalorder %s146, 0
      %p913 = por %p911, %p912
      %s915 = sadd.s32 %s914, 1
      %p918 = scmp.eq.s32.totalorder %s140, 1
      %p919 = scmp.ne.s32.totalorder %s914, %s916
      %p920 = scmp.eq.s32.totalorder %s140, 0
      %p921 = por %p919, %p920
      %p922 = scmp.ne.s32.totalorder %s914, %s916
      %p923 = scmp.eq.s32.totalorder %s145, 1
      %p924 = por %p922, %p923
      %p925 = scmp.ne.s32.totalorder %s916, %s917
      %p926 = scmp.eq.s32.totalorder %s145, 0
      %p927 = por %p925, %p926
      %p928 = scmp.ne.s32.totalorder %s916, %s917
      %p929 = scmp.eq.s32.totalorder %s146, 1
      %p930 = por %p928, %p929
      %p932 = scmp.ne.s32.totalorder %s917, %s931
      %p933 = scmp.eq.s32.totalorder %s146, 0
      %p934 = por %p932, %p933
      %s936 = sadd.s32 %s935, 1
      %p939 = scmp.eq.s32.totalorder %s140, 1
      %p940 = scmp.ne.s32.totalorder %s935, %s937
      %p941 = scmp.eq.s32.totalorder %s140, 0
      %p942 = por %p940, %p941
      %p943 = scmp.ne.s32.totalorder %s935, %s937
      %p944 = scmp.eq.s32.totalorder %s145, 1
      %p945 = por %p943, %p944
      %p946 = scmp.ne.s32.totalorder %s937, %s938
      %p947 = scmp.eq.s32.totalorder %s145, 0
      %p948 = por %p946, %p947
      %p949 = scmp.ne.s32.totalorder %s937, %s938
      %p950 = scmp.eq.s32.totalorder %s146, 1
      %p951 = por %p949, %p950
      %p953 = scmp.ne.s32.totalorder %s938, %s952
      %p954 = scmp.eq.s32.totalorder %s146, 0
      %p955 = por %p953, %p954
      %s957 = sadd.s32 %s956, 1
      %p960 = scmp.eq.s32.totalorder %s140, 1
      %p961 = scmp.ne.s32.totalorder %s956, %s958
      %p962 = scmp.eq.s32.totalorder %s140, 0
      %p963 = por %p961, %p962
      %p964 = scmp.ne.s32.totalorder %s956, %s958
      %p965 = scmp.eq.s32.totalorder %s145, 1
      %p966 = por %p964, %p965
      %p967 = scmp.ne.s32.totalorder %s958, %s959
      %p968 = scmp.eq.s32.totalorder %s145, 0
      %p969 = por %p967, %p968
      %p970 = scmp.ne.s32.totalorder %s958, %s959
      %p971 = scmp.eq.s32.totalorder %s146, 1
      %p972 = por %p970, %p971
      %p974 = scmp.ne.s32.totalorder %s959, %s973
      %p975 = scmp.eq.s32.totalorder %s146, 0
      %p976 = por %p974, %p975
      %s978 = sadd.s32 %s977, 1
      %p981 = scmp.eq.s32.totalorder %s140, 1
      %p982 = scmp.ne.s32.totalorder %s977, %s979
      %p983 = scmp.eq.s32.totalorder %s140, 0
      %p984 = por %p982, %p983
      %p985 = scmp.ne.s32.totalorder %s977, %s979
      %p986 = scmp.eq.s32.totalorder %s145, 1
      %p987 = por %p985, %p986
      %p988 = scmp.ne.s32.totalorder %s979, %s980
      %p989 = scmp.eq.s32.totalorder %s145, 0
      %p990 = por %p988, %p989
      %p991 = scmp.ne.s32.totalorder %s979, %s980
      %p992 = scmp.eq.s32.totalorder %s146, 1
      %p993 = por %p991, %p992
      %p995 = scmp.ne.s32.totalorder %s980, %s994
      %p996 = scmp.eq.s32.totalorder %s146, 0
      %p997 = por %p995, %p996
      %s999 = sadd.s32 %s998, 1
      %p1002 = scmp.eq.s32.totalorder %s140, 1
      %p1003 = scmp.ne.s32.totalorder %s998, %s1000
      %p1004 = scmp.eq.s32.totalorder %s140, 0
      %p1005 = por %p1003, %p1004
      %p1006 = scmp.ne.s32.totalorder %s998, %s1000
      %p1007 = scmp.eq.s32.totalorder %s145, 1
      %p1008 = por %p1006, %p1007
      %p1009 = scmp.ne.s32.totalorder %s1000, %s1001
      %p1010 = scmp.eq.s32.totalorder %s145, 0
      %p1011 = por %p1009, %p1010
      %p1012 = scmp.ne.s32.totalorder %s1000, %s1001
      %p1013 = scmp.eq.s32.totalorder %s146, 1
      %p1014 = por %p1012, %p1013
      %p1016 = scmp.ne.s32.totalorder %s1001, %s1015
      %p1017 = scmp.eq.s32.totalorder %s146, 0
      %p1018 = por %p1016, %p1017
      %s1020 = sadd.s32 %s1019, 1
      %p1023 = scmp.eq.s32.totalorder %s140, 1
      %p1024 = scmp.ne.s32.totalorder %s1019, %s1021
      %p1025 = scmp.eq.s32.totalorder %s140, 0
      %p1026 = por %p1024, %p1025
      %p1027 = scmp.ne.s32.totalorder %s1019, %s1021
      %p1028 = scmp.eq.s32.totalorder %s145, 1
      %p1029 = por %p1027, %p1028
      %p1030 = scmp.ne.s32.totalorder %s1021, %s1022
      %p1031 = scmp.eq.s32.totalorder %s145, 0
      %p1032 = por %p1030, %p1031
      %p1033 = scmp.ne.s32.totalorder %s1021, %s1022
      %p1034 = scmp.eq.s32.totalorder %s146, 1
      %p1035 = por %p1033, %p1034
      %p1037 = scmp.ne.s32.totalorder %s1022, %s1036
      %p1038 = scmp.eq.s32.totalorder %s146, 0
      %p1039 = por %p1037, %p1038
      %s1041 = sadd.s32 %s1040, 1
      %p1044 = scmp.eq.s32.totalorder %s140, 1
      %p1045 = scmp.ne.s32.totalorder %s1040, %s1042
      %p1046 = scmp.eq.s32.totalorder %s140, 0
      %p1047 = por %p1045, %p1046
      %p1048 = scmp.ne.s32.totalorder %s1040, %s1042
      %p1049 = scmp.eq.s32.totalorder %s145, 1
      %p1050 = por %p1048, %p1049
      %p1051 = scmp.ne.s32.totalorder %s1042, %s1043
      %p1052 = scmp.eq.s32.totalorder %s145, 0
      %p1053 = por %p1051, %p1052
      %p1054 = scmp.ne.s32.totalorder %s1042, %s1043
      %p1055 = scmp.eq.s32.totalorder %s146, 1
      %p1056 = por %p1054, %p1055
      %p1058 = scmp.ne.s32.totalorder %s1043, %s1057
      %p1059 = scmp.eq.s32.totalorder %s146, 0
      %p1060 = por %p1058, %p1059
      %s1062 = sadd.s32 %s1061, 1
      %p1065 = scmp.eq.s32.totalorder %s140, 1
      %p1066 = scmp.ne.s32.totalorder %s1061, %s1063
      %p1067 = scmp.eq.s32.totalorder %s140, 0
      %p1068 = por %p1066, %p1067
      %p1069 = scmp.ne.s32.totalorder %s1061, %s1063
      %p1070 = scmp.eq.s32.totalorder %s145, 1
      %p1071 = por %p1069, %p1070
      %p1072 = scmp.ne.s32.totalorder %s1063, %s1064
      %p1073 = scmp.eq.s32.totalorder %s145, 0
      %p1074 = por %p1072, %p1073
      %p1075 = scmp.ne.s32.totalorder %s1063, %s1064
      %p1076 = scmp.eq.s32.totalorder %s146, 1
      %p1077 = por %p1075, %p1076
      %p1079 = scmp.ne.s32.totalorder %s1064, %s1078
      %p1080 = scmp.eq.s32.totalorder %s146, 0
      %p1081 = por %p1079, %p1080
      %s1083 = sadd.s32 %s1082, 1
      %p1086 = scmp.eq.s32.totalorder %s140, 1
      %p1087 = scmp.ne.s32.totalorder %s1082, %s1084
      %p1088 = scmp.eq.s32.totalorder %s140, 0
      %p1089 = por %p1087, %p1088
      %p1090 = scmp.ne.s32.totalorder %s1082, %s1084
      %p1091 = scmp.eq.s32.totalorder %s145, 1
      %p1092 = por %p1090, %p1091
      %p1093 = scmp.ne.s32.totalorder %s1084, %s1085
      %p1094 = scmp.eq.s32.totalorder %s145, 0
      %p1095 = por %p1093, %p1094
      %p1096 = scmp.ne.s32.totalorder %s1084, %s1085
      %p1097 = scmp.eq.s32.totalorder %s146, 1
      %p1098 = por %p1096, %p1097
      %p1100 = scmp.ne.s32.totalorder %s1085, %s1099
      %p1101 = scmp.eq.s32.totalorder %s146, 0
      %p1102 = por %p1100, %p1101
      %s1104 = sadd.s32 %s1103, 1
      %p1107 = scmp.eq.s32.totalorder %s140, 1
      %p1108 = scmp.ne.s32.totalorder %s1103, %s1105
      %p1109 = scmp.eq.s32.totalorder %s140, 0
      %p1110 = por %p1108, %p1109
      %p1111 = scmp.ne.s32.totalorder %s1103, %s1105
      %p1112 = scmp.eq.s32.totalorder %s145, 1
      %p1113 = por %p1111, %p1112
      %p1114 = scmp.ne.s32.totalorder %s1105, %s1106
      %p1115 = scmp.eq.s32.totalorder %s145, 0
      %p1116 = por %p1114, %p1115
      %p1117 = scmp.ne.s32.totalorder %s1105, %s1106
      %p1118 = scmp.eq.s32.totalorder %s146, 1
      %p1119 = por %p1117, %p1118
      %p1121 = scmp.ne.s32.totalorder %s1106, %s1120
      %p1122 = scmp.eq.s32.totalorder %s146, 0
      %p1123 = por %p1121, %p1122
      %s1125 = sadd.s32 %s1124, 1
      %p1128 = scmp.eq.s32.totalorder %s140, 1
      %p1129 = scmp.ne.s32.totalorder %s1124, %s1126
      %p1130 = scmp.eq.s32.totalorder %s140, 0
      %p1131 = por %p1129, %p1130
      %p1132 = scmp.ne.s32.totalorder %s1124, %s1126
      %p1133 = scmp.eq.s32.totalorder %s145, 1
      %p1134 = por %p1132, %p1133
      %p1135 = scmp.ne.s32.totalorder %s1126, %s1127
      %p1136 = scmp.eq.s32.totalorder %s145, 0
      %p1137 = por %p1135, %p1136
      %p1138 = scmp.ne.s32.totalorder %s1126, %s1127
      %p1139 = scmp.eq.s32.totalorder %s146, 1
      %p1140 = por %p1138, %p1139
      %p1142 = scmp.ne.s32.totalorder %s1127, %s1141
      %p1143 = scmp.eq.s32.totalorder %s146, 0
      %p1144 = por %p1142, %p1143
      %s1146 = sadd.s32 %s1145, 1
      %p1149 = scmp.eq.s32.totalorder %s140, 1
      %p1150 = scmp.ne.s32.totalorder %s1145, %s1147
      %p1151 = scmp.eq.s32.totalorder %s140, 0
      %p1152 = por %p1150, %p1151
      %p1153 = scmp.ne.s32.totalorder %s1145, %s1147
      %p1154 = scmp.eq.s32.totalorder %s145, 1
      %p1155 = por %p1153, %p1154
      %p1156 = scmp.ne.s32.totalorder %s1147, %s1148
      %p1157 = scmp.eq.s32.totalorder %s145, 0
      %p1158 = por %p1156, %p1157
      %p1159 = scmp.ne.s32.totalorder %s1147, %s1148
      %p1160 = scmp.eq.s32.totalorder %s146, 1
      %p1161 = por %p1159, %p1160
      %p1163 = scmp.ne.s32.totalorder %s1148, %s1162
      %p1164 = scmp.eq.s32.totalorder %s146, 0
      %p1165 = por %p1163, %p1164
      %s1167 = sadd.s32 %s1166, 1
      %p1170 = scmp.eq.s32.totalorder %s140, 1
      %p1171 = scmp.ne.s32.totalorder %s1166, %s1168
      %p1172 = scmp.eq.s32.totalorder %s140, 0
      %p1173 = por %p1171, %p1172
      %p1174 = scmp.ne.s32.totalorder %s1166, %s1168
      %p1175 = scmp.eq.s32.totalorder %s145, 1
      %p1176 = por %p1174, %p1175
      %p1177 = scmp.ne.s32.totalorder %s1168, %s1169
      %p1178 = scmp.eq.s32.totalorder %s145, 0
      %p1179 = por %p1177, %p1178
      %p1180 = scmp.ne.s32.totalorder %s1168, %s1169
      %p1181 = scmp.eq.s32.totalorder %s146, 1
      %p1182 = por %p1180, %p1181
      %p1184 = scmp.ne.s32.totalorder %s1169, %s1183
      %p1185 = scmp.eq.s32.totalorder %s146, 0
      %p1186 = por %p1184, %p1185
      %s1188 = sadd.s32 %s1187, 1
      %p1191 = scmp.eq.s32.totalorder %s140, 1
      %p1192 = scmp.ne.s32.totalorder %s1187, %s1189
      %p1193 = scmp.eq.s32.totalorder %s140, 0
      %p1194 = por %p1192, %p1193
      %p1195 = scmp.ne.s32.totalorder %s1187, %s1189
      %p1196 = scmp.eq.s32.totalorder %s145, 1
      %p1197 = por %p1195, %p1196
      %p1198 = scmp.ne.s32.totalorder %s1189, %s1190
      %p1199 = scmp.eq.s32.totalorder %s145, 0
      %p1200 = por %p1198, %p1199
      %p1201 = scmp.ne.s32.totalorder %s1189, %s1190
      %p1202 = scmp.eq.s32.totalorder %s146, 1
      %p1203 = por %p1201, %p1202
      %p1205 = scmp.ne.s32.totalorder %s1190, %s1204
      %p1206 = scmp.eq.s32.totalorder %s146, 0
      %p1207 = por %p1205, %p1206
      %s1209 = sadd.s32 %s1208, 1
      %p1212 = scmp.eq.s32.totalorder %s140, 1
      %p1213 = scmp.ne.s32.totalorder %s1208, %s1210
      %p1214 = scmp.eq.s32.totalorder %s140, 0
      %p1215 = por %p1213, %p1214
      %p1216 = scmp.ne.s32.totalorder %s1208, %s1210
      %p1217 = scmp.eq.s32.totalorder %s145, 1
      %p1218 = por %p1216, %p1217
      %p1219 = scmp.ne.s32.totalorder %s1210, %s1211
      %p1220 = scmp.eq.s32.totalorder %s145, 0
      %p1221 = por %p1219, %p1220
      %p1222 = scmp.ne.s32.totalorder %s1210, %s1211
      %p1223 = scmp.eq.s32.totalorder %s146, 1
      %p1224 = por %p1222, %p1223
      %p1226 = scmp.ne.s32.totalorder %s1211, %s1225
      %p1227 = scmp.eq.s32.totalorder %s146, 0
      %p1228 = por %p1226, %p1227
      %s1230 = sadd.s32 %s1229, 1
      %p1233 = scmp.eq.s32.totalorder %s140, 1
      %p1234 = scmp.ne.s32.totalorder %s1229, %s1231
      %p1235 = scmp.eq.s32.totalorder %s140, 0
      %p1236 = por %p1234, %p1235
      %p1237 = scmp.ne.s32.totalorder %s1229, %s1231
      %p1238 = scmp.eq.s32.totalorder %s145, 1
      %p1239 = por %p1237, %p1238
      %p1240 = scmp.ne.s32.totalorder %s1231, %s1232
      %p1241 = scmp.eq.s32.totalorder %s145, 0
      %p1242 = por %p1240, %p1241
      %p1243 = scmp.ne.s32.totalorder %s1231, %s1232
      %p1244 = scmp.eq.s32.totalorder %s146, 1
      %p1245 = por %p1243, %p1244
      %p1247 = scmp.ne.s32.totalorder %s1232, %s1246
      %p1248 = scmp.eq.s32.totalorder %s146, 0
      %p1249 = por %p1247, %p1248
      %s1251 = sadd.s32 %s1250, 1
      %p1254 = scmp.eq.s32.totalorder %s140, 1
      %p1255 = scmp.ne.s32.totalorder %s1250, %s1252
      %p1256 = scmp.eq.s32.totalorder %s140, 0
      %p1257 = por %p1255, %p1256
      %p1258 = scmp.ne.s32.totalorder %s1250, %s1252
      %p1259 = scmp.eq.s32.totalorder %s145, 1
      %p1260 = por %p1258, %p1259
      %p1261 = scmp.ne.s32.totalorder %s1252, %s1253
      %p1262 = scmp.eq.s32.totalorder %s145, 0
      %p1263 = por %p1261, %p1262
      %p1264 = scmp.ne.s32.totalorder %s1252, %s1253
      %p1265 = scmp.eq.s32.totalorder %s146, 1
      %p1266 = por %p1264, %p1265
      %p1268 = scmp.ne.s32.totalorder %s1253, %s1267
      %p1269 = scmp.eq.s32.totalorder %s146, 0
      %p1270 = por %p1268, %p1269
      %s1272 = sadd.s32 %s1271, 1
      %p1275 = scmp.eq.s32.totalorder %s140, 1
      %p1276 = scmp.ne.s32.totalorder %s1271, %s1273
      %p1277 = scmp.eq.s32.totalorder %s140, 0
      %p1278 = por %p1276, %p1277
      %p1279 = scmp.ne.s32.totalorder %s1271, %s1273
      %p1280 = scmp.eq.s32.totalorder %s145, 1
      %p1281 = por %p1279, %p1280
      %p1282 = scmp.ne.s32.totalorder %s1273, %s1274
      %p1283 = scmp.eq.s32.totalorder %s145, 0
      %p1284 = por %p1282, %p1283
      %p1285 = scmp.ne.s32.totalorder %s1273, %s1274
      %p1286 = scmp.eq.s32.totalorder %s146, 1
      %p1287 = por %p1285, %p1286
      %p1289 = scmp.ne.s32.totalorder %s1274, %s1288
      %p1290 = scmp.eq.s32.totalorder %s146, 0
      %p1291 = por %p1289, %p1290
      %s1293 = sadd.s32 %s1292, 1
      %p1296 = scmp.eq.s32.totalorder %s140, 1
      %p1297 = scmp.ne.s32.totalorder %s1292, %s1294
      %p1298 = scmp.eq.s32.totalorder %s140, 0
      %p1299 = por %p1297, %p1298
      %p1300 = scmp.ne.s32.totalorder %s1292, %s1294
      %p1301 = scmp.eq.s32.totalorder %s145, 1
      %p1302 = por %p1300, %p1301
      %p1303 = scmp.ne.s32.totalorder %s1294, %s1295
      %p1304 = scmp.eq.s32.totalorder %s145, 0
      %p1305 = por %p1303, %p1304
      %p1306 = scmp.ne.s32.totalorder %s1294, %s1295
      %p1307 = scmp.eq.s32.totalorder %s146, 1
      %p1308 = por %p1306, %p1307
      %p1310 = scmp.ne.s32.totalorder %s1295, %s1309
      %p1311 = scmp.eq.s32.totalorder %s146, 0
      %p1312 = por %p1310, %p1311
      %s1314 = sadd.s32 %s1313, 1
      %p1317 = scmp.eq.s32.totalorder %s140, 1
      %p1318 = scmp.ne.s32.totalorder %s1313, %s1315
      %p1319 = scmp.eq.s32.totalorder %s140, 0
      %p1320 = por %p1318, %p1319
      %p1321 = scmp.ne.s32.totalorder %s1313, %s1315
      %p1322 = scmp.eq.s32.totalorder %s145, 1
      %p1323 = por %p1321, %p1322
      %p1324 = scmp.ne.s32.totalorder %s1315, %s1316
      %p1325 = scmp.eq.s32.totalorder %s145, 0
      %p1326 = por %p1324, %p1325
      %p1327 = scmp.ne.s32.totalorder %s1315, %s1316
      %p1328 = scmp.eq.s32.totalorder %s146, 1
      %p1329 = por %p1327, %p1328
      %p1331 = scmp.ne.s32.totalorder %s1316, %s1330
      %p1332 = scmp.eq.s32.totalorder %s146, 0
      %p1333 = por %p1331, %p1332
      %s1335 = sadd.s32 %s1334, 1
      %p1338 = scmp.eq.s32.totalorder %s140, 1
      %p1339 = scmp.ne.s32.totalorder %s1334, %s1336
      %p1340 = scmp.eq.s32.totalorder %s140, 0
      %p1341 = por %p1339, %p1340
      %p1342 = scmp.ne.s32.totalorder %s1334, %s1336
      %p1343 = scmp.eq.s32.totalorder %s145, 1
      %p1344 = por %p1342, %p1343
      %p1345 = scmp.ne.s32.totalorder %s1336, %s1337
      %p1346 = scmp.eq.s32.totalorder %s145, 0
      %p1347 = por %p1345, %p1346
      %p1348 = scmp.ne.s32.totalorder %s1336, %s1337
      %p1349 = scmp.eq.s32.totalorder %s146, 1
      %p1350 = por %p1348, %p1349
      %p1352 = scmp.ne.s32.totalorder %s1337, %s1351
      %p1353 = scmp.eq.s32.totalorder %s146, 0
      %p1354 = por %p1352, %p1353
      %s1356 = sadd.s32 %s1355, 1
      %p1359 = scmp.eq.s32.totalorder %s140, 1
      %p1360 = scmp.ne.s32.totalorder %s1355, %s1357
      %p1361 = scmp.eq.s32.totalorder %s140, 0
      %p1362 = por %p1360, %p1361
      %p1363 = scmp.ne.s32.totalorder %s1355, %s1357
      %p1364 = scmp.eq.s32.totalorder %s145, 1
      %p1365 = por %p1363, %p1364
      %p1366 = scmp.ne.s32.totalorder %s1357, %s1358
      %p1367 = scmp.eq.s32.totalorder %s145, 0
      %p1368 = por %p1366, %p1367
      %p1369 = scmp.ne.s32.totalorder %s1357, %s1358
      %p1370 = scmp.eq.s32.totalorder %s146, 1
      %p1371 = por %p1369, %p1370
      %p1373 = scmp.ne.s32.totalorder %s1358, %s1372
      %p1374 = scmp.eq.s32.totalorder %s146, 0
      %p1375 = por %p1373, %p1374
      %s1377 = sadd.s32 %s1376, 1
      %p1380 = scmp.eq.s32.totalorder %s140, 1
      %p1381 = scmp.ne.s32.totalorder %s1376, %s1378
      %p1382 = scmp.eq.s32.totalorder %s140, 0
      %p1383 = por %p1381, %p1382
      %p1384 = scmp.ne.s32.totalorder %s1376, %s1378
      %p1385 = scmp.eq.s32.totalorder %s145, 1
      %p1386 = por %p1384, %p1385
      %p1387 = scmp.ne.s32.totalorder %s1378, %s1379
      %p1388 = scmp.eq.s32.totalorder %s145, 0
      %p1389 = por %p1387, %p1388
      %p1390 = scmp.ne.s32.totalorder %s1378, %s1379
      %p1391 = scmp.eq.s32.totalorder %s146, 1
      %p1392 = por %p1390, %p1391
      %p1394 = scmp.ne.s32.totalorder %s1379, %s1393
      %p1395 = scmp.eq.s32.totalorder %s146, 0
      %p1396 = por %p1394, %p1395
      %s1397 = ssub.s32 %s140, %s147
      %p1398 = scmp.eq.s32.totalorder %s1397, 0
      %s1400 = sadd.s32 %s1399, 1
      %s1401 = scalar_select %p1398, %s1399, %s1400
      %p1404 = pneg %p1398
      %p1405 = scmp.eq.s32.totalorder %s140, 1
      %p1406 = por %p1404, %p1405
      %p1407 = scmp.ne.s32.totalorder %s1399, %s1402
      %p1408 = scmp.eq.s32.totalorder %s140, 0
      %p1409 = por %p1407, %p1408
      %p1410 = scmp.ne.s32.totalorder %s1399, %s1402
      %p1411 = scmp.eq.s32.totalorder %s145, 1
      %p1412 = por %p1410, %p1411
      %p1413 = scmp.ne.s32.totalorder %s1402, %s1403
      %p1414 = scmp.eq.s32.totalorder %s145, 0
      %p1415 = por %p1413, %p1414
      %p1416 = scmp.ne.s32.totalorder %s1402, %s1403
      %p1417 = scmp.eq.s32.totalorder %s146, 1
      %p1418 = por %p1416, %p1417
      %p1420 = scmp.ne.s32.totalorder %s1403, %s1419
      %p1421 = scmp.eq.s32.totalorder %s146, 0
      %p1422 = por %p1420, %p1421
      %s1423 = ssub.s32 %s140, %s147
      %p1424 = scmp.eq.s32.totalorder %s1423, 0
      %s1426 = sadd.s32 %s1425, 1
      %s1427 = scalar_select %p1424, %s1425, %s1426
      %p1430 = pneg %p1424
      %p1431 = scmp.eq.s32.totalorder %s140, 1
      %p1432 = por %p1430, %p1431
      %p1433 = scmp.ne.s32.totalorder %s1425, %s1428
      %p1434 = scmp.eq.s32.totalorder %s140, 0
      %p1435 = por %p1433, %p1434
      %p1436 = scmp.ne.s32.totalorder %s1425, %s1428
      %p1437 = scmp.eq.s32.totalorder %s145, 1
      %p1438 = por %p1436, %p1437
      %p1439 = scmp.ne.s32.totalorder %s1428, %s1429
      %p1440 = scmp.eq.s32.totalorder %s145, 0
      %p1441 = por %p1439, %p1440
      %p1442 = scmp.ne.s32.totalorder %s1428, %s1429
      %p1443 = scmp.eq.s32.totalorder %s146, 1
      %p1444 = por %p1442, %p1443
      %p1446 = scmp.ne.s32.totalorder %s1429, %s1445
      %p1447 = scmp.eq.s32.totalorder %s146, 0
      %p1448 = por %p1446, %p1447
      %p1449 = scmp.le.s32.totalorder 1, %s140
      %p1450 = scmp.lt.s32.totalorder %s140, 3
      %p1451 = pnand %p1449, %p1450
      %p1452 = pneg %p1451
      // Predicated region
      $region9: #{mlstm_forward.1} parent=5 // pred_check
        _
      $region10: #{mlstm_forward.1} parent=5 // pred_check_branch
        %1454 = sbr.rel (%p1451) target = $region12
      $region11: #{mlstm_forward.1} parent=5 // pred_region
        %s1455 = ssub.s32 %s140, 1
        // Predicated region
        $region13: #{mlstm_forward.1} parent=11 // pred_check
          %p1456 = pneg %p213
        $region14: #{mlstm_forward.1} parent=11 // pred_check_branch
          %1458 = sbr.rel (%p1456) target = $region16
        $region15: #{mlstm_forward.1} parent=11 // pred_region
          %1460 = vsyncadd [#allocation7], 0
          %s1462 = sshll.u32 %s5, 4
          %s1463 = int_to_ptr.hbm [resolvable:$true] %s1462
          %s1464 = sshll.u32 [#allocation6], 4
          %s1465 = int_to_ptr.vmem [resolvable:$true] %s1464
          %1467 = dma.hbm_to_vmem [thread:$0]  %s1463, 16, %s1465, [#allocation7]
        $region16: #{mlstm_forward.1} parent=11 // pred_fallthru
          _
        // Predicated region
        $region17: #{mlstm_forward.1} parent=11 // pred_check
          %p1468 = pneg %p234
        $region18: #{mlstm_forward.1} parent=11 // pred_check_branch
          %1470 = sbr.rel (%p1468) target = $region20
        $region19: #{mlstm_forward.1} parent=11 // pred_region
          %1472 = vsyncadd [#allocation10], 0
          %s1474 = sshll.u32 %s7, 4
          %s1475 = int_to_ptr.hbm [resolvable:$true] %s1474
          %s1476 = sshll.u32 [#allocation9], 4
          %s1477 = int_to_ptr.vmem [resolvable:$true] %s1476
          %1479 = dma.hbm_to_vmem [thread:$0]  %s1475, 16, %s1477, [#allocation10]
        $region20: #{mlstm_forward.1} parent=11 // pred_fallthru
          _
        // Predicated region
        $region21: #{mlstm_forward.1} parent=11 // pred_check
          %p1480 = pneg %p255
        $region22: #{mlstm_forward.1} parent=11 // pred_check_branch
          %1482 = sbr.rel (%p1480) target = $region24
        $region23: #{mlstm_forward.1} parent=11 // pred_region
          _
        $region24: #{mlstm_forward.1} parent=11 // pred_fallthru
          _
        // Predicated region
        $region25: #{mlstm_forward.1} parent=11 // pred_check
          %p1483 = pneg %p276
        $region26: #{mlstm_forward.1} parent=11 // pred_check_branch
          %1485 = sbr.rel (%p1483) target = $region28
        $region27: #{mlstm_forward.1} parent=11 // pred_region
          _
        $region28: #{mlstm_forward.1} parent=11 // pred_fallthru
          _
        // Predicated region
        $region29: #{mlstm_forward.1} parent=11 // pred_check
          %p1486 = pneg %p297
        $region30: #{mlstm_forward.1} parent=11 // pred_check_branch
          %1488 = sbr.rel (%p1486) target = $region32
        $region31: #{mlstm_forward.1} parent=11 // pred_region
          %1490 = vsyncadd [#allocation10], 0
          %s1492 = sshll.u32 %s13, 4
          %s1493 = int_to_ptr.hbm [resolvable:$true] %s1492
          %s1494 = sshll.u32 [#allocation11], 4
          %s1495 = int_to_ptr.vmem [resolvable:$true] %s1494
          %1497 = dma.hbm_to_vmem [thread:$0]  %s1493, 16, %s1495, [#allocation10]
        $region32: #{mlstm_forward.1} parent=11 // pred_fallthru
          _
        // Predicated region
        $region33: #{mlstm_forward.1} parent=11 // pred_check
          %p1498 = pneg %p318
        $region34: #{mlstm_forward.1} parent=11 // pred_check_branch
          %1500 = sbr.rel (%p1498) target = $region36
        $region35: #{mlstm_forward.1} parent=11 // pred_region
          %1502 = vsyncadd [#allocation13], 0
          %s1504 = sshll.u32 %s15, 4
          %s1505 = int_to_ptr.hbm [resolvable:$true] %s1504
          %s1506 = sshll.u32 [#allocation12], 4
          %s1507 = int_to_ptr.vmem [resolvable:$true] %s1506
          %1509 = dma.hbm_to_vmem [thread:$0]  %s1505, 16, %s1507, [#allocation13]
        $region36: #{mlstm_forward.1} parent=11 // pred_fallthru
          _
        // Predicated region
        $region37: #{mlstm_forward.1} parent=11 // pred_check
          %p1510 = pneg %p339
        $region38: #{mlstm_forward.1} parent=11 // pred_check_branch
          %1512 = sbr.rel (%p1510) target = $region40
        $region39: #{mlstm_forward.1} parent=11 // pred_region
          _
        $region40: #{mlstm_forward.1} parent=11 // pred_fallthru
          _
        // Predicated region
        $region41: #{mlstm_forward.1} parent=11 // pred_check
          %p1513 = pneg %p360
        $region42: #{mlstm_forward.1} parent=11 // pred_check_branch
          %1515 = sbr.rel (%p1513) target = $region44
        $region43: #{mlstm_forward.1} parent=11 // pred_region
          _
        $region44: #{mlstm_forward.1} parent=11 // pred_fallthru
          _
        // Predicated region
        $region45: #{mlstm_forward.1} parent=11 // pred_check
          %p1516 = pneg %p381
        $region46: #{mlstm_forward.1} parent=11 // pred_check_branch
          %1518 = sbr.rel (%p1516) target = $region48
        $region47: #{mlstm_forward.1} parent=11 // pred_region
          %1520 = vsyncadd [#allocation13], 0
          %s1521 = sshll.u32 %s21, 4
          %s1522 = int_to_ptr.hbm [resolvable:$true] %s1521
          %s1523 = sshll.u32 [#allocation14], 4
          %s1524 = int_to_ptr.vmem [resolvable:$true] %s1523
          %1529 = dma.hbm_to_vmem [thread:$0]  %s1522, 32, %s1524, [#allocation13], 16, 16, 1
        $region48: #{mlstm_forward.1} parent=11 // pred_fallthru
          _
        // Predicated region
        $region49: #{mlstm_forward.1} parent=11 // pred_check
          %p1530 = pneg %p402
        $region50: #{mlstm_forward.1} parent=11 // pred_check_branch
          %1532 = sbr.rel (%p1530) target = $region52
        $region51: #{mlstm_forward.1} parent=11 // pred_region
          _
        $region52: #{mlstm_forward.1} parent=11 // pred_fallthru
          _
        // Predicated region
        $region53: #{mlstm_forward.1} parent=11 // pred_check
          %p1533 = pneg %p423
        $region54: #{mlstm_forward.1} parent=11 // pred_check_branch
          %1535 = sbr.rel (%p1533) target = $region56
        $region55: #{mlstm_forward.1} parent=11 // pred_region
          %1537 = vsyncadd [#allocation16], 0
          %s1538 = sshll.u32 %s25, 4
          %s1539 = int_to_ptr.hbm [resolvable:$true] %s1538
          %s1540 = sshll.u32 [#allocation15], 4
          %s1541 = int_to_ptr.vmem [resolvable:$true] %s1540
          %1546 = dma.hbm_to_vmem [thread:$0]  %s1539, 32, %s1541, [#allocation16], 16, 16, 1
        $region56: #{mlstm_forward.1} parent=11 // pred_fallthru
          _
        // Predicated region
        $region57: #{mlstm_forward.1} parent=11 // pred_check
          %p1547 = pneg %p444
        $region58: #{mlstm_forward.1} parent=11 // pred_check_branch
          %1549 = sbr.rel (%p1547) target = $region60
        $region59: #{mlstm_forward.1} parent=11 // pred_region
          %1551 = vsyncadd [#allocation16], 0
          %s1553 = sshll.u32 %s27, 4
          %s1554 = int_to_ptr.hbm [resolvable:$true] %s1553
          %s1555 = sshll.u32 [#allocation17], 4
          %s1556 = int_to_ptr.vmem [resolvable:$true] %s1555
          %1558 = dma.hbm_to_vmem [thread:$0]  %s1554, 16, %s1556, [#allocation16]
        $region60: #{mlstm_forward.1} parent=11 // pred_fallthru
          _
        // Predicated region
        $region61: #{mlstm_forward.1} parent=11 // pred_check
          %p1559 = pneg %p465
        $region62: #{mlstm_forward.1} parent=11 // pred_check_branch
          %1561 = sbr.rel (%p1559) target = $region64
        $region63: #{mlstm_forward.1} parent=11 // pred_region
          _
        $region64: #{mlstm_forward.1} parent=11 // pred_fallthru
          _
        // Predicated region
        $region65: #{mlstm_forward.1} parent=11 // pred_check
          %p1562 = pneg %p486
        $region66: #{mlstm_forward.1} parent=11 // pred_check_branch
          %1564 = sbr.rel (%p1562) target = $region68
        $region67: #{mlstm_forward.1} parent=11 // pred_region
          _
        $region68: #{mlstm_forward.1} parent=11 // pred_fallthru
          _
        // Predicated region
        $region69: #{mlstm_forward.1} parent=11 // pred_check
          %p1565 = pneg %p507
        $region70: #{mlstm_forward.1} parent=11 // pred_check_branch
          %1567 = sbr.rel (%p1565) target = $region72
        $region71: #{mlstm_forward.1} parent=11 // pred_region
          _
        $region72: #{mlstm_forward.1} parent=11 // pred_fallthru
          _
        // Predicated region
        $region73: #{mlstm_forward.1} parent=11 // pred_check
          %p1568 = pneg %p528
        $region74: #{mlstm_forward.1} parent=11 // pred_check_branch
          %1570 = sbr.rel (%p1568) target = $region76
        $region75: #{mlstm_forward.1} parent=11 // pred_region
          _
        $region76: #{mlstm_forward.1} parent=11 // pred_fallthru
          _
        // Predicated region
        $region77: #{mlstm_forward.1} parent=11 // pred_check
          %p1571 = pneg %p549
        $region78: #{mlstm_forward.1} parent=11 // pred_check_branch
          %1573 = sbr.rel (%p1571) target = $region80
        $region79: #{mlstm_forward.1} parent=11 // pred_region
          _
        $region80: #{mlstm_forward.1} parent=11 // pred_fallthru
          _
        // Predicated region
        $region81: #{mlstm_forward.1} parent=11 // pred_check
          %p1574 = pneg %p570
        $region82: #{mlstm_forward.1} parent=11 // pred_check_branch
          %1576 = sbr.rel (%p1574) target = $region84
        $region83: #{mlstm_forward.1} parent=11 // pred_region
          _
        $region84: #{mlstm_forward.1} parent=11 // pred_fallthru
          _
        // Predicated region
        $region85: #{mlstm_forward.1} parent=11 // pred_check
          %p1577 = pneg %p591
        $region86: #{mlstm_forward.1} parent=11 // pred_check_branch
          %1579 = sbr.rel (%p1577) target = $region88
        $region87: #{mlstm_forward.1} parent=11 // pred_region
          _
        $region88: #{mlstm_forward.1} parent=11 // pred_fallthru
          _
        // Predicated region
        $region89: #{mlstm_forward.1} parent=11 // pred_check
          %p1580 = pneg %p612
        $region90: #{mlstm_forward.1} parent=11 // pred_check_branch
          %1582 = sbr.rel (%p1580) target = $region92
        $region91: #{mlstm_forward.1} parent=11 // pred_region
          _
        $region92: #{mlstm_forward.1} parent=11 // pred_fallthru
          _
        // Predicated region
        $region93: #{mlstm_forward.1} parent=11 // pred_check
          %p1583 = pneg %p633
        $region94: #{mlstm_forward.1} parent=11 // pred_check_branch
          %1585 = sbr.rel (%p1583) target = $region96
        $region95: #{mlstm_forward.1} parent=11 // pred_region
          %1587 = vsyncadd [#allocation19], 0
          %s1588 = sshll.u32 %s45, 4
          %s1589 = int_to_ptr.hbm [resolvable:$true] %s1588
          %s1590 = sshll.u32 [#allocation18], 4
          %s1591 = int_to_ptr.vmem [resolvable:$true] %s1590
          %1596 = dma.hbm_to_vmem [thread:$0]  %s1589, 32, %s1591, [#allocation19], 16, 16, 1
        $region96: #{mlstm_forward.1} parent=11 // pred_fallthru
          _
        // Predicated region
        $region97: #{mlstm_forward.1} parent=11 // pred_check
          %p1597 = pneg %p654
        $region98: #{mlstm_forward.1} parent=11 // pred_check_branch
          %1599 = sbr.rel (%p1597) target = $region100
        $region99: #{mlstm_forward.1} parent=11 // pred_region
          _
        $region100: #{mlstm_forward.1} parent=11 // pred_fallthru
          _
        // Predicated region
        $region101: #{mlstm_forward.1} parent=11 // pred_check
          %p1600 = pneg %p675
        $region102: #{mlstm_forward.1} parent=11 // pred_check_branch
          %1602 = sbr.rel (%p1600) target = $region104
        $region103: #{mlstm_forward.1} parent=11 // pred_region
          %1604 = vsyncadd [#allocation19], 0
          %s1605 = sshll.u32 %s49, 4
          %s1606 = int_to_ptr.hbm [resolvable:$true] %s1605
          %s1607 = sshll.u32 [#allocation20], 4
          %s1608 = int_to_ptr.vmem [resolvable:$true] %s1607
          %1613 = dma.hbm_to_vmem [thread:$0]  %s1606, 32, %s1608, [#allocation19], 16, 16, 1
        $region104: #{mlstm_forward.1} parent=11 // pred_fallthru
          _
        // Predicated region
        $region105: #{mlstm_forward.1} parent=11 // pred_check
          %p1614 = pneg %p696
        $region106: #{mlstm_forward.1} parent=11 // pred_check_branch
          %1616 = sbr.rel (%p1614) target = $region108
        $region107: #{mlstm_forward.1} parent=11 // pred_region
          %1618 = vsyncadd [#allocation22], 0
          %s1620 = sshll.u32 %s51, 4
          %s1621 = int_to_ptr.hbm [resolvable:$true] %s1620
          %s1622 = sshll.u32 [#allocation21], 4
          %s1623 = int_to_ptr.vmem [resolvable:$true] %s1622
          %1625 = dma.hbm_to_vmem [thread:$0]  %s1621, 16, %s1623, [#allocation22]
        $region108: #{mlstm_forward.1} parent=11 // pred_fallthru
          _
        // Predicated region
        $region109: #{mlstm_forward.1} parent=11 // pred_check
          %p1626 = pneg %p717
        $region110: #{mlstm_forward.1} parent=11 // pred_check_branch
          %1628 = sbr.rel (%p1626) target = $region112
        $region111: #{mlstm_forward.1} parent=11 // pred_region
          _
        $region112: #{mlstm_forward.1} parent=11 // pred_fallthru
          _
        // Predicated region
        $region113: #{mlstm_forward.1} parent=11 // pred_check
          %p1629 = pneg %p738
        $region114: #{mlstm_forward.1} parent=11 // pred_check_branch
          %1631 = sbr.rel (%p1629) target = $region116
        $region115: #{mlstm_forward.1} parent=11 // pred_region
          _
        $region116: #{mlstm_forward.1} parent=11 // pred_fallthru
          _
        // Predicated region
        $region117: #{mlstm_forward.1} parent=11 // pred_check
          %p1632 = pneg %p759
        $region118: #{mlstm_forward.1} parent=11 // pred_check_branch
          %1634 = sbr.rel (%p1632) target = $region120
        $region119: #{mlstm_forward.1} parent=11 // pred_region
          _
        $region120: #{mlstm_forward.1} parent=11 // pred_fallthru
          _
        // Predicated region
        $region121: #{mlstm_forward.1} parent=11 // pred_check
          %p1635 = pneg %p780
        $region122: #{mlstm_forward.1} parent=11 // pred_check_branch
          %1637 = sbr.rel (%p1635) target = $region124
        $region123: #{mlstm_forward.1} parent=11 // pred_region
          _
        $region124: #{mlstm_forward.1} parent=11 // pred_fallthru
          _
        // Predicated region
        $region125: #{mlstm_forward.1} parent=11 // pred_check
          %p1638 = pneg %p801
        $region126: #{mlstm_forward.1} parent=11 // pred_check_branch
          %1640 = sbr.rel (%p1638) target = $region128
        $region127: #{mlstm_forward.1} parent=11 // pred_region
          _
        $region128: #{mlstm_forward.1} parent=11 // pred_fallthru
          _
        // Predicated region
        $region129: #{mlstm_forward.1} parent=11 // pred_check
          %p1641 = pneg %p822
        $region130: #{mlstm_forward.1} parent=11 // pred_check_branch
          %1643 = sbr.rel (%p1641) target = $region132
        $region131: #{mlstm_forward.1} parent=11 // pred_region
          _
        $region132: #{mlstm_forward.1} parent=11 // pred_fallthru
          _
        // Predicated region
        $region133: #{mlstm_forward.1} parent=11 // pred_check
          %p1644 = pneg %p843
        $region134: #{mlstm_forward.1} parent=11 // pred_check_branch
          %1646 = sbr.rel (%p1644) target = $region136
        $region135: #{mlstm_forward.1} parent=11 // pred_region
          _
        $region136: #{mlstm_forward.1} parent=11 // pred_fallthru
          _
        // Predicated region
        $region137: #{mlstm_forward.1} parent=11 // pred_check
          %p1647 = pneg %p864
        $region138: #{mlstm_forward.1} parent=11 // pred_check_branch
          %1649 = sbr.rel (%p1647) target = $region140
        $region139: #{mlstm_forward.1} parent=11 // pred_region
          _
        $region140: #{mlstm_forward.1} parent=11 // pred_fallthru
          _
        // Predicated region
        $region141: #{mlstm_forward.1} parent=11 // pred_check
          %p1650 = pneg %p885
        $region142: #{mlstm_forward.1} parent=11 // pred_check_branch
          %1652 = sbr.rel (%p1650) target = $region144
        $region143: #{mlstm_forward.1} parent=11 // pred_region
          %1654 = vsyncadd [#allocation22], 0
          %s1655 = sshll.u32 %s69, 4
          %s1656 = int_to_ptr.hbm [resolvable:$true] %s1655
          %s1657 = sshll.u32 [#allocation23], 4
          %s1658 = int_to_ptr.vmem [resolvable:$true] %s1657
          %1663 = dma.hbm_to_vmem [thread:$0]  %s1656, 32, %s1658, [#allocation22], 16, 16, 1
        $region144: #{mlstm_forward.1} parent=11 // pred_fallthru
          _
        // Predicated region
        $region145: #{mlstm_forward.1} parent=11 // pred_check
          %p1664 = pneg %p906
        $region146: #{mlstm_forward.1} parent=11 // pred_check_branch
          %1666 = sbr.rel (%p1664) target = $region148
        $region147: #{mlstm_forward.1} parent=11 // pred_region
          _
        $region148: #{mlstm_forward.1} parent=11 // pred_fallthru
          _
        // Predicated region
        $region149: #{mlstm_forward.1} parent=11 // pred_check
          %p1667 = pneg %p927
        $region150: #{mlstm_forward.1} parent=11 // pred_check_branch
          %1669 = sbr.rel (%p1667) target = $region152
        $region151: #{mlstm_forward.1} parent=11 // pred_region
          %1671 = vsyncadd [#allocation25], 0
          %s1672 = sshll.u32 %s73, 4
          %s1673 = int_to_ptr.hbm [resolvable:$true] %s1672
          %s1674 = sshll.u32 [#allocation24], 4
          %s1675 = int_to_ptr.vmem [resolvable:$true] %s1674
          %1680 = dma.hbm_to_vmem [thread:$0]  %s1673, 32, %s1675, [#allocation25], 16, 16, 1
        $region152: #{mlstm_forward.1} parent=11 // pred_fallthru
          _
        // Predicated region
        $region153: #{mlstm_forward.1} parent=11 // pred_check
          %p1681 = pneg %p948
        $region154: #{mlstm_forward.1} parent=11 // pred_check_branch
          %1683 = sbr.rel (%p1681) target = $region156
        $region155: #{mlstm_forward.1} parent=11 // pred_region
          %1685 = vsyncadd [#allocation25], 0
          %s1687 = sshll.u32 %s75, 4
          %s1688 = int_to_ptr.hbm [resolvable:$true] %s1687
          %s1689 = sshll.u32 [#allocation26], 4
          %s1690 = int_to_ptr.vmem [resolvable:$true] %s1689
          %1692 = dma.hbm_to_vmem [thread:$0]  %s1688, 16, %s1690, [#allocation25]
        $region156: #{mlstm_forward.1} parent=11 // pred_fallthru
          _
        // Predicated region
        $region157: #{mlstm_forward.1} parent=11 // pred_check
          %p1693 = pneg %p969
        $region158: #{mlstm_forward.1} parent=11 // pred_check_branch
          %1695 = sbr.rel (%p1693) target = $region160
        $region159: #{mlstm_forward.1} parent=11 // pred_region
          _
        $region160: #{mlstm_forward.1} parent=11 // pred_fallthru
          _
        // Predicated region
        $region161: #{mlstm_forward.1} parent=11 // pred_check
          %p1696 = pneg %p990
        $region162: #{mlstm_forward.1} parent=11 // pred_check_branch
          %1698 = sbr.rel (%p1696) target = $region164
        $region163: #{mlstm_forward.1} parent=11 // pred_region
          _
        $region164: #{mlstm_forward.1} parent=11 // pred_fallthru
          _
        // Predicated region
        $region165: #{mlstm_forward.1} parent=11 // pred_check
          %p1699 = pneg %p1011
        $region166: #{mlstm_forward.1} parent=11 // pred_check_branch
          %1701 = sbr.rel (%p1699) target = $region168
        $region167: #{mlstm_forward.1} parent=11 // pred_region
          _
        $region168: #{mlstm_forward.1} parent=11 // pred_fallthru
          _
        // Predicated region
        $region169: #{mlstm_forward.1} parent=11 // pred_check
          %p1702 = pneg %p1032
        $region170: #{mlstm_forward.1} parent=11 // pred_check_branch
          %1704 = sbr.rel (%p1702) target = $region172
        $region171: #{mlstm_forward.1} parent=11 // pred_region
          _
        $region172: #{mlstm_forward.1} parent=11 // pred_fallthru
          _
        // Predicated region
        $region173: #{mlstm_forward.1} parent=11 // pred_check
          %p1705 = pneg %p1053
        $region174: #{mlstm_forward.1} parent=11 // pred_check_branch
          %1707 = sbr.rel (%p1705) target = $region176
        $region175: #{mlstm_forward.1} parent=11 // pred_region
          _
        $region176: #{mlstm_forward.1} parent=11 // pred_fallthru
          _
        // Predicated region
        $region177: #{mlstm_forward.1} parent=11 // pred_check
          %p1708 = pneg %p1074
        $region178: #{mlstm_forward.1} parent=11 // pred_check_branch
          %1710 = sbr.rel (%p1708) target = $region180
        $region179: #{mlstm_forward.1} parent=11 // pred_region
          _
        $region180: #{mlstm_forward.1} parent=11 // pred_fallthru
          _
        // Predicated region
        $region181: #{mlstm_forward.1} parent=11 // pred_check
          %p1711 = pneg %p1095
        $region182: #{mlstm_forward.1} parent=11 // pred_check_branch
          %1713 = sbr.rel (%p1711) target = $region184
        $region183: #{mlstm_forward.1} parent=11 // pred_region
          _
        $region184: #{mlstm_forward.1} parent=11 // pred_fallthru
          _
        // Predicated region
        $region185: #{mlstm_forward.1} parent=11 // pred_check
          %p1714 = pneg %p1116
        $region186: #{mlstm_forward.1} parent=11 // pred_check_branch
          %1716 = sbr.rel (%p1714) target = $region188
        $region187: #{mlstm_forward.1} parent=11 // pred_region
          _
        $region188: #{mlstm_forward.1} parent=11 // pred_fallthru
          _
        // Predicated region
        $region189: #{mlstm_forward.1} parent=11 // pred_check
          %p1717 = pneg %p1137
        $region190: #{mlstm_forward.1} parent=11 // pred_check_branch
          %1719 = sbr.rel (%p1717) target = $region192
        $region191: #{mlstm_forward.1} parent=11 // pred_region
          %1721 = vsyncadd [#allocation28], 0
          %s1722 = sshll.u32 %s93, 4
          %s1723 = int_to_ptr.hbm [resolvable:$true] %s1722
          %s1724 = sshll.u32 [#allocation27], 4
          %s1725 = int_to_ptr.vmem [resolvable:$true] %s1724
          %1730 = dma.hbm_to_vmem [thread:$0]  %s1723, 32, %s1725, [#allocation28], 16, 16, 1
        $region192: #{mlstm_forward.1} parent=11 // pred_fallthru
          _
        // Predicated region
        $region193: #{mlstm_forward.1} parent=11 // pred_check
          %p1731 = pneg %p1158
        $region194: #{mlstm_forward.1} parent=11 // pred_check_branch
          %1733 = sbr.rel (%p1731) target = $region196
        $region195: #{mlstm_forward.1} parent=11 // pred_region
          _
        $region196: #{mlstm_forward.1} parent=11 // pred_fallthru
          _
        // Predicated region
        $region197: #{mlstm_forward.1} parent=11 // pred_check
          %p1734 = pneg %p1179
        $region198: #{mlstm_forward.1} parent=11 // pred_check_branch
          %1736 = sbr.rel (%p1734) target = $region200
        $region199: #{mlstm_forward.1} parent=11 // pred_region
          %1738 = vsyncadd [#allocation28], 0
          %s1739 = sshll.u32 %s97, 4
          %s1740 = int_to_ptr.hbm [resolvable:$true] %s1739
          %s1741 = sshll.u32 [#allocation29], 4
          %s1742 = int_to_ptr.vmem [resolvable:$true] %s1741
          %1747 = dma.hbm_to_vmem [thread:$0]  %s1740, 32, %s1742, [#allocation28], 16, 16, 1
        $region200: #{mlstm_forward.1} parent=11 // pred_fallthru
          _
        // Predicated region
        $region201: #{mlstm_forward.1} parent=11 // pred_check
          %p1748 = pneg %p1200
        $region202: #{mlstm_forward.1} parent=11 // pred_check_branch
          %1750 = sbr.rel (%p1748) target = $region204
        $region203: #{mlstm_forward.1} parent=11 // pred_region
          %1752 = vsyncadd [#allocation31], 0
          %s1754 = sshll.u32 %s99, 4
          %s1755 = int_to_ptr.hbm [resolvable:$true] %s1754
          %s1756 = sshll.u32 [#allocation30], 4
          %s1757 = int_to_ptr.vmem [resolvable:$true] %s1756
          %1759 = dma.hbm_to_vmem [thread:$0]  %s1755, 16, %s1757, [#allocation31]
        $region204: #{mlstm_forward.1} parent=11 // pred_fallthru
          _
        // Predicated region
        $region205: #{mlstm_forward.1} parent=11 // pred_check
          %p1760 = pneg %p1221
        $region206: #{mlstm_forward.1} parent=11 // pred_check_branch
          %1762 = sbr.rel (%p1760) target = $region208
        $region207: #{mlstm_forward.1} parent=11 // pred_region
          _
        $region208: #{mlstm_forward.1} parent=11 // pred_fallthru
          _
        // Predicated region
        $region209: #{mlstm_forward.1} parent=11 // pred_check
          %p1763 = pneg %p1242
        $region210: #{mlstm_forward.1} parent=11 // pred_check_branch
          %1765 = sbr.rel (%p1763) target = $region212
        $region211: #{mlstm_forward.1} parent=11 // pred_region
          _
        $region212: #{mlstm_forward.1} parent=11 // pred_fallthru
          _
        // Predicated region
        $region213: #{mlstm_forward.1} parent=11 // pred_check
          %p1766 = pneg %p1263
        $region214: #{mlstm_forward.1} parent=11 // pred_check_branch
          %1768 = sbr.rel (%p1766) target = $region216
        $region215: #{mlstm_forward.1} parent=11 // pred_region
          _
        $region216: #{mlstm_forward.1} parent=11 // pred_fallthru
          _
        // Predicated region
        $region217: #{mlstm_forward.1} parent=11 // pred_check
          %p1769 = pneg %p1284
        $region218: #{mlstm_forward.1} parent=11 // pred_check_branch
          %1771 = sbr.rel (%p1769) target = $region220
        $region219: #{mlstm_forward.1} parent=11 // pred_region
          _
        $region220: #{mlstm_forward.1} parent=11 // pred_fallthru
          _
        // Predicated region
        $region221: #{mlstm_forward.1} parent=11 // pred_check
          %p1772 = pneg %p1305
        $region222: #{mlstm_forward.1} parent=11 // pred_check_branch
          %1774 = sbr.rel (%p1772) target = $region224
        $region223: #{mlstm_forward.1} parent=11 // pred_region
          _
        $region224: #{mlstm_forward.1} parent=11 // pred_fallthru
          _
        // Predicated region
        $region225: #{mlstm_forward.1} parent=11 // pred_check
          %p1775 = pneg %p1326
        $region226: #{mlstm_forward.1} parent=11 // pred_check_branch
          %1777 = sbr.rel (%p1775) target = $region228
        $region227: #{mlstm_forward.1} parent=11 // pred_region
          _
        $region228: #{mlstm_forward.1} parent=11 // pred_fallthru
          _
        // Predicated region
        $region229: #{mlstm_forward.1} parent=11 // pred_check
          %p1778 = pneg %p1347
        $region230: #{mlstm_forward.1} parent=11 // pred_check_branch
          %1780 = sbr.rel (%p1778) target = $region232
        $region231: #{mlstm_forward.1} parent=11 // pred_region
          _
        $region232: #{mlstm_forward.1} parent=11 // pred_fallthru
          _
        // Predicated region
        $region233: #{mlstm_forward.1} parent=11 // pred_check
          %p1781 = pneg %p1368
        $region234: #{mlstm_forward.1} parent=11 // pred_check_branch
          %1783 = sbr.rel (%p1781) target = $region236
        $region235: #{mlstm_forward.1} parent=11 // pred_region
          _
        $region236: #{mlstm_forward.1} parent=11 // pred_fallthru
          _
        // Predicated region
        $region237: #{mlstm_forward.1} parent=11 // pred_check
          %p1784 = pneg %p1389
        $region238: #{mlstm_forward.1} parent=11 // pred_check_branch
          %1786 = sbr.rel (%p1784) target = $region240
        $region239: #{mlstm_forward.1} parent=11 // pred_region
          _
        $region240: #{mlstm_forward.1} parent=11 // pred_fallthru
          _
      $region12: #{mlstm_forward.1} parent=5 // pred_fallthru
        _
      %p1787 = scmp.lt.s32.totalorder %s140, 2
      // Predicated region
      $region241: #{mlstm_forward.1} parent=5 // pred_check
        %p1788 = pneg %p1787
      $region242: #{mlstm_forward.1} parent=5 // pred_check_branch
        %1790 = sbr.rel (%p1788) target = $region244
      $region243: #{mlstm_forward.1} parent=5 // pred_region
        // Predicated region
        $region245: #{mlstm_forward.1} parent=243 // pred_check
          %p1791 = pneg %p160
        $region246: #{mlstm_forward.1} parent=243 // pred_check_branch
          %1793 = sbr.rel (%p1791) target = $region248
        $region247: #{mlstm_forward.1} parent=243 // pred_region
          %p1794 = scmp.lt.s32.totalorder %s140, 1
          %s1795 = scalar_select %p1794, %s140, 1
          %s1796 = smul.addr %s1795, 3
          %s1797 = smul.addr %s1796, 8
          %s1798 = scalar_lea.vmem %s1, %s1797
        $region248: #{mlstm_forward.1} parent=243 // pred_fallthru
          _
        // Predicated region
        $region249: #{mlstm_forward.1} parent=243 // pred_check
          %p1799 = pneg %p186
        $region250: #{mlstm_forward.1} parent=243 // pred_check_branch
          %1801 = sbr.rel (%p1799) target = $region252
        $region251: #{mlstm_forward.1} parent=243 // pred_region
          %p1802 = scmp.lt.s32.totalorder %s140, 1
          %s1803 = scalar_select %p1802, %s140, 1
          %s1804 = smul.addr %s1803, 3
          %s1805 = smul.addr %s1804, 4
          %s1806 = scalar_lea.vmem %s3, %s1805
        $region252: #{mlstm_forward.1} parent=243 // pred_fallthru
          _
      $region244: #{mlstm_forward.1} parent=5 // pred_fallthru
        _
      %p1807 = scmp.le.s32.totalorder 1, %s140
      %p1808 = scmp.lt.s32.totalorder %s140, 3
      %p1809 = pnand %p1807, %p1808
      %p1810 = pneg %p1809
      // Predicated region
      $region253: #{mlstm_forward.1} parent=5 // pred_check
        _
      $region254: #{mlstm_forward.1} parent=5 // pred_check_branch
        %1812 = sbr.rel (%p1809) target = $region256
      $region255: #{mlstm_forward.1} parent=5 // pred_region
        %s1813 = ssub.s32 %s140, 1
        // Predicated region
        $region257: #{mlstm_forward.1} parent=255 // pred_check
          %p1814 = pneg %p213
        $region258: #{mlstm_forward.1} parent=255 // pred_check_branch
          %1816 = sbr.rel (%p1814) target = $region260
        $region259: #{mlstm_forward.1} parent=255 // pred_region
          %1818 = dma.done [#allocation7], 16
        $region260: #{mlstm_forward.1} parent=255 // pred_fallthru
          _
        // Predicated region
        $region261: #{mlstm_forward.1} parent=255 // pred_check
          %p1819 = pneg %p234
        $region262: #{mlstm_forward.1} parent=255 // pred_check_branch
          %1821 = sbr.rel (%p1819) target = $region264
        $region263: #{mlstm_forward.1} parent=255 // pred_region
          %1823 = dma.done [#allocation10], 16
        $region264: #{mlstm_forward.1} parent=255 // pred_fallthru
          _
        // Predicated region
        $region265: #{mlstm_forward.1} parent=255 // pred_check
          %p1824 = pneg %p297
        $region266: #{mlstm_forward.1} parent=255 // pred_check_branch
          %1826 = sbr.rel (%p1824) target = $region268
        $region267: #{mlstm_forward.1} parent=255 // pred_region
          %1828 = dma.done [#allocation10], 16
        $region268: #{mlstm_forward.1} parent=255 // pred_fallthru
          _
        // Predicated region
        $region269: #{mlstm_forward.1} parent=255 // pred_check
          %p1829 = pneg %p318
        $region270: #{mlstm_forward.1} parent=255 // pred_check_branch
          %1831 = sbr.rel (%p1829) target = $region272
        $region271: #{mlstm_forward.1} parent=255 // pred_region
          %1833 = dma.done [#allocation13], 16
        $region272: #{mlstm_forward.1} parent=255 // pred_fallthru
          _
        // Predicated region
        $region273: #{mlstm_forward.1} parent=255 // pred_check
          %p1834 = pneg %p381
        $region274: #{mlstm_forward.1} parent=255 // pred_check_branch
          %1836 = sbr.rel (%p1834) target = $region276
        $region275: #{mlstm_forward.1} parent=255 // pred_region
          %1838 = dma.done [#allocation13], 32
        $region276: #{mlstm_forward.1} parent=255 // pred_fallthru
          _
        // Predicated region
        $region277: #{mlstm_forward.1} parent=255 // pred_check
          %p1839 = pneg %p423
        $region278: #{mlstm_forward.1} parent=255 // pred_check_branch
          %1841 = sbr.rel (%p1839) target = $region280
        $region279: #{mlstm_forward.1} parent=255 // pred_region
          %1843 = dma.done [#allocation16], 32
        $region280: #{mlstm_forward.1} parent=255 // pred_fallthru
          _
        // Predicated region
        $region281: #{mlstm_forward.1} parent=255 // pred_check
          %p1844 = pneg %p444
        $region282: #{mlstm_forward.1} parent=255 // pred_check_branch
          %1846 = sbr.rel (%p1844) target = $region284
        $region283: #{mlstm_forward.1} parent=255 // pred_region
          %1848 = dma.done [#allocation16], 16
        $region284: #{mlstm_forward.1} parent=255 // pred_fallthru
          _
        // Predicated region
        $region285: #{mlstm_forward.1} parent=255 // pred_check
          %p1849 = pneg %p633
        $region286: #{mlstm_forward.1} parent=255 // pred_check_branch
          %1851 = sbr.rel (%p1849) target = $region288
        $region287: #{mlstm_forward.1} parent=255 // pred_region
          %1853 = dma.done [#allocation19], 32
        $region288: #{mlstm_forward.1} parent=255 // pred_fallthru
          _
        // Predicated region
        $region289: #{mlstm_forward.1} parent=255 // pred_check
          %p1854 = pneg %p675
        $region290: #{mlstm_forward.1} parent=255 // pred_check_branch
          %1856 = sbr.rel (%p1854) target = $region292
        $region291: #{mlstm_forward.1} parent=255 // pred_region
          %1858 = dma.done [#allocation19], 32
        $region292: #{mlstm_forward.1} parent=255 // pred_fallthru
          _
        // Predicated region
        $region293: #{mlstm_forward.1} parent=255 // pred_check
          %p1859 = pneg %p696
        $region294: #{mlstm_forward.1} parent=255 // pred_check_branch
          %1861 = sbr.rel (%p1859) target = $region296
        $region295: #{mlstm_forward.1} parent=255 // pred_region
          %1863 = dma.done [#allocation22], 16
        $region296: #{mlstm_forward.1} parent=255 // pred_fallthru
          _
        // Predicated region
        $region297: #{mlstm_forward.1} parent=255 // pred_check
          %p1864 = pneg %p885
        $region298: #{mlstm_forward.1} parent=255 // pred_check_branch
          %1866 = sbr.rel (%p1864) target = $region300
        $region299: #{mlstm_forward.1} parent=255 // pred_region
          %1868 = dma.done [#allocation22], 32
        $region300: #{mlstm_forward.1} parent=255 // pred_fallthru
          _
        // Predicated region
        $region301: #{mlstm_forward.1} parent=255 // pred_check
          %p1869 = pneg %p927
        $region302: #{mlstm_forward.1} parent=255 // pred_check_branch
          %1871 = sbr.rel (%p1869) target = $region304
        $region303: #{mlstm_forward.1} parent=255 // pred_region
          %1873 = dma.done [#allocation25], 32
        $region304: #{mlstm_forward.1} parent=255 // pred_fallthru
          _
        // Predicated region
        $region305: #{mlstm_forward.1} parent=255 // pred_check
          %p1874 = pneg %p948
        $region306: #{mlstm_forward.1} parent=255 // pred_check_branch
          %1876 = sbr.rel (%p1874) target = $region308
        $region307: #{mlstm_forward.1} parent=255 // pred_region
          %1878 = dma.done [#allocation25], 16
        $region308: #{mlstm_forward.1} parent=255 // pred_fallthru
          _
        // Predicated region
        $region309: #{mlstm_forward.1} parent=255 // pred_check
          %p1879 = pneg %p1137
        $region310: #{mlstm_forward.1} parent=255 // pred_check_branch
          %1881 = sbr.rel (%p1879) target = $region312
        $region311: #{mlstm_forward.1} parent=255 // pred_region
          %1883 = dma.done [#allocation28], 32
        $region312: #{mlstm_forward.1} parent=255 // pred_fallthru
          _
        // Predicated region
        $region313: #{mlstm_forward.1} parent=255 // pred_check
          %p1884 = pneg %p1179
        $region314: #{mlstm_forward.1} parent=255 // pred_check_branch
          %1886 = sbr.rel (%p1884) target = $region316
        $region315: #{mlstm_forward.1} parent=255 // pred_region
          %1888 = dma.done [#allocation28], 32
        $region316: #{mlstm_forward.1} parent=255 // pred_fallthru
          _
        // Predicated region
        $region317: #{mlstm_forward.1} parent=255 // pred_check
          %p1889 = pneg %p1200
        $region318: #{mlstm_forward.1} parent=255 // pred_check_branch
          %1891 = sbr.rel (%p1889) target = $region320
        $region319: #{mlstm_forward.1} parent=255 // pred_region
          %1893 = dma.done [#allocation31], 16
        $region320: #{mlstm_forward.1} parent=255 // pred_fallthru
          _
        %p1894 = scmp.lt.s32.totalorder %s145, 1
        %s1895 = scalar_select %p1894, %s145, 1
        %s1896 = smul.addr %s1895, 3
        %s1897 = smul.addr %s1896, 8
        %s1898 = scalar_lea.vmem %s1, %s1897
        %p1899 = pneg %p166
        %p1900 = pneg %p163
        %p1901 = scmp.lt.s32.totalorder %s145, 1
        %s1902 = scalar_select %p1901, %s145, 1
        %s1903 = smul.addr %s1902, 3
        %s1904 = smul.addr %s1903, 4
        %s1905 = scalar_lea.vmem %s3, %s1904
        %p1906 = pneg %p192
        %p1907 = pneg %p189
        %p1908 = pneg %p213
        %p1909 = pneg %p210
        %p1910 = pneg %p234
        %p1911 = pneg %p231
        %p1912 = pneg %p255
        %p1913 = pneg %p252
        %p1914 = pneg %p276
        %p1915 = pneg %p273
        %p1916 = pneg %p297
        %p1917 = pneg %p294
        %p1918 = pneg %p318
        %p1919 = pneg %p315
        %p1920 = pneg %p339
        %p1921 = pneg %p336
        %p1922 = pneg %p360
        %p1923 = pneg %p357
        %p1924 = pneg %p381
        %p1925 = pneg %p378
        %p1926 = pneg %p402
        %p1927 = pneg %p399
        %p1928 = pneg %p423
        %p1929 = pneg %p420
        %p1930 = pneg %p444
        %p1931 = pneg %p441
        %p1932 = pneg %p465
        %p1933 = pneg %p462
        %p1934 = pneg %p486
        %p1935 = pneg %p483
        %p1936 = pneg %p507
        %p1937 = pneg %p504
        %p1938 = pneg %p528
        %p1939 = pneg %p525
        %p1940 = pneg %p549
        %p1941 = pneg %p546
        %p1942 = pneg %p570
        %p1943 = pneg %p567
        %p1944 = pneg %p591
        %p1945 = pneg %p588
        %p1946 = pneg %p612
        %p1947 = pneg %p609
        %p1948 = pneg %p633
        %p1949 = pneg %p630
        %p1950 = pneg %p654
        %p1951 = pneg %p651
        %p1952 = pneg %p675
        %p1953 = pneg %p672
        %p1954 = pneg %p696
        %p1955 = pneg %p693
        %p1956 = pneg %p717
        %p1957 = pneg %p714
        %p1958 = pneg %p738
        %p1959 = pneg %p735
        %p1960 = pneg %p759
        %p1961 = pneg %p756
        %p1962 = pneg %p780
        %p1963 = pneg %p777
        %p1964 = pneg %p801
        %p1965 = pneg %p798
        %p1966 = pneg %p822
        %p1967 = pneg %p819
        %p1968 = pneg %p843
        %p1969 = pneg %p840
        %p1970 = pneg %p864
        %p1971 = pneg %p861
        %p1972 = pneg %p885
        %p1973 = pneg %p882
        %p1974 = pneg %p906
        %p1975 = pneg %p903
        %p1976 = pneg %p927
        %p1977 = pneg %p924
        %p1978 = pneg %p948
        %p1979 = pneg %p945
        %p1980 = pneg %p969
        %p1981 = pneg %p966
        %p1982 = pneg %p990
        %p1983 = pneg %p987
        %p1984 = pneg %p1011
        %p1985 = pneg %p1008
        %p1986 = pneg %p1032
        %p1987 = pneg %p1029
        %p1988 = pneg %p1053
        %p1989 = pneg %p1050
        %p1990 = pneg %p1074
        %p1991 = pneg %p1071
        %p1992 = pneg %p1095
        %p1993 = pneg %p1092
        %p1994 = pneg %p1116
        %p1995 = pneg %p1113
        %p1996 = pneg %p1137
        %p1997 = pneg %p1134
        %p1998 = pneg %p1158
        %p1999 = pneg %p1155
        %p2000 = pneg %p1179
        %p2001 = pneg %p1176
        %p2002 = pneg %p1200
        %p2003 = pneg %p1197
        %p2004 = pneg %p1221
        %p2005 = pneg %p1218
        %p2006 = pneg %p1242
        %p2007 = pneg %p1239
        %p2008 = pneg %p1263
        %p2009 = pneg %p1260
        %p2010 = pneg %p1284
        %p2011 = pneg %p1281
        %p2012 = pneg %p1305
        %p2013 = pneg %p1302
        %p2014 = pneg %p1326
        %p2015 = pneg %p1323
        %p2016 = pneg %p1347
        %p2017 = pneg %p1344
        %p2018 = pneg %p1368
        %p2019 = pneg %p1365
        %p2020 = pneg %p1389
        %p2021 = pneg %p1386
        %p2022 = pneg %p1415
        %p2023 = pneg %p1412
        %p2024 = scmp.lt.s32.totalorder %s145, 1
        %s2025 = scalar_select %p2024, %s145, 1
        %s2026 = smul.addr %s2025, 8
        %s2027 = scalar_lea.vmem %s119, %s2026
        %p2028 = pneg %p1441
        %p2029 = pneg %p1438
        %s2030 = sand.u32 %s1428, 1
        %s2031 = scalar_lea.sflag [#allocation8], %s2030
        %s2032 = sand.u32 %s1428, 1
        %s2033 = smul.addr %s2032, 4
        %s2034 = scalar_lea.vmem [#allocation32], %s2033
        %p2035 = scmp.lt.s32.totalorder %s145, 1
        %s2036 = scalar_select %p2035, %s145, 1
        %s2037 = smul.addr %s2036, 3
        %s2038 = smul.addr %s2037, 8
        %s2039 = scalar_lea.vmem %s1, %s2038
        %p2040 = scmp.lt.s32.totalorder %s145, 1
        %s2041 = scalar_select %p2040, %s145, 1
        %s2042 = smul.addr %s2041, 3
        %s2043 = smul.addr %s2042, 4
        %s2044 = scalar_lea.vmem %s3, %s2043
        %p2045 = scmp.lt.s32.totalorder %s145, 1
        %s2046 = scalar_select %p2045, %s145, 1
        %s2047 = smul.addr %s2046, 8
        %s2048 = scalar_lea.vmem %s119, %s2047
        %vm2050 = vcmask 259072
        %2051 = vst.msk [vmem:[#allocation2] sm:$0x3f] %vm2050, 0.0
        %2052 = vst.msk [vmem:[#allocation2 + $0x8] sm:$0x3f] %vm2050, 0.0
        %vm2053 = vcmask 29696
        %2054 = vst.msk [vmem:[#allocation3] sm:$0x3f] %vm2053, 0.0
        %2055 = vst.msk [vmem:[#allocation3 + $0x8] sm:$0x3f] %vm2053, 0.0
        %2056 = vst.msk [vmem:[#allocation3 + $0x10] sm:$0x3f] %vm2053, 0.0
        %2057 = vst.msk [vmem:[#allocation3 + $0x18] sm:$0x3f] %vm2053, 0.0
        %vm2058 = vcmask 257024
        %2059 = vst.msk [vmem:[#allocation4] sm:$0xf] %vm2058, 0.0
        %2060 = vst.msk [vmem:[#allocation4 + $0x4] sm:$0xf] %vm2058, 0.0
        %vm2061 = vcmask 44032
        %2062 = vst.msk [vmem:[#allocation5] sm:$0xf] %vm2061, 0.0
        %2063 = vst.msk [vmem:[#allocation5 + $0x4] sm:$0xf] %vm2061, 0.0
        %2064 = vst.msk [vmem:[#allocation5 + $0x8] sm:$0xf] %vm2061, 0.0
        %2065 = vst.msk [vmem:[#allocation5 + $0xc] sm:$0xf] %vm2061, 0.0
        loop: start=0, step=1, limit=3
        $region321: #{mlstm_forward.1} parent=255 // loop_pre_header
          _
        $region322: #{mlstm_forward.1} parent=255 // loop_header
          %s2067 = sphi 0, %s2071
          %p2068 = scmp.ge.s32.totalorder %s2067, 3
        $region323: #{mlstm_forward.1} parent=255 // loop_header_branch
          %2070 = sbr.rel (%p2068) target = $region327
        $region324: #{mlstm_forward.1} parent=255 // loop_body
          %s2072 = smul.u32 %s2067, 8
          %s2073 = scalar_lea.vmem %s2039, %s2072
          %v2074 = vld [vmem:[%s2073] sm:$0x3f]
          %s2075 = smul.u32 %s2067, 4
          %s2076 = scalar_lea.vmem %s2044, %s2075
          %v2077 = vld [vmem:[%s2076] sm:$0xf]
          %v2078 = vld [vmem:[#allocation2] sm:$0x3f]
          %v2079 = vpack.c.bf16 %v2074, %v2074
          %v2080 = vpack.c.bf16 %v2077, %v2077
          %v2081 = vpack.c.bf16 %v2078, %v2078
          %v2082 = vld [vmem:[%s35] sm:$0xf]
          %v2083 = vld [vmem:[%s31] sm:$0xf]
          %v2084 = vld [vmem:[%s31 + $0x4] sm:$0xf]
          %v2085 = vld [vmem:[%s31 + $0x8] sm:$0xf]
          %v2086 = vld [vmem:[%s31 + $0xc] sm:$0xf]
          %v2091 = vunpack.c.l.b16 %v2083
          %v2092 = vunpack.c.l.b16 %v2084
          %v2093 = vunpack.c.l.b16 %v2085
          %v2094 = vunpack.c.l.b16 %v2086
          %v2095 = vpack.c.b16 %v2092, %v2091
          %v2096 = vpack.c.b16 %v2094, %v2093
          %vm2099 = vcmask 261120
          %v2101 = vsel %vm2099, %v2081, 0
          %2103 = vmatpush.bf16.msra.mxu0 0
          %2104 = vmatpush.bf16.msra.mxu0 0
          %2105 = vmatpush.bf16.msra.mxu0 0
          %2106 = vmatpush.bf16.msra.mxu0 0
          %2107 = vmatpush.bf16.msra.mxu0 0
          %2108 = vmatpush.bf16.msra.mxu0 0
          %2109 = vmatpush.bf16.msra.mxu0 %v2096
          %2110 = vmatpush.bf16.msra.mxu0 %v2095
          %2111 = vmatmul.bf16.gmra.mxu0 %v2101
          %v2112 = vpop.f32.mrf.mxu0
          %v2113 = vadd.f32 0.0, %v2112
          %v2114 = vpop.f32.mrf.mxu0
          %2115 = vdwg.mxu0
          %vm2116 = vcmask 64512
          %v2118 = vsel %vm2116, %v2079, 0
          %vm2120 = vcmask 1043456
          %v2122 = vsel %vm2120, %v2082, 0
          %2124 = vmatpush.bf16.msra.mxu0 0
          %2125 = vmatpush.bf16.msra.mxu0 0
          %2126 = vmatpush.bf16.msra.mxu0 0
          %2127 = vmatpush.bf16.msra.mxu0 0
          %2128 = vmatpush.bf16.msra.mxu0 0
          %2129 = vmatpush.bf16.msra.mxu0 0
          %2130 = vmatpush.bf16.msra.mxu0 0
          %2131 = vmatpush.bf16.msra.mxu0 %v2122
          %2132 = vmatmul.bf16.gmra.mxu0 %v2118
          %v2133 = vpop.f32.mrf.mxu0
          %v2134 = vadd.f32 %v2113, %v2133
          %v2135 = vpop.f32.mrf.mxu0
          %2136 = vdwg.mxu0
          %v2137 = vld [vmem:[%s23] sm:$0x1]
          %v2139 = vperm.slane %v2137, 0
          %v2141 = vadd.f32 %v2134, %v2139
          %s2142 = scalar_lea.vmem %s35, 4
          %v2143 = vld [vmem:[%s2142] sm:$0xf]
          %s2144 = scalar_lea.vmem %s31, 16
          %v2145 = vld [vmem:[%s2144] sm:$0xf]
          %v2146 = vld [vmem:[%s2144 + $0x4] sm:$0xf]
          %v2147 = vld [vmem:[%s2144 + $0x8] sm:$0xf]
          %v2148 = vld [vmem:[%s2144 + $0xc] sm:$0xf]
          %v2153 = vunpack.c.l.b16 %v2145
          %v2154 = vunpack.c.l.b16 %v2146
          %v2155 = vunpack.c.l.b16 %v2147
          %v2156 = vunpack.c.l.b16 %v2148
          %v2157 = vpack.c.b16 %v2154, %v2153
          %v2158 = vpack.c.b16 %v2156, %v2155
          %2161 = vmatpush.bf16.msra.mxu0 0
          %2162 = vmatpush.bf16.msra.mxu0 0
          %2163 = vmatpush.bf16.msra.mxu0 0
          %2164 = vmatpush.bf16.msra.mxu0 0
          %2165 = vmatpush.bf16.msra.mxu0 0
          %2166 = vmatpush.bf16.msra.mxu0 0
          %2167 = vmatpush.bf16.msra.mxu0 %v2158
          %2168 = vmatpush.bf16.msra.mxu0 %v2157
          %2169 = vmatmul.bf16.gmra.mxu0 %v2101
          %v2170 = vpop.f32.mrf.mxu0
          %v2171 = vadd.f32 0.0, %v2170
          %v2172 = vpop.f32.mrf.mxu0
          %2173 = vdwg.mxu0
          %v2175 = vsel %vm2120, %v2143, 0
          %2177 = vmatpush.bf16.msra.mxu0 0
          %2178 = vmatpush.bf16.msra.mxu0 0
          %2179 = vmatpush.bf16.msra.mxu0 0
          %2180 = vmatpush.bf16.msra.mxu0 0
          %2181 = vmatpush.bf16.msra.mxu0 0
          %2182 = vmatpush.bf16.msra.mxu0 0
          %2183 = vmatpush.bf16.msra.mxu0 0
          %2184 = vmatpush.bf16.msra.mxu0 %v2175
          %2185 = vmatmul.bf16.gmra.mxu0 %v2118
          %v2186 = vpop.f32.mrf.mxu0
          %v2187 = vadd.f32 %v2171, %v2186
          %v2188 = vpop.f32.mrf.mxu0
          %2189 = vdwg.mxu0
          %s2190 = scalar_lea.vmem %s23, 1
          %v2191 = vld [vmem:[%s2190] sm:$0x1]
          %v2193 = vperm.slane %v2191, 0
          %v2195 = vadd.f32 %v2187, %v2193
          %s2196 = scalar_lea.vmem %s35, 8
          %v2197 = vld [vmem:[%s2196] sm:$0xf]
          %s2198 = scalar_lea.vmem %s31, 32
          %v2199 = vld [vmem:[%s2198] sm:$0xf]
          %v2200 = vld [vmem:[%s2198 + $0x4] sm:$0xf]
          %v2201 = vld [vmem:[%s2198 + $0x8] sm:$0xf]
          %v2202 = vld [vmem:[%s2198 + $0xc] sm:$0xf]
          %v2207 = vunpack.c.l.b16 %v2199
          %v2208 = vunpack.c.l.b16 %v2200
          %v2209 = vunpack.c.l.b16 %v2201
          %v2210 = vunpack.c.l.b16 %v2202
          %v2211 = vpack.c.b16 %v2208, %v2207
          %v2212 = vpack.c.b16 %v2210, %v2209
          %2215 = vmatpush.bf16.msra.mxu0 0
          %2216 = vmatpush.bf16.msra.mxu0 0
          %2217 = vmatpush.bf16.msra.mxu0 0
          %2218 = vmatpush.bf16.msra.mxu0 0
          %2219 = vmatpush.bf16.msra.mxu0 0
          %2220 = vmatpush.bf16.msra.mxu0 0
          %2221 = vmatpush.bf16.msra.mxu0 %v2212
          %2222 = vmatpush.bf16.msra.mxu0 %v2211
          %2223 = vmatmul.bf16.gmra.mxu0 %v2101
          %v2224 = vpop.f32.mrf.mxu0
          %v2225 = vadd.f32 0.0, %v2224
          %v2226 = vpop.f32.mrf.mxu0
          %2227 = vdwg.mxu0
          %v2229 = vsel %vm2120, %v2197, 0
          %2231 = vmatpush.bf16.msra.mxu0 0
          %2232 = vmatpush.bf16.msra.mxu0 0
          %2233 = vmatpush.bf16.msra.mxu0 0
          %2234 = vmatpush.bf16.msra.mxu0 0
          %2235 = vmatpush.bf16.msra.mxu0 0
          %2236 = vmatpush.bf16.msra.mxu0 0
          %2237 = vmatpush.bf16.msra.mxu0 0
          %2238 = vmatpush.bf16.msra.mxu0 %v2229
          %2239 = vmatmul.bf16.gmra.mxu0 %v2118
          %v2240 = vpop.f32.mrf.mxu0
          %v2241 = vadd.f32 %v2225, %v2240
          %v2242 = vpop.f32.mrf.mxu0
          %2243 = vdwg.mxu0
          %s2244 = scalar_lea.vmem %s23, 2
          %v2245 = vld [vmem:[%s2244] sm:$0x1]
          %v2247 = vperm.slane %v2245, 0
          %v2249 = vadd.f32 %v2241, %v2247
          %v2250 = vxor.u32 %v2249, 2147483648
          %v2251 = vmul.f32 %v2250, 1.442695
          %v2252 = vpow.pop %v2251
          %v2253 = vadd.f32 %v2252, 1.0
          %v2254 = vrcp.pop %v2253
          %v2255 = vmul.f32 %v2253, %v2254
          %v2256 = vsub.f32 1.0, %v2255
          %v2257 = vmul.f32 %v2254, %v2256
          %v2258 = vadd.f32 %v2254, %v2257
          %vm2259 = vweird.f32 %v2253
          %vm2260 = vweird.f32 %v2254
          %vm2261 = vmor %vm2259, %vm2260
          %v2262 = vsel %vm2261, %v2254, %v2258
          %v2263 = vand.u32 2147483647, %v2253
          %vm2264 = vcmp.eq.f32.partialorder %v2263, 8.507059e+37
          %v2265 = vand.u32 %v2253, 2147483648
          %v2266 = vor.u32 1.1754944e-38, %v2265
          %v2267 = vsel %vm2264, %v2266, %v2262
          %v2268 = vmul.f32 1.0, %v2267
          %v2269 = vpack.c.bf16 %v2141, %v2141
          %v2270 = vpack.c.bf16 %v2195, %v2195
          %v2271 = vld [vmem:[%s33] sm:$0xf]
          %v2272 = vld [vmem:[%s33 + $0x4] sm:$0xf]
          %v2273 = vld [vmem:[%s33 + $0x8] sm:$0xf]
          %v2274 = vld [vmem:[%s33 + $0xc] sm:$0xf]
          %v2275 = vld [vmem:[#allocation15] sm:$0x1]
          %v2277 = vperm.slane %v2275, 0
          %v2283 = vunpack.c.l.b16 %v2271
          %v2284 = vunpack.c.l.b16 %v2272
          %v2285 = vunpack.c.l.b16 %v2273
          %v2286 = vunpack.c.l.b16 %v2274
          %v2287 = vpack.c.b16 %v2284, %v2283
          %v2288 = vpack.c.b16 %v2286, %v2285
          %v2292 = vsel %vm2099, %v2269, 0
          %2294 = vmatpush.bf16.msra.mxu0 0
          %2295 = vmatpush.bf16.msra.mxu0 0
          %2296 = vmatpush.bf16.msra.mxu0 0
          %2297 = vmatpush.bf16.msra.mxu0 0
          %2298 = vmatpush.bf16.msra.mxu0 0
          %2299 = vmatpush.bf16.msra.mxu0 0
          %2300 = vmatpush.bf16.msra.mxu0 %v2288
          %2301 = vmatpush.bf16.msra.mxu0 %v2287
          %2302 = vmatmul.bf16.gmra.mxu0 %v2292
          %v2303 = vpop.f32.mrf.mxu0
          %v2304 = vadd.f32 %v2277, %v2303
          %v2305 = vpop.f32.mrf.mxu0
          %2306 = vdwg.mxu0
          %v2307 = vtanh.pop %v2304
          %v2308 = vld [vmem:[%s29] sm:$0xf]
          %v2309 = vld [vmem:[%s29 + $0x4] sm:$0xf]
          %v2310 = vld [vmem:[%s29 + $0x8] sm:$0xf]
          %v2311 = vld [vmem:[%s29 + $0xc] sm:$0xf]
          %v2312 = vld [vmem:[#allocation14] sm:$0x1]
          %v2314 = vperm.slane %v2312, 0
          %v2320 = vunpack.c.l.b16 %v2308
          %v2321 = vunpack.c.l.b16 %v2309
          %v2322 = vunpack.c.l.b16 %v2310
          %v2323 = vunpack.c.l.b16 %v2311
          %v2324 = vpack.c.b16 %v2321, %v2320
          %v2325 = vpack.c.b16 %v2323, %v2322
          %v2329 = vsel %vm2099, %v2270, 0
          %2331 = vmatpush.bf16.msra.mxu0 0
          %2332 = vmatpush.bf16.msra.mxu0 0
          %2333 = vmatpush.bf16.msra.mxu0 0
          %2334 = vmatpush.bf16.msra.mxu0 0
          %2335 = vmatpush.bf16.msra.mxu0 0
          %2336 = vmatpush.bf16.msra.mxu0 0
          %2337 = vmatpush.bf16.msra.mxu0 %v2325
          %2338 = vmatpush.bf16.msra.mxu0 %v2324
          %2339 = vmatmul.bf16.gmra.mxu0 %v2329
          %v2340 = vpop.f32.mrf.mxu0
          %v2341 = vadd.f32 %v2314, %v2340
          %v2342 = vpop.f32.mrf.mxu0
          %2343 = vdwg.mxu0
          %v2344 = vxor.u32 %v2341, 2147483648
          %v2345 = vmul.f32 %v2344, 1.442695
          %v2346 = vpow.pop %v2345
          %v2347 = vadd.f32 %v2346, 1.0
          %v2348 = vrcp.pop %v2347
          %v2349 = vmul.f32 %v2347, %v2348
          %v2350 = vsub.f32 1.0, %v2349
          %v2351 = vmul.f32 %v2348, %v2350
          %v2352 = vadd.f32 %v2348, %v2351
          %vm2353 = vweird.f32 %v2347
          %vm2354 = vweird.f32 %v2348
          %vm2355 = vmor %vm2353, %vm2354
          %v2356 = vsel %vm2355, %v2348, %v2352
          %v2357 = vand.u32 2147483647, %v2347
          %vm2358 = vcmp.eq.f32.partialorder %v2357, 8.507059e+37
          %v2359 = vand.u32 %v2347, 2147483648
          %v2360 = vor.u32 1.1754944e-38, %v2359
          %v2361 = vsel %vm2358, %v2360, %v2356
          %v2362 = vmul.f32 1.0, %v2361
          %v2363 = vld [vmem:[%s41] sm:$0xf]
          %v2365 = vsel %vm2120, %v2363, 0
          %2367 = vmatpush.bf16.msra.mxu0 0
          %2368 = vmatpush.bf16.msra.mxu0 0
          %2369 = vmatpush.bf16.msra.mxu0 0
          %2370 = vmatpush.bf16.msra.mxu0 0
          %2371 = vmatpush.bf16.msra.mxu0 0
          %2372 = vmatpush.bf16.msra.mxu0 0
          %2373 = vmatpush.bf16.msra.mxu0 0
          %2374 = vmatpush.bf16.msra.mxu0 %v2365
          %2375 = vmatmul.bf16.gmra.mxu0 %v2118
          %v2376 = vpop.f32.mrf.mxu0
          %v2377 = vadd.f32 0.0, %v2376
          %v2378 = vpop.f32.mrf.mxu0
          %2379 = vdwg.mxu0
          %v2380 = vpack.c.bf16 %v2377, %v2377
          %v2381 = vld [vmem:[%s37] sm:$0xf]
          %v2383 = vsel %vm2116, %v2080, 0
          %v2386 = vsel %vm2120, %v2381, 0
          %2388 = vmatpush.bf16.msra.mxu0 0
          %2389 = vmatpush.bf16.msra.mxu0 0
          %2390 = vmatpush.bf16.msra.mxu0 0
          %2391 = vmatpush.bf16.msra.mxu0 0
          %2392 = vmatpush.bf16.msra.mxu0 0
          %2393 = vmatpush.bf16.msra.mxu0 0
          %2394 = vmatpush.bf16.msra.mxu0 0
          %2395 = vmatpush.bf16.msra.mxu0 %v2386
          %2396 = vmatmul.bf16.gmra.mxu0 %v2383
          %v2397 = vpop.f32.mrf.mxu0
          %v2398 = vadd.f32 0.0, %v2397
          %v2399 = vpop.f32.mrf.mxu0
          %2400 = vdwg.mxu0
          %v2401 = vpack.c.bf16 %v2398, %v2398
          %v2402 = vld [vmem:[%s43] sm:$0xf]
          %v2404 = vsel %vm2120, %v2402, 0
          %2406 = vmatpush.bf16.msra.mxu0 0
          %2407 = vmatpush.bf16.msra.mxu0 0
          %2408 = vmatpush.bf16.msra.mxu0 0
          %2409 = vmatpush.bf16.msra.mxu0 0
          %2410 = vmatpush.bf16.msra.mxu0 0
          %2411 = vmatpush.bf16.msra.mxu0 0
          %2412 = vmatpush.bf16.msra.mxu0 0
          %2413 = vmatpush.bf16.msra.mxu0 %v2404
          %2414 = vmatmul.bf16.gmra.mxu0 %v2383
          %v2415 = vpop.f32.mrf.mxu0
          %v2416 = vadd.f32 0.0, %v2415
          %v2417 = vpop.f32.mrf.mxu0
          %2418 = vdwg.mxu0
          %v2419 = vpack.c.bf16 %v2416, %v2416
          %vm2420 = vcmask 130048
          %v2422 = vsel %vm2420, %v2380, 0
          %v2425 = vsel %vm2420, %v2401, 0
          %2427 = vmatpush.bf16.xpose.msra.mxu0 0
          %2428 = vmatpush.bf16.xpose.msra.mxu0 0
          %2429 = vmatpush.bf16.xpose.msra.mxu0 0
          %2430 = vmatpush.bf16.xpose.msra.mxu0 0
          %2431 = vmatpush.bf16.xpose.msra.mxu0 0
          %2432 = vmatpush.bf16.xpose.msra.mxu0 0
          %2433 = vmatpush.bf16.xpose.msra.mxu0 0
          %2434 = vmatpush.bf16.xpose.msra.mxu0 %v2425
          %2435 = vmatmul.bf16.gmra.mxu0 %v2422
          %v2436 = vpop.f32.mrf.mxu0
          %v2437 = vadd.f32 0.0, %v2436
          %v2438 = vpop.f32.mrf.mxu0
          %2439 = vdwg.mxu0
          %v2440 = vld [vmem:[#allocation3] sm:$0x3f]
          %v2441 = vmul.f32 %v2440, %v2362
          %v2442 = vmul.f32 %v2437, %v2307
          %v2443 = vadd.f32 %v2441, %v2442
          %2444 = vst.msk [vmem:[#allocation3] sm:$0x3f] %vm2053, %v2443
          %v2445 = vpack.c.bf16 %v2443, %v2443
          %vm2446 = vcmask 31744
          %v2448 = vsel %vm2446, %v2445, 0
          %vm2450 = vcmask 1041408
          %v2452 = vsel %vm2450, %v2419, 0
          %2454 = vmatpush.bf16.msra.mxu0 0
          %2455 = vmatpush.bf16.msra.mxu0 0
          %2456 = vmatpush.bf16.msra.mxu0 0
          %2457 = vmatpush.bf16.msra.mxu0 0
          %2458 = vmatpush.bf16.msra.mxu0 0
          %2459 = vmatpush.bf16.msra.mxu0 0
          %2460 = vmatpush.bf16.msra.mxu0 0
          %2461 = vmatpush.bf16.msra.mxu0 %v2452
          %2462 = vmatmul.bf16.gmra.mxu0 %v2448
          %v2463 = vpop.f32.mrf.mxu0
          %v2464 = vadd.f32 0.0, %v2463
          %v2465 = vpop.f32.mrf.mxu0
          %2466 = vdwg.mxu0
          %v2467 = vpack.c.bf16 %v2464, %v2464
          %v2468 = vld [vmem:[%s39] sm:$0xf]
          %v2469 = vld [vmem:[%s39 + $0x4] sm:$0xf]
          %s2470 = scalar_lea.vmem %s33, 16
          %v2471 = vld [vmem:[%s2470] sm:$0xf]
          %v2472 = vld [vmem:[%s2470 + $0x4] sm:$0xf]
          %v2473 = vld [vmem:[%s2470 + $0x8] sm:$0xf]
          %v2474 = vld [vmem:[%s2470 + $0xc] sm:$0xf]
          %s2475 = scalar_lea.vmem [#allocation15], 1
          %v2476 = vld [vmem:[%s2475] sm:$0x1]
          %v2478 = vperm.slane %v2476, 0
          %v2484 = vunpack.c.l.b16 %v2471
          %v2485 = vunpack.c.l.b16 %v2472
          %v2486 = vunpack.c.l.b16 %v2473
          %v2487 = vunpack.c.l.b16 %v2474
          %v2488 = vpack.c.b16 %v2485, %v2484
          %v2489 = vpack.c.b16 %v2487, %v2486
          %2492 = vmatpush.bf16.msra.mxu0 0
          %2493 = vmatpush.bf16.msra.mxu0 0
          %2494 = vmatpush.bf16.msra.mxu0 0
          %2495 = vmatpush.bf16.msra.mxu0 0
          %2496 = vmatpush.bf16.msra.mxu0 0
          %2497 = vmatpush.bf16.msra.mxu0 0
          %2498 = vmatpush.bf16.msra.mxu0 %v2489
          %2499 = vmatpush.bf16.msra.mxu0 %v2488
          %2500 = vmatmul.bf16.gmra.mxu0 %v2292
          %v2501 = vpop.f32.mrf.mxu0
          %v2502 = vadd.f32 %v2478, %v2501
          %v2503 = vpop.f32.mrf.mxu0
          %2504 = vdwg.mxu0
          %v2505 = vtanh.pop %v2502
          %s2506 = scalar_lea.vmem %s29, 16
          %v2507 = vld [vmem:[%s2506] sm:$0xf]
          %v2508 = vld [vmem:[%s2506 + $0x4] sm:$0xf]
          %v2509 = vld [vmem:[%s2506 + $0x8] sm:$0xf]
          %v2510 = vld [vmem:[%s2506 + $0xc] sm:$0xf]
          %s2511 = scalar_lea.vmem [#allocation14], 1
          %v2512 = vld [vmem:[%s2511] sm:$0x1]
          %v2514 = vperm.slane %v2512, 0
          %v2520 = vunpack.c.l.b16 %v2507
          %v2521 = vunpack.c.l.b16 %v2508
          %v2522 = vunpack.c.l.b16 %v2509
          %v2523 = vunpack.c.l.b16 %v2510
          %v2524 = vpack.c.b16 %v2521, %v2520
          %v2525 = vpack.c.b16 %v2523, %v2522
          %2528 = vmatpush.bf16.msra.mxu0 0
          %2529 = vmatpush.bf16.msra.mxu0 0
          %2530 = vmatpush.bf16.msra.mxu0 0
          %2531 = vmatpush.bf16.msra.mxu0 0
          %2532 = vmatpush.bf16.msra.mxu0 0
          %2533 = vmatpush.bf16.msra.mxu0 0
          %2534 = vmatpush.bf16.msra.mxu0 %v2525
          %2535 = vmatpush.bf16.msra.mxu0 %v2524
          %2536 = vmatmul.bf16.gmra.mxu0 %v2329
          %v2537 = vpop.f32.mrf.mxu0
          %v2538 = vadd.f32 %v2514, %v2537
          %v2539 = vpop.f32.mrf.mxu0
          %2540 = vdwg.mxu0
          %v2541 = vxor.u32 %v2538, 2147483648
          %v2542 = vmul.f32 %v2541, 1.442695
          %v2543 = vpow.pop %v2542
          %v2544 = vadd.f32 %v2543, 1.0
          %v2545 = vrcp.pop %v2544
          %v2546 = vmul.f32 %v2544, %v2545
          %v2547 = vsub.f32 1.0, %v2546
          %v2548 = vmul.f32 %v2545, %v2547
          %v2549 = vadd.f32 %v2545, %v2548
          %vm2550 = vweird.f32 %v2544
          %vm2551 = vweird.f32 %v2545
          %vm2552 = vmor %vm2550, %vm2551
          %v2553 = vsel %vm2552, %v2545, %v2549
          %v2554 = vand.u32 2147483647, %v2544
          %vm2555 = vcmp.eq.f32.partialorder %v2554, 8.507059e+37
          %v2556 = vand.u32 %v2544, 2147483648
          %v2557 = vor.u32 1.1754944e-38, %v2556
          %v2558 = vsel %vm2555, %v2557, %v2553
          %v2559 = vmul.f32 1.0, %v2558
          %s2560 = scalar_lea.vmem %s41, 4
          %v2561 = vld [vmem:[%s2560] sm:$0xf]
          %v2563 = vsel %vm2120, %v2561, 0
          %2565 = vmatpush.bf16.msra.mxu0 0
          %2566 = vmatpush.bf16.msra.mxu0 0
          %2567 = vmatpush.bf16.msra.mxu0 0
          %2568 = vmatpush.bf16.msra.mxu0 0
          %2569 = vmatpush.bf16.msra.mxu0 0
          %2570 = vmatpush.bf16.msra.mxu0 0
          %2571 = vmatpush.bf16.msra.mxu0 0
          %2572 = vmatpush.bf16.msra.mxu0 %v2563
          %2573 = vmatmul.bf16.gmra.mxu0 %v2118
          %v2574 = vpop.f32.mrf.mxu0
          %v2575 = vadd.f32 0.0, %v2574
          %v2576 = vpop.f32.mrf.mxu0
          %2577 = vdwg.mxu0
          %v2578 = vpack.c.bf16 %v2575, %v2575
          %s2579 = scalar_lea.vmem %s37, 4
          %v2580 = vld [vmem:[%s2579] sm:$0xf]
          %v2582 = vsel %vm2120, %v2580, 0
          %2584 = vmatpush.bf16.msra.mxu0 0
          %2585 = vmatpush.bf16.msra.mxu0 0
          %2586 = vmatpush.bf16.msra.mxu0 0
          %2587 = vmatpush.bf16.msra.mxu0 0
          %2588 = vmatpush.bf16.msra.mxu0 0
          %2589 = vmatpush.bf16.msra.mxu0 0
          %2590 = vmatpush.bf16.msra.mxu0 0
          %2591 = vmatpush.bf16.msra.mxu0 %v2582
          %2592 = vmatmul.bf16.gmra.mxu0 %v2383
          %v2593 = vpop.f32.mrf.mxu0
          %v2594 = vadd.f32 0.0, %v2593
          %v2595 = vpop.f32.mrf.mxu0
          %2596 = vdwg.mxu0
          %v2597 = vpack.c.bf16 %v2594, %v2594
          %s2598 = scalar_lea.vmem %s43, 4
          %v2599 = vld [vmem:[%s2598] sm:$0xf]
          %v2601 = vsel %vm2120, %v2599, 0
          %2603 = vmatpush.bf16.msra.mxu0 0
          %2604 = vmatpush.bf16.msra.mxu0 0
          %2605 = vmatpush.bf16.msra.mxu0 0
          %2606 = vmatpush.bf16.msra.mxu0 0
          %2607 = vmatpush.bf16.msra.mxu0 0
          %2608 = vmatpush.bf16.msra.mxu0 0
          %2609 = vmatpush.bf16.msra.mxu0 0
          %2610 = vmatpush.bf16.msra.mxu0 %v2601
          %2611 = vmatmul.bf16.gmra.mxu0 %v2383
          %v2612 = vpop.f32.mrf.mxu0
          %v2613 = vadd.f32 0.0, %v2612
          %v2614 = vpop.f32.mrf.mxu0
          %2615 = vdwg.mxu0
          %v2616 = vpack.c.bf16 %v2613, %v2613
          %v2618 = vsel %vm2420, %v2578, 0
          %v2621 = vsel %vm2420, %v2597, 0
          %2623 = vmatpush.bf16.xpose.msra.mxu0 0
          %2624 = vmatpush.bf16.xpose.msra.mxu0 0
          %2625 = vmatpush.bf16.xpose.msra.mxu0 0
          %2626 = vmatpush.bf16.xpose.msra.mxu0 0
          %2627 = vmatpush.bf16.xpose.msra.mxu0 0
          %2628 = vmatpush.bf16.xpose.msra.mxu0 0
          %2629 = vmatpush.bf16.xpose.msra.mxu0 0
          %2630 = vmatpush.bf16.xpose.msra.mxu0 %v2621
          %2631 = vmatmul.bf16.gmra.mxu0 %v2618
          %v2632 = vpop.f32.mrf.mxu0
          %v2633 = vadd.f32 0.0, %v2632
          %v2634 = vpop.f32.mrf.mxu0
          %2635 = vdwg.mxu0
          %s2636 = scalar_lea.vmem [#allocation3], 8
          %v2637 = vld [vmem:[%s2636] sm:$0x3f]
          %v2638 = vmul.f32 %v2637, %v2559
          %v2639 = vmul.f32 %v2633, %v2505
          %v2640 = vadd.f32 %v2638, %v2639
          %2641 = vst.msk [vmem:[%s2636] sm:$0x3f] %vm2053, %v2640
          %v2642 = vpack.c.bf16 %v2640, %v2640
          %v2644 = vsel %vm2446, %v2642, 0
          %v2647 = vsel %vm2450, %v2616, 0
          %2649 = vmatpush.bf16.msra.mxu0 0
          %2650 = vmatpush.bf16.msra.mxu0 0
          %2651 = vmatpush.bf16.msra.mxu0 0
          %2652 = vmatpush.bf16.msra.mxu0 0
          %2653 = vmatpush.bf16.msra.mxu0 0
          %2654 = vmatpush.bf16.msra.mxu0 0
          %2655 = vmatpush.bf16.msra.mxu0 0
          %2656 = vmatpush.bf16.msra.mxu0 %v2647
          %2657 = vmatmul.bf16.gmra.mxu0 %v2644
          %v2658 = vpop.f32.mrf.mxu0
          %v2659 = vadd.f32 0.0, %v2658
          %v2660 = vpop.f32.mrf.mxu0
          %2661 = vdwg.mxu0
          %v2662 = vpack.c.bf16 %v2659, %v2659
          %s2663 = scalar_lea.vmem %s39, 8
          %v2664 = vld [vmem:[%s2663] sm:$0xf]
          %v2665 = vld [vmem:[%s2663 + $0x4] sm:$0xf]
          %v2668 = vunpack.c.l.b16 %v2664
          %v2669 = vunpack.c.l.b16 %v2665
          %v2670 = vpack.c.b16 %v2669, %v2668
          %v2673 = vsel %vm2420, %v2662, 0
          %2675 = vmatpush.bf16.msra.mxu0 0
          %2676 = vmatpush.bf16.msra.mxu0 0
          %2677 = vmatpush.bf16.msra.mxu0 0
          %2678 = vmatpush.bf16.msra.mxu0 0
          %2679 = vmatpush.bf16.msra.mxu0 0
          %2680 = vmatpush.bf16.msra.mxu0 0
          %2681 = vmatpush.bf16.msra.mxu0 0
          %2682 = vmatpush.bf16.msra.mxu0 %v2670
          %2683 = vmatmul.bf16.gmra.mxu0 %v2673
          %v2684 = vpop.f32.mrf.mxu0
          %v2685 = vadd.f32 0.0, %v2684
          %v2686 = vpop.f32.mrf.mxu0
          %2687 = vdwg.mxu0
          %v2690 = vunpack.c.l.b16 %v2468
          %v2691 = vunpack.c.l.b16 %v2469
          %v2692 = vpack.c.b16 %v2691, %v2690
          %v2695 = vsel %vm2420, %v2467, 0
          %2697 = vmatpush.bf16.msra.mxu0 0
          %2698 = vmatpush.bf16.msra.mxu0 0
          %2699 = vmatpush.bf16.msra.mxu0 0
          %2700 = vmatpush.bf16.msra.mxu0 0
          %2701 = vmatpush.bf16.msra.mxu0 0
          %2702 = vmatpush.bf16.msra.mxu0 0
          %2703 = vmatpush.bf16.msra.mxu0 0
          %2704 = vmatpush.bf16.msra.mxu0 %v2692
          %2705 = vmatmul.bf16.gmra.mxu0 %v2695
          %v2706 = vpop.f32.mrf.mxu0
          %v2707 = vadd.f32 %v2685, %v2706
          %v2708 = vpop.f32.mrf.mxu0
          %2709 = vdwg.mxu0
          %v2710 = vld [vmem:[#allocation17] sm:$0x1]
          %v2712 = vperm.slane %v2710, 0
          %v2714 = vadd.f32 %v2707, %v2712
          %v2715 = vmul.f32 %v2268, %v2714
          %v2716 = vld [vmem:[#allocation4] sm:$0xf]
          %v2717 = vpack.c.bf16 %v2716, %v2716
          %v2718 = vld [vmem:[%s59] sm:$0xf]
          %v2719 = vld [vmem:[%s55] sm:$0xf]
          %v2720 = vld [vmem:[%s55 + $0x4] sm:$0xf]
          %v2721 = vld [vmem:[%s55 + $0x8] sm:$0xf]
          %v2722 = vld [vmem:[%s55 + $0xc] sm:$0xf]
          %v2727 = vunpack.c.l.b16 %v2719
          %v2728 = vunpack.c.l.b16 %v2720
          %v2729 = vunpack.c.l.b16 %v2721
          %v2730 = vunpack.c.l.b16 %v2722
          %v2731 = vpack.c.b16 %v2728, %v2727
          %v2732 = vpack.c.b16 %v2730, %v2729
          %v2736 = vsel %vm2099, %v2717, 0
          %2738 = vmatpush.bf16.msra.mxu0 0
          %2739 = vmatpush.bf16.msra.mxu0 0
          %2740 = vmatpush.bf16.msra.mxu0 0
          %2741 = vmatpush.bf16.msra.mxu0 0
          %2742 = vmatpush.bf16.msra.mxu0 0
          %2743 = vmatpush.bf16.msra.mxu0 0
          %2744 = vmatpush.bf16.msra.mxu0 %v2732
          %2745 = vmatpush.bf16.msra.mxu0 %v2731
          %2746 = vmatmul.bf16.gmra.mxu0 %v2736
          %v2747 = vpop.f32.mrf.mxu0
          %v2748 = vadd.f32 0.0, %v2747
          %v2749 = vpop.f32.mrf.mxu0
          %2750 = vdwg.mxu0
          %v2752 = vsel %vm2120, %v2718, 0
          %2754 = vmatpush.bf16.msra.mxu0 0
          %2755 = vmatpush.bf16.msra.mxu0 0
          %2756 = vmatpush.bf16.msra.mxu0 0
          %2757 = vmatpush.bf16.msra.mxu0 0
          %2758 = vmatpush.bf16.msra.mxu0 0
          %2759 = vmatpush.bf16.msra.mxu0 0
          %2760 = vmatpush.bf16.msra.mxu0 0
          %2761 = vmatpush.bf16.msra.mxu0 %v2752
          %2762 = vmatmul.bf16.gmra.mxu0 %v2383
          %v2763 = vpop.f32.mrf.mxu0
          %v2764 = vadd.f32 %v2748, %v2763
          %v2765 = vpop.f32.mrf.mxu0
          %2766 = vdwg.mxu0
          %v2767 = vld [vmem:[%s47] sm:$0x1]
          %v2769 = vperm.slane %v2767, 0
          %v2771 = vadd.f32 %v2764, %v2769
          %s2772 = scalar_lea.vmem %s59, 4
          %v2773 = vld [vmem:[%s2772] sm:$0xf]
          %s2774 = scalar_lea.vmem %s55, 16
          %v2775 = vld [vmem:[%s2774] sm:$0xf]
          %v2776 = vld [vmem:[%s2774 + $0x4] sm:$0xf]
          %v2777 = vld [vmem:[%s2774 + $0x8] sm:$0xf]
          %v2778 = vld [vmem:[%s2774 + $0xc] sm:$0xf]
          %v2783 = vunpack.c.l.b16 %v2775
          %v2784 = vunpack.c.l.b16 %v2776
          %v2785 = vunpack.c.l.b16 %v2777
          %v2786 = vunpack.c.l.b16 %v2778
          %v2787 = vpack.c.b16 %v2784, %v2783
          %v2788 = vpack.c.b16 %v2786, %v2785
          %2791 = vmatpush.bf16.msra.mxu0 0
          %2792 = vmatpush.bf16.msra.mxu0 0
          %2793 = vmatpush.bf16.msra.mxu0 0
          %2794 = vmatpush.bf16.msra.mxu0 0
          %2795 = vmatpush.bf16.msra.mxu0 0
          %2796 = vmatpush.bf16.msra.mxu0 0
          %2797 = vmatpush.bf16.msra.mxu0 %v2788
          %2798 = vmatpush.bf16.msra.mxu0 %v2787
          %2799 = vmatmul.bf16.gmra.mxu0 %v2736
          %v2800 = vpop.f32.mrf.mxu0
          %v2801 = vadd.f32 0.0, %v2800
          %v2802 = vpop.f32.mrf.mxu0
          %2803 = vdwg.mxu0
          %v2805 = vsel %vm2120, %v2773, 0
          %2807 = vmatpush.bf16.msra.mxu0 0
          %2808 = vmatpush.bf16.msra.mxu0 0
          %2809 = vmatpush.bf16.msra.mxu0 0
          %2810 = vmatpush.bf16.msra.mxu0 0
          %2811 = vmatpush.bf16.msra.mxu0 0
          %2812 = vmatpush.bf16.msra.mxu0 0
          %2813 = vmatpush.bf16.msra.mxu0 0
          %2814 = vmatpush.bf16.msra.mxu0 %v2805
          %2815 = vmatmul.bf16.gmra.mxu0 %v2383
          %v2816 = vpop.f32.mrf.mxu0
          %v2817 = vadd.f32 %v2801, %v2816
          %v2818 = vpop.f32.mrf.mxu0
          %2819 = vdwg.mxu0
          %s2820 = scalar_lea.vmem %s47, 1
          %v2821 = vld [vmem:[%s2820] sm:$0x1]
          %v2823 = vperm.slane %v2821, 0
          %v2825 = vadd.f32 %v2817, %v2823
          %s2826 = scalar_lea.vmem %s59, 8
          %v2827 = vld [vmem:[%s2826] sm:$0xf]
          %s2828 = scalar_lea.vmem %s55, 32
          %v2829 = vld [vmem:[%s2828] sm:$0xf]
          %v2830 = vld [vmem:[%s2828 + $0x4] sm:$0xf]
          %v2831 = vld [vmem:[%s2828 + $0x8] sm:$0xf]
          %v2832 = vld [vmem:[%s2828 + $0xc] sm:$0xf]
          %v2837 = vunpack.c.l.b16 %v2829
          %v2838 = vunpack.c.l.b16 %v2830
          %v2839 = vunpack.c.l.b16 %v2831
          %v2840 = vunpack.c.l.b16 %v2832
          %v2841 = vpack.c.b16 %v2838, %v2837
          %v2842 = vpack.c.b16 %v2840, %v2839
          %2845 = vmatpush.bf16.msra.mxu0 0
          %2846 = vmatpush.bf16.msra.mxu0 0
          %2847 = vmatpush.bf16.msra.mxu0 0
          %2848 = vmatpush.bf16.msra.mxu0 0
          %2849 = vmatpush.bf16.msra.mxu0 0
          %2850 = vmatpush.bf16.msra.mxu0 0
          %2851 = vmatpush.bf16.msra.mxu0 %v2842
          %2852 = vmatpush.bf16.msra.mxu0 %v2841
          %2853 = vmatmul.bf16.gmra.mxu0 %v2736
          %v2854 = vpop.f32.mrf.mxu0
          %v2855 = vadd.f32 0.0, %v2854
          %v2856 = vpop.f32.mrf.mxu0
          %2857 = vdwg.mxu0
          %v2859 = vsel %vm2120, %v2827, 0
          %2861 = vmatpush.bf16.msra.mxu0 0
          %2862 = vmatpush.bf16.msra.mxu0 0
          %2863 = vmatpush.bf16.msra.mxu0 0
          %2864 = vmatpush.bf16.msra.mxu0 0
          %2865 = vmatpush.bf16.msra.mxu0 0
          %2866 = vmatpush.bf16.msra.mxu0 0
          %2867 = vmatpush.bf16.msra.mxu0 0
          %2868 = vmatpush.bf16.msra.mxu0 %v2859
          %2869 = vmatmul.bf16.gmra.mxu0 %v2383
          %v2870 = vpop.f32.mrf.mxu0
          %v2871 = vadd.f32 %v2855, %v2870
          %v2872 = vpop.f32.mrf.mxu0
          %2873 = vdwg.mxu0
          %s2874 = scalar_lea.vmem %s47, 2
          %v2875 = vld [vmem:[%s2874] sm:$0x1]
          %v2877 = vperm.slane %v2875, 0
          %v2879 = vadd.f32 %v2871, %v2877
          %v2880 = vxor.u32 %v2879, 2147483648
          %v2881 = vmul.f32 %v2880, 1.442695
          %v2882 = vpow.pop %v2881
          %v2883 = vadd.f32 %v2882, 1.0
          %v2884 = vrcp.pop %v2883
          %v2885 = vmul.f32 %v2883, %v2884
          %v2886 = vsub.f32 1.0, %v2885
          %v2887 = vmul.f32 %v2884, %v2886
          %v2888 = vadd.f32 %v2884, %v2887
          %vm2889 = vweird.f32 %v2883
          %vm2890 = vweird.f32 %v2884
          %vm2891 = vmor %vm2889, %vm2890
          %v2892 = vsel %vm2891, %v2884, %v2888
          %v2893 = vand.u32 2147483647, %v2883
          %vm2894 = vcmp.eq.f32.partialorder %v2893, 8.507059e+37
          %v2895 = vand.u32 %v2883, 2147483648
          %v2896 = vor.u32 1.1754944e-38, %v2895
          %v2897 = vsel %vm2894, %v2896, %v2892
          %v2898 = vmul.f32 1.0, %v2897
          %v2899 = vpack.c.bf16 %v2771, %v2771
          %v2900 = vpack.c.bf16 %v2825, %v2825
          %v2901 = vld [vmem:[%s57] sm:$0xf]
          %v2902 = vld [vmem:[%s57 + $0x4] sm:$0xf]
          %v2903 = vld [vmem:[%s57 + $0x8] sm:$0xf]
          %v2904 = vld [vmem:[%s57 + $0xc] sm:$0xf]
          %v2905 = vld [vmem:[#allocation20] sm:$0x1]
          %v2907 = vperm.slane %v2905, 0
          %v2913 = vunpack.c.l.b16 %v2901
          %v2914 = vunpack.c.l.b16 %v2902
          %v2915 = vunpack.c.l.b16 %v2903
          %v2916 = vunpack.c.l.b16 %v2904
          %v2917 = vpack.c.b16 %v2914, %v2913
          %v2918 = vpack.c.b16 %v2916, %v2915
          %v2922 = vsel %vm2099, %v2899, 0
          %2924 = vmatpush.bf16.msra.mxu0 0
          %2925 = vmatpush.bf16.msra.mxu0 0
          %2926 = vmatpush.bf16.msra.mxu0 0
          %2927 = vmatpush.bf16.msra.mxu0 0
          %2928 = vmatpush.bf16.msra.mxu0 0
          %2929 = vmatpush.bf16.msra.mxu0 0
          %2930 = vmatpush.bf16.msra.mxu0 %v2918
          %2931 = vmatpush.bf16.msra.mxu0 %v2917
          %2932 = vmatmul.bf16.gmra.mxu0 %v2922
          %v2933 = vpop.f32.mrf.mxu0
          %v2934 = vadd.f32 %v2907, %v2933
          %v2935 = vpop.f32.mrf.mxu0
          %2936 = vdwg.mxu0
          %v2937 = vtanh.pop %v2934
          %v2938 = vld [vmem:[%s53] sm:$0xf]
          %v2939 = vld [vmem:[%s53 + $0x4] sm:$0xf]
          %v2940 = vld [vmem:[%s53 + $0x8] sm:$0xf]
          %v2941 = vld [vmem:[%s53 + $0xc] sm:$0xf]
          %v2942 = vld [vmem:[#allocation18] sm:$0x1]
          %v2944 = vperm.slane %v2942, 0
          %v2950 = vunpack.c.l.b16 %v2938
          %v2951 = vunpack.c.l.b16 %v2939
          %v2952 = vunpack.c.l.b16 %v2940
          %v2953 = vunpack.c.l.b16 %v2941
          %v2954 = vpack.c.b16 %v2951, %v2950
          %v2955 = vpack.c.b16 %v2953, %v2952
          %v2959 = vsel %vm2099, %v2900, 0
          %2961 = vmatpush.bf16.msra.mxu0 0
          %2962 = vmatpush.bf16.msra.mxu0 0
          %2963 = vmatpush.bf16.msra.mxu0 0
          %2964 = vmatpush.bf16.msra.mxu0 0
          %2965 = vmatpush.bf16.msra.mxu0 0
          %2966 = vmatpush.bf16.msra.mxu0 0
          %2967 = vmatpush.bf16.msra.mxu0 %v2955
          %2968 = vmatpush.bf16.msra.mxu0 %v2954
          %2969 = vmatmul.bf16.gmra.mxu0 %v2959
          %v2970 = vpop.f32.mrf.mxu0
          %v2971 = vadd.f32 %v2944, %v2970
          %v2972 = vpop.f32.mrf.mxu0
          %2973 = vdwg.mxu0
          %v2974 = vxor.u32 %v2971, 2147483648
          %v2975 = vmul.f32 %v2974, 1.442695
          %v2976 = vpow.pop %v2975
          %v2977 = vadd.f32 %v2976, 1.0
          %v2978 = vrcp.pop %v2977
          %v2979 = vmul.f32 %v2977, %v2978
          %v2980 = vsub.f32 1.0, %v2979
          %v2981 = vmul.f32 %v2978, %v2980
          %v2982 = vadd.f32 %v2978, %v2981
          %vm2983 = vweird.f32 %v2977
          %vm2984 = vweird.f32 %v2978
          %vm2985 = vmor %vm2983, %vm2984
          %v2986 = vsel %vm2985, %v2978, %v2982
          %v2987 = vand.u32 2147483647, %v2977
          %vm2988 = vcmp.eq.f32.partialorder %v2987, 8.507059e+37
          %v2989 = vand.u32 %v2977, 2147483648
          %v2990 = vor.u32 1.1754944e-38, %v2989
          %v2991 = vsel %vm2988, %v2990, %v2986
          %v2992 = vmul.f32 1.0, %v2991
          %v2993 = vld [vmem:[%s65] sm:$0xf]
          %v2995 = vsel %vm2120, %v2993, 0
          %2997 = vmatpush.bf16.msra.mxu0 0
          %2998 = vmatpush.bf16.msra.mxu0 0
          %2999 = vmatpush.bf16.msra.mxu0 0
          %3000 = vmatpush.bf16.msra.mxu0 0
          %3001 = vmatpush.bf16.msra.mxu0 0
          %3002 = vmatpush.bf16.msra.mxu0 0
          %3003 = vmatpush.bf16.msra.mxu0 0
          %3004 = vmatpush.bf16.msra.mxu0 %v2995
          %3005 = vmatmul.bf16.gmra.mxu0 %v2383
          %v3006 = vpop.f32.mrf.mxu0
          %v3007 = vadd.f32 0.0, %v3006
          %v3008 = vpop.f32.mrf.mxu0
          %3009 = vdwg.mxu0
          %v3010 = vpack.c.bf16 %v3007, %v3007
          %v3011 = vld [vmem:[%s61] sm:$0xf]
          %v3013 = vsel %vm2120, %v3011, 0
          %3015 = vmatpush.bf16.msra.mxu0 0
          %3016 = vmatpush.bf16.msra.mxu0 0
          %3017 = vmatpush.bf16.msra.mxu0 0
          %3018 = vmatpush.bf16.msra.mxu0 0
          %3019 = vmatpush.bf16.msra.mxu0 0
          %3020 = vmatpush.bf16.msra.mxu0 0
          %3021 = vmatpush.bf16.msra.mxu0 0
          %3022 = vmatpush.bf16.msra.mxu0 %v3013
          %3023 = vmatmul.bf16.gmra.mxu0 %v2118
          %v3024 = vpop.f32.mrf.mxu0
          %v3025 = vadd.f32 0.0, %v3024
          %v3026 = vpop.f32.mrf.mxu0
          %3027 = vdwg.mxu0
          %v3028 = vpack.c.bf16 %v3025, %v3025
          %v3029 = vld [vmem:[%s67] sm:$0xf]
          %v3031 = vsel %vm2120, %v3029, 0
          %3033 = vmatpush.bf16.msra.mxu0 0
          %3034 = vmatpush.bf16.msra.mxu0 0
          %3035 = vmatpush.bf16.msra.mxu0 0
          %3036 = vmatpush.bf16.msra.mxu0 0
          %3037 = vmatpush.bf16.msra.mxu0 0
          %3038 = vmatpush.bf16.msra.mxu0 0
          %3039 = vmatpush.bf16.msra.mxu0 0
          %3040 = vmatpush.bf16.msra.mxu0 %v3031
          %3041 = vmatmul.bf16.gmra.mxu0 %v2118
          %v3042 = vpop.f32.mrf.mxu0
          %v3043 = vadd.f32 0.0, %v3042
          %v3044 = vpop.f32.mrf.mxu0
          %3045 = vdwg.mxu0
          %v3046 = vpack.c.bf16 %v3043, %v3043
          %v3048 = vsel %vm2420, %v3010, 0
          %v3051 = vsel %vm2420, %v3028, 0
          %3053 = vmatpush.bf16.xpose.msra.mxu0 0
          %3054 = vmatpush.bf16.xpose.msra.mxu0 0
          %3055 = vmatpush.bf16.xpose.msra.mxu0 0
          %3056 = vmatpush.bf16.xpose.msra.mxu0 0
          %3057 = vmatpush.bf16.xpose.msra.mxu0 0
          %3058 = vmatpush.bf16.xpose.msra.mxu0 0
          %3059 = vmatpush.bf16.xpose.msra.mxu0 0
          %3060 = vmatpush.bf16.xpose.msra.mxu0 %v3051
          %3061 = vmatmul.bf16.gmra.mxu0 %v3048
          %v3062 = vpop.f32.mrf.mxu0
          %v3063 = vadd.f32 0.0, %v3062
          %v3064 = vpop.f32.mrf.mxu0
          %3065 = vdwg.mxu0
          %v3066 = vld [vmem:[#allocation5] sm:$0xf]
          %v3067 = vmul.f32 %v3066, %v2992
          %v3068 = vmul.f32 %v3063, %v2937
          %v3069 = vadd.f32 %v3067, %v3068
          %3070 = vst.msk [vmem:[#allocation5] sm:$0xf] %vm2061, %v3069
          %v3071 = vpack.c.bf16 %v3069, %v3069
          %vm3072 = vcmask 48128
          %v3074 = vsel %vm3072, %v3071, 0
          %vm3076 = vcmask 1042432
          %v3078 = vsel %vm3076, %v3046, 0
          %3080 = vmatpush.bf16.msra.mxu0 0
          %3081 = vmatpush.bf16.msra.mxu0 0
          %3082 = vmatpush.bf16.msra.mxu0 0
          %3083 = vmatpush.bf16.msra.mxu0 0
          %3084 = vmatpush.bf16.msra.mxu0 0
          %3085 = vmatpush.bf16.msra.mxu0 0
          %3086 = vmatpush.bf16.msra.mxu0 0
          %3087 = vmatpush.bf16.msra.mxu0 %v3078
          %3088 = vmatmul.bf16.gmra.mxu0 %v3074
          %v3089 = vpop.f32.mrf.mxu0
          %v3090 = vadd.f32 0.0, %v3089
          %v3091 = vpop.f32.mrf.mxu0
          %3092 = vdwg.mxu0
          %v3093 = vpack.c.bf16 %v3090, %v3090
          %v3094 = vld [vmem:[%s63] sm:$0xf]
          %v3095 = vld [vmem:[%s63 + $0x4] sm:$0xf]
          %s3096 = scalar_lea.vmem %s57, 16
          %v3097 = vld [vmem:[%s3096] sm:$0xf]
          %v3098 = vld [vmem:[%s3096 + $0x4] sm:$0xf]
          %v3099 = vld [vmem:[%s3096 + $0x8] sm:$0xf]
          %v3100 = vld [vmem:[%s3096 + $0xc] sm:$0xf]
          %s3101 = scalar_lea.vmem [#allocation20], 1
          %v3102 = vld [vmem:[%s3101] sm:$0x1]
          %v3104 = vperm.slane %v3102, 0
          %v3110 = vunpack.c.l.b16 %v3097
          %v3111 = vunpack.c.l.b16 %v3098
          %v3112 = vunpack.c.l.b16 %v3099
          %v3113 = vunpack.c.l.b16 %v3100
          %v3114 = vpack.c.b16 %v3111, %v3110
          %v3115 = vpack.c.b16 %v3113, %v3112
          %3118 = vmatpush.bf16.msra.mxu0 0
          %3119 = vmatpush.bf16.msra.mxu0 0
          %3120 = vmatpush.bf16.msra.mxu0 0
          %3121 = vmatpush.bf16.msra.mxu0 0
          %3122 = vmatpush.bf16.msra.mxu0 0
          %3123 = vmatpush.bf16.msra.mxu0 0
          %3124 = vmatpush.bf16.msra.mxu0 %v3115
          %3125 = vmatpush.bf16.msra.mxu0 %v3114
          %3126 = vmatmul.bf16.gmra.mxu0 %v2922
          %v3127 = vpop.f32.mrf.mxu0
          %v3128 = vadd.f32 %v3104, %v3127
          %v3129 = vpop.f32.mrf.mxu0
          %3130 = vdwg.mxu0
          %v3131 = vtanh.pop %v3128
          %s3132 = scalar_lea.vmem %s53, 16
          %v3133 = vld [vmem:[%s3132] sm:$0xf]
          %v3134 = vld [vmem:[%s3132 + $0x4] sm:$0xf]
          %v3135 = vld [vmem:[%s3132 + $0x8] sm:$0xf]
          %v3136 = vld [vmem:[%s3132 + $0xc] sm:$0xf]
          %s3137 = scalar_lea.vmem [#allocation18], 1
          %v3138 = vld [vmem:[%s3137] sm:$0x1]
          %v3140 = vperm.slane %v3138, 0
          %v3146 = vunpack.c.l.b16 %v3133
          %v3147 = vunpack.c.l.b16 %v3134
          %v3148 = vunpack.c.l.b16 %v3135
          %v3149 = vunpack.c.l.b16 %v3136
          %v3150 = vpack.c.b16 %v3147, %v3146
          %v3151 = vpack.c.b16 %v3149, %v3148
          %3154 = vmatpush.bf16.msra.mxu0 0
          %3155 = vmatpush.bf16.msra.mxu0 0
          %3156 = vmatpush.bf16.msra.mxu0 0
          %3157 = vmatpush.bf16.msra.mxu0 0
          %3158 = vmatpush.bf16.msra.mxu0 0
          %3159 = vmatpush.bf16.msra.mxu0 0
          %3160 = vmatpush.bf16.msra.mxu0 %v3151
          %3161 = vmatpush.bf16.msra.mxu0 %v3150
          %3162 = vmatmul.bf16.gmra.mxu0 %v2959
          %v3163 = vpop.f32.mrf.mxu0
          %v3164 = vadd.f32 %v3140, %v3163
          %v3165 = vpop.f32.mrf.mxu0
          %3166 = vdwg.mxu0
          %v3167 = vxor.u32 %v3164, 2147483648
          %v3168 = vmul.f32 %v3167, 1.442695
          %v3169 = vpow.pop %v3168
          %v3170 = vadd.f32 %v3169, 1.0
          %v3171 = vrcp.pop %v3170
          %v3172 = vmul.f32 %v3170, %v3171
          %v3173 = vsub.f32 1.0, %v3172
          %v3174 = vmul.f32 %v3171, %v3173
          %v3175 = vadd.f32 %v3171, %v3174
          %vm3176 = vweird.f32 %v3170
          %vm3177 = vweird.f32 %v3171
          %vm3178 = vmor %vm3176, %vm3177
          %v3179 = vsel %vm3178, %v3171, %v3175
          %v3180 = vand.u32 2147483647, %v3170
          %vm3181 = vcmp.eq.f32.partialorder %v3180, 8.507059e+37
          %v3182 = vand.u32 %v3170, 2147483648
          %v3183 = vor.u32 1.1754944e-38, %v3182
          %v3184 = vsel %vm3181, %v3183, %v3179
          %v3185 = vmul.f32 1.0, %v3184
          %s3186 = scalar_lea.vmem %s65, 4
          %v3187 = vld [vmem:[%s3186] sm:$0xf]
          %v3189 = vsel %vm2120, %v3187, 0
          %3191 = vmatpush.bf16.msra.mxu0 0
          %3192 = vmatpush.bf16.msra.mxu0 0
          %3193 = vmatpush.bf16.msra.mxu0 0
          %3194 = vmatpush.bf16.msra.mxu0 0
          %3195 = vmatpush.bf16.msra.mxu0 0
          %3196 = vmatpush.bf16.msra.mxu0 0
          %3197 = vmatpush.bf16.msra.mxu0 0
          %3198 = vmatpush.bf16.msra.mxu0 %v3189
          %3199 = vmatmul.bf16.gmra.mxu0 %v2383
          %v3200 = vpop.f32.mrf.mxu0
          %v3201 = vadd.f32 0.0, %v3200
          %v3202 = vpop.f32.mrf.mxu0
          %3203 = vdwg.mxu0
          %v3204 = vpack.c.bf16 %v3201, %v3201
          %s3205 = scalar_lea.vmem %s61, 4
          %v3206 = vld [vmem:[%s3205] sm:$0xf]
          %v3208 = vsel %vm2120, %v3206, 0
          %3210 = vmatpush.bf16.msra.mxu0 0
          %3211 = vmatpush.bf16.msra.mxu0 0
          %3212 = vmatpush.bf16.msra.mxu0 0
          %3213 = vmatpush.bf16.msra.mxu0 0
          %3214 = vmatpush.bf16.msra.mxu0 0
          %3215 = vmatpush.bf16.msra.mxu0 0
          %3216 = vmatpush.bf16.msra.mxu0 0
          %3217 = vmatpush.bf16.msra.mxu0 %v3208
          %3218 = vmatmul.bf16.gmra.mxu0 %v2118
          %v3219 = vpop.f32.mrf.mxu0
          %v3220 = vadd.f32 0.0, %v3219
          %v3221 = vpop.f32.mrf.mxu0
          %3222 = vdwg.mxu0
          %v3223 = vpack.c.bf16 %v3220, %v3220
          %s3224 = scalar_lea.vmem %s67, 4
          %v3225 = vld [vmem:[%s3224] sm:$0xf]
          %v3227 = vsel %vm2120, %v3225, 0
          %3229 = vmatpush.bf16.msra.mxu0 0
          %3230 = vmatpush.bf16.msra.mxu0 0
          %3231 = vmatpush.bf16.msra.mxu0 0
          %3232 = vmatpush.bf16.msra.mxu0 0
          %3233 = vmatpush.bf16.msra.mxu0 0
          %3234 = vmatpush.bf16.msra.mxu0 0
          %3235 = vmatpush.bf16.msra.mxu0 0
          %3236 = vmatpush.bf16.msra.mxu0 %v3227
          %3237 = vmatmul.bf16.gmra.mxu0 %v2118
          %v3238 = vpop.f32.mrf.mxu0
          %v3239 = vadd.f32 0.0, %v3238
          %v3240 = vpop.f32.mrf.mxu0
          %3241 = vdwg.mxu0
          %v3242 = vpack.c.bf16 %v3239, %v3239
          %v3244 = vsel %vm2420, %v3204, 0
          %v3247 = vsel %vm2420, %v3223, 0
          %3249 = vmatpush.bf16.xpose.msra.mxu0 0
          %3250 = vmatpush.bf16.xpose.msra.mxu0 0
          %3251 = vmatpush.bf16.xpose.msra.mxu0 0
          %3252 = vmatpush.bf16.xpose.msra.mxu0 0
          %3253 = vmatpush.bf16.xpose.msra.mxu0 0
          %3254 = vmatpush.bf16.xpose.msra.mxu0 0
          %3255 = vmatpush.bf16.xpose.msra.mxu0 0
          %3256 = vmatpush.bf16.xpose.msra.mxu0 %v3247
          %3257 = vmatmul.bf16.gmra.mxu0 %v3244
          %v3258 = vpop.f32.mrf.mxu0
          %v3259 = vadd.f32 0.0, %v3258
          %v3260 = vpop.f32.mrf.mxu0
          %3261 = vdwg.mxu0
          %s3262 = scalar_lea.vmem [#allocation5], 4
          %v3263 = vld [vmem:[%s3262] sm:$0xf]
          %v3264 = vmul.f32 %v3263, %v3185
          %v3265 = vmul.f32 %v3259, %v3131
          %v3266 = vadd.f32 %v3264, %v3265
          %3267 = vst.msk [vmem:[%s3262] sm:$0xf] %vm2061, %v3266
          %v3268 = vpack.c.bf16 %v3266, %v3266
          %v3270 = vsel %vm3072, %v3268, 0
          %v3273 = vsel %vm3076, %v3242, 0
          %3275 = vmatpush.bf16.msra.mxu0 0
          %3276 = vmatpush.bf16.msra.mxu0 0
          %3277 = vmatpush.bf16.msra.mxu0 0
          %3278 = vmatpush.bf16.msra.mxu0 0
          %3279 = vmatpush.bf16.msra.mxu0 0
          %3280 = vmatpush.bf16.msra.mxu0 0
          %3281 = vmatpush.bf16.msra.mxu0 0
          %3282 = vmatpush.bf16.msra.mxu0 %v3273
          %3283 = vmatmul.bf16.gmra.mxu0 %v3270
          %v3284 = vpop.f32.mrf.mxu0
          %v3285 = vadd.f32 0.0, %v3284
          %v3286 = vpop.f32.mrf.mxu0
          %3287 = vdwg.mxu0
          %v3288 = vpack.c.bf16 %v3285, %v3285
          %s3289 = scalar_lea.vmem %s63, 8
          %v3290 = vld [vmem:[%s3289] sm:$0xf]
          %v3291 = vld [vmem:[%s3289 + $0x4] sm:$0xf]
          %v3294 = vunpack.c.l.b16 %v3290
          %v3295 = vunpack.c.l.b16 %v3291
          %v3296 = vpack.c.b16 %v3295, %v3294
          %v3299 = vsel %vm2420, %v3288, 0
          %3301 = vmatpush.bf16.msra.mxu0 0
          %3302 = vmatpush.bf16.msra.mxu0 0
          %3303 = vmatpush.bf16.msra.mxu0 0
          %3304 = vmatpush.bf16.msra.mxu0 0
          %3305 = vmatpush.bf16.msra.mxu0 0
          %3306 = vmatpush.bf16.msra.mxu0 0
          %3307 = vmatpush.bf16.msra.mxu0 0
          %3308 = vmatpush.bf16.msra.mxu0 %v3296
          %3309 = vmatmul.bf16.gmra.mxu0 %v3299
          %v3310 = vpop.f32.mrf.mxu0
          %v3311 = vadd.f32 0.0, %v3310
          %v3312 = vpop.f32.mrf.mxu0
          %3313 = vdwg.mxu0
          %v3316 = vunpack.c.l.b16 %v3094
          %v3317 = vunpack.c.l.b16 %v3095
          %v3318 = vpack.c.b16 %v3317, %v3316
          %v3321 = vsel %vm2420, %v3093, 0
          %3323 = vmatpush.bf16.msra.mxu0 0
          %3324 = vmatpush.bf16.msra.mxu0 0
          %3325 = vmatpush.bf16.msra.mxu0 0
          %3326 = vmatpush.bf16.msra.mxu0 0
          %3327 = vmatpush.bf16.msra.mxu0 0
          %3328 = vmatpush.bf16.msra.mxu0 0
          %3329 = vmatpush.bf16.msra.mxu0 0
          %3330 = vmatpush.bf16.msra.mxu0 %v3318
          %3331 = vmatmul.bf16.gmra.mxu0 %v3321
          %v3332 = vpop.f32.mrf.mxu0
          %v3333 = vadd.f32 %v3311, %v3332
          %v3334 = vpop.f32.mrf.mxu0
          %3335 = vdwg.mxu0
          %v3336 = vld [vmem:[#allocation21] sm:$0x1]
          %v3338 = vperm.slane %v3336, 0
          %v3340 = vadd.f32 %v3333, %v3338
          %v3341 = vmul.f32 %v2898, %v3340
          %3342 = vst.msk [vmem:[#allocation2] sm:$0x3f] %vm2050, %v2715
          %3343 = vst.msk [vmem:[#allocation4] sm:$0xf] %vm2058, %v3341
          %v3344 = vld [vmem:[%s117] sm:$0x1]
          %s3345 = scalar_lea.vmem %s117, 1
          %v3346 = vld [vmem:[%s3345] sm:$0x1]
          %s3347 = scalar_lea.vmem %s117, 2
          %v3348 = vld [vmem:[%s3347] sm:$0x1]
          %s3349 = scalar_lea.vmem %s117, 3
          %v3350 = vld [vmem:[%s3349] sm:$0x1]
          %v3351 = vsel %vm2050, %v2715, 0.0
          %3352 = vadd.xlane.f32.xlu0 %v3351
          %v3353 = vpop.xlane.xlu0 %3352
          %v3354 = vrcp.pop 32.0
          %v3355 = vmul.f32 32.0, %v3354
          %v3356 = vsub.f32 1.0, %v3355
          %v3357 = vmul.f32 %v3354, %v3356
          %v3358 = vadd.f32 %v3354, %v3357
          %vm3359 = vweird.f32 %v3354
          %v3360 = vsel %vm3359, %v3354, %v3358
          %v3361 = vmul.f32 %v3353, %v3360
          %v3362 = vsub.f32 %v2715, %v3361
          %v3363 = vmul.f32 %v3362, %v3362
          %v3364 = vsel %vm2050, %v3363, 0.0
          %3365 = vadd.xlane.f32.xlu0 %v3364
          %v3366 = vpop.xlane.xlu0 %3365
          %v3367 = vmul.f32 %v3366, %v3360
          %v3368 = vadd.f32 %v3367, 1e-05
          %v3369 = vrsqrt.pop %v3368
          %v3370 = vmul.f32 %v3369, %v3368
          %v3371 = vmul.f32 %v3370, %v3369
          %v3372 = vmul.f32 0.5, %v3371
          %v3373 = vsub.f32 1.5, %v3372
          %v3374 = vmul.f32 %v3369, %v3373
          %vm3375 = vweird.f32 %v3368
          %vm3376 = vweird.f32 %v3369
          %vm3377 = vmor %vm3375, %vm3376
          %v3378 = vsel %vm3377, %v3369, %v3374
          %v3379 = vmul.f32 %v3362, %v3378
          %v3381 = vperm.slane %v3344, 0
          %v3383 = vmul.f32 %v3379, %v3381
          %v3385 = vperm.slane %v3346, 0
          %v3387 = vadd.f32 %v3383, %v3385
          %v3388 = vpack.c.bf16 %v3387, %v3387
          %v3389 = vld [vmem:[%s9] sm:$0xf]
          %v3390 = vld [vmem:[%s9 + $0x4] sm:$0xf]
          %v3391 = vld [vmem:[%s9 + $0x8] sm:$0xf]
          %v3392 = vld [vmem:[%s9 + $0xc] sm:$0xf]
          %v3393 = vld [vmem:[#allocation6] sm:$0x1]
          %v3395 = vperm.slane %v3393, 0
          %v3401 = vunpack.c.l.b16 %v3389
          %v3402 = vunpack.c.l.b16 %v3390
          %v3403 = vunpack.c.l.b16 %v3391
          %v3404 = vunpack.c.l.b16 %v3392
          %v3405 = vpack.c.b16 %v3402, %v3401
          %v3406 = vpack.c.b16 %v3404, %v3403
          %v3410 = vsel %vm2099, %v3388, 0
          %3412 = vmatpush.bf16.msra.mxu0 0
          %3413 = vmatpush.bf16.msra.mxu0 0
          %3414 = vmatpush.bf16.msra.mxu0 0
          %3415 = vmatpush.bf16.msra.mxu0 0
          %3416 = vmatpush.bf16.msra.mxu0 0
          %3417 = vmatpush.bf16.msra.mxu0 0
          %3418 = vmatpush.bf16.msra.mxu0 %v3406
          %3419 = vmatpush.bf16.msra.mxu0 %v3405
          %3420 = vmatmul.bf16.gmra.mxu0 %v3410
          %v3421 = vpop.f32.mrf.mxu0
          %v3422 = vadd.f32 %v3395, %v3421
          %v3423 = vpop.f32.mrf.mxu0
          %3424 = vdwg.mxu0
          %v3425 = vmul.f32 %v3422, 0.5
          %v3426 = vmul.f32 %v3422, 0.70710677
          %v3427 = vand.u32 2147483647, %v3426
          %v3428 = vmul.f32 %v3427, 0.3275911
          %v3429 = vadd.f32 %v3428, 1.0
          %v3430 = vrcp.pop %v3429
          %v3431 = vmul.f32 %v3429, %v3430
          %v3432 = vsub.f32 1.0, %v3431
          %v3433 = vmul.f32 %v3430, %v3432
          %v3434 = vadd.f32 %v3430, %v3433
          %vm3435 = vweird.f32 %v3429
          %vm3436 = vweird.f32 %v3430
          %vm3437 = vmor %vm3435, %vm3436
          %v3438 = vsel %vm3437, %v3430, %v3434
          %v3439 = vand.u32 2147483647, %v3429
          %vm3440 = vcmp.eq.f32.partialorder %v3439, 8.507059e+37
          %v3441 = vand.u32 %v3429, 2147483648
          %v3442 = vor.u32 1.1754944e-38, %v3441
          %v3443 = vsel %vm3440, %v3442, %v3438
          %v3444 = vmul.f32 1.0, %v3443
          %v3445 = vmul.f32 %v3444, 1.0614054
          %v3446 = vadd.f32 %v3445, -1.4531521
          %v3447 = vmul.f32 %v3446, %v3444
          %v3448 = vadd.f32 %v3447, 1.4214138
          %v3449 = vmul.f32 %v3448, %v3444
          %v3450 = vadd.f32 %v3449, -0.28449672
          %v3451 = vmul.f32 %v3450, %v3444
          %v3452 = vadd.f32 %v3451, 0.2548296
          %v3453 = vmul.f32 %v3452, %v3444
          %v3454 = vsub.f32 0.0, %v3427
          %v3455 = vmul.f32 %v3454, %v3427
          %v3456 = vmul.f32 %v3455, 1.442695
          %v3457 = vpow.pop %v3456
          %v3458 = vmul.f32 %v3453, %v3457
          %v3459 = vsub.f32 1.0, %v3458
          %vm3460 = vcmp.ge.f32.partialorder %v3426, 0.0
          %v3461 = vsub.f32 0.0, %v3459
          %v3462 = vsel %vm3460, %v3459, %v3461
          %v3463 = vadd.f32 %v3462, 1.0
          %v3464 = vmul.f32 %v3425, %v3463
          %v3465 = vpack.c.bf16 %v3464, %v3464
          %v3466 = vld [vmem:[%s11] sm:$0xf]
          %v3467 = vld [vmem:[%s11 + $0x4] sm:$0xf]
          %v3468 = vld [vmem:[%s11 + $0x8] sm:$0xf]
          %v3469 = vld [vmem:[%s11 + $0xc] sm:$0xf]
          %v3470 = vld [vmem:[%s11 + $0x10] sm:$0xf]
          %v3471 = vld [vmem:[%s11 + $0x14] sm:$0xf]
          %v3472 = vld [vmem:[%s11 + $0x18] sm:$0xf]
          %v3473 = vld [vmem:[%s11 + $0x1c] sm:$0xf]
          %v3474 = vld [vmem:[%s11 + $0x20] sm:$0xf]
          %v3475 = vld [vmem:[%s11 + $0x24] sm:$0xf]
          %v3476 = vld [vmem:[%s11 + $0x28] sm:$0xf]
          %v3477 = vld [vmem:[%s11 + $0x2c] sm:$0xf]
          %v3478 = vld [vmem:[%s11 + $0x30] sm:$0xf]
          %v3479 = vld [vmem:[%s11 + $0x34] sm:$0xf]
          %v3480 = vld [vmem:[%s11 + $0x38] sm:$0xf]
          %v3481 = vld [vmem:[%s11 + $0x3c] sm:$0xf]
          %v3482 = vld [vmem:[#allocation9] sm:$0x1]
          %v3484 = vperm.slane %v3482, 0
          %v3502 = vunpack.c.l.b16 %v3466
          %v3503 = vunpack.c.l.b16 %v3467
          %v3504 = vunpack.c.l.b16 %v3468
          %v3505 = vunpack.c.l.b16 %v3469
          %v3506 = vunpack.c.l.b16 %v3470
          %v3507 = vunpack.c.l.b16 %v3471
          %v3508 = vunpack.c.l.b16 %v3472
          %v3509 = vunpack.c.l.b16 %v3473
          %v3510 = vunpack.c.l.b16 %v3474
          %v3511 = vunpack.c.l.b16 %v3475
          %v3512 = vunpack.c.l.b16 %v3476
          %v3513 = vunpack.c.l.b16 %v3477
          %v3514 = vunpack.c.l.b16 %v3478
          %v3515 = vunpack.c.l.b16 %v3479
          %v3516 = vunpack.c.l.b16 %v3480
          %v3517 = vunpack.c.l.b16 %v3481
          %v3518 = vpack.c.b16 %v3503, %v3502
          %v3519 = vpack.c.b16 %v3505, %v3504
          %v3520 = vpack.c.b16 %v3507, %v3506
          %v3521 = vpack.c.b16 %v3509, %v3508
          %v3522 = vpack.c.b16 %v3511, %v3510
          %v3523 = vpack.c.b16 %v3513, %v3512
          %v3524 = vpack.c.b16 %v3515, %v3514
          %v3525 = vpack.c.b16 %v3517, %v3516
          %3534 = vmatpush.bf16.msra.mxu0 %v3525
          %3535 = vmatpush.bf16.msra.mxu0 %v3524
          %3536 = vmatpush.bf16.msra.mxu0 %v3523
          %3537 = vmatpush.bf16.msra.mxu0 %v3522
          %3538 = vmatpush.bf16.msra.mxu0 %v3521
          %3539 = vmatpush.bf16.msra.mxu0 %v3520
          %3540 = vmatpush.bf16.msra.mxu0 %v3519
          %3541 = vmatpush.bf16.msra.mxu0 %v3518
          %3542 = vmatmul.bf16.gmra.mxu0 %v3465
          %v3543 = vpop.f32.mrf.mxu0
          %v3544 = vadd.f32 %v3484, %v3543
          %v3545 = vpop.f32.mrf.mxu0
          %3546 = vdwg.mxu0
          %v3547 = vadd.f32 %v3387, %v3544
          %v3548 = vsel %vm2050, %v3547, 0.0
          %3549 = vadd.xlane.f32.xlu0 %v3548
          %v3550 = vpop.xlane.xlu0 %3549
          %v3551 = vmul.f32 %v3550, %v3360
          %v3552 = vsub.f32 %v3547, %v3551
          %v3553 = vmul.f32 %v3552, %v3552
          %v3554 = vsel %vm2050, %v3553, 0.0
          %3555 = vadd.xlane.f32.xlu0 %v3554
          %v3556 = vpop.xlane.xlu0 %3555
          %v3557 = vmul.f32 %v3556, %v3360
          %v3558 = vadd.f32 %v3557, 1e-05
          %v3559 = vrsqrt.pop %v3558
          %v3560 = vmul.f32 %v3559, %v3558
          %v3561 = vmul.f32 %v3560, %v3559
          %v3562 = vmul.f32 0.5, %v3561
          %v3563 = vsub.f32 1.5, %v3562
          %v3564 = vmul.f32 %v3559, %v3563
          %vm3565 = vweird.f32 %v3558
          %vm3566 = vweird.f32 %v3559
          %vm3567 = vmor %vm3565, %vm3566
          %v3568 = vsel %vm3567, %v3559, %v3564
          %v3569 = vmul.f32 %v3552, %v3568
          %v3571 = vperm.slane %v3348, 0
          %v3573 = vmul.f32 %v3569, %v3571
          %v3575 = vperm.slane %v3350, 0
          %v3577 = vadd.f32 %v3573, %v3575
          %s3578 = scalar_lea.vmem %s117, 4
          %v3579 = vld [vmem:[%s3578] sm:$0x1]
          %s3580 = scalar_lea.vmem %s117, 5
          %v3581 = vld [vmem:[%s3580] sm:$0x1]
          %s3582 = scalar_lea.vmem %s117, 6
          %v3583 = vld [vmem:[%s3582] sm:$0x1]
          %s3584 = scalar_lea.vmem %s117, 7
          %v3585 = vld [vmem:[%s3584] sm:$0x1]
          %v3586 = vsel %vm2058, %v3341, 0.0
          %3587 = vadd.xlane.f32.xlu0 %v3586
          %v3588 = vpop.xlane.xlu0 %3587
          %v3589 = vmul.f32 %v3588, %v3360
          %v3590 = vsub.f32 %v3341, %v3589
          %v3591 = vmul.f32 %v3590, %v3590
          %v3592 = vsel %vm2058, %v3591, 0.0
          %3593 = vadd.xlane.f32.xlu0 %v3592
          %v3594 = vpop.xlane.xlu0 %3593
          %v3595 = vmul.f32 %v3594, %v3360
          %v3596 = vadd.f32 %v3595, 1e-05
          %v3597 = vrsqrt.pop %v3596
          %v3598 = vmul.f32 %v3597, %v3596
          %v3599 = vmul.f32 %v3598, %v3597
          %v3600 = vmul.f32 0.5, %v3599
          %v3601 = vsub.f32 1.5, %v3600
          %v3602 = vmul.f32 %v3597, %v3601
          %vm3603 = vweird.f32 %v3596
          %vm3604 = vweird.f32 %v3597
          %vm3605 = vmor %vm3603, %vm3604
          %v3606 = vsel %vm3605, %v3597, %v3602
          %v3607 = vmul.f32 %v3590, %v3606
          %v3609 = vperm.slane %v3579, 0
          %v3611 = vmul.f32 %v3607, %v3609
          %v3613 = vperm.slane %v3581, 0
          %v3615 = vadd.f32 %v3611, %v3613
          %v3616 = vpack.c.bf16 %v3615, %v3615
          %v3617 = vld [vmem:[%s17] sm:$0xf]
          %v3618 = vld [vmem:[%s17 + $0x4] sm:$0xf]
          %v3619 = vld [vmem:[%s17 + $0x8] sm:$0xf]
          %v3620 = vld [vmem:[%s17 + $0xc] sm:$0xf]
          %v3621 = vld [vmem:[#allocation11] sm:$0x1]
          %v3623 = vperm.slane %v3621, 0
          %v3629 = vunpack.c.l.b16 %v3617
          %v3630 = vunpack.c.l.b16 %v3618
          %v3631 = vunpack.c.l.b16 %v3619
          %v3632 = vunpack.c.l.b16 %v3620
          %v3633 = vpack.c.b16 %v3630, %v3629
          %v3634 = vpack.c.b16 %v3632, %v3631
          %v3638 = vsel %vm2099, %v3616, 0
          %3640 = vmatpush.bf16.msra.mxu0 0
          %3641 = vmatpush.bf16.msra.mxu0 0
          %3642 = vmatpush.bf16.msra.mxu0 0
          %3643 = vmatpush.bf16.msra.mxu0 0
          %3644 = vmatpush.bf16.msra.mxu0 0
          %3645 = vmatpush.bf16.msra.mxu0 0
          %3646 = vmatpush.bf16.msra.mxu0 %v3634
          %3647 = vmatpush.bf16.msra.mxu0 %v3633
          %3648 = vmatmul.bf16.gmra.mxu0 %v3638
          %v3649 = vpop.f32.mrf.mxu0
          %v3650 = vadd.f32 %v3623, %v3649
          %v3651 = vpop.f32.mrf.mxu0
          %3652 = vdwg.mxu0
          %v3653 = vmul.f32 %v3650, 0.5
          %v3654 = vmul.f32 %v3650, 0.70710677
          %v3655 = vand.u32 2147483647, %v3654
          %v3656 = vmul.f32 %v3655, 0.3275911
          %v3657 = vadd.f32 %v3656, 1.0
          %v3658 = vrcp.pop %v3657
          %v3659 = vmul.f32 %v3657, %v3658
          %v3660 = vsub.f32 1.0, %v3659
          %v3661 = vmul.f32 %v3658, %v3660
          %v3662 = vadd.f32 %v3658, %v3661
          %vm3663 = vweird.f32 %v3657
          %vm3664 = vweird.f32 %v3658
          %vm3665 = vmor %vm3663, %vm3664
          %v3666 = vsel %vm3665, %v3658, %v3662
          %v3667 = vand.u32 2147483647, %v3657
          %vm3668 = vcmp.eq.f32.partialorder %v3667, 8.507059e+37
          %v3669 = vand.u32 %v3657, 2147483648
          %v3670 = vor.u32 1.1754944e-38, %v3669
          %v3671 = vsel %vm3668, %v3670, %v3666
          %v3672 = vmul.f32 1.0, %v3671
          %v3673 = vmul.f32 %v3672, 1.0614054
          %v3674 = vadd.f32 %v3673, -1.4531521
          %v3675 = vmul.f32 %v3674, %v3672
          %v3676 = vadd.f32 %v3675, 1.4214138
          %v3677 = vmul.f32 %v3676, %v3672
          %v3678 = vadd.f32 %v3677, -0.28449672
          %v3679 = vmul.f32 %v3678, %v3672
          %v3680 = vadd.f32 %v3679, 0.2548296
          %v3681 = vmul.f32 %v3680, %v3672
          %v3682 = vsub.f32 0.0, %v3655
          %v3683 = vmul.f32 %v3682, %v3655
          %v3684 = vmul.f32 %v3683, 1.442695
          %v3685 = vpow.pop %v3684
          %v3686 = vmul.f32 %v3681, %v3685
          %v3687 = vsub.f32 1.0, %v3686
          %vm3688 = vcmp.ge.f32.partialorder %v3654, 0.0
          %v3689 = vsub.f32 0.0, %v3687
          %v3690 = vsel %vm3688, %v3687, %v3689
          %v3691 = vadd.f32 %v3690, 1.0
          %v3692 = vmul.f32 %v3653, %v3691
          %v3693 = vpack.c.bf16 %v3692, %v3692
          %v3694 = vld [vmem:[%s19] sm:$0xf]
          %v3695 = vld [vmem:[%s19 + $0x4] sm:$0xf]
          %v3696 = vld [vmem:[%s19 + $0x8] sm:$0xf]
          %v3697 = vld [vmem:[%s19 + $0xc] sm:$0xf]
          %v3698 = vld [vmem:[%s19 + $0x10] sm:$0xf]
          %v3699 = vld [vmem:[%s19 + $0x14] sm:$0xf]
          %v3700 = vld [vmem:[%s19 + $0x18] sm:$0xf]
          %v3701 = vld [vmem:[%s19 + $0x1c] sm:$0xf]
          %v3702 = vld [vmem:[%s19 + $0x20] sm:$0xf]
          %v3703 = vld [vmem:[%s19 + $0x24] sm:$0xf]
          %v3704 = vld [vmem:[%s19 + $0x28] sm:$0xf]
          %v3705 = vld [vmem:[%s19 + $0x2c] sm:$0xf]
          %v3706 = vld [vmem:[%s19 + $0x30] sm:$0xf]
          %v3707 = vld [vmem:[%s19 + $0x34] sm:$0xf]
          %v3708 = vld [vmem:[%s19 + $0x38] sm:$0xf]
          %v3709 = vld [vmem:[%s19 + $0x3c] sm:$0xf]
          %v3710 = vld [vmem:[#allocation12] sm:$0x1]
          %v3712 = vperm.slane %v3710, 0
          %v3730 = vunpack.c.l.b16 %v3694
          %v3731 = vunpack.c.l.b16 %v3695
          %v3732 = vunpack.c.l.b16 %v3696
          %v3733 = vunpack.c.l.b16 %v3697
          %v3734 = vunpack.c.l.b16 %v3698
          %v3735 = vunpack.c.l.b16 %v3699
          %v3736 = vunpack.c.l.b16 %v3700
          %v3737 = vunpack.c.l.b16 %v3701
          %v3738 = vunpack.c.l.b16 %v3702
          %v3739 = vunpack.c.l.b16 %v3703
          %v3740 = vunpack.c.l.b16 %v3704
          %v3741 = vunpack.c.l.b16 %v3705
          %v3742 = vunpack.c.l.b16 %v3706
          %v3743 = vunpack.c.l.b16 %v3707
          %v3744 = vunpack.c.l.b16 %v3708
          %v3745 = vunpack.c.l.b16 %v3709
          %v3746 = vpack.c.b16 %v3731, %v3730
          %v3747 = vpack.c.b16 %v3733, %v3732
          %v3748 = vpack.c.b16 %v3735, %v3734
          %v3749 = vpack.c.b16 %v3737, %v3736
          %v3750 = vpack.c.b16 %v3739, %v3738
          %v3751 = vpack.c.b16 %v3741, %v3740
          %v3752 = vpack.c.b16 %v3743, %v3742
          %v3753 = vpack.c.b16 %v3745, %v3744
          %3762 = vmatpush.bf16.msra.mxu0 %v3753
          %3763 = vmatpush.bf16.msra.mxu0 %v3752
          %3764 = vmatpush.bf16.msra.mxu0 %v3751
          %3765 = vmatpush.bf16.msra.mxu0 %v3750
          %3766 = vmatpush.bf16.msra.mxu0 %v3749
          %3767 = vmatpush.bf16.msra.mxu0 %v3748
          %3768 = vmatpush.bf16.msra.mxu0 %v3747
          %3769 = vmatpush.bf16.msra.mxu0 %v3746
          %3770 = vmatmul.bf16.gmra.mxu0 %v3693
          %v3771 = vpop.f32.mrf.mxu0
          %v3772 = vadd.f32 %v3712, %v3771
          %v3773 = vpop.f32.mrf.mxu0
          %3774 = vdwg.mxu0
          %v3775 = vadd.f32 %v3615, %v3772
          %v3776 = vsel %vm2058, %v3775, 0.0
          %3777 = vadd.xlane.f32.xlu0 %v3776
          %v3778 = vpop.xlane.xlu0 %3777
          %v3779 = vmul.f32 %v3778, %v3360
          %v3780 = vsub.f32 %v3775, %v3779
          %v3781 = vmul.f32 %v3780, %v3780
          %v3782 = vsel %vm2058, %v3781, 0.0
          %3783 = vadd.xlane.f32.xlu0 %v3782
          %v3784 = vpop.xlane.xlu0 %3783
          %v3785 = vmul.f32 %v3784, %v3360
          %v3786 = vadd.f32 %v3785, 1e-05
          %v3787 = vrsqrt.pop %v3786
          %v3788 = vmul.f32 %v3787, %v3786
          %v3789 = vmul.f32 %v3788, %v3787
          %v3790 = vmul.f32 0.5, %v3789
          %v3791 = vsub.f32 1.5, %v3790
          %v3792 = vmul.f32 %v3787, %v3791
          %vm3793 = vweird.f32 %v3786
          %vm3794 = vweird.f32 %v3787
          %vm3795 = vmor %vm3793, %vm3794
          %v3796 = vsel %vm3795, %v3787, %v3792
          %v3797 = vmul.f32 %v3780, %v3796
          %v3799 = vperm.slane %v3583, 0
          %v3801 = vmul.f32 %v3797, %v3799
          %v3803 = vperm.slane %v3585, 0
          %v3805 = vadd.f32 %v3801, %v3803
          %s3806 = scalar_lea.vmem [#allocation2], 8
          %v3807 = vld [vmem:[%s3806] sm:$0x3f]
          %v3808 = vpack.c.bf16 %v3577, %v3577
          %v3809 = vpack.c.bf16 %v3805, %v3805
          %v3810 = vpack.c.bf16 %v3807, %v3807
          %v3811 = vld [vmem:[%s83] sm:$0xf]
          %v3812 = vld [vmem:[%s83 + $0x4] sm:$0xf]
          %v3813 = vld [vmem:[%s83 + $0x8] sm:$0xf]
          %v3814 = vld [vmem:[%s83 + $0xc] sm:$0xf]
          %v3815 = vld [vmem:[%s79] sm:$0xf]
          %v3816 = vld [vmem:[%s79 + $0x4] sm:$0xf]
          %v3817 = vld [vmem:[%s79 + $0x8] sm:$0xf]
          %v3818 = vld [vmem:[%s79 + $0xc] sm:$0xf]
          %v3823 = vunpack.c.l.b16 %v3815
          %v3824 = vunpack.c.l.b16 %v3816
          %v3825 = vunpack.c.l.b16 %v3817
          %v3826 = vunpack.c.l.b16 %v3818
          %v3827 = vpack.c.b16 %v3824, %v3823
          %v3828 = vpack.c.b16 %v3826, %v3825
          %v3832 = vsel %vm2099, %v3810, 0
          %3834 = vmatpush.bf16.msra.mxu0 0
          %3835 = vmatpush.bf16.msra.mxu0 0
          %3836 = vmatpush.bf16.msra.mxu0 0
          %3837 = vmatpush.bf16.msra.mxu0 0
          %3838 = vmatpush.bf16.msra.mxu0 0
          %3839 = vmatpush.bf16.msra.mxu0 0
          %3840 = vmatpush.bf16.msra.mxu0 %v3828
          %3841 = vmatpush.bf16.msra.mxu0 %v3827
          %3842 = vmatmul.bf16.gmra.mxu0 %v3832
          %v3843 = vpop.f32.mrf.mxu0
          %v3844 = vadd.f32 0.0, %v3843
          %v3845 = vpop.f32.mrf.mxu0
          %3846 = vdwg.mxu0
          %v3851 = vunpack.c.l.b16 %v3811
          %v3852 = vunpack.c.l.b16 %v3812
          %v3853 = vunpack.c.l.b16 %v3813
          %v3854 = vunpack.c.l.b16 %v3814
          %v3855 = vpack.c.b16 %v3852, %v3851
          %v3856 = vpack.c.b16 %v3854, %v3853
          %v3860 = vsel %vm2099, %v3808, 0
          %3862 = vmatpush.bf16.msra.mxu0 0
          %3863 = vmatpush.bf16.msra.mxu0 0
          %3864 = vmatpush.bf16.msra.mxu0 0
          %3865 = vmatpush.bf16.msra.mxu0 0
          %3866 = vmatpush.bf16.msra.mxu0 0
          %3867 = vmatpush.bf16.msra.mxu0 0
          %3868 = vmatpush.bf16.msra.mxu0 %v3856
          %3869 = vmatpush.bf16.msra.mxu0 %v3855
          %3870 = vmatmul.bf16.gmra.mxu0 %v3860
          %v3871 = vpop.f32.mrf.mxu0
          %v3872 = vadd.f32 %v3844, %v3871
          %v3873 = vpop.f32.mrf.mxu0
          %3874 = vdwg.mxu0
          %v3875 = vld [vmem:[%s71] sm:$0x1]
          %v3877 = vperm.slane %v3875, 0
          %v3879 = vadd.f32 %v3872, %v3877
          %s3880 = scalar_lea.vmem %s83, 16
          %v3881 = vld [vmem:[%s3880] sm:$0xf]
          %v3882 = vld [vmem:[%s3880 + $0x4] sm:$0xf]
          %v3883 = vld [vmem:[%s3880 + $0x8] sm:$0xf]
          %v3884 = vld [vmem:[%s3880 + $0xc] sm:$0xf]
          %s3885 = scalar_lea.vmem %s79, 16
          %v3886 = vld [vmem:[%s3885] sm:$0xf]
          %v3887 = vld [vmem:[%s3885 + $0x4] sm:$0xf]
          %v3888 = vld [vmem:[%s3885 + $0x8] sm:$0xf]
          %v3889 = vld [vmem:[%s3885 + $0xc] sm:$0xf]
          %v3894 = vunpack.c.l.b16 %v3886
          %v3895 = vunpack.c.l.b16 %v3887
          %v3896 = vunpack.c.l.b16 %v3888
          %v3897 = vunpack.c.l.b16 %v3889
          %v3898 = vpack.c.b16 %v3895, %v3894
          %v3899 = vpack.c.b16 %v3897, %v3896
          %3902 = vmatpush.bf16.msra.mxu0 0
          %3903 = vmatpush.bf16.msra.mxu0 0
          %3904 = vmatpush.bf16.msra.mxu0 0
          %3905 = vmatpush.bf16.msra.mxu0 0
          %3906 = vmatpush.bf16.msra.mxu0 0
          %3907 = vmatpush.bf16.msra.mxu0 0
          %3908 = vmatpush.bf16.msra.mxu0 %v3899
          %3909 = vmatpush.bf16.msra.mxu0 %v3898
          %3910 = vmatmul.bf16.gmra.mxu0 %v3832
          %v3911 = vpop.f32.mrf.mxu0
          %v3912 = vadd.f32 0.0, %v3911
          %v3913 = vpop.f32.mrf.mxu0
          %3914 = vdwg.mxu0
          %v3919 = vunpack.c.l.b16 %v3881
          %v3920 = vunpack.c.l.b16 %v3882
          %v3921 = vunpack.c.l.b16 %v3883
          %v3922 = vunpack.c.l.b16 %v3884
          %v3923 = vpack.c.b16 %v3920, %v3919
          %v3924 = vpack.c.b16 %v3922, %v3921
          %3927 = vmatpush.bf16.msra.mxu0 0
          %3928 = vmatpush.bf16.msra.mxu0 0
          %3929 = vmatpush.bf16.msra.mxu0 0
          %3930 = vmatpush.bf16.msra.mxu0 0
          %3931 = vmatpush.bf16.msra.mxu0 0
          %3932 = vmatpush.bf16.msra.mxu0 0
          %3933 = vmatpush.bf16.msra.mxu0 %v3924
          %3934 = vmatpush.bf16.msra.mxu0 %v3923
          %3935 = vmatmul.bf16.gmra.mxu0 %v3860
          %v3936 = vpop.f32.mrf.mxu0
          %v3937 = vadd.f32 %v3912, %v3936
          %v3938 = vpop.f32.mrf.mxu0
          %3939 = vdwg.mxu0
          %s3940 = scalar_lea.vmem %s71, 1
          %v3941 = vld [vmem:[%s3940] sm:$0x1]
          %v3943 = vperm.slane %v3941, 0
          %v3945 = vadd.f32 %v3937, %v3943
          %s3946 = scalar_lea.vmem %s83, 32
          %v3947 = vld [vmem:[%s3946] sm:$0xf]
          %v3948 = vld [vmem:[%s3946 + $0x4] sm:$0xf]
          %v3949 = vld [vmem:[%s3946 + $0x8] sm:$0xf]
          %v3950 = vld [vmem:[%s3946 + $0xc] sm:$0xf]
          %s3951 = scalar_lea.vmem %s79, 32
          %v3952 = vld [vmem:[%s3951] sm:$0xf]
          %v3953 = vld [vmem:[%s3951 + $0x4] sm:$0xf]
          %v3954 = vld [vmem:[%s3951 + $0x8] sm:$0xf]
          %v3955 = vld [vmem:[%s3951 + $0xc] sm:$0xf]
          %v3960 = vunpack.c.l.b16 %v3952
          %v3961 = vunpack.c.l.b16 %v3953
          %v3962 = vunpack.c.l.b16 %v3954
          %v3963 = vunpack.c.l.b16 %v3955
          %v3964 = vpack.c.b16 %v3961, %v3960
          %v3965 = vpack.c.b16 %v3963, %v3962
          %3968 = vmatpush.bf16.msra.mxu0 0
          %3969 = vmatpush.bf16.msra.mxu0 0
          %3970 = vmatpush.bf16.msra.mxu0 0
          %3971 = vmatpush.bf16.msra.mxu0 0
          %3972 = vmatpush.bf16.msra.mxu0 0
          %3973 = vmatpush.bf16.msra.mxu0 0
          %3974 = vmatpush.bf16.msra.mxu0 %v3965
          %3975 = vmatpush.bf16.msra.mxu0 %v3964
          %3976 = vmatmul.bf16.gmra.mxu0 %v3832
          %v3977 = vpop.f32.mrf.mxu0
          %v3978 = vadd.f32 0.0, %v3977
          %v3979 = vpop.f32.mrf.mxu0
          %3980 = vdwg.mxu0
          %v3985 = vunpack.c.l.b16 %v3947
          %v3986 = vunpack.c.l.b16 %v3948
          %v3987 = vunpack.c.l.b16 %v3949
          %v3988 = vunpack.c.l.b16 %v3950
          %v3989 = vpack.c.b16 %v3986, %v3985
          %v3990 = vpack.c.b16 %v3988, %v3987
          %3993 = vmatpush.bf16.msra.mxu0 0
          %3994 = vmatpush.bf16.msra.mxu0 0
          %3995 = vmatpush.bf16.msra.mxu0 0
          %3996 = vmatpush.bf16.msra.mxu0 0
          %3997 = vmatpush.bf16.msra.mxu0 0
          %3998 = vmatpush.bf16.msra.mxu0 0
          %3999 = vmatpush.bf16.msra.mxu0 %v3990
          %4000 = vmatpush.bf16.msra.mxu0 %v3989
          %4001 = vmatmul.bf16.gmra.mxu0 %v3860
          %v4002 = vpop.f32.mrf.mxu0
          %v4003 = vadd.f32 %v3978, %v4002
          %v4004 = vpop.f32.mrf.mxu0
          %4005 = vdwg.mxu0
          %s4006 = scalar_lea.vmem %s71, 2
          %v4007 = vld [vmem:[%s4006] sm:$0x1]
          %v4009 = vperm.slane %v4007, 0
          %v4011 = vadd.f32 %v4003, %v4009
          %v4012 = vxor.u32 %v4011, 2147483648
          %v4013 = vmul.f32 %v4012, 1.442695
          %v4014 = vpow.pop %v4013
          %v4015 = vadd.f32 %v4014, 1.0
          %v4016 = vrcp.pop %v4015
          %v4017 = vmul.f32 %v4015, %v4016
          %v4018 = vsub.f32 1.0, %v4017
          %v4019 = vmul.f32 %v4016, %v4018
          %v4020 = vadd.f32 %v4016, %v4019
          %vm4021 = vweird.f32 %v4015
          %vm4022 = vweird.f32 %v4016
          %vm4023 = vmor %vm4021, %vm4022
          %v4024 = vsel %vm4023, %v4016, %v4020
          %v4025 = vand.u32 2147483647, %v4015
          %vm4026 = vcmp.eq.f32.partialorder %v4025, 8.507059e+37
          %v4027 = vand.u32 %v4015, 2147483648
          %v4028 = vor.u32 1.1754944e-38, %v4027
          %v4029 = vsel %vm4026, %v4028, %v4024
          %v4030 = vmul.f32 1.0, %v4029
          %v4031 = vpack.c.bf16 %v3879, %v3879
          %v4032 = vpack.c.bf16 %v3945, %v3945
          %v4033 = vld [vmem:[%s81] sm:$0xf]
          %v4034 = vld [vmem:[%s81 + $0x4] sm:$0xf]
          %v4035 = vld [vmem:[%s81 + $0x8] sm:$0xf]
          %v4036 = vld [vmem:[%s81 + $0xc] sm:$0xf]
          %v4037 = vld [vmem:[#allocation24] sm:$0x1]
          %v4039 = vperm.slane %v4037, 0
          %v4045 = vunpack.c.l.b16 %v4033
          %v4046 = vunpack.c.l.b16 %v4034
          %v4047 = vunpack.c.l.b16 %v4035
          %v4048 = vunpack.c.l.b16 %v4036
          %v4049 = vpack.c.b16 %v4046, %v4045
          %v4050 = vpack.c.b16 %v4048, %v4047
          %v4054 = vsel %vm2099, %v4031, 0
          %4056 = vmatpush.bf16.msra.mxu0 0
          %4057 = vmatpush.bf16.msra.mxu0 0
          %4058 = vmatpush.bf16.msra.mxu0 0
          %4059 = vmatpush.bf16.msra.mxu0 0
          %4060 = vmatpush.bf16.msra.mxu0 0
          %4061 = vmatpush.bf16.msra.mxu0 0
          %4062 = vmatpush.bf16.msra.mxu0 %v4050
          %4063 = vmatpush.bf16.msra.mxu0 %v4049
          %4064 = vmatmul.bf16.gmra.mxu0 %v4054
          %v4065 = vpop.f32.mrf.mxu0
          %v4066 = vadd.f32 %v4039, %v4065
          %v4067 = vpop.f32.mrf.mxu0
          %4068 = vdwg.mxu0
          %v4069 = vtanh.pop %v4066
          %v4070 = vld [vmem:[%s77] sm:$0xf]
          %v4071 = vld [vmem:[%s77 + $0x4] sm:$0xf]
          %v4072 = vld [vmem:[%s77 + $0x8] sm:$0xf]
          %v4073 = vld [vmem:[%s77 + $0xc] sm:$0xf]
          %v4074 = vld [vmem:[#allocation23] sm:$0x1]
          %v4076 = vperm.slane %v4074, 0
          %v4082 = vunpack.c.l.b16 %v4070
          %v4083 = vunpack.c.l.b16 %v4071
          %v4084 = vunpack.c.l.b16 %v4072
          %v4085 = vunpack.c.l.b16 %v4073
          %v4086 = vpack.c.b16 %v4083, %v4082
          %v4087 = vpack.c.b16 %v4085, %v4084
          %v4091 = vsel %vm2099, %v4032, 0
          %4093 = vmatpush.bf16.msra.mxu0 0
          %4094 = vmatpush.bf16.msra.mxu0 0
          %4095 = vmatpush.bf16.msra.mxu0 0
          %4096 = vmatpush.bf16.msra.mxu0 0
          %4097 = vmatpush.bf16.msra.mxu0 0
          %4098 = vmatpush.bf16.msra.mxu0 0
          %4099 = vmatpush.bf16.msra.mxu0 %v4087
          %4100 = vmatpush.bf16.msra.mxu0 %v4086
          %4101 = vmatmul.bf16.gmra.mxu0 %v4091
          %v4102 = vpop.f32.mrf.mxu0
          %v4103 = vadd.f32 %v4076, %v4102
          %v4104 = vpop.f32.mrf.mxu0
          %4105 = vdwg.mxu0
          %v4106 = vxor.u32 %v4103, 2147483648
          %v4107 = vmul.f32 %v4106, 1.442695
          %v4108 = vpow.pop %v4107
          %v4109 = vadd.f32 %v4108, 1.0
          %v4110 = vrcp.pop %v4109
          %v4111 = vmul.f32 %v4109, %v4110
          %v4112 = vsub.f32 1.0, %v4111
          %v4113 = vmul.f32 %v4110, %v4112
          %v4114 = vadd.f32 %v4110, %v4113
          %vm4115 = vweird.f32 %v4109
          %vm4116 = vweird.f32 %v4110
          %vm4117 = vmor %vm4115, %vm4116
          %v4118 = vsel %vm4117, %v4110, %v4114
          %v4119 = vand.u32 2147483647, %v4109
          %vm4120 = vcmp.eq.f32.partialorder %v4119, 8.507059e+37
          %v4121 = vand.u32 %v4109, 2147483648
          %v4122 = vor.u32 1.1754944e-38, %v4121
          %v4123 = vsel %vm4120, %v4122, %v4118
          %v4124 = vmul.f32 1.0, %v4123
          %v4125 = vld [vmem:[%s89] sm:$0xf]
          %v4126 = vld [vmem:[%s89 + $0x4] sm:$0xf]
          %v4127 = vld [vmem:[%s89 + $0x8] sm:$0xf]
          %v4128 = vld [vmem:[%s89 + $0xc] sm:$0xf]
          %v4133 = vunpack.c.l.b16 %v4125
          %v4134 = vunpack.c.l.b16 %v4126
          %v4135 = vunpack.c.l.b16 %v4127
          %v4136 = vunpack.c.l.b16 %v4128
          %v4137 = vpack.c.b16 %v4134, %v4133
          %v4138 = vpack.c.b16 %v4136, %v4135
          %4141 = vmatpush.bf16.msra.mxu0 0
          %4142 = vmatpush.bf16.msra.mxu0 0
          %4143 = vmatpush.bf16.msra.mxu0 0
          %4144 = vmatpush.bf16.msra.mxu0 0
          %4145 = vmatpush.bf16.msra.mxu0 0
          %4146 = vmatpush.bf16.msra.mxu0 0
          %4147 = vmatpush.bf16.msra.mxu0 %v4138
          %4148 = vmatpush.bf16.msra.mxu0 %v4137
          %4149 = vmatmul.bf16.gmra.mxu0 %v3860
          %v4150 = vpop.f32.mrf.mxu0
          %v4151 = vadd.f32 0.0, %v4150
          %v4152 = vpop.f32.mrf.mxu0
          %4153 = vdwg.mxu0
          %v4154 = vpack.c.bf16 %v4151, %v4151
          %v4155 = vld [vmem:[%s85] sm:$0xf]
          %v4156 = vld [vmem:[%s85 + $0x4] sm:$0xf]
          %v4157 = vld [vmem:[%s85 + $0x8] sm:$0xf]
          %v4158 = vld [vmem:[%s85 + $0xc] sm:$0xf]
          %v4163 = vunpack.c.l.b16 %v4155
          %v4164 = vunpack.c.l.b16 %v4156
          %v4165 = vunpack.c.l.b16 %v4157
          %v4166 = vunpack.c.l.b16 %v4158
          %v4167 = vpack.c.b16 %v4164, %v4163
          %v4168 = vpack.c.b16 %v4166, %v4165
          %v4172 = vsel %vm2099, %v3809, 0
          %4174 = vmatpush.bf16.msra.mxu0 0
          %4175 = vmatpush.bf16.msra.mxu0 0
          %4176 = vmatpush.bf16.msra.mxu0 0
          %4177 = vmatpush.bf16.msra.mxu0 0
          %4178 = vmatpush.bf16.msra.mxu0 0
          %4179 = vmatpush.bf16.msra.mxu0 0
          %4180 = vmatpush.bf16.msra.mxu0 %v4168
          %4181 = vmatpush.bf16.msra.mxu0 %v4167
          %4182 = vmatmul.bf16.gmra.mxu0 %v4172
          %v4183 = vpop.f32.mrf.mxu0
          %v4184 = vadd.f32 0.0, %v4183
          %v4185 = vpop.f32.mrf.mxu0
          %4186 = vdwg.mxu0
          %v4187 = vpack.c.bf16 %v4184, %v4184
          %v4188 = vld [vmem:[%s91] sm:$0xf]
          %v4189 = vld [vmem:[%s91 + $0x4] sm:$0xf]
          %v4190 = vld [vmem:[%s91 + $0x8] sm:$0xf]
          %v4191 = vld [vmem:[%s91 + $0xc] sm:$0xf]
          %v4196 = vunpack.c.l.b16 %v4188
          %v4197 = vunpack.c.l.b16 %v4189
          %v4198 = vunpack.c.l.b16 %v4190
          %v4199 = vunpack.c.l.b16 %v4191
          %v4200 = vpack.c.b16 %v4197, %v4196
          %v4201 = vpack.c.b16 %v4199, %v4198
          %4204 = vmatpush.bf16.msra.mxu0 0
          %4205 = vmatpush.bf16.msra.mxu0 0
          %4206 = vmatpush.bf16.msra.mxu0 0
          %4207 = vmatpush.bf16.msra.mxu0 0
          %4208 = vmatpush.bf16.msra.mxu0 0
          %4209 = vmatpush.bf16.msra.mxu0 0
          %4210 = vmatpush.bf16.msra.mxu0 %v4201
          %4211 = vmatpush.bf16.msra.mxu0 %v4200
          %4212 = vmatmul.bf16.gmra.mxu0 %v4172
          %v4213 = vpop.f32.mrf.mxu0
          %v4214 = vadd.f32 0.0, %v4213
          %v4215 = vpop.f32.mrf.mxu0
          %4216 = vdwg.mxu0
          %v4217 = vpack.c.bf16 %v4214, %v4214
          %v4219 = vsel %vm2420, %v4154, 0
          %v4222 = vsel %vm2420, %v4187, 0
          %4224 = vmatpush.bf16.xpose.msra.mxu0 0
          %4225 = vmatpush.bf16.xpose.msra.mxu0 0
          %4226 = vmatpush.bf16.xpose.msra.mxu0 0
          %4227 = vmatpush.bf16.xpose.msra.mxu0 0
          %4228 = vmatpush.bf16.xpose.msra.mxu0 0
          %4229 = vmatpush.bf16.xpose.msra.mxu0 0
          %4230 = vmatpush.bf16.xpose.msra.mxu0 0
          %4231 = vmatpush.bf16.xpose.msra.mxu0 %v4222
          %4232 = vmatmul.bf16.gmra.mxu0 %v4219
          %v4233 = vpop.f32.mrf.mxu0
          %v4234 = vadd.f32 0.0, %v4233
          %v4235 = vpop.f32.mrf.mxu0
          %4236 = vdwg.mxu0
          %s4237 = scalar_lea.vmem [#allocation3], 16
          %v4238 = vld [vmem:[%s4237] sm:$0x3f]
          %v4239 = vmul.f32 %v4238, %v4124
          %v4240 = vmul.f32 %v4234, %v4069
          %v4241 = vadd.f32 %v4239, %v4240
          %4242 = vst.msk [vmem:[%s4237] sm:$0x3f] %vm2053, %v4241
          %v4243 = vpack.c.bf16 %v4241, %v4241
          %v4245 = vsel %vm2446, %v4243, 0
          %v4248 = vsel %vm2450, %v4217, 0
          %4250 = vmatpush.bf16.msra.mxu0 0
          %4251 = vmatpush.bf16.msra.mxu0 0
          %4252 = vmatpush.bf16.msra.mxu0 0
          %4253 = vmatpush.bf16.msra.mxu0 0
          %4254 = vmatpush.bf16.msra.mxu0 0
          %4255 = vmatpush.bf16.msra.mxu0 0
          %4256 = vmatpush.bf16.msra.mxu0 0
          %4257 = vmatpush.bf16.msra.mxu0 %v4248
          %4258 = vmatmul.bf16.gmra.mxu0 %v4245
          %v4259 = vpop.f32.mrf.mxu0
          %v4260 = vadd.f32 0.0, %v4259
          %v4261 = vpop.f32.mrf.mxu0
          %4262 = vdwg.mxu0
          %v4263 = vpack.c.bf16 %v4260, %v4260
          %v4264 = vld [vmem:[%s87] sm:$0xf]
          %v4265 = vld [vmem:[%s87 + $0x4] sm:$0xf]
          %s4266 = scalar_lea.vmem %s81, 16
          %v4267 = vld [vmem:[%s4266] sm:$0xf]
          %v4268 = vld [vmem:[%s4266 + $0x4] sm:$0xf]
          %v4269 = vld [vmem:[%s4266 + $0x8] sm:$0xf]
          %v4270 = vld [vmem:[%s4266 + $0xc] sm:$0xf]
          %s4271 = scalar_lea.vmem [#allocation24], 1
          %v4272 = vld [vmem:[%s4271] sm:$0x1]
          %v4274 = vperm.slane %v4272, 0
          %v4280 = vunpack.c.l.b16 %v4267
          %v4281 = vunpack.c.l.b16 %v4268
          %v4282 = vunpack.c.l.b16 %v4269
          %v4283 = vunpack.c.l.b16 %v4270
          %v4284 = vpack.c.b16 %v4281, %v4280
          %v4285 = vpack.c.b16 %v4283, %v4282
          %4288 = vmatpush.bf16.msra.mxu0 0
          %4289 = vmatpush.bf16.msra.mxu0 0
          %4290 = vmatpush.bf16.msra.mxu0 0
          %4291 = vmatpush.bf16.msra.mxu0 0
          %4292 = vmatpush.bf16.msra.mxu0 0
          %4293 = vmatpush.bf16.msra.mxu0 0
          %4294 = vmatpush.bf16.msra.mxu0 %v4285
          %4295 = vmatpush.bf16.msra.mxu0 %v4284
          %4296 = vmatmul.bf16.gmra.mxu0 %v4054
          %v4297 = vpop.f32.mrf.mxu0
          %v4298 = vadd.f32 %v4274, %v4297
          %v4299 = vpop.f32.mrf.mxu0
          %4300 = vdwg.mxu0
          %v4301 = vtanh.pop %v4298
          %s4302 = scalar_lea.vmem %s77, 16
          %v4303 = vld [vmem:[%s4302] sm:$0xf]
          %v4304 = vld [vmem:[%s4302 + $0x4] sm:$0xf]
          %v4305 = vld [vmem:[%s4302 + $0x8] sm:$0xf]
          %v4306 = vld [vmem:[%s4302 + $0xc] sm:$0xf]
          %s4307 = scalar_lea.vmem [#allocation23], 1
          %v4308 = vld [vmem:[%s4307] sm:$0x1]
          %v4310 = vperm.slane %v4308, 0
          %v4316 = vunpack.c.l.b16 %v4303
          %v4317 = vunpack.c.l.b16 %v4304
          %v4318 = vunpack.c.l.b16 %v4305
          %v4319 = vunpack.c.l.b16 %v4306
          %v4320 = vpack.c.b16 %v4317, %v4316
          %v4321 = vpack.c.b16 %v4319, %v4318
          %4324 = vmatpush.bf16.msra.mxu0 0
          %4325 = vmatpush.bf16.msra.mxu0 0
          %4326 = vmatpush.bf16.msra.mxu0 0
          %4327 = vmatpush.bf16.msra.mxu0 0
          %4328 = vmatpush.bf16.msra.mxu0 0
          %4329 = vmatpush.bf16.msra.mxu0 0
          %4330 = vmatpush.bf16.msra.mxu0 %v4321
          %4331 = vmatpush.bf16.msra.mxu0 %v4320
          %4332 = vmatmul.bf16.gmra.mxu0 %v4091
          %v4333 = vpop.f32.mrf.mxu0
          %v4334 = vadd.f32 %v4310, %v4333
          %v4335 = vpop.f32.mrf.mxu0
          %4336 = vdwg.mxu0
          %v4337 = vxor.u32 %v4334, 2147483648
          %v4338 = vmul.f32 %v4337, 1.442695
          %v4339 = vpow.pop %v4338
          %v4340 = vadd.f32 %v4339, 1.0
          %v4341 = vrcp.pop %v4340
          %v4342 = vmul.f32 %v4340, %v4341
          %v4343 = vsub.f32 1.0, %v4342
          %v4344 = vmul.f32 %v4341, %v4343
          %v4345 = vadd.f32 %v4341, %v4344
          %vm4346 = vweird.f32 %v4340
          %vm4347 = vweird.f32 %v4341
          %vm4348 = vmor %vm4346, %vm4347
          %v4349 = vsel %vm4348, %v4341, %v4345
          %v4350 = vand.u32 2147483647, %v4340
          %vm4351 = vcmp.eq.f32.partialorder %v4350, 8.507059e+37
          %v4352 = vand.u32 %v4340, 2147483648
          %v4353 = vor.u32 1.1754944e-38, %v4352
          %v4354 = vsel %vm4351, %v4353, %v4349
          %v4355 = vmul.f32 1.0, %v4354
          %s4356 = scalar_lea.vmem %s89, 16
          %v4357 = vld [vmem:[%s4356] sm:$0xf]
          %v4358 = vld [vmem:[%s4356 + $0x4] sm:$0xf]
          %v4359 = vld [vmem:[%s4356 + $0x8] sm:$0xf]
          %v4360 = vld [vmem:[%s4356 + $0xc] sm:$0xf]
          %v4365 = vunpack.c.l.b16 %v4357
          %v4366 = vunpack.c.l.b16 %v4358
          %v4367 = vunpack.c.l.b16 %v4359
          %v4368 = vunpack.c.l.b16 %v4360
          %v4369 = vpack.c.b16 %v4366, %v4365
          %v4370 = vpack.c.b16 %v4368, %v4367
          %4373 = vmatpush.bf16.msra.mxu0 0
          %4374 = vmatpush.bf16.msra.mxu0 0
          %4375 = vmatpush.bf16.msra.mxu0 0
          %4376 = vmatpush.bf16.msra.mxu0 0
          %4377 = vmatpush.bf16.msra.mxu0 0
          %4378 = vmatpush.bf16.msra.mxu0 0
          %4379 = vmatpush.bf16.msra.mxu0 %v4370
          %4380 = vmatpush.bf16.msra.mxu0 %v4369
          %4381 = vmatmul.bf16.gmra.mxu0 %v3860
          %v4382 = vpop.f32.mrf.mxu0
          %v4383 = vadd.f32 0.0, %v4382
          %v4384 = vpop.f32.mrf.mxu0
          %4385 = vdwg.mxu0
          %v4386 = vpack.c.bf16 %v4383, %v4383
          %s4387 = scalar_lea.vmem %s85, 16
          %v4388 = vld [vmem:[%s4387] sm:$0xf]
          %v4389 = vld [vmem:[%s4387 + $0x4] sm:$0xf]
          %v4390 = vld [vmem:[%s4387 + $0x8] sm:$0xf]
          %v4391 = vld [vmem:[%s4387 + $0xc] sm:$0xf]
          %v4396 = vunpack.c.l.b16 %v4388
          %v4397 = vunpack.c.l.b16 %v4389
          %v4398 = vunpack.c.l.b16 %v4390
          %v4399 = vunpack.c.l.b16 %v4391
          %v4400 = vpack.c.b16 %v4397, %v4396
          %v4401 = vpack.c.b16 %v4399, %v4398
          %4404 = vmatpush.bf16.msra.mxu0 0
          %4405 = vmatpush.bf16.msra.mxu0 0
          %4406 = vmatpush.bf16.msra.mxu0 0
          %4407 = vmatpush.bf16.msra.mxu0 0
          %4408 = vmatpush.bf16.msra.mxu0 0
          %4409 = vmatpush.bf16.msra.mxu0 0
          %4410 = vmatpush.bf16.msra.mxu0 %v4401
          %4411 = vmatpush.bf16.msra.mxu0 %v4400
          %4412 = vmatmul.bf16.gmra.mxu0 %v4172
          %v4413 = vpop.f32.mrf.mxu0
          %v4414 = vadd.f32 0.0, %v4413
          %v4415 = vpop.f32.mrf.mxu0
          %4416 = vdwg.mxu0
          %v4417 = vpack.c.bf16 %v4414, %v4414
          %s4418 = scalar_lea.vmem %s91, 16
          %v4419 = vld [vmem:[%s4418] sm:$0xf]
          %v4420 = vld [vmem:[%s4418 + $0x4] sm:$0xf]
          %v4421 = vld [vmem:[%s4418 + $0x8] sm:$0xf]
          %v4422 = vld [vmem:[%s4418 + $0xc] sm:$0xf]
          %v4427 = vunpack.c.l.b16 %v4419
          %v4428 = vunpack.c.l.b16 %v4420
          %v4429 = vunpack.c.l.b16 %v4421
          %v4430 = vunpack.c.l.b16 %v4422
          %v4431 = vpack.c.b16 %v4428, %v4427
          %v4432 = vpack.c.b16 %v4430, %v4429
          %4435 = vmatpush.bf16.msra.mxu0 0
          %4436 = vmatpush.bf16.msra.mxu0 0
          %4437 = vmatpush.bf16.msra.mxu0 0
          %4438 = vmatpush.bf16.msra.mxu0 0
          %4439 = vmatpush.bf16.msra.mxu0 0
          %4440 = vmatpush.bf16.msra.mxu0 0
          %4441 = vmatpush.bf16.msra.mxu0 %v4432
          %4442 = vmatpush.bf16.msra.mxu0 %v4431
          %4443 = vmatmul.bf16.gmra.mxu0 %v4172
          %v4444 = vpop.f32.mrf.mxu0
          %v4445 = vadd.f32 0.0, %v4444
          %v4446 = vpop.f32.mrf.mxu0
          %4447 = vdwg.mxu0
          %v4448 = vpack.c.bf16 %v4445, %v4445
          %v4450 = vsel %vm2420, %v4386, 0
          %v4453 = vsel %vm2420, %v4417, 0
          %4455 = vmatpush.bf16.xpose.msra.mxu0 0
          %4456 = vmatpush.bf16.xpose.msra.mxu0 0
          %4457 = vmatpush.bf16.xpose.msra.mxu0 0
          %4458 = vmatpush.bf16.xpose.msra.mxu0 0
          %4459 = vmatpush.bf16.xpose.msra.mxu0 0
          %4460 = vmatpush.bf16.xpose.msra.mxu0 0
          %4461 = vmatpush.bf16.xpose.msra.mxu0 0
          %4462 = vmatpush.bf16.xpose.msra.mxu0 %v4453
          %4463 = vmatmul.bf16.gmra.mxu0 %v4450
          %v4464 = vpop.f32.mrf.mxu0
          %v4465 = vadd.f32 0.0, %v4464
          %v4466 = vpop.f32.mrf.mxu0
          %4467 = vdwg.mxu0
          %s4468 = scalar_lea.vmem [#allocation3], 24
          %v4469 = vld [vmem:[%s4468] sm:$0x3f]
          %v4470 = vmul.f32 %v4469, %v4355
          %v4471 = vmul.f32 %v4465, %v4301
          %v4472 = vadd.f32 %v4470, %v4471
          %4473 = vst.msk [vmem:[%s4468] sm:$0x3f] %vm2053, %v4472
          %v4474 = vpack.c.bf16 %v4472, %v4472
          %v4476 = vsel %vm2446, %v4474, 0
          %v4479 = vsel %vm2450, %v4448, 0
          %4481 = vmatpush.bf16.msra.mxu0 0
          %4482 = vmatpush.bf16.msra.mxu0 0
          %4483 = vmatpush.bf16.msra.mxu0 0
          %4484 = vmatpush.bf16.msra.mxu0 0
          %4485 = vmatpush.bf16.msra.mxu0 0
          %4486 = vmatpush.bf16.msra.mxu0 0
          %4487 = vmatpush.bf16.msra.mxu0 0
          %4488 = vmatpush.bf16.msra.mxu0 %v4479
          %4489 = vmatmul.bf16.gmra.mxu0 %v4476
          %v4490 = vpop.f32.mrf.mxu0
          %v4491 = vadd.f32 0.0, %v4490
          %v4492 = vpop.f32.mrf.mxu0
          %4493 = vdwg.mxu0
          %v4494 = vpack.c.bf16 %v4491, %v4491
          %s4495 = scalar_lea.vmem %s87, 8
          %v4496 = vld [vmem:[%s4495] sm:$0xf]
          %v4497 = vld [vmem:[%s4495 + $0x4] sm:$0xf]
          %v4500 = vunpack.c.l.b16 %v4496
          %v4501 = vunpack.c.l.b16 %v4497
          %v4502 = vpack.c.b16 %v4501, %v4500
          %v4505 = vsel %vm2420, %v4494, 0
          %4507 = vmatpush.bf16.msra.mxu0 0
          %4508 = vmatpush.bf16.msra.mxu0 0
          %4509 = vmatpush.bf16.msra.mxu0 0
          %4510 = vmatpush.bf16.msra.mxu0 0
          %4511 = vmatpush.bf16.msra.mxu0 0
          %4512 = vmatpush.bf16.msra.mxu0 0
          %4513 = vmatpush.bf16.msra.mxu0 0
          %4514 = vmatpush.bf16.msra.mxu0 %v4502
          %4515 = vmatmul.bf16.gmra.mxu0 %v4505
          %v4516 = vpop.f32.mrf.mxu0
          %v4517 = vadd.f32 0.0, %v4516
          %v4518 = vpop.f32.mrf.mxu0
          %4519 = vdwg.mxu0
          %v4522 = vunpack.c.l.b16 %v4264
          %v4523 = vunpack.c.l.b16 %v4265
          %v4524 = vpack.c.b16 %v4523, %v4522
          %v4527 = vsel %vm2420, %v4263, 0
          %4529 = vmatpush.bf16.msra.mxu0 0
          %4530 = vmatpush.bf16.msra.mxu0 0
          %4531 = vmatpush.bf16.msra.mxu0 0
          %4532 = vmatpush.bf16.msra.mxu0 0
          %4533 = vmatpush.bf16.msra.mxu0 0
          %4534 = vmatpush.bf16.msra.mxu0 0
          %4535 = vmatpush.bf16.msra.mxu0 0
          %4536 = vmatpush.bf16.msra.mxu0 %v4524
          %4537 = vmatmul.bf16.gmra.mxu0 %v4527
          %v4538 = vpop.f32.mrf.mxu0
          %v4539 = vadd.f32 %v4517, %v4538
          %v4540 = vpop.f32.mrf.mxu0
          %4541 = vdwg.mxu0
          %v4542 = vld [vmem:[#allocation26] sm:$0x1]
          %v4544 = vperm.slane %v4542, 0
          %v4546 = vadd.f32 %v4539, %v4544
          %v4547 = vmul.f32 %v4030, %v4546
          %s4548 = scalar_lea.vmem [#allocation4], 4
          %v4549 = vld [vmem:[%s4548] sm:$0xf]
          %v4550 = vpack.c.bf16 %v4549, %v4549
          %v4551 = vld [vmem:[%s107] sm:$0xf]
          %v4552 = vld [vmem:[%s107 + $0x4] sm:$0xf]
          %v4553 = vld [vmem:[%s107 + $0x8] sm:$0xf]
          %v4554 = vld [vmem:[%s107 + $0xc] sm:$0xf]
          %v4555 = vld [vmem:[%s103] sm:$0xf]
          %v4556 = vld [vmem:[%s103 + $0x4] sm:$0xf]
          %v4557 = vld [vmem:[%s103 + $0x8] sm:$0xf]
          %v4558 = vld [vmem:[%s103 + $0xc] sm:$0xf]
          %v4563 = vunpack.c.l.b16 %v4555
          %v4564 = vunpack.c.l.b16 %v4556
          %v4565 = vunpack.c.l.b16 %v4557
          %v4566 = vunpack.c.l.b16 %v4558
          %v4567 = vpack.c.b16 %v4564, %v4563
          %v4568 = vpack.c.b16 %v4566, %v4565
          %v4572 = vsel %vm2099, %v4550, 0
          %4574 = vmatpush.bf16.msra.mxu0 0
          %4575 = vmatpush.bf16.msra.mxu0 0
          %4576 = vmatpush.bf16.msra.mxu0 0
          %4577 = vmatpush.bf16.msra.mxu0 0
          %4578 = vmatpush.bf16.msra.mxu0 0
          %4579 = vmatpush.bf16.msra.mxu0 0
          %4580 = vmatpush.bf16.msra.mxu0 %v4568
          %4581 = vmatpush.bf16.msra.mxu0 %v4567
          %4582 = vmatmul.bf16.gmra.mxu0 %v4572
          %v4583 = vpop.f32.mrf.mxu0
          %v4584 = vadd.f32 0.0, %v4583
          %v4585 = vpop.f32.mrf.mxu0
          %4586 = vdwg.mxu0
          %v4591 = vunpack.c.l.b16 %v4551
          %v4592 = vunpack.c.l.b16 %v4552
          %v4593 = vunpack.c.l.b16 %v4553
          %v4594 = vunpack.c.l.b16 %v4554
          %v4595 = vpack.c.b16 %v4592, %v4591
          %v4596 = vpack.c.b16 %v4594, %v4593
          %4599 = vmatpush.bf16.msra.mxu0 0
          %4600 = vmatpush.bf16.msra.mxu0 0
          %4601 = vmatpush.bf16.msra.mxu0 0
          %4602 = vmatpush.bf16.msra.mxu0 0
          %4603 = vmatpush.bf16.msra.mxu0 0
          %4604 = vmatpush.bf16.msra.mxu0 0
          %4605 = vmatpush.bf16.msra.mxu0 %v4596
          %4606 = vmatpush.bf16.msra.mxu0 %v4595
          %4607 = vmatmul.bf16.gmra.mxu0 %v4172
          %v4608 = vpop.f32.mrf.mxu0
          %v4609 = vadd.f32 %v4584, %v4608
          %v4610 = vpop.f32.mrf.mxu0
          %4611 = vdwg.mxu0
          %v4612 = vld [vmem:[%s95] sm:$0x1]
          %v4614 = vperm.slane %v4612, 0
          %v4616 = vadd.f32 %v4609, %v4614
          %s4617 = scalar_lea.vmem %s107, 16
          %v4618 = vld [vmem:[%s4617] sm:$0xf]
          %v4619 = vld [vmem:[%s4617 + $0x4] sm:$0xf]
          %v4620 = vld [vmem:[%s4617 + $0x8] sm:$0xf]
          %v4621 = vld [vmem:[%s4617 + $0xc] sm:$0xf]
          %s4622 = scalar_lea.vmem %s103, 16
          %v4623 = vld [vmem:[%s4622] sm:$0xf]
          %v4624 = vld [vmem:[%s4622 + $0x4] sm:$0xf]
          %v4625 = vld [vmem:[%s4622 + $0x8] sm:$0xf]
          %v4626 = vld [vmem:[%s4622 + $0xc] sm:$0xf]
          %v4631 = vunpack.c.l.b16 %v4623
          %v4632 = vunpack.c.l.b16 %v4624
          %v4633 = vunpack.c.l.b16 %v4625
          %v4634 = vunpack.c.l.b16 %v4626
          %v4635 = vpack.c.b16 %v4632, %v4631
          %v4636 = vpack.c.b16 %v4634, %v4633
          %4639 = vmatpush.bf16.msra.mxu0 0
          %4640 = vmatpush.bf16.msra.mxu0 0
          %4641 = vmatpush.bf16.msra.mxu0 0
          %4642 = vmatpush.bf16.msra.mxu0 0
          %4643 = vmatpush.bf16.msra.mxu0 0
          %4644 = vmatpush.bf16.msra.mxu0 0
          %4645 = vmatpush.bf16.msra.mxu0 %v4636
          %4646 = vmatpush.bf16.msra.mxu0 %v4635
          %4647 = vmatmul.bf16.gmra.mxu0 %v4572
          %v4648 = vpop.f32.mrf.mxu0
          %v4649 = vadd.f32 0.0, %v4648
          %v4650 = vpop.f32.mrf.mxu0
          %4651 = vdwg.mxu0
          %v4656 = vunpack.c.l.b16 %v4618
          %v4657 = vunpack.c.l.b16 %v4619
          %v4658 = vunpack.c.l.b16 %v4620
          %v4659 = vunpack.c.l.b16 %v4621
          %v4660 = vpack.c.b16 %v4657, %v4656
          %v4661 = vpack.c.b16 %v4659, %v4658
          %4664 = vmatpush.bf16.msra.mxu0 0
          %4665 = vmatpush.bf16.msra.mxu0 0
          %4666 = vmatpush.bf16.msra.mxu0 0
          %4667 = vmatpush.bf16.msra.mxu0 0
          %4668 = vmatpush.bf16.msra.mxu0 0
          %4669 = vmatpush.bf16.msra.mxu0 0
          %4670 = vmatpush.bf16.msra.mxu0 %v4661
          %4671 = vmatpush.bf16.msra.mxu0 %v4660
          %4672 = vmatmul.bf16.gmra.mxu0 %v4172
          %v4673 = vpop.f32.mrf.mxu0
          %v4674 = vadd.f32 %v4649, %v4673
          %v4675 = vpop.f32.mrf.mxu0
          %4676 = vdwg.mxu0
          %s4677 = scalar_lea.vmem %s95, 1
          %v4678 = vld [vmem:[%s4677] sm:$0x1]
          %v4680 = vperm.slane %v4678, 0
          %v4682 = vadd.f32 %v4674, %v4680
          %s4683 = scalar_lea.vmem %s107, 32
          %v4684 = vld [vmem:[%s4683] sm:$0xf]
          %v4685 = vld [vmem:[%s4683 + $0x4] sm:$0xf]
          %v4686 = vld [vmem:[%s4683 + $0x8] sm:$0xf]
          %v4687 = vld [vmem:[%s4683 + $0xc] sm:$0xf]
          %s4688 = scalar_lea.vmem %s103, 32
          %v4689 = vld [vmem:[%s4688] sm:$0xf]
          %v4690 = vld [vmem:[%s4688 + $0x4] sm:$0xf]
          %v4691 = vld [vmem:[%s4688 + $0x8] sm:$0xf]
          %v4692 = vld [vmem:[%s4688 + $0xc] sm:$0xf]
          %v4697 = vunpack.c.l.b16 %v4689
          %v4698 = vunpack.c.l.b16 %v4690
          %v4699 = vunpack.c.l.b16 %v4691
          %v4700 = vunpack.c.l.b16 %v4692
          %v4701 = vpack.c.b16 %v4698, %v4697
          %v4702 = vpack.c.b16 %v4700, %v4699
          %4705 = vmatpush.bf16.msra.mxu0 0
          %4706 = vmatpush.bf16.msra.mxu0 0
          %4707 = vmatpush.bf16.msra.mxu0 0
          %4708 = vmatpush.bf16.msra.mxu0 0
          %4709 = vmatpush.bf16.msra.mxu0 0
          %4710 = vmatpush.bf16.msra.mxu0 0
          %4711 = vmatpush.bf16.msra.mxu0 %v4702
          %4712 = vmatpush.bf16.msra.mxu0 %v4701
          %4713 = vmatmul.bf16.gmra.mxu0 %v4572
          %v4714 = vpop.f32.mrf.mxu0
          %v4715 = vadd.f32 0.0, %v4714
          %v4716 = vpop.f32.mrf.mxu0
          %4717 = vdwg.mxu0
          %v4722 = vunpack.c.l.b16 %v4684
          %v4723 = vunpack.c.l.b16 %v4685
          %v4724 = vunpack.c.l.b16 %v4686
          %v4725 = vunpack.c.l.b16 %v4687
          %v4726 = vpack.c.b16 %v4723, %v4722
          %v4727 = vpack.c.b16 %v4725, %v4724
          %4730 = vmatpush.bf16.msra.mxu0 0
          %4731 = vmatpush.bf16.msra.mxu0 0
          %4732 = vmatpush.bf16.msra.mxu0 0
          %4733 = vmatpush.bf16.msra.mxu0 0
          %4734 = vmatpush.bf16.msra.mxu0 0
          %4735 = vmatpush.bf16.msra.mxu0 0
          %4736 = vmatpush.bf16.msra.mxu0 %v4727
          %4737 = vmatpush.bf16.msra.mxu0 %v4726
          %4738 = vmatmul.bf16.gmra.mxu0 %v4172
          %v4739 = vpop.f32.mrf.mxu0
          %v4740 = vadd.f32 %v4715, %v4739
          %v4741 = vpop.f32.mrf.mxu0
          %4742 = vdwg.mxu0
          %s4743 = scalar_lea.vmem %s95, 2
          %v4744 = vld [vmem:[%s4743] sm:$0x1]
          %v4746 = vperm.slane %v4744, 0
          %v4748 = vadd.f32 %v4740, %v4746
          %v4749 = vxor.u32 %v4748, 2147483648
          %v4750 = vmul.f32 %v4749, 1.442695
          %v4751 = vpow.pop %v4750
          %v4752 = vadd.f32 %v4751, 1.0
          %v4753 = vrcp.pop %v4752
          %v4754 = vmul.f32 %v4752, %v4753
          %v4755 = vsub.f32 1.0, %v4754
          %v4756 = vmul.f32 %v4753, %v4755
          %v4757 = vadd.f32 %v4753, %v4756
          %vm4758 = vweird.f32 %v4752
          %vm4759 = vweird.f32 %v4753
          %vm4760 = vmor %vm4758, %vm4759
          %v4761 = vsel %vm4760, %v4753, %v4757
          %v4762 = vand.u32 2147483647, %v4752
          %vm4763 = vcmp.eq.f32.partialorder %v4762, 8.507059e+37
          %v4764 = vand.u32 %v4752, 2147483648
          %v4765 = vor.u32 1.1754944e-38, %v4764
          %v4766 = vsel %vm4763, %v4765, %v4761
          %v4767 = vmul.f32 1.0, %v4766
          %v4768 = vpack.c.bf16 %v4616, %v4616
          %v4769 = vpack.c.bf16 %v4682, %v4682
          %v4770 = vld [vmem:[%s105] sm:$0xf]
          %v4771 = vld [vmem:[%s105 + $0x4] sm:$0xf]
          %v4772 = vld [vmem:[%s105 + $0x8] sm:$0xf]
          %v4773 = vld [vmem:[%s105 + $0xc] sm:$0xf]
          %v4774 = vld [vmem:[#allocation29] sm:$0x1]
          %v4776 = vperm.slane %v4774, 0
          %v4782 = vunpack.c.l.b16 %v4770
          %v4783 = vunpack.c.l.b16 %v4771
          %v4784 = vunpack.c.l.b16 %v4772
          %v4785 = vunpack.c.l.b16 %v4773
          %v4786 = vpack.c.b16 %v4783, %v4782
          %v4787 = vpack.c.b16 %v4785, %v4784
          %v4791 = vsel %vm2099, %v4768, 0
          %4793 = vmatpush.bf16.msra.mxu0 0
          %4794 = vmatpush.bf16.msra.mxu0 0
          %4795 = vmatpush.bf16.msra.mxu0 0
          %4796 = vmatpush.bf16.msra.mxu0 0
          %4797 = vmatpush.bf16.msra.mxu0 0
          %4798 = vmatpush.bf16.msra.mxu0 0
          %4799 = vmatpush.bf16.msra.mxu0 %v4787
          %4800 = vmatpush.bf16.msra.mxu0 %v4786
          %4801 = vmatmul.bf16.gmra.mxu0 %v4791
          %v4802 = vpop.f32.mrf.mxu0
          %v4803 = vadd.f32 %v4776, %v4802
          %v4804 = vpop.f32.mrf.mxu0
          %4805 = vdwg.mxu0
          %v4806 = vtanh.pop %v4803
          %v4807 = vld [vmem:[%s101] sm:$0xf]
          %v4808 = vld [vmem:[%s101 + $0x4] sm:$0xf]
          %v4809 = vld [vmem:[%s101 + $0x8] sm:$0xf]
          %v4810 = vld [vmem:[%s101 + $0xc] sm:$0xf]
          %v4811 = vld [vmem:[#allocation27] sm:$0x1]
          %v4813 = vperm.slane %v4811, 0
          %v4819 = vunpack.c.l.b16 %v4807
          %v4820 = vunpack.c.l.b16 %v4808
          %v4821 = vunpack.c.l.b16 %v4809
          %v4822 = vunpack.c.l.b16 %v4810
          %v4823 = vpack.c.b16 %v4820, %v4819
          %v4824 = vpack.c.b16 %v4822, %v4821
          %v4828 = vsel %vm2099, %v4769, 0
          %4830 = vmatpush.bf16.msra.mxu0 0
          %4831 = vmatpush.bf16.msra.mxu0 0
          %4832 = vmatpush.bf16.msra.mxu0 0
          %4833 = vmatpush.bf16.msra.mxu0 0
          %4834 = vmatpush.bf16.msra.mxu0 0
          %4835 = vmatpush.bf16.msra.mxu0 0
          %4836 = vmatpush.bf16.msra.mxu0 %v4824
          %4837 = vmatpush.bf16.msra.mxu0 %v4823
          %4838 = vmatmul.bf16.gmra.mxu0 %v4828
          %v4839 = vpop.f32.mrf.mxu0
          %v4840 = vadd.f32 %v4813, %v4839
          %v4841 = vpop.f32.mrf.mxu0
          %4842 = vdwg.mxu0
          %v4843 = vxor.u32 %v4840, 2147483648
          %v4844 = vmul.f32 %v4843, 1.442695
          %v4845 = vpow.pop %v4844
          %v4846 = vadd.f32 %v4845, 1.0
          %v4847 = vrcp.pop %v4846
          %v4848 = vmul.f32 %v4846, %v4847
          %v4849 = vsub.f32 1.0, %v4848
          %v4850 = vmul.f32 %v4847, %v4849
          %v4851 = vadd.f32 %v4847, %v4850
          %vm4852 = vweird.f32 %v4846
          %vm4853 = vweird.f32 %v4847
          %vm4854 = vmor %vm4852, %vm4853
          %v4855 = vsel %vm4854, %v4847, %v4851
          %v4856 = vand.u32 2147483647, %v4846
          %vm4857 = vcmp.eq.f32.partialorder %v4856, 8.507059e+37
          %v4858 = vand.u32 %v4846, 2147483648
          %v4859 = vor.u32 1.1754944e-38, %v4858
          %v4860 = vsel %vm4857, %v4859, %v4855
          %v4861 = vmul.f32 1.0, %v4860
          %v4862 = vld [vmem:[%s113] sm:$0xf]
          %v4863 = vld [vmem:[%s113 + $0x4] sm:$0xf]
          %v4864 = vld [vmem:[%s113 + $0x8] sm:$0xf]
          %v4865 = vld [vmem:[%s113 + $0xc] sm:$0xf]
          %v4870 = vunpack.c.l.b16 %v4862
          %v4871 = vunpack.c.l.b16 %v4863
          %v4872 = vunpack.c.l.b16 %v4864
          %v4873 = vunpack.c.l.b16 %v4865
          %v4874 = vpack.c.b16 %v4871, %v4870
          %v4875 = vpack.c.b16 %v4873, %v4872
          %4878 = vmatpush.bf16.msra.mxu0 0
          %4879 = vmatpush.bf16.msra.mxu0 0
          %4880 = vmatpush.bf16.msra.mxu0 0
          %4881 = vmatpush.bf16.msra.mxu0 0
          %4882 = vmatpush.bf16.msra.mxu0 0
          %4883 = vmatpush.bf16.msra.mxu0 0
          %4884 = vmatpush.bf16.msra.mxu0 %v4875
          %4885 = vmatpush.bf16.msra.mxu0 %v4874
          %4886 = vmatmul.bf16.gmra.mxu0 %v4172
          %v4887 = vpop.f32.mrf.mxu0
          %v4888 = vadd.f32 0.0, %v4887
          %v4889 = vpop.f32.mrf.mxu0
          %4890 = vdwg.mxu0
          %v4891 = vpack.c.bf16 %v4888, %v4888
          %v4892 = vld [vmem:[%s109] sm:$0xf]
          %v4893 = vld [vmem:[%s109 + $0x4] sm:$0xf]
          %v4894 = vld [vmem:[%s109 + $0x8] sm:$0xf]
          %v4895 = vld [vmem:[%s109 + $0xc] sm:$0xf]
          %v4900 = vunpack.c.l.b16 %v4892
          %v4901 = vunpack.c.l.b16 %v4893
          %v4902 = vunpack.c.l.b16 %v4894
          %v4903 = vunpack.c.l.b16 %v4895
          %v4904 = vpack.c.b16 %v4901, %v4900
          %v4905 = vpack.c.b16 %v4903, %v4902
          %4908 = vmatpush.bf16.msra.mxu0 0
          %4909 = vmatpush.bf16.msra.mxu0 0
          %4910 = vmatpush.bf16.msra.mxu0 0
          %4911 = vmatpush.bf16.msra.mxu0 0
          %4912 = vmatpush.bf16.msra.mxu0 0
          %4913 = vmatpush.bf16.msra.mxu0 0
          %4914 = vmatpush.bf16.msra.mxu0 %v4905
          %4915 = vmatpush.bf16.msra.mxu0 %v4904
          %4916 = vmatmul.bf16.gmra.mxu0 %v3860
          %v4917 = vpop.f32.mrf.mxu0
          %v4918 = vadd.f32 0.0, %v4917
          %v4919 = vpop.f32.mrf.mxu0
          %4920 = vdwg.mxu0
          %v4921 = vpack.c.bf16 %v4918, %v4918
          %v4922 = vld [vmem:[%s115] sm:$0xf]
          %v4923 = vld [vmem:[%s115 + $0x4] sm:$0xf]
          %v4924 = vld [vmem:[%s115 + $0x8] sm:$0xf]
          %v4925 = vld [vmem:[%s115 + $0xc] sm:$0xf]
          %v4930 = vunpack.c.l.b16 %v4922
          %v4931 = vunpack.c.l.b16 %v4923
          %v4932 = vunpack.c.l.b16 %v4924
          %v4933 = vunpack.c.l.b16 %v4925
          %v4934 = vpack.c.b16 %v4931, %v4930
          %v4935 = vpack.c.b16 %v4933, %v4932
          %4938 = vmatpush.bf16.msra.mxu0 0
          %4939 = vmatpush.bf16.msra.mxu0 0
          %4940 = vmatpush.bf16.msra.mxu0 0
          %4941 = vmatpush.bf16.msra.mxu0 0
          %4942 = vmatpush.bf16.msra.mxu0 0
          %4943 = vmatpush.bf16.msra.mxu0 0
          %4944 = vmatpush.bf16.msra.mxu0 %v4935
          %4945 = vmatpush.bf16.msra.mxu0 %v4934
          %4946 = vmatmul.bf16.gmra.mxu0 %v3860
          %v4947 = vpop.f32.mrf.mxu0
          %v4948 = vadd.f32 0.0, %v4947
          %v4949 = vpop.f32.mrf.mxu0
          %4950 = vdwg.mxu0
          %v4951 = vpack.c.bf16 %v4948, %v4948
          %v4953 = vsel %vm2420, %v4891, 0
          %v4956 = vsel %vm2420, %v4921, 0
          %4958 = vmatpush.bf16.xpose.msra.mxu0 0
          %4959 = vmatpush.bf16.xpose.msra.mxu0 0
          %4960 = vmatpush.bf16.xpose.msra.mxu0 0
          %4961 = vmatpush.bf16.xpose.msra.mxu0 0
          %4962 = vmatpush.bf16.xpose.msra.mxu0 0
          %4963 = vmatpush.bf16.xpose.msra.mxu0 0
          %4964 = vmatpush.bf16.xpose.msra.mxu0 0
          %4965 = vmatpush.bf16.xpose.msra.mxu0 %v4956
          %4966 = vmatmul.bf16.gmra.mxu0 %v4953
          %v4967 = vpop.f32.mrf.mxu0
          %v4968 = vadd.f32 0.0, %v4967
          %v4969 = vpop.f32.mrf.mxu0
          %4970 = vdwg.mxu0
          %s4971 = scalar_lea.vmem [#allocation5], 8
          %v4972 = vld [vmem:[%s4971] sm:$0xf]
          %v4973 = vmul.f32 %v4972, %v4861
          %v4974 = vmul.f32 %v4968, %v4806
          %v4975 = vadd.f32 %v4973, %v4974
          %4976 = vst.msk [vmem:[%s4971] sm:$0xf] %vm2061, %v4975
          %v4977 = vpack.c.bf16 %v4975, %v4975
          %v4979 = vsel %vm3072, %v4977, 0
          %v4982 = vsel %vm3076, %v4951, 0
          %4984 = vmatpush.bf16.msra.mxu0 0
          %4985 = vmatpush.bf16.msra.mxu0 0
          %4986 = vmatpush.bf16.msra.mxu0 0
          %4987 = vmatpush.bf16.msra.mxu0 0
          %4988 = vmatpush.bf16.msra.mxu0 0
          %4989 = vmatpush.bf16.msra.mxu0 0
          %4990 = vmatpush.bf16.msra.mxu0 0
          %4991 = vmatpush.bf16.msra.mxu0 %v4982
          %4992 = vmatmul.bf16.gmra.mxu0 %v4979
          %v4993 = vpop.f32.mrf.mxu0
          %v4994 = vadd.f32 0.0, %v4993
          %v4995 = vpop.f32.mrf.mxu0
          %4996 = vdwg.mxu0
          %v4997 = vpack.c.bf16 %v4994, %v4994
          %v4998 = vld [vmem:[%s111] sm:$0xf]
          %v4999 = vld [vmem:[%s111 + $0x4] sm:$0xf]
          %s5000 = scalar_lea.vmem %s105, 16
          %v5001 = vld [vmem:[%s5000] sm:$0xf]
          %v5002 = vld [vmem:[%s5000 + $0x4] sm:$0xf]
          %v5003 = vld [vmem:[%s5000 + $0x8] sm:$0xf]
          %v5004 = vld [vmem:[%s5000 + $0xc] sm:$0xf]
          %s5005 = scalar_lea.vmem [#allocation29], 1
          %v5006 = vld [vmem:[%s5005] sm:$0x1]
          %v5008 = vperm.slane %v5006, 0
          %v5014 = vunpack.c.l.b16 %v5001
          %v5015 = vunpack.c.l.b16 %v5002
          %v5016 = vunpack.c.l.b16 %v5003
          %v5017 = vunpack.c.l.b16 %v5004
          %v5018 = vpack.c.b16 %v5015, %v5014
          %v5019 = vpack.c.b16 %v5017, %v5016
          %5022 = vmatpush.bf16.msra.mxu0 0
          %5023 = vmatpush.bf16.msra.mxu0 0
          %5024 = vmatpush.bf16.msra.mxu0 0
          %5025 = vmatpush.bf16.msra.mxu0 0
          %5026 = vmatpush.bf16.msra.mxu0 0
          %5027 = vmatpush.bf16.msra.mxu0 0
          %5028 = vmatpush.bf16.msra.mxu0 %v5019
          %5029 = vmatpush.bf16.msra.mxu0 %v5018
          %5030 = vmatmul.bf16.gmra.mxu0 %v4791
          %v5031 = vpop.f32.mrf.mxu0
          %v5032 = vadd.f32 %v5008, %v5031
          %v5033 = vpop.f32.mrf.mxu0
          %5034 = vdwg.mxu0
          %v5035 = vtanh.pop %v5032
          %s5036 = scalar_lea.vmem %s101, 16
          %v5037 = vld [vmem:[%s5036] sm:$0xf]
          %v5038 = vld [vmem:[%s5036 + $0x4] sm:$0xf]
          %v5039 = vld [vmem:[%s5036 + $0x8] sm:$0xf]
          %v5040 = vld [vmem:[%s5036 + $0xc] sm:$0xf]
          %s5041 = scalar_lea.vmem [#allocation27], 1
          %v5042 = vld [vmem:[%s5041] sm:$0x1]
          %v5044 = vperm.slane %v5042, 0
          %v5050 = vunpack.c.l.b16 %v5037
          %v5051 = vunpack.c.l.b16 %v5038
          %v5052 = vunpack.c.l.b16 %v5039
          %v5053 = vunpack.c.l.b16 %v5040
          %v5054 = vpack.c.b16 %v5051, %v5050
          %v5055 = vpack.c.b16 %v5053, %v5052
          %5058 = vmatpush.bf16.msra.mxu0 0
          %5059 = vmatpush.bf16.msra.mxu0 0
          %5060 = vmatpush.bf16.msra.mxu0 0
          %5061 = vmatpush.bf16.msra.mxu0 0
          %5062 = vmatpush.bf16.msra.mxu0 0
          %5063 = vmatpush.bf16.msra.mxu0 0
          %5064 = vmatpush.bf16.msra.mxu0 %v5055
          %5065 = vmatpush.bf16.msra.mxu0 %v5054
          %5066 = vmatmul.bf16.gmra.mxu0 %v4828
          %v5067 = vpop.f32.mrf.mxu0
          %v5068 = vadd.f32 %v5044, %v5067
          %v5069 = vpop.f32.mrf.mxu0
          %5070 = vdwg.mxu0
          %v5071 = vxor.u32 %v5068, 2147483648
          %v5072 = vmul.f32 %v5071, 1.442695
          %v5073 = vpow.pop %v5072
          %v5074 = vadd.f32 %v5073, 1.0
          %v5075 = vrcp.pop %v5074
          %v5076 = vmul.f32 %v5074, %v5075
          %v5077 = vsub.f32 1.0, %v5076
          %v5078 = vmul.f32 %v5075, %v5077
          %v5079 = vadd.f32 %v5075, %v5078
          %vm5080 = vweird.f32 %v5074
          %vm5081 = vweird.f32 %v5075
          %vm5082 = vmor %vm5080, %vm5081
          %v5083 = vsel %vm5082, %v5075, %v5079
          %v5084 = vand.u32 2147483647, %v5074
          %vm5085 = vcmp.eq.f32.partialorder %v5084, 8.507059e+37
          %v5086 = vand.u32 %v5074, 2147483648
          %v5087 = vor.u32 1.1754944e-38, %v5086
          %v5088 = vsel %vm5085, %v5087, %v5083
          %v5089 = vmul.f32 1.0, %v5088
          %s5090 = scalar_lea.vmem %s113, 16
          %v5091 = vld [vmem:[%s5090] sm:$0xf]
          %v5092 = vld [vmem:[%s5090 + $0x4] sm:$0xf]
          %v5093 = vld [vmem:[%s5090 + $0x8] sm:$0xf]
          %v5094 = vld [vmem:[%s5090 + $0xc] sm:$0xf]
          %v5099 = vunpack.c.l.b16 %v5091
          %v5100 = vunpack.c.l.b16 %v5092
          %v5101 = vunpack.c.l.b16 %v5093
          %v5102 = vunpack.c.l.b16 %v5094
          %v5103 = vpack.c.b16 %v5100, %v5099
          %v5104 = vpack.c.b16 %v5102, %v5101
          %5107 = vmatpush.bf16.msra.mxu0 0
          %5108 = vmatpush.bf16.msra.mxu0 0
          %5109 = vmatpush.bf16.msra.mxu0 0
          %5110 = vmatpush.bf16.msra.mxu0 0
          %5111 = vmatpush.bf16.msra.mxu0 0
          %5112 = vmatpush.bf16.msra.mxu0 0
          %5113 = vmatpush.bf16.msra.mxu0 %v5104
          %5114 = vmatpush.bf16.msra.mxu0 %v5103
          %5115 = vmatmul.bf16.gmra.mxu0 %v4172
          %v5116 = vpop.f32.mrf.mxu0
          %v5117 = vadd.f32 0.0, %v5116
          %v5118 = vpop.f32.mrf.mxu0
          %5119 = vdwg.mxu0
          %v5120 = vpack.c.bf16 %v5117, %v5117
          %s5121 = scalar_lea.vmem %s109, 16
          %v5122 = vld [vmem:[%s5121] sm:$0xf]
          %v5123 = vld [vmem:[%s5121 + $0x4] sm:$0xf]
          %v5124 = vld [vmem:[%s5121 + $0x8] sm:$0xf]
          %v5125 = vld [vmem:[%s5121 + $0xc] sm:$0xf]
          %v5130 = vunpack.c.l.b16 %v5122
          %v5131 = vunpack.c.l.b16 %v5123
          %v5132 = vunpack.c.l.b16 %v5124
          %v5133 = vunpack.c.l.b16 %v5125
          %v5134 = vpack.c.b16 %v5131, %v5130
          %v5135 = vpack.c.b16 %v5133, %v5132
          %5138 = vmatpush.bf16.msra.mxu0 0
          %5139 = vmatpush.bf16.msra.mxu0 0
          %5140 = vmatpush.bf16.msra.mxu0 0
          %5141 = vmatpush.bf16.msra.mxu0 0
          %5142 = vmatpush.bf16.msra.mxu0 0
          %5143 = vmatpush.bf16.msra.mxu0 0
          %5144 = vmatpush.bf16.msra.mxu0 %v5135
          %5145 = vmatpush.bf16.msra.mxu0 %v5134
          %5146 = vmatmul.bf16.gmra.mxu0 %v3860
          %v5147 = vpop.f32.mrf.mxu0
          %v5148 = vadd.f32 0.0, %v5147
          %v5149 = vpop.f32.mrf.mxu0
          %5150 = vdwg.mxu0
          %v5151 = vpack.c.bf16 %v5148, %v5148
          %s5152 = scalar_lea.vmem %s115, 16
          %v5153 = vld [vmem:[%s5152] sm:$0xf]
          %v5154 = vld [vmem:[%s5152 + $0x4] sm:$0xf]
          %v5155 = vld [vmem:[%s5152 + $0x8] sm:$0xf]
          %v5156 = vld [vmem:[%s5152 + $0xc] sm:$0xf]
          %v5161 = vunpack.c.l.b16 %v5153
          %v5162 = vunpack.c.l.b16 %v5154
          %v5163 = vunpack.c.l.b16 %v5155
          %v5164 = vunpack.c.l.b16 %v5156
          %v5165 = vpack.c.b16 %v5162, %v5161
          %v5166 = vpack.c.b16 %v5164, %v5163
          %5169 = vmatpush.bf16.msra.mxu0 0
          %5170 = vmatpush.bf16.msra.mxu0 0
          %5171 = vmatpush.bf16.msra.mxu0 0
          %5172 = vmatpush.bf16.msra.mxu0 0
          %5173 = vmatpush.bf16.msra.mxu0 0
          %5174 = vmatpush.bf16.msra.mxu0 0
          %5175 = vmatpush.bf16.msra.mxu0 %v5166
          %5176 = vmatpush.bf16.msra.mxu0 %v5165
          %5177 = vmatmul.bf16.gmra.mxu0 %v3860
          %v5178 = vpop.f32.mrf.mxu0
          %v5179 = vadd.f32 0.0, %v5178
          %v5180 = vpop.f32.mrf.mxu0
          %5181 = vdwg.mxu0
          %v5182 = vpack.c.bf16 %v5179, %v5179
          %v5184 = vsel %vm2420, %v5120, 0
          %v5187 = vsel %vm2420, %v5151, 0
          %5189 = vmatpush.bf16.xpose.msra.mxu0 0
          %5190 = vmatpush.bf16.xpose.msra.mxu0 0
          %5191 = vmatpush.bf16.xpose.msra.mxu0 0
          %5192 = vmatpush.bf16.xpose.msra.mxu0 0
          %5193 = vmatpush.bf16.xpose.msra.mxu0 0
          %5194 = vmatpush.bf16.xpose.msra.mxu0 0
          %5195 = vmatpush.bf16.xpose.msra.mxu0 0
          %5196 = vmatpush.bf16.xpose.msra.mxu0 %v5187
          %5197 = vmatmul.bf16.gmra.mxu0 %v5184
          %v5198 = vpop.f32.mrf.mxu0
          %v5199 = vadd.f32 0.0, %v5198
          %v5200 = vpop.f32.mrf.mxu0
          %5201 = vdwg.mxu0
          %s5202 = scalar_lea.vmem [#allocation5], 12
          %v5203 = vld [vmem:[%s5202] sm:$0xf]
          %v5204 = vmul.f32 %v5203, %v5089
          %v5205 = vmul.f32 %v5199, %v5035
          %v5206 = vadd.f32 %v5204, %v5205
          %5207 = vst.msk [vmem:[%s5202] sm:$0xf] %vm2061, %v5206
          %v5208 = vpack.c.bf16 %v5206, %v5206
          %v5210 = vsel %vm3072, %v5208, 0
          %v5213 = vsel %vm3076, %v5182, 0
          %5215 = vmatpush.bf16.msra.mxu0 0
          %5216 = vmatpush.bf16.msra.mxu0 0
          %5217 = vmatpush.bf16.msra.mxu0 0
          %5218 = vmatpush.bf16.msra.mxu0 0
          %5219 = vmatpush.bf16.msra.mxu0 0
          %5220 = vmatpush.bf16.msra.mxu0 0
          %5221 = vmatpush.bf16.msra.mxu0 0
          %5222 = vmatpush.bf16.msra.mxu0 %v5213
          %5223 = vmatmul.bf16.gmra.mxu0 %v5210
          %v5224 = vpop.f32.mrf.mxu0
          %v5225 = vadd.f32 0.0, %v5224
          %v5226 = vpop.f32.mrf.mxu0
          %5227 = vdwg.mxu0
          %v5228 = vpack.c.bf16 %v5225, %v5225
          %s5229 = scalar_lea.vmem %s111, 8
          %v5230 = vld [vmem:[%s5229] sm:$0xf]
          %v5231 = vld [vmem:[%s5229 + $0x4] sm:$0xf]
          %v5234 = vunpack.c.l.b16 %v5230
          %v5235 = vunpack.c.l.b16 %v5231
          %v5236 = vpack.c.b16 %v5235, %v5234
          %v5239 = vsel %vm2420, %v5228, 0
          %5241 = vmatpush.bf16.msra.mxu0 0
          %5242 = vmatpush.bf16.msra.mxu0 0
          %5243 = vmatpush.bf16.msra.mxu0 0
          %5244 = vmatpush.bf16.msra.mxu0 0
          %5245 = vmatpush.bf16.msra.mxu0 0
          %5246 = vmatpush.bf16.msra.mxu0 0
          %5247 = vmatpush.bf16.msra.mxu0 0
          %5248 = vmatpush.bf16.msra.mxu0 %v5236
          %5249 = vmatmul.bf16.gmra.mxu0 %v5239
          %v5250 = vpop.f32.mrf.mxu0
          %v5251 = vadd.f32 0.0, %v5250
          %v5252 = vpop.f32.mrf.mxu0
          %5253 = vdwg.mxu0
          %v5256 = vunpack.c.l.b16 %v4998
          %v5257 = vunpack.c.l.b16 %v4999
          %v5258 = vpack.c.b16 %v5257, %v5256
          %v5261 = vsel %vm2420, %v4997, 0
          %5263 = vmatpush.bf16.msra.mxu0 0
          %5264 = vmatpush.bf16.msra.mxu0 0
          %5265 = vmatpush.bf16.msra.mxu0 0
          %5266 = vmatpush.bf16.msra.mxu0 0
          %5267 = vmatpush.bf16.msra.mxu0 0
          %5268 = vmatpush.bf16.msra.mxu0 0
          %5269 = vmatpush.bf16.msra.mxu0 0
          %5270 = vmatpush.bf16.msra.mxu0 %v5258
          %5271 = vmatmul.bf16.gmra.mxu0 %v5261
          %v5272 = vpop.f32.mrf.mxu0
          %v5273 = vadd.f32 %v5251, %v5272
          %v5274 = vpop.f32.mrf.mxu0
          %5275 = vdwg.mxu0
          %v5276 = vld [vmem:[#allocation30] sm:$0x1]
          %v5278 = vperm.slane %v5276, 0
          %v5280 = vadd.f32 %v5273, %v5278
          %v5281 = vmul.f32 %v4767, %v5280
          %5282 = vst.msk [vmem:[%s3806] sm:$0x3f] %vm2050, %v4547
          %5283 = vst.msk [vmem:[%s4548] sm:$0xf] %vm2058, %v5281
          %v5284 = vadd.f32 %v3577, %v4547
          %v5285 = vld [vmem:[%s117] sm:$0x1]
          %v5286 = vld [vmem:[%s3345] sm:$0x1]
          %v5287 = vld [vmem:[%s3347] sm:$0x1]
          %v5288 = vld [vmem:[%s3349] sm:$0x1]
          %v5289 = vsel %vm2050, %v5284, 0.0
          %5290 = vadd.xlane.f32.xlu0 %v5289
          %v5291 = vpop.xlane.xlu0 %5290
          %v5292 = vmul.f32 %v5291, %v3360
          %v5293 = vsub.f32 %v5284, %v5292
          %v5294 = vmul.f32 %v5293, %v5293
          %v5295 = vsel %vm2050, %v5294, 0.0
          %5296 = vadd.xlane.f32.xlu0 %v5295
          %v5297 = vpop.xlane.xlu0 %5296
          %v5298 = vmul.f32 %v5297, %v3360
          %v5299 = vadd.f32 %v5298, 1e-05
          %v5300 = vrsqrt.pop %v5299
          %v5301 = vmul.f32 %v5300, %v5299
          %v5302 = vmul.f32 %v5301, %v5300
          %v5303 = vmul.f32 0.5, %v5302
          %v5304 = vsub.f32 1.5, %v5303
          %v5305 = vmul.f32 %v5300, %v5304
          %vm5306 = vweird.f32 %v5299
          %vm5307 = vweird.f32 %v5300
          %vm5308 = vmor %vm5306, %vm5307
          %v5309 = vsel %vm5308, %v5300, %v5305
          %v5310 = vmul.f32 %v5293, %v5309
          %v5312 = vperm.slane %v5285, 0
          %v5314 = vmul.f32 %v5310, %v5312
          %v5316 = vperm.slane %v5286, 0
          %v5318 = vadd.f32 %v5314, %v5316
          %v5319 = vpack.c.bf16 %v5318, %v5318
          %v5320 = vld [vmem:[%s9] sm:$0xf]
          %v5321 = vld [vmem:[%s9 + $0x4] sm:$0xf]
          %v5322 = vld [vmem:[%s9 + $0x8] sm:$0xf]
          %v5323 = vld [vmem:[%s9 + $0xc] sm:$0xf]
          %v5324 = vld [vmem:[#allocation6] sm:$0x1]
          %v5326 = vperm.slane %v5324, 0
          %v5332 = vunpack.c.l.b16 %v5320
          %v5333 = vunpack.c.l.b16 %v5321
          %v5334 = vunpack.c.l.b16 %v5322
          %v5335 = vunpack.c.l.b16 %v5323
          %v5336 = vpack.c.b16 %v5333, %v5332
          %v5337 = vpack.c.b16 %v5335, %v5334
          %v5341 = vsel %vm2099, %v5319, 0
          %5343 = vmatpush.bf16.msra.mxu0 0
          %5344 = vmatpush.bf16.msra.mxu0 0
          %5345 = vmatpush.bf16.msra.mxu0 0
          %5346 = vmatpush.bf16.msra.mxu0 0
          %5347 = vmatpush.bf16.msra.mxu0 0
          %5348 = vmatpush.bf16.msra.mxu0 0
          %5349 = vmatpush.bf16.msra.mxu0 %v5337
          %5350 = vmatpush.bf16.msra.mxu0 %v5336
          %5351 = vmatmul.bf16.gmra.mxu0 %v5341
          %v5352 = vpop.f32.mrf.mxu0
          %v5353 = vadd.f32 %v5326, %v5352
          %v5354 = vpop.f32.mrf.mxu0
          %5355 = vdwg.mxu0
          %v5356 = vmul.f32 %v5353, 0.5
          %v5357 = vmul.f32 %v5353, 0.70710677
          %v5358 = vand.u32 2147483647, %v5357
          %v5359 = vmul.f32 %v5358, 0.3275911
          %v5360 = vadd.f32 %v5359, 1.0
          %v5361 = vrcp.pop %v5360
          %v5362 = vmul.f32 %v5360, %v5361
          %v5363 = vsub.f32 1.0, %v5362
          %v5364 = vmul.f32 %v5361, %v5363
          %v5365 = vadd.f32 %v5361, %v5364
          %vm5366 = vweird.f32 %v5360
          %vm5367 = vweird.f32 %v5361
          %vm5368 = vmor %vm5366, %vm5367
          %v5369 = vsel %vm5368, %v5361, %v5365
          %v5370 = vand.u32 2147483647, %v5360
          %vm5371 = vcmp.eq.f32.partialorder %v5370, 8.507059e+37
          %v5372 = vand.u32 %v5360, 2147483648
          %v5373 = vor.u32 1.1754944e-38, %v5372
          %v5374 = vsel %vm5371, %v5373, %v5369
          %v5375 = vmul.f32 1.0, %v5374
          %v5376 = vmul.f32 %v5375, 1.0614054
          %v5377 = vadd.f32 %v5376, -1.4531521
          %v5378 = vmul.f32 %v5377, %v5375
          %v5379 = vadd.f32 %v5378, 1.4214138
          %v5380 = vmul.f32 %v5379, %v5375
          %v5381 = vadd.f32 %v5380, -0.28449672
          %v5382 = vmul.f32 %v5381, %v5375
          %v5383 = vadd.f32 %v5382, 0.2548296
          %v5384 = vmul.f32 %v5383, %v5375
          %v5385 = vsub.f32 0.0, %v5358
          %v5386 = vmul.f32 %v5385, %v5358
          %v5387 = vmul.f32 %v5386, 1.442695
          %v5388 = vpow.pop %v5387
          %v5389 = vmul.f32 %v5384, %v5388
          %v5390 = vsub.f32 1.0, %v5389
          %vm5391 = vcmp.ge.f32.partialorder %v5357, 0.0
          %v5392 = vsub.f32 0.0, %v5390
          %v5393 = vsel %vm5391, %v5390, %v5392
          %v5394 = vadd.f32 %v5393, 1.0
          %v5395 = vmul.f32 %v5356, %v5394
          %v5396 = vpack.c.bf16 %v5395, %v5395
          %v5397 = vld [vmem:[%s11] sm:$0xf]
          %v5398 = vld [vmem:[%s11 + $0x4] sm:$0xf]
          %v5399 = vld [vmem:[%s11 + $0x8] sm:$0xf]
          %v5400 = vld [vmem:[%s11 + $0xc] sm:$0xf]
          %v5401 = vld [vmem:[%s11 + $0x10] sm:$0xf]
          %v5402 = vld [vmem:[%s11 + $0x14] sm:$0xf]
          %v5403 = vld [vmem:[%s11 + $0x18] sm:$0xf]
          %v5404 = vld [vmem:[%s11 + $0x1c] sm:$0xf]
          %v5405 = vld [vmem:[%s11 + $0x20] sm:$0xf]
          %v5406 = vld [vmem:[%s11 + $0x24] sm:$0xf]
          %v5407 = vld [vmem:[%s11 + $0x28] sm:$0xf]
          %v5408 = vld [vmem:[%s11 + $0x2c] sm:$0xf]
          %v5409 = vld [vmem:[%s11 + $0x30] sm:$0xf]
          %v5410 = vld [vmem:[%s11 + $0x34] sm:$0xf]
          %v5411 = vld [vmem:[%s11 + $0x38] sm:$0xf]
          %v5412 = vld [vmem:[%s11 + $0x3c] sm:$0xf]
          %v5413 = vld [vmem:[#allocation9] sm:$0x1]
          %v5415 = vperm.slane %v5413, 0
          %v5433 = vunpack.c.l.b16 %v5397
          %v5434 = vunpack.c.l.b16 %v5398
          %v5435 = vunpack.c.l.b16 %v5399
          %v5436 = vunpack.c.l.b16 %v5400
          %v5437 = vunpack.c.l.b16 %v5401
          %v5438 = vunpack.c.l.b16 %v5402
          %v5439 = vunpack.c.l.b16 %v5403
          %v5440 = vunpack.c.l.b16 %v5404
          %v5441 = vunpack.c.l.b16 %v5405
          %v5442 = vunpack.c.l.b16 %v5406
          %v5443 = vunpack.c.l.b16 %v5407
          %v5444 = vunpack.c.l.b16 %v5408
          %v5445 = vunpack.c.l.b16 %v5409
          %v5446 = vunpack.c.l.b16 %v5410
          %v5447 = vunpack.c.l.b16 %v5411
          %v5448 = vunpack.c.l.b16 %v5412
          %v5449 = vpack.c.b16 %v5434, %v5433
          %v5450 = vpack.c.b16 %v5436, %v5435
          %v5451 = vpack.c.b16 %v5438, %v5437
          %v5452 = vpack.c.b16 %v5440, %v5439
          %v5453 = vpack.c.b16 %v5442, %v5441
          %v5454 = vpack.c.b16 %v5444, %v5443
          %v5455 = vpack.c.b16 %v5446, %v5445
          %v5456 = vpack.c.b16 %v5448, %v5447
          %5465 = vmatpush.bf16.msra.mxu0 %v5456
          %5466 = vmatpush.bf16.msra.mxu0 %v5455
          %5467 = vmatpush.bf16.msra.mxu0 %v5454
          %5468 = vmatpush.bf16.msra.mxu0 %v5453
          %5469 = vmatpush.bf16.msra.mxu0 %v5452
          %5470 = vmatpush.bf16.msra.mxu0 %v5451
          %5471 = vmatpush.bf16.msra.mxu0 %v5450
          %5472 = vmatpush.bf16.msra.mxu0 %v5449
          %5473 = vmatmul.bf16.gmra.mxu0 %v5396
          %v5474 = vpop.f32.mrf.mxu0
          %v5475 = vadd.f32 %v5415, %v5474
          %v5476 = vpop.f32.mrf.mxu0
          %5477 = vdwg.mxu0
          %v5478 = vadd.f32 %v5318, %v5475
          %v5479 = vsel %vm2050, %v5478, 0.0
          %5480 = vadd.xlane.f32.xlu0 %v5479
          %v5481 = vpop.xlane.xlu0 %5480
          %v5482 = vmul.f32 %v5481, %v3360
          %v5483 = vsub.f32 %v5478, %v5482
          %v5484 = vmul.f32 %v5483, %v5483
          %v5485 = vsel %vm2050, %v5484, 0.0
          %5486 = vadd.xlane.f32.xlu0 %v5485
          %v5487 = vpop.xlane.xlu0 %5486
          %v5488 = vmul.f32 %v5487, %v3360
          %v5489 = vadd.f32 %v5488, 1e-05
          %v5490 = vrsqrt.pop %v5489
          %v5491 = vmul.f32 %v5490, %v5489
          %v5492 = vmul.f32 %v5491, %v5490
          %v5493 = vmul.f32 0.5, %v5492
          %v5494 = vsub.f32 1.5, %v5493
          %v5495 = vmul.f32 %v5490, %v5494
          %vm5496 = vweird.f32 %v5489
          %vm5497 = vweird.f32 %v5490
          %vm5498 = vmor %vm5496, %vm5497
          %v5499 = vsel %vm5498, %v5490, %v5495
          %v5500 = vmul.f32 %v5483, %v5499
          %v5502 = vperm.slane %v5287, 0
          %v5504 = vmul.f32 %v5500, %v5502
          %v5506 = vperm.slane %v5288, 0
          %v5508 = vadd.f32 %v5504, %v5506
          %v5509 = vadd.f32 %v3805, %v5281
          %v5510 = vld [vmem:[%s3578] sm:$0x1]
          %v5511 = vld [vmem:[%s3580] sm:$0x1]
          %v5512 = vld [vmem:[%s3582] sm:$0x1]
          %v5513 = vld [vmem:[%s3584] sm:$0x1]
          %v5514 = vsel %vm2058, %v5509, 0.0
          %5515 = vadd.xlane.f32.xlu0 %v5514
          %v5516 = vpop.xlane.xlu0 %5515
          %v5517 = vmul.f32 %v5516, %v3360
          %v5518 = vsub.f32 %v5509, %v5517
          %v5519 = vmul.f32 %v5518, %v5518
          %v5520 = vsel %vm2058, %v5519, 0.0
          %5521 = vadd.xlane.f32.xlu0 %v5520
          %v5522 = vpop.xlane.xlu0 %5521
          %v5523 = vmul.f32 %v5522, %v3360
          %v5524 = vadd.f32 %v5523, 1e-05
          %v5525 = vrsqrt.pop %v5524
          %v5526 = vmul.f32 %v5525, %v5524
          %v5527 = vmul.f32 %v5526, %v5525
          %v5528 = vmul.f32 0.5, %v5527
          %v5529 = vsub.f32 1.5, %v5528
          %v5530 = vmul.f32 %v5525, %v5529
          %vm5531 = vweird.f32 %v5524
          %vm5532 = vweird.f32 %v5525
          %vm5533 = vmor %vm5531, %vm5532
          %v5534 = vsel %vm5533, %v5525, %v5530
          %v5535 = vmul.f32 %v5518, %v5534
          %v5537 = vperm.slane %v5510, 0
          %v5539 = vmul.f32 %v5535, %v5537
          %v5541 = vperm.slane %v5511, 0
          %v5543 = vadd.f32 %v5539, %v5541
          %v5544 = vpack.c.bf16 %v5543, %v5543
          %v5545 = vld [vmem:[%s17] sm:$0xf]
          %v5546 = vld [vmem:[%s17 + $0x4] sm:$0xf]
          %v5547 = vld [vmem:[%s17 + $0x8] sm:$0xf]
          %v5548 = vld [vmem:[%s17 + $0xc] sm:$0xf]
          %v5549 = vld [vmem:[#allocation11] sm:$0x1]
          %v5551 = vperm.slane %v5549, 0
          %v5557 = vunpack.c.l.b16 %v5545
          %v5558 = vunpack.c.l.b16 %v5546
          %v5559 = vunpack.c.l.b16 %v5547
          %v5560 = vunpack.c.l.b16 %v5548
          %v5561 = vpack.c.b16 %v5558, %v5557
          %v5562 = vpack.c.b16 %v5560, %v5559
          %v5566 = vsel %vm2099, %v5544, 0
          %5568 = vmatpush.bf16.msra.mxu0 0
          %5569 = vmatpush.bf16.msra.mxu0 0
          %5570 = vmatpush.bf16.msra.mxu0 0
          %5571 = vmatpush.bf16.msra.mxu0 0
          %5572 = vmatpush.bf16.msra.mxu0 0
          %5573 = vmatpush.bf16.msra.mxu0 0
          %5574 = vmatpush.bf16.msra.mxu0 %v5562
          %5575 = vmatpush.bf16.msra.mxu0 %v5561
          %5576 = vmatmul.bf16.gmra.mxu0 %v5566
          %v5577 = vpop.f32.mrf.mxu0
          %v5578 = vadd.f32 %v5551, %v5577
          %v5579 = vpop.f32.mrf.mxu0
          %5580 = vdwg.mxu0
          %v5581 = vmul.f32 %v5578, 0.5
          %v5582 = vmul.f32 %v5578, 0.70710677
          %v5583 = vand.u32 2147483647, %v5582
          %v5584 = vmul.f32 %v5583, 0.3275911
          %v5585 = vadd.f32 %v5584, 1.0
          %v5586 = vrcp.pop %v5585
          %v5587 = vmul.f32 %v5585, %v5586
          %v5588 = vsub.f32 1.0, %v5587
          %v5589 = vmul.f32 %v5586, %v5588
          %v5590 = vadd.f32 %v5586, %v5589
          %vm5591 = vweird.f32 %v5585
          %vm5592 = vweird.f32 %v5586
          %vm5593 = vmor %vm5591, %vm5592
          %v5594 = vsel %vm5593, %v5586, %v5590
          %v5595 = vand.u32 2147483647, %v5585
          %vm5596 = vcmp.eq.f32.partialorder %v5595, 8.507059e+37
          %v5597 = vand.u32 %v5585, 2147483648
          %v5598 = vor.u32 1.1754944e-38, %v5597
          %v5599 = vsel %vm5596, %v5598, %v5594
          %v5600 = vmul.f32 1.0, %v5599
          %v5601 = vmul.f32 %v5600, 1.0614054
          %v5602 = vadd.f32 %v5601, -1.4531521
          %v5603 = vmul.f32 %v5602, %v5600
          %v5604 = vadd.f32 %v5603, 1.4214138
          %v5605 = vmul.f32 %v5604, %v5600
          %v5606 = vadd.f32 %v5605, -0.28449672
          %v5607 = vmul.f32 %v5606, %v5600
          %v5608 = vadd.f32 %v5607, 0.2548296
          %v5609 = vmul.f32 %v5608, %v5600
          %v5610 = vsub.f32 0.0, %v5583
          %v5611 = vmul.f32 %v5610, %v5583
          %v5612 = vmul.f32 %v5611, 1.442695
          %v5613 = vpow.pop %v5612
          %v5614 = vmul.f32 %v5609, %v5613
          %v5615 = vsub.f32 1.0, %v5614
          %vm5616 = vcmp.ge.f32.partialorder %v5582, 0.0
          %v5617 = vsub.f32 0.0, %v5615
          %v5618 = vsel %vm5616, %v5615, %v5617
          %v5619 = vadd.f32 %v5618, 1.0
          %v5620 = vmul.f32 %v5581, %v5619
          %v5621 = vpack.c.bf16 %v5620, %v5620
          %v5622 = vld [vmem:[%s19] sm:$0xf]
          %v5623 = vld [vmem:[%s19 + $0x4] sm:$0xf]
          %v5624 = vld [vmem:[%s19 + $0x8] sm:$0xf]
          %v5625 = vld [vmem:[%s19 + $0xc] sm:$0xf]
          %v5626 = vld [vmem:[%s19 + $0x10] sm:$0xf]
          %v5627 = vld [vmem:[%s19 + $0x14] sm:$0xf]
          %v5628 = vld [vmem:[%s19 + $0x18] sm:$0xf]
          %v5629 = vld [vmem:[%s19 + $0x1c] sm:$0xf]
          %v5630 = vld [vmem:[%s19 + $0x20] sm:$0xf]
          %v5631 = vld [vmem:[%s19 + $0x24] sm:$0xf]
          %v5632 = vld [vmem:[%s19 + $0x28] sm:$0xf]
          %v5633 = vld [vmem:[%s19 + $0x2c] sm:$0xf]
          %v5634 = vld [vmem:[%s19 + $0x30] sm:$0xf]
          %v5635 = vld [vmem:[%s19 + $0x34] sm:$0xf]
          %v5636 = vld [vmem:[%s19 + $0x38] sm:$0xf]
          %v5637 = vld [vmem:[%s19 + $0x3c] sm:$0xf]
          %v5638 = vld [vmem:[#allocation12] sm:$0x1]
          %v5640 = vperm.slane %v5638, 0
          %v5658 = vunpack.c.l.b16 %v5622
          %v5659 = vunpack.c.l.b16 %v5623
          %v5660 = vunpack.c.l.b16 %v5624
          %v5661 = vunpack.c.l.b16 %v5625
          %v5662 = vunpack.c.l.b16 %v5626
          %v5663 = vunpack.c.l.b16 %v5627
          %v5664 = vunpack.c.l.b16 %v5628
          %v5665 = vunpack.c.l.b16 %v5629
          %v5666 = vunpack.c.l.b16 %v5630
          %v5667 = vunpack.c.l.b16 %v5631
          %v5668 = vunpack.c.l.b16 %v5632
          %v5669 = vunpack.c.l.b16 %v5633
          %v5670 = vunpack.c.l.b16 %v5634
          %v5671 = vunpack.c.l.b16 %v5635
          %v5672 = vunpack.c.l.b16 %v5636
          %v5673 = vunpack.c.l.b16 %v5637
          %v5674 = vpack.c.b16 %v5659, %v5658
          %v5675 = vpack.c.b16 %v5661, %v5660
          %v5676 = vpack.c.b16 %v5663, %v5662
          %v5677 = vpack.c.b16 %v5665, %v5664
          %v5678 = vpack.c.b16 %v5667, %v5666
          %v5679 = vpack.c.b16 %v5669, %v5668
          %v5680 = vpack.c.b16 %v5671, %v5670
          %v5681 = vpack.c.b16 %v5673, %v5672
          %5690 = vmatpush.bf16.msra.mxu0 %v5681
          %5691 = vmatpush.bf16.msra.mxu0 %v5680
          %5692 = vmatpush.bf16.msra.mxu0 %v5679
          %5693 = vmatpush.bf16.msra.mxu0 %v5678
          %5694 = vmatpush.bf16.msra.mxu0 %v5677
          %5695 = vmatpush.bf16.msra.mxu0 %v5676
          %5696 = vmatpush.bf16.msra.mxu0 %v5675
          %5697 = vmatpush.bf16.msra.mxu0 %v5674
          %5698 = vmatmul.bf16.gmra.mxu0 %v5621
          %v5699 = vpop.f32.mrf.mxu0
          %v5700 = vadd.f32 %v5640, %v5699
          %v5701 = vpop.f32.mrf.mxu0
          %5702 = vdwg.mxu0
          %v5703 = vadd.f32 %v5543, %v5700
          %v5704 = vsel %vm2058, %v5703, 0.0
          %5705 = vadd.xlane.f32.xlu0 %v5704
          %v5706 = vpop.xlane.xlu0 %5705
          %v5707 = vmul.f32 %v5706, %v3360
          %v5708 = vsub.f32 %v5703, %v5707
          %v5709 = vmul.f32 %v5708, %v5708
          %v5710 = vsel %vm2058, %v5709, 0.0
          %5711 = vadd.xlane.f32.xlu0 %v5710
          %v5712 = vpop.xlane.xlu0 %5711
          %v5713 = vmul.f32 %v5712, %v3360
          %v5714 = vadd.f32 %v5713, 1e-05
          %v5715 = vrsqrt.pop %v5714
          %v5716 = vmul.f32 %v5715, %v5714
          %v5717 = vmul.f32 %v5716, %v5715
          %v5718 = vmul.f32 0.5, %v5717
          %v5719 = vsub.f32 1.5, %v5718
          %v5720 = vmul.f32 %v5715, %v5719
          %vm5721 = vweird.f32 %v5714
          %vm5722 = vweird.f32 %v5715
          %vm5723 = vmor %vm5721, %vm5722
          %v5724 = vsel %vm5723, %v5715, %v5720
          %v5725 = vmul.f32 %v5708, %v5724
          %v5727 = vperm.slane %v5512, 0
          %v5729 = vmul.f32 %v5725, %v5727
          %v5731 = vperm.slane %v5513, 0
          %v5733 = vadd.f32 %v5729, %v5731
          %p5734 = scmp.eq.s32.totalorder %s2067, 2
          // Predicated region
          $region328: #{mlstm_forward.1} parent=324 // pred_check
            %p5735 = pneg %p5734
          $region329: #{mlstm_forward.1} parent=324 // pred_check_branch
            %5737 = sbr.rel (%p5735) target = $region331
          $region330: #{mlstm_forward.1} parent=324 // pred_region
            %5738 = vst.msk [vmem:[%s2048] sm:$0x3f] %vm2050, %v5508
            %5739 = vst.msk [vmem:[%s2034] sm:$0xf] %vm2058, %v5733
          $region331: #{mlstm_forward.1} parent=324 // pred_fallthru
            _
        $region325: #{mlstm_forward.1} parent=255 // loop_footer
          %s2071 = sadd.s32 1, %s2067
        $region326: #{mlstm_forward.1} parent=255 // loop_footer_branch
          %2066 = sbr.rel target = $region322
        $region327: #{mlstm_forward.1} parent=255 // loop_exit
          _
        %p5740 = scmp.lt.s32.totalorder %s145, 1
        %s5741 = scalar_select %p5740, %s145, 1
        %s5742 = smul.addr %s5741, 8
        %s5743 = scalar_lea.vmem %s119, %s5742
        %s5744 = sand.u32 %s1428, 1
        %s5745 = scalar_lea.sflag [#allocation8], %s5744
        %s5746 = sand.u32 %s1428, 1
        %s5747 = smul.addr %s5746, 4
        %s5748 = scalar_lea.vmem [#allocation32], %s5747
        // Predicated region
        $region332: #{mlstm_forward.1} parent=255 // pred_check
          %p5749 = pneg %p1412
        $region333: #{mlstm_forward.1} parent=255 // pred_check_branch
          %5751 = sbr.rel (%p5749) target = $region335
        $region334: #{mlstm_forward.1} parent=255 // pred_region
          _
        $region335: #{mlstm_forward.1} parent=255 // pred_fallthru
          _
        // Predicated region
        $region336: #{mlstm_forward.1} parent=255 // pred_check
          %p5752 = pneg %p1438
        $region337: #{mlstm_forward.1} parent=255 // pred_check_branch
          %5754 = sbr.rel (%p5752) target = $region339
        $region338: #{mlstm_forward.1} parent=255 // pred_region
          %5756 = vsyncadd %s5745, 0
          %s5757 = smul.addr %s145, 4
          %s5758 = scalar_lea.hbm %s121, %s5757
          %s5760 = sshll.u32 %s5748, 4
          %s5761 = int_to_ptr.vmem [resolvable:$true] %s5760
          %s5762 = sshll.u32 %s5758, 4
          %s5763 = int_to_ptr.hbm [resolvable:$true] %s5762
          %5765 = dma.vmem_to_hbm [thread:$0]  %s5761, 64, %s5763, %s5745
        $region339: #{mlstm_forward.1} parent=255 // pred_fallthru
          _
      $region256: #{mlstm_forward.1} parent=5 // pred_fallthru
        _
      %p5766 = scmp.le.s32.totalorder 2, %s140
      // Predicated region
      $region340: #{mlstm_forward.1} parent=5 // pred_check
        %p5767 = pneg %p5766
      $region341: #{mlstm_forward.1} parent=5 // pred_check_branch
        %5769 = sbr.rel (%p5767) target = $region343
      $region342: #{mlstm_forward.1} parent=5 // pred_region
        %s5770 = ssub.s32 %s140, 2
        // Predicated region
        $region344: #{mlstm_forward.1} parent=342 // pred_check
          %p5771 = pneg %p1418
        $region345: #{mlstm_forward.1} parent=342 // pred_check_branch
          %5773 = sbr.rel (%p5771) target = $region347
        $region346: #{mlstm_forward.1} parent=342 // pred_region
          %p5774 = scmp.lt.s32.totalorder %s146, 1
          %s5775 = scalar_select %p5774, %s146, 1
          %s5776 = smul.addr %s5775, 8
          %s5777 = scalar_lea.vmem %s119, %s5776
        $region347: #{mlstm_forward.1} parent=342 // pred_fallthru
          _
        // Predicated region
        $region348: #{mlstm_forward.1} parent=342 // pred_check
          %p5778 = pneg %p1444
        $region349: #{mlstm_forward.1} parent=342 // pred_check_branch
          %5780 = sbr.rel (%p5778) target = $region351
        $region350: #{mlstm_forward.1} parent=342 // pred_region
          %s5781 = sand.u32 %s1429, 1
          %s5782 = scalar_lea.sflag [#allocation8], %s5781
          %s5783 = sand.u32 %s1429, 1
          %s5784 = smul.addr %s5783, 4
          %s5785 = scalar_lea.vmem [#allocation32], %s5784
          %5787 = dma.done %s5782, 64
        $region351: #{mlstm_forward.1} parent=342 // pred_fallthru
          _
      $region343: #{mlstm_forward.1} parent=5 // pred_fallthru
        _
    $region6: #{mlstm_forward.1} parent=1 // loop_footer
      %s144 = sadd.s32 1, %s140
    $region7: #{mlstm_forward.1} parent=1 // loop_footer_branch
      %139 = sbr.rel target = $region3
    $region8: #{mlstm_forward.1} parent=1 // loop_exit
      _
    %5788 = vsyncpa [#allocation7], 1
    %s5789 = scalar_lea.sflag [#allocation7], 1
    %5790 = vsyncpa %s5789, 1
    %5791 = vsyncpa [#allocation10], 1
    %5792 = vsyncpa [#allocation13], 1
    %5793 = vsyncpa [#allocation16], 1
    %5794 = vsyncpa [#allocation19], 1
    %5795 = vsyncpa [#allocation22], 1
    %5796 = vsyncpa [#allocation25], 1
    %5797 = vsyncpa [#allocation28], 1
    %5798 = vsyncpa [#allocation31], 1
    %5799 = vsyncpa [#allocation8], 1
    %s5800 = scalar_lea.sflag [#allocation8], 1
    %5801 = vsyncpa %s5800, 1

</llo_original>
